<compile_context>
chip_gen: v7x
topology: tpu7x:2x2x1
jax: 0.10.0
libtpu: 0.0.40
codegen_flags: <defaults>
</compile_context>

<pallas_src>
import jax
import jax.numpy as jnp
from jax import lax
from jax.experimental import pallas as pl
from jax.experimental.pallas import tpu as pltpu


# ---------------------------------- kernel -----------------------------------

def combine_feature_kernel(high_ref, low_ref, w0_ref, wlow_ref, wbr_ref,
                           wrf_ref, cp_ref, out_ref, xp_ref, sp_ref):
    H, W, Ch = high_ref.shape[1:]
    Cl = low_ref.shape[-1]
    Cm = w0_ref.shape[-1]
    HW = H * W

    # ---- 1x1 convs: conv0(high) and up2_low(low), two plain MXU dots --------
    in0 = jnp.dot(high_ref[0].reshape(HW, Ch), w0_ref[...],
                  preferred_element_type=jnp.float32)            # (HW, Cm)
    lo = jnp.dot(low_ref[0].reshape(HW, Cl), wlow_ref[...],
                 preferred_element_type=jnp.float32)             # (HW, Cm), bn2 scale folded

    # ---- DilatedParallelConvBlockD2 via per-tap accumulation ----------------
    # One pad-2 buffer covers both the dil=1 (pad 1) and dil=2 (pad 2) windows.
    xp_ref[...] = jnp.zeros_like(xp_ref)
    xp_ref[2:2 + H, 2:2 + W, :] = in0.reshape(H, W, Cm)

    hi = jnp.zeros((HW, Cm), jnp.float32)
    for ky in range(3):
        for kx in range(3):
            t = ky * 3 + kx
            # branch 1: 3x3, dilation 1 -> block-diag weight fills lanes [0:n]
            win1 = xp_ref[ky + 1:ky + 1 + H, kx + 1:kx + 1 + W, :].reshape(HW, Cm)
            hi = hi + jnp.dot(win1, wbr_ref[t],
                              preferred_element_type=jnp.float32)
            # branch 2: 3x3, dilation 2 -> block-diag weight fills lanes [n:Cm]
            win2 = xp_ref[2 * ky:2 * ky + H, 2 * kx:2 * kx + W, :].reshape(HW, Cm)
            hi = hi + jnp.dot(win2, wbr_ref[9 + t],
                              preferred_element_type=jnp.float32)

    cp = cp_ref[...]                       # (4, Cm) packed per-channel params
    s = hi + lo + cp[0:1]                  # bn1_shift + bn2_shift (scales folded)
    s = jnp.where(s > 0, s, cp[1:2] * s)   # up2_act: PReLU(middle_channel)

    # ---- refine: 3x3 conv (pad 1) via per-tap accumulation + BN + PReLU -----
    sp_ref[...] = jnp.zeros_like(sp_ref)
    sp_ref[1:1 + H, 1:1 + W, :] = s.reshape(H, W, Cm)
    r = jnp.zeros((HW, Cm), jnp.float32)
    for ky in range(3):
        for kx in range(3):
            win = sp_ref[ky:ky + H, kx:kx + W, :].reshape(HW, Cm)
            r = r + jnp.dot(win, wrf_ref[ky * 3 + kx],
                            preferred_element_type=jnp.float32)
    r = r + cp[2:3]                        # refine BN shift (scale folded)
    r = jnp.where(r > 0, r, cp[3:4] * r)   # refine PReLU (shared alpha, broadcast)

    # Lane-dense store: (Cm, HW) with HW = 2*128 lanes -> unmasked vst.
    out_ref[0] = r.T.astype(out_ref.dtype)


# --------------------------------- wrapper ------------------------------------

def conbine_feature_forward(high, low, params):
    """high: (N,H,W,Ch), low: (N,H,W,Cl) float32 NHWC -> (N,H,W,middle_channel)."""
    # (If `low` were None in the original module, pass zeros for low and for the
    #  bn2 scale/shift: the low branch then contributes exactly 0.)
    N, H, W, Ch = high.shape
    Cl = low.shape[-1]
    Cm = params["w0"].shape[-1]
    n = (Cm + 1) // 2                      # torch.chunk: first chunk = ceil(Cm/2)
    n2 = Cm - n
    HW = H * W
    f32 = jnp.float32

    bn1_s = params["bn1_scale"].reshape(Cm).astype(f32)
    bn1_b = params["bn1_shift"].reshape(Cm).astype(f32)
    bn2_s = params["bn2_scale"].reshape(Cm).astype(f32)
    bn2_b = params["bn2_shift"].reshape(Cm).astype(f32)
    bn3_s = params["bn3_scale"].reshape(Cm).astype(f32)
    bn3_b = params["bn3_shift"].reshape(Cm).astype(f32)

    # ---- pack weights once (wrapper-side layout plumbing, tiny arrays) ----
    # bn1 applies after conv1/conv2 so it cannot fold into w0; bn2 folds into
    # wlow, bn1 into the tap weights, bn3 into the refine tap weights.
    w0 = params["w0"].astype(f32)                                 # (Ch, Cm)
    wlow = params["wlow"].astype(f32) * bn2_s[None, :]            # (Cl, Cm)

    # Per-tap (Cm, Cm) block-diagonal weights for the dilated parallel block:
    # taps [0:9]  -> branch 1 (3x3, dil=1), top-left  (n, n)  block,
    # taps [9:18] -> branch 2 (3x3, dil=2), bottom-right (n2, n2) block.
    w1 = params["w1"].astype(f32) * bn1_s[:n][None, None, None, :]    # (3,3,n,n) HWIO
    w2 = params["w2"].astype(f32) * bn1_s[n:][None, None, None, :]    # (3,3,n2,n2)
    wbr = jnp.zeros((18, Cm, Cm), f32)
    wbr = wbr.at[0:9, :n, :n].set(w1.reshape(9, n, n))
    wbr = wbr.at[9:18, n:, n:].set(w2.reshape(9, n2, n2))

    # Per-tap refine weights, bn3 scale folded.
    wrf = (params["wref"].astype(f32) * bn3_s[None, None, None, :]).reshape(9, Cm, Cm)

    # Packed per-channel params (4, Cm): [bn1_shift + bn2_shift, a_act, bn3_shift, a_ref]
    a_ref = jnp.broadcast_to(params["a_ref"].reshape(-1)[:1], (Cm,)).astype(f32)
    cp = jnp.stack([bn1_b + bn2_b,
                    params["a_act"].reshape(Cm).astype(f32),
                    bn3_b,
                    a_ref], axis=0)

    flops = N * (2 * HW * (Ch + Cl) * Cm + 27 * 2 * HW * Cm * Cm)
    bytes_accessed = 4 * (high.size + low.size + w0.size + wlow.size
                          + wbr.size + wrf.size + cp.size + N * Cm * HW)

    grid_spec = pltpu.PrefetchScalarGridSpec(
        num_scalar_prefetch=0,
        grid=(N,),
        in_specs=[
            pl.BlockSpec((1, H, W, Ch), lambda b: (b, 0, 0, 0)),
            pl.BlockSpec((1, H, W, Cl), lambda b: (b, 0, 0, 0)),
            pl.BlockSpec((Ch, Cm), lambda b: (0, 0)),
            pl.BlockSpec((Cl, Cm), lambda b: (0, 0)),
            pl.BlockSpec((18, Cm, Cm), lambda b: (0, 0, 0)),
            pl.BlockSpec((9, Cm, Cm), lambda b: (0, 0, 0)),
            pl.BlockSpec((4, Cm), lambda b: (0, 0)),
        ],
        out_specs=pl.BlockSpec((1, Cm, HW), lambda b: (b, 0, 0)),
        scratch_shapes=[
            pltpu.VMEM((H + 4, W + 4, Cm), jnp.float32),   # pad-2 buffer (both dilations)
            pltpu.VMEM((H + 2, W + 2, Cm), jnp.float32),   # pad-1 buffer (refine)
        ],
    )

    out = pl.pallas_call(
        combine_feature_kernel,
        out_shape=jax.ShapeDtypeStruct((N, Cm, HW), jnp.float32),
        grid_spec=grid_spec,
        compiler_params=pltpu.CompilerParams(
            dimension_semantics=("parallel",)),
        cost_estimate=pl.CostEstimate(flops=flops, transcendentals=0,
                                      bytes_accessed=bytes_accessed),
    )(high, low, w0, wlow, wbr, wrf, cp)

    # lane-dense (Cm, HW) slab -> NHWC (wrapper-side layout plumbing only).
    return jnp.transpose(out, (0, 2, 1)).reshape(N, H, W, Cm)


# ------------------------- pure-JAX reference (checker) -----------------------

def ref_forward(high, low, p):
    def conv(x, w, pad, dil):
        return lax.conv_general_dilated(
            x, w, window_strides=(1, 1), padding=((pad, pad), (pad, pad)),
            rhs_dilation=(dil, dil),
            dimension_numbers=("NHWC", "HWIO", "NHWC"))

    Cm = p["w0"].shape[-1]
    n = (Cm + 1) // 2
    in0 = jnp.einsum("nhwc,cd->nhwd", high, p["w0"])
    b1 = conv(in0[..., :n], p["w1"], 1, 1)
    b2 = conv(in0[..., n:], p["w2"], 2, 2)
    hi = jnp.concatenate([b1, b2], axis=-1) * p["bn1_scale"] + p["bn1_shift"]
    lo = jnp.einsum("nhwc,cd->nhwd", low, p["wlow"]) * p["bn2_scale"] + p["bn2_shift"]
    s = hi + lo
    s = jnp.where(s > 0, s, p["a_act"] * s)
    r = conv(s, p["wref"], 1, 1) * p["bn3_scale"] + p["bn3_shift"]
    r = jnp.where(r > 0, r, p["a_ref"] * r)
    return r


# ----------------------------------- main -------------------------------------

if __name__ == "__main__":
    key = jax.random.PRNGKey(0)
    N, H, W = 2, 16, 16
    Ch, Cl, Cm = 128, 128, 32          # high_channel, low_channel, middle_channel
    n = (Cm + 1) // 2
    n2 = Cm - n

    ks = jax.random.split(key, 12)

    def normal(k, shape, scale=0.1):
        return scale * jax.random.normal(k, shape, jnp.float32)

    def bn_params(k, C, eps=1e-5):
        k1, k2, k3, k4 = jax.random.split(k, 4)
        gamma = 1.0 + 0.1 * jax.random.normal(k1, (C,), jnp.float32)
        beta = 0.1 * jax.random.normal(k2, (C,), jnp.float32)
        mean = 0.1 * jax.random.normal(k3, (C,), jnp.float32)
        var = 0.5 + jax.random.uniform(k4, (C,), jnp.float32)
        scale = gamma / jnp.sqrt(var + eps)
        shift = beta - mean * scale
        return scale.reshape(1, C), shift.reshape(1, C)

    params = {
        "w0":   normal(ks[0], (Ch, Cm)),          # conv0 1x1 (Cin, Cout)
        "w1":   normal(ks[1], (3, 3, n, n)),      # conv1 3x3 dil=1
        "w2":   normal(ks[2], (3, 3, n2, n2)),    # conv2 3x3 dil=2
        "wlow": normal(ks[3], (Cl, Cm)),          # up2_low 1x1
        "wref": normal(ks[4], (3, 3, Cm, Cm)),    # refine 3x3
        "a_act": 0.25 * jnp.ones((1, Cm), jnp.float32) + normal(ks[5], (1, Cm), 0.01),
        "a_ref": jnp.full((1, 1), 0.25, jnp.float32),   # nn.PReLU() shared alpha
    }
    params["bn1_scale"], params["bn1_shift"] = bn_params(ks[6], Cm)
    params["bn2_scale"], params["bn2_shift"] = bn_params(ks[7], Cm)
    params["bn3_scale"], params["bn3_shift"] = bn_params(ks[8], Cm)

    high = jax.random.normal(ks[9],  (N, H, W, Ch), jnp.float32)
    low  = jax.random.normal(ks[10], (N, H, W, Cl), jnp.float32)

    out = conbine_feature_forward(high, low, params)
    out = jax.block_until_ready(out)

    ref = ref_forward(high, low, params)
    err = float(jnp.max(jnp.abs(out - ref)))
    assert jnp.allclose(out, ref, rtol=1e-3, atol=1e-3), f"max abs err = {err}"

    print("KERNEL_OK")
</pallas_src>

<mosaic_0001>
module attributes {stable_mosaic.version = 11 : i64} {
  func.func @combine_feature_kernel(%arg0: i32, %arg1: memref<1x16x16x128xf32, #tpu.memory_space<vmem>>, %arg2: memref<1x16x16x128xf32, #tpu.memory_space<vmem>>, %arg3: memref<128x32xf32, #tpu.memory_space<vmem>>, %arg4: memref<128x32xf32, #tpu.memory_space<vmem>>, %arg5: memref<18x32x32xf32, #tpu.memory_space<vmem>>, %arg6: memref<9x32x32xf32, #tpu.memory_space<vmem>>, %arg7: memref<4x32xf32, #tpu.memory_space<vmem>>, %arg8: memref<1x32x256xf32, #tpu.memory_space<vmem>>, %arg9: memref<20x20x32xf32, #tpu.memory_space<vmem>>, %arg10: memref<18x18x32xf32, #tpu.memory_space<vmem>>) attributes {dimension_semantics = [#tpu.dimension_semantics<parallel>], iteration_bounds = array<i64: 2>, scalar_prefetch = 0 : i64, scratch_operands = 2 : i64, tpu.core_type = #tpu.core_type<tc>, window_params = [{transform_indices = @transform_0, window_bounds = array<i64: 1, 16, 16, 128>}, {transform_indices = @transform_1, window_bounds = array<i64: 1, 16, 16, 128>}, {pipeline_mode = #tpu.pipeline_mode<synchronous>, transform_indices = @transform_2, window_bounds = array<i64: 128, 32>}, {pipeline_mode = #tpu.pipeline_mode<synchronous>, transform_indices = @transform_3, window_bounds = array<i64: 128, 32>}, {pipeline_mode = #tpu.pipeline_mode<synchronous>, transform_indices = @transform_4, window_bounds = array<i64: 18, 32, 32>}, {pipeline_mode = #tpu.pipeline_mode<synchronous>, transform_indices = @transform_5, window_bounds = array<i64: 9, 32, 32>}, {pipeline_mode = #tpu.pipeline_mode<synchronous>, transform_indices = @transform_6, window_bounds = array<i64: 4, 32>}, {transform_indices = @transform_7, window_bounds = array<i64: 1, 32, 256>}]} {
    %c0 = arith.constant 0 : index
    %c0_0 = arith.constant 0 : index
    %c0_1 = arith.constant 0 : index
    %c0_2 = arith.constant 0 : index
    %0 = vector.load %arg1[%c0, %c0_0, %c0_1, %c0_2] : memref<1x16x16x128xf32, #tpu.memory_space<vmem>>, vector<1x16x16x128xf32>
    %1 = vector.shape_cast %0 : vector<1x16x16x128xf32> to vector<16x16x128xf32>
    %2 = vector.shape_cast %1 : vector<16x16x128xf32> to vector<256x128xf32>
    %c0_3 = arith.constant 0 : index
    %c0_4 = arith.constant 0 : index
    %3 = vector.load %arg3[%c0_3, %c0_4] : memref<128x32xf32, #tpu.memory_space<vmem>>, vector<128x32xf32>
    %cst = arith.constant dense<0.000000e+00> : vector<256x32xf32>
    %4 = tpu.matmul %2, %3, %cst {dimension_numbers = #tpu.dot_dimension_numbers<[1], [0], [0], [1], [0, 0, 1, 1], [], []>} : vector<256x128xf32>, vector<128x32xf32>, vector<256x32xf32> -> vector<256x32xf32>
    %c0_5 = arith.constant 0 : index
    %c0_6 = arith.constant 0 : index
    %c0_7 = arith.constant 0 : index
    %c0_8 = arith.constant 0 : index
    %5 = vector.load %arg2[%c0_5, %c0_6, %c0_7, %c0_8] : memref<1x16x16x128xf32, #tpu.memory_space<vmem>>, vector<1x16x16x128xf32>
    %6 = vector.shape_cast %5 : vector<1x16x16x128xf32> to vector<16x16x128xf32>
    %7 = vector.shape_cast %6 : vector<16x16x128xf32> to vector<256x128xf32>
    %c0_9 = arith.constant 0 : index
    %c0_10 = arith.constant 0 : index
    %8 = vector.load %arg4[%c0_9, %c0_10] : memref<128x32xf32, #tpu.memory_space<vmem>>, vector<128x32xf32>
    %cst_11 = arith.constant dense<0.000000e+00> : vector<256x32xf32>
    %9 = tpu.matmul %7, %8, %cst_11 {dimension_numbers = #tpu.dot_dimension_numbers<[1], [0], [0], [1], [0, 0, 1, 1], [], []>} : vector<256x128xf32>, vector<128x32xf32>, vector<256x32xf32> -> vector<256x32xf32>
    %cst_12 = arith.constant 0.000000e+00 : f32
    %10 = vector.broadcast %cst_12 : f32 to vector<20x20x32xf32>
    %c0_13 = arith.constant 0 : index
    %c0_14 = arith.constant 0 : index
    %c0_15 = arith.constant 0 : index
    %11 = vector.load %arg9[%c0_13, %c0_14, %c0_15] : memref<20x20x32xf32, #tpu.memory_space<vmem>>, vector<20x20x32xf32>
    tpu.vector_store %arg9[%c0_13, %c0_14, %c0_15], %10 {strides = array<i32>} : memref<20x20x32xf32, #tpu.memory_space<vmem>>, vector<20x20x32xf32>,
    %12 = vector.shape_cast %4 : vector<256x32xf32> to vector<16x16x32xf32>
    %c2 = arith.constant 2 : index
    %c2_16 = arith.constant 2 : index
    %c0_17 = arith.constant 0 : index
    %13 = vector.load %arg9[%c2, %c2_16, %c0_17] : memref<20x20x32xf32, #tpu.memory_space<vmem>>, vector<16x16x32xf32>
    tpu.vector_store %arg9[%c2, %c2_16, %c0_17], %12 {strides = array<i32>} : memref<20x20x32xf32, #tpu.memory_space<vmem>>, vector<16x16x32xf32>,
    %cst_18 = arith.constant 0.000000e+00 : f32
    %14 = vector.broadcast %cst_18 : f32 to vector<256x32xf32>
    %c1 = arith.constant 1 : index
    %c1_19 = arith.constant 1 : index
    %c0_20 = arith.constant 0 : index
    %15 = vector.load %arg9[%c1, %c1_19, %c0_20] : memref<20x20x32xf32, #tpu.memory_space<vmem>>, vector<16x16x32xf32>
    %16 = vector.shape_cast %15 : vector<16x16x32xf32> to vector<256x32xf32>
    %c0_21 = arith.constant 0 : index
    %c0_22 = arith.constant 0 : index
    %c0_23 = arith.constant 0 : index
    %17 = vector.load %arg5[%c0_21, %c0_22, %c0_23] : memref<18x32x32xf32, #tpu.memory_space<vmem>>, vector<1x32x32xf32>
    %18 = vector.shape_cast %17 : vector<1x32x32xf32> to vector<32x32xf32>
    %cst_24 = arith.constant dense<0.000000e+00> : vector<256x32xf32>
    %19 = tpu.matmul %16, %18, %cst_24 {dimension_numbers = #tpu.dot_dimension_numbers<[1], [0], [0], [1], [0, 0, 1, 1], [], []>} : vector<256x32xf32>, vector<32x32xf32>, vector<256x32xf32> -> vector<256x32xf32>
    %20 = arith.addf %14, %19 : vector<256x32xf32>
    %c0_25 = arith.constant 0 : index
    %c0_26 = arith.constant 0 : index
    %c0_27 = arith.constant 0 : index
    %21 = vector.load %arg9[%c0_25, %c0_26, %c0_27] : memref<20x20x32xf32, #tpu.memory_space<vmem>>, vector<16x16x32xf32>
    %22 = vector.shape_cast %21 : vector<16x16x32xf32> to vector<256x32xf32>
    %c9 = arith.constant 9 : index
    %c0_28 = arith.constant 0 : index
    %c0_29 = arith.constant 0 : index
    %23 = vector.load %arg5[%c9, %c0_28, %c0_29] : memref<18x32x32xf32, #tpu.memory_space<vmem>>, vector<1x32x32xf32>
    %24 = vector.shape_cast %23 : vector<1x32x32xf32> to vector<32x32xf32>
    %cst_30 = arith.constant dense<0.000000e+00> : vector<256x32xf32>
    %25 = tpu.matmul %22, %24, %cst_30 {dimension_numbers = #tpu.dot_dimension_numbers<[1], [0], [0], [1], [0, 0, 1, 1], [], []>} : vector<256x32xf32>, vector<32x32xf32>, vector<256x32xf32> -> vector<256x32xf32>
    %26 = arith.addf %20, %25 : vector<256x32xf32>
    %c1_31 = arith.constant 1 : index
    %c2_32 = arith.constant 2 : index
    %c0_33 = arith.constant 0 : index
    %27 = vector.load %arg9[%c1_31, %c2_32, %c0_33] : memref<20x20x32xf32, #tpu.memory_space<vmem>>, vector<16x16x32xf32>
    %28 = vector.shape_cast %27 : vector<16x16x32xf32> to vector<256x32xf32>
    %c1_34 = arith.constant 1 : index
    %c0_35 = arith.constant 0 : index
    %c0_36 = arith.constant 0 : index
    %29 = vector.load %arg5[%c1_34, %c0_35, %c0_36] : memref<18x32x32xf32, #tpu.memory_space<vmem>>, vector<1x32x32xf32>
    %30 = vector.shape_cast %29 : vector<1x32x32xf32> to vector<32x32xf32>
    %cst_37 = arith.constant dense<0.000000e+00> : vector<256x32xf32>
    %31 = tpu.matmul %28, %30, %cst_37 {dimension_numbers = #tpu.dot_dimension_numbers<[1], [0], [0], [1], [0, 0, 1, 1], [], []>} : vector<256x32xf32>, vector<32x32xf32>, vector<256x32xf32> -> vector<256x32xf32>
    %32 = arith.addf %26, %31 : vector<256x32xf32>
    %c0_38 = arith.constant 0 : index
    %c2_39 = arith.constant 2 : index
    %c0_40 = arith.constant 0 : index
    %33 = vector.load %arg9[%c0_38, %c2_39, %c0_40] : memref<20x20x32xf32, #tpu.memory_space<vmem>>, vector<16x16x32xf32>
    %34 = vector.shape_cast %33 : vector<16x16x32xf32> to vector<256x32xf32>
    %c10 = arith.constant 10 : index
    %c0_41 = arith.constant 0 : index
    %c0_42 = arith.constant 0 : index
    %35 = vector.load %arg5[%c10, %c0_41, %c0_42] : memref<18x32x32xf32, #tpu.memory_space<vmem>>, vector<1x32x32xf32>
    %36 = vector.shape_cast %35 : vector<1x32x32xf32> to vector<32x32xf32>
    %cst_43 = arith.constant dense<0.000000e+00> : vector<256x32xf32>
    %37 = tpu.matmul %34, %36, %cst_43 {dimension_numbers = #tpu.dot_dimension_numbers<[1], [0], [0], [1], [0, 0, 1, 1], [], []>} : vector<256x32xf32>, vector<32x32xf32>, vector<256x32xf32> -> vector<256x32xf32>
    %38 = arith.addf %32, %37 : vector<256x32xf32>
    %c1_44 = arith.constant 1 : index
    %c3 = arith.constant 3 : index
    %c0_45 = arith.constant 0 : index
    %39 = vector.load %arg9[%c1_44, %c3, %c0_45] : memref<20x20x32xf32, #tpu.memory_space<vmem>>, vector<16x16x32xf32>
    %40 = vector.shape_cast %39 : vector<16x16x32xf32> to vector<256x32xf32>
    %c2_46 = arith.constant 2 : index
    %c0_47 = arith.constant 0 : index
    %c0_48 = arith.constant 0 : index
    %41 = vector.load %arg5[%c2_46, %c0_47, %c0_48] : memref<18x32x32xf32, #tpu.memory_space<vmem>>, vector<1x32x32xf32>
    %42 = vector.shape_cast %41 : vector<1x32x32xf32> to vector<32x32xf32>
    %cst_49 = arith.constant dense<0.000000e+00> : vector<256x32xf32>
    %43 = tpu.matmul %40, %42, %cst_49 {dimension_numbers = #tpu.dot_dimension_numbers<[1], [0], [0], [1], [0, 0, 1, 1], [], []>} : vector<256x32xf32>, vector<32x32xf32>, vector<256x32xf32> -> vector<256x32xf32>
    %44 = arith.addf %38, %43 : vector<256x32xf32>
    %c0_50 = arith.constant 0 : index
    %c4 = arith.constant 4 : index
    %c0_51 = arith.constant 0 : index
    %45 = vector.load %arg9[%c0_50, %c4, %c0_51] : memref<20x20x32xf32, #tpu.memory_space<vmem>>, vector<16x16x32xf32>
    %46 = vector.shape_cast %45 : vector<16x16x32xf32> to vector<256x32xf32>
    %c11 = arith.constant 11 : index
    %c0_52 = arith.constant 0 : index
    %c0_53 = arith.constant 0 : index
    %47 = vector.load %arg5[%c11, %c0_52, %c0_53] : memref<18x32x32xf32, #tpu.memory_space<vmem>>, vector<1x32x32xf32>
    %48 = vector.shape_cast %47 : vector<1x32x32xf32> to vector<32x32xf32>
    %cst_54 = arith.constant dense<0.000000e+00> : vector<256x32xf32>
    %49 = tpu.matmul %46, %48, %cst_54 {dimension_numbers = #tpu.dot_dimension_numbers<[1], [0], [0], [1], [0, 0, 1, 1], [], []>} : vector<256x32xf32>, vector<32x32xf32>, vector<256x32xf32> -> vector<256x32xf32>
    %50 = arith.addf %44, %49 : vector<256x32xf32>
    %c2_55 = arith.constant 2 : index
    %c1_56 = arith.constant 1 : index
    %c0_57 = arith.constant 0 : index
    %51 = vector.load %arg9[%c2_55, %c1_56, %c0_57] : memref<20x20x32xf32, #tpu.memory_space<vmem>>, vector<16x16x32xf32>
    %52 = vector.shape_cast %51 : vector<16x16x32xf32> to vector<256x32xf32>
    %c3_58 = arith.constant 3 : index
    %c0_59 = arith.constant 0 : index
    %c0_60 = arith.constant 0 : index
    %53 = vector.load %arg5[%c3_58, %c0_59, %c0_60] : memref<18x32x32xf32, #tpu.memory_space<vmem>>, vector<1x32x32xf32>
    %54 = vector.shape_cast %53 : vector<1x32x32xf32> to vector<32x32xf32>
    %cst_61 = arith.constant dense<0.000000e+00> : vector<256x32xf32>
    %55 = tpu.matmul %52, %54, %cst_61 {dimension_numbers = #tpu.dot_dimension_numbers<[1], [0], [0], [1], [0, 0, 1, 1], [], []>} : vector<256x32xf32>, vector<32x32xf32>, vector<256x32xf32> -> vector<256x32xf32>
    %56 = arith.addf %50, %55 : vector<256x32xf32>
    %c2_62 = arith.constant 2 : index
    %c0_63 = arith.constant 0 : index
    %c0_64 = arith.constant 0 : index
    %57 = vector.load %arg9[%c2_62, %c0_63, %c0_64] : memref<20x20x32xf32, #tpu.memory_space<vmem>>, vector<16x16x32xf32>
    %58 = vector.shape_cast %57 : vector<16x16x32xf32> to vector<256x32xf32>
    %c12 = arith.constant 12 : index
    %c0_65 = arith.constant 0 : index
    %c0_66 = arith.constant 0 : index
    %59 = vector.load %arg5[%c12, %c0_65, %c0_66] : memref<18x32x32xf32, #tpu.memory_space<vmem>>, vector<1x32x32xf32>
    %60 = vector.shape_cast %59 : vector<1x32x32xf32> to vector<32x32xf32>
    %cst_67 = arith.constant dense<0.000000e+00> : vector<256x32xf32>
    %61 = tpu.matmul %58, %60, %cst_67 {dimension_numbers = #tpu.dot_dimension_numbers<[1], [0], [0], [1], [0, 0, 1, 1], [], []>} : vector<256x32xf32>, vector<32x32xf32>, vector<256x32xf32> -> vector<256x32xf32>
    %62 = arith.addf %56, %61 : vector<256x32xf32>
    %c2_68 = arith.constant 2 : index
    %c2_69 = arith.constant 2 : index
    %c0_70 = arith.constant 0 : index
    %63 = vector.load %arg9[%c2_68, %c2_69, %c0_70] : memref<20x20x32xf32, #tpu.memory_space<vmem>>, vector<16x16x32xf32>
    %64 = vector.shape_cast %63 : vector<16x16x32xf32> to vector<256x32xf32>
    %c4_71 = arith.constant 4 : index
    %c0_72 = arith.constant 0 : index
    %c0_73 = arith.constant 0 : index
    %65 = vector.load %arg5[%c4_71, %c0_72, %c0_73] : memref<18x32x32xf32, #tpu.memory_space<vmem>>, vector<1x32x32xf32>
    %66 = vector.shape_cast %65 : vector<1x32x32xf32> to vector<32x32xf32>
    %cst_74 = arith.constant dense<0.000000e+00> : vector<256x32xf32>
    %67 = tpu.matmul %64, %66, %cst_74 {dimension_numbers = #tpu.dot_dimension_numbers<[1], [0], [0], [1], [0, 0, 1, 1], [], []>} : vector<256x32xf32>, vector<32x32xf32>, vector<256x32xf32> -> vector<256x32xf32>
    %68 = arith.addf %62, %67 : vector<256x32xf32>
    %c2_75 = arith.constant 2 : index
    %c2_76 = arith.constant 2 : index
    %c0_77 = arith.constant 0 : index
    %69 = vector.load %arg9[%c2_75, %c2_76, %c0_77] : memref<20x20x32xf32, #tpu.memory_space<vmem>>, vector<16x16x32xf32>
    %70 = vector.shape_cast %69 : vector<16x16x32xf32> to vector<256x32xf32>
    %c13 = arith.constant 13 : index
    %c0_78 = arith.constant 0 : index
    %c0_79 = arith.constant 0 : index
    %71 = vector.load %arg5[%c13, %c0_78, %c0_79] : memref<18x32x32xf32, #tpu.memory_space<vmem>>, vector<1x32x32xf32>
    %72 = vector.shape_cast %71 : vector<1x32x32xf32> to vector<32x32xf32>
    %cst_80 = arith.constant dense<0.000000e+00> : vector<256x32xf32>
    %73 = tpu.matmul %70, %72, %cst_80 {dimension_numbers = #tpu.dot_dimension_numbers<[1], [0], [0], [1], [0, 0, 1, 1], [], []>} : vector<256x32xf32>, vector<32x32xf32>, vector<256x32xf32> -> vector<256x32xf32>
    %74 = arith.addf %68, %73 : vector<256x32xf32>
    %c2_81 = arith.constant 2 : index
    %c3_82 = arith.constant 3 : index
    %c0_83 = arith.constant 0 : index
    %75 = vector.load %arg9[%c2_81, %c3_82, %c0_83] : memref<20x20x32xf32, #tpu.memory_space<vmem>>, vector<16x16x32xf32>
    %76 = vector.shape_cast %75 : vector<16x16x32xf32> to vector<256x32xf32>
    %c5 = arith.constant 5 : index
    %c0_84 = arith.constant 0 : index
    %c0_85 = arith.constant 0 : index
    %77 = vector.load %arg5[%c5, %c0_84, %c0_85] : memref<18x32x32xf32, #tpu.memory_space<vmem>>, vector<1x32x32xf32>
    %78 = vector.shape_cast %77 : vector<1x32x32xf32> to vector<32x32xf32>
    %cst_86 = arith.constant dense<0.000000e+00> : vector<256x32xf32>
    %79 = tpu.matmul %76, %78, %cst_86 {dimension_numbers = #tpu.dot_dimension_numbers<[1], [0], [0], [1], [0, 0, 1, 1], [], []>} : vector<256x32xf32>, vector<32x32xf32>, vector<256x32xf32> -> vector<256x32xf32>
    %80 = arith.addf %74, %79 : vector<256x32xf32>
    %c2_87 = arith.constant 2 : index
    %c4_88 = arith.constant 4 : index
    %c0_89 = arith.constant 0 : index
    %81 = vector.load %arg9[%c2_87, %c4_88, %c0_89] : memref<20x20x32xf32, #tpu.memory_space<vmem>>, vector<16x16x32xf32>
    %82 = vector.shape_cast %81 : vector<16x16x32xf32> to vector<256x32xf32>
    %c14 = arith.constant 14 : index
    %c0_90 = arith.constant 0 : index
    %c0_91 = arith.constant 0 : index
    %83 = vector.load %arg5[%c14, %c0_90, %c0_91] : memref<18x32x32xf32, #tpu.memory_space<vmem>>, vector<1x32x32xf32>
    %84 = vector.shape_cast %83 : vector<1x32x32xf32> to vector<32x32xf32>
    %cst_92 = arith.constant dense<0.000000e+00> : vector<256x32xf32>
    %85 = tpu.matmul %82, %84, %cst_92 {dimension_numbers = #tpu.dot_dimension_numbers<[1], [0], [0], [1], [0, 0, 1, 1], [], []>} : vector<256x32xf32>, vector<32x32xf32>, vector<256x32xf32> -> vector<256x32xf32>
    %86 = arith.addf %80, %85 : vector<256x32xf32>
    %c3_93 = arith.constant 3 : index
    %c1_94 = arith.constant 1 : index
    %c0_95 = arith.constant 0 : index
    %87 = vector.load %arg9[%c3_93, %c1_94, %c0_95] : memref<20x20x32xf32, #tpu.memory_space<vmem>>, vector<16x16x32xf32>
    %88 = vector.shape_cast %87 : vector<16x16x32xf32> to vector<256x32xf32>
    %c6 = arith.constant 6 : index
    %c0_96 = arith.constant 0 : index
    %c0_97 = arith.constant 0 : index
    %89 = vector.load %arg5[%c6, %c0_96, %c0_97] : memref<18x32x32xf32, #tpu.memory_space<vmem>>, vector<1x32x32xf32>
    %90 = vector.shape_cast %89 : vector<1x32x32xf32> to vector<32x32xf32>
    %cst_98 = arith.constant dense<0.000000e+00> : vector<256x32xf32>
    %91 = tpu.matmul %88, %90, %cst_98 {dimension_numbers = #tpu.dot_dimension_numbers<[1], [0], [0], [1], [0, 0, 1, 1], [], []>} : vector<256x32xf32>, vector<32x32xf32>, vector<256x32xf32> -> vector<256x32xf32>
    %92 = arith.addf %86, %91 : vector<256x32xf32>
    %c4_99 = arith.constant 4 : index
    %c0_100 = arith.constant 0 : index
    %c0_101 = arith.constant 0 : index
    %93 = vector.load %arg9[%c4_99, %c0_100, %c0_101] : memref<20x20x32xf32, #tpu.memory_space<vmem>>, vector<16x16x32xf32>
    %94 = vector.shape_cast %93 : vector<16x16x32xf32> to vector<256x32xf32>
    %c15 = arith.constant 15 : index
    %c0_102 = arith.constant 0 : index
    %c0_103 = arith.constant 0 : index
    %95 = vector.load %arg5[%c15, %c0_102, %c0_103] : memref<18x32x32xf32, #tpu.memory_space<vmem>>, vector<1x32x32xf32>
    %96 = vector.shape_cast %95 : vector<1x32x32xf32> to vector<32x32xf32>
    %cst_104 = arith.constant dense<0.000000e+00> : vector<256x32xf32>
    %97 = tpu.matmul %94, %96, %cst_104 {dimension_numbers = #tpu.dot_dimension_numbers<[1], [0], [0], [1], [0, 0, 1, 1], [], []>} : vector<256x32xf32>, vector<32x32xf32>, vector<256x32xf32> -> vector<256x32xf32>
    %98 = arith.addf %92, %97 : vector<256x32xf32>
    %c3_105 = arith.constant 3 : index
    %c2_106 = arith.constant 2 : index
    %c0_107 = arith.constant 0 : index
    %99 = vector.load %arg9[%c3_105, %c2_106, %c0_107] : memref<20x20x32xf32, #tpu.memory_space<vmem>>, vector<16x16x32xf32>
    %100 = vector.shape_cast %99 : vector<16x16x32xf32> to vector<256x32xf32>
    %c7 = arith.constant 7 : index
    %c0_108 = arith.constant 0 : index
    %c0_109 = arith.constant 0 : index
    %101 = vector.load %arg5[%c7, %c0_108, %c0_109] : memref<18x32x32xf32, #tpu.memory_space<vmem>>, vector<1x32x32xf32>
    %102 = vector.shape_cast %101 : vector<1x32x32xf32> to vector<32x32xf32>
    %cst_110 = arith.constant dense<0.000000e+00> : vector<256x32xf32>
    %103 = tpu.matmul %100, %102, %cst_110 {dimension_numbers = #tpu.dot_dimension_numbers<[1], [0], [0], [1], [0, 0, 1, 1], [], []>} : vector<256x32xf32>, vector<32x32xf32>, vector<256x32xf32> -> vector<256x32xf32>
    %104 = arith.addf %98, %103 : vector<256x32xf32>
    %c4_111 = arith.constant 4 : index
    %c2_112 = arith.constant 2 : index
    %c0_113 = arith.constant 0 : index
    %105 = vector.load %arg9[%c4_111, %c2_112, %c0_113] : memref<20x20x32xf32, #tpu.memory_space<vmem>>, vector<16x16x32xf32>
    %106 = vector.shape_cast %105 : vector<16x16x32xf32> to vector<256x32xf32>
    %c16 = arith.constant 16 : index
    %c0_114 = arith.constant 0 : index
    %c0_115 = arith.constant 0 : index
    %107 = vector.load %arg5[%c16, %c0_114, %c0_115] : memref<18x32x32xf32, #tpu.memory_space<vmem>>, vector<1x32x32xf32>
    %108 = vector.shape_cast %107 : vector<1x32x32xf32> to vector<32x32xf32>
    %cst_116 = arith.constant dense<0.000000e+00> : vector<256x32xf32>
    %109 = tpu.matmul %106, %108, %cst_116 {dimension_numbers = #tpu.dot_dimension_numbers<[1], [0], [0], [1], [0, 0, 1, 1], [], []>} : vector<256x32xf32>, vector<32x32xf32>, vector<256x32xf32> -> vector<256x32xf32>
    %110 = arith.addf %104, %109 : vector<256x32xf32>
    %c3_117 = arith.constant 3 : index
    %c3_118 = arith.constant 3 : index
    %c0_119 = arith.constant 0 : index
    %111 = vector.load %arg9[%c3_117, %c3_118, %c0_119] : memref<20x20x32xf32, #tpu.memory_space<vmem>>, vector<16x16x32xf32>
    %112 = vector.shape_cast %111 : vector<16x16x32xf32> to vector<256x32xf32>
    %c8 = arith.constant 8 : index
    %c0_120 = arith.constant 0 : index
    %c0_121 = arith.constant 0 : index
    %113 = vector.load %arg5[%c8, %c0_120, %c0_121] : memref<18x32x32xf32, #tpu.memory_space<vmem>>, vector<1x32x32xf32>
    %114 = vector.shape_cast %113 : vector<1x32x32xf32> to vector<32x32xf32>
    %cst_122 = arith.constant dense<0.000000e+00> : vector<256x32xf32>
    %115 = tpu.matmul %112, %114, %cst_122 {dimension_numbers = #tpu.dot_dimension_numbers<[1], [0], [0], [1], [0, 0, 1, 1], [], []>} : vector<256x32xf32>, vector<32x32xf32>, vector<256x32xf32> -> vector<256x32xf32>
    %116 = arith.addf %110, %115 : vector<256x32xf32>
    %c4_123 = arith.constant 4 : index
    %c4_124 = arith.constant 4 : index
    %c0_125 = arith.constant 0 : index
    %117 = vector.load %arg9[%c4_123, %c4_124, %c0_125] : memref<20x20x32xf32, #tpu.memory_space<vmem>>, vector<16x16x32xf32>
    %118 = vector.shape_cast %117 : vector<16x16x32xf32> to vector<256x32xf32>
    %c17 = arith.constant 17 : index
    %c0_126 = arith.constant 0 : index
    %c0_127 = arith.constant 0 : index
    %119 = vector.load %arg5[%c17, %c0_126, %c0_127] : memref<18x32x32xf32, #tpu.memory_space<vmem>>, vector<1x32x32xf32>
    %120 = vector.shape_cast %119 : vector<1x32x32xf32> to vector<32x32xf32>
    %cst_128 = arith.constant dense<0.000000e+00> : vector<256x32xf32>
    %121 = tpu.matmul %118, %120, %cst_128 {dimension_numbers = #tpu.dot_dimension_numbers<[1], [0], [0], [1], [0, 0, 1, 1], [], []>} : vector<256x32xf32>, vector<32x32xf32>, vector<256x32xf32> -> vector<256x32xf32>
    %122 = arith.addf %116, %121 : vector<256x32xf32>
    %c0_129 = arith.constant 0 : index
    %c0_130 = arith.constant 0 : index
    %123 = vector.load %arg7[%c0_129, %c0_130] : memref<4x32xf32, #tpu.memory_space<vmem>>, vector<4x32xf32>
    %124 = arith.addf %122, %9 : vector<256x32xf32>
    %125 = vector.extract_strided_slice %123 {offsets = [0, 0], sizes = [1, 32], strides = [1, 1]} : vector<4x32xf32> to vector<1x32xf32>
    %126 = vector.broadcast %125 : vector<1x32xf32> to vector<256x32xf32>
    %127 = arith.addf %124, %126 : vector<256x32xf32>
    %cst_131 = arith.constant 0.000000e+00 : f32
    %128 = vector.broadcast %cst_131 : f32 to vector<256x32xf32>
    %129 = arith.cmpf ogt, %127, %128 : vector<256x32xf32>
    %130 = vector.extract_strided_slice %123 {offsets = [1, 0], sizes = [1, 32], strides = [1, 1]} : vector<4x32xf32> to vector<1x32xf32>
    %131 = vector.broadcast %130 : vector<1x32xf32> to vector<256x32xf32>
    %132 = arith.mulf %131, %127 : vector<256x32xf32>
    %133 = arith.select %129, %127, %132 : vector<256x32xi1>, vector<256x32xf32>
    %cst_132 = arith.constant 0.000000e+00 : f32
    %134 = vector.broadcast %cst_132 : f32 to vector<18x18x32xf32>
    %c0_133 = arith.constant 0 : index
    %c0_134 = arith.constant 0 : index
    %c0_135 = arith.constant 0 : index
    %135 = vector.load %arg10[%c0_133, %c0_134, %c0_135] : memref<18x18x32xf32, #tpu.memory_space<vmem>>, vector<18x18x32xf32>
    tpu.vector_store %arg10[%c0_133, %c0_134, %c0_135], %134 {strides = array<i32>} : memref<18x18x32xf32, #tpu.memory_space<vmem>>, vector<18x18x32xf32>,
    %136 = vector.shape_cast %133 : vector<256x32xf32> to vector<16x16x32xf32>
    %c1_136 = arith.constant 1 : index
    %c1_137 = arith.constant 1 : index
    %c0_138 = arith.constant 0 : index
    %137 = vector.load %arg10[%c1_136, %c1_137, %c0_138] : memref<18x18x32xf32, #tpu.memory_space<vmem>>, vector<16x16x32xf32>
    tpu.vector_store %arg10[%c1_136, %c1_137, %c0_138], %136 {strides = array<i32>} : memref<18x18x32xf32, #tpu.memory_space<vmem>>, vector<16x16x32xf32>,
    %cst_139 = arith.constant 0.000000e+00 : f32
    %138 = vector.broadcast %cst_139 : f32 to vector<256x32xf32>
    %c0_140 = arith.constant 0 : index
    %c0_141 = arith.constant 0 : index
    %c0_142 = arith.constant 0 : index
    %139 = vector.load %arg10[%c0_140, %c0_141, %c0_142] : memref<18x18x32xf32, #tpu.memory_space<vmem>>, vector<16x16x32xf32>
    %140 = vector.shape_cast %139 : vector<16x16x32xf32> to vector<256x32xf32>
    %c0_143 = arith.constant 0 : index
    %c0_144 = arith.constant 0 : index
    %c0_145 = arith.constant 0 : index
    %141 = vector.load %arg6[%c0_143, %c0_144, %c0_145] : memref<9x32x32xf32, #tpu.memory_space<vmem>>, vector<1x32x32xf32>
    %142 = vector.shape_cast %141 : vector<1x32x32xf32> to vector<32x32xf32>
    %cst_146 = arith.constant dense<0.000000e+00> : vector<256x32xf32>
    %143 = tpu.matmul %140, %142, %cst_146 {dimension_numbers = #tpu.dot_dimension_numbers<[1], [0], [0], [1], [0, 0, 1, 1], [], []>} : vector<256x32xf32>, vector<32x32xf32>, vector<256x32xf32> -> vector<256x32xf32>
    %144 = arith.addf %138, %143 : vector<256x32xf32>
    %c0_147 = arith.constant 0 : index
    %c1_148 = arith.constant 1 : index
    %c0_149 = arith.constant 0 : index
    %145 = vector.load %arg10[%c0_147, %c1_148, %c0_149] : memref<18x18x32xf32, #tpu.memory_space<vmem>>, vector<16x16x32xf32>
    %146 = vector.shape_cast %145 : vector<16x16x32xf32> to vector<256x32xf32>
    %c1_150 = arith.constant 1 : index
    %c0_151 = arith.constant 0 : index
    %c0_152 = arith.constant 0 : index
    %147 = vector.load %arg6[%c1_150, %c0_151, %c0_152] : memref<9x32x32xf32, #tpu.memory_space<vmem>>, vector<1x32x32xf32>
    %148 = vector.shape_cast %147 : vector<1x32x32xf32> to vector<32x32xf32>
    %cst_153 = arith.constant dense<0.000000e+00> : vector<256x32xf32>
    %149 = tpu.matmul %146, %148, %cst_153 {dimension_numbers = #tpu.dot_dimension_numbers<[1], [0], [0], [1], [0, 0, 1, 1], [], []>} : vector<256x32xf32>, vector<32x32xf32>, vector<256x32xf32> -> vector<256x32xf32>
    %150 = arith.addf %144, %149 : vector<256x32xf32>
    %c0_154 = arith.constant 0 : index
    %c2_155 = arith.constant 2 : index
    %c0_156 = arith.constant 0 : index
    %151 = vector.load %arg10[%c0_154, %c2_155, %c0_156] : memref<18x18x32xf32, #tpu.memory_space<vmem>>, vector<16x16x32xf32>
    %152 = vector.shape_cast %151 : vector<16x16x32xf32> to vector<256x32xf32>
    %c2_157 = arith.constant 2 : index
    %c0_158 = arith.constant 0 : index
    %c0_159 = arith.constant 0 : index
    %153 = vector.load %arg6[%c2_157, %c0_158, %c0_159] : memref<9x32x32xf32, #tpu.memory_space<vmem>>, vector<1x32x32xf32>
    %154 = vector.shape_cast %153 : vector<1x32x32xf32> to vector<32x32xf32>
    %cst_160 = arith.constant dense<0.000000e+00> : vector<256x32xf32>
    %155 = tpu.matmul %152, %154, %cst_160 {dimension_numbers = #tpu.dot_dimension_numbers<[1], [0], [0], [1], [0, 0, 1, 1], [], []>} : vector<256x32xf32>, vector<32x32xf32>, vector<256x32xf32> -> vector<256x32xf32>
    %156 = arith.addf %150, %155 : vector<256x32xf32>
    %c1_161 = arith.constant 1 : index
    %c0_162 = arith.constant 0 : index
    %c0_163 = arith.constant 0 : index
    %157 = vector.load %arg10[%c1_161, %c0_162, %c0_163] : memref<18x18x32xf32, #tpu.memory_space<vmem>>, vector<16x16x32xf32>
    %158 = vector.shape_cast %157 : vector<16x16x32xf32> to vector<256x32xf32>
    %c3_164 = arith.constant 3 : index
    %c0_165 = arith.constant 0 : index
    %c0_166 = arith.constant 0 : index
    %159 = vector.load %arg6[%c3_164, %c0_165, %c0_166] : memref<9x32x32xf32, #tpu.memory_space<vmem>>, vector<1x32x32xf32>
    %160 = vector.shape_cast %159 : vector<1x32x32xf32> to vector<32x32xf32>
    %cst_167 = arith.constant dense<0.000000e+00> : vector<256x32xf32>
    %161 = tpu.matmul %158, %160, %cst_167 {dimension_numbers = #tpu.dot_dimension_numbers<[1], [0], [0], [1], [0, 0, 1, 1], [], []>} : vector<256x32xf32>, vector<32x32xf32>, vector<256x32xf32> -> vector<256x32xf32>
    %162 = arith.addf %156, %161 : vector<256x32xf32>
    %c1_168 = arith.constant 1 : index
    %c1_169 = arith.constant 1 : index
    %c0_170 = arith.constant 0 : index
    %163 = vector.load %arg10[%c1_168, %c1_169, %c0_170] : memref<18x18x32xf32, #tpu.memory_space<vmem>>, vector<16x16x32xf32>
    %164 = vector.shape_cast %163 : vector<16x16x32xf32> to vector<256x32xf32>
    %c4_171 = arith.constant 4 : index
    %c0_172 = arith.constant 0 : index
    %c0_173 = arith.constant 0 : index
    %165 = vector.load %arg6[%c4_171, %c0_172, %c0_173] : memref<9x32x32xf32, #tpu.memory_space<vmem>>, vector<1x32x32xf32>
    %166 = vector.shape_cast %165 : vector<1x32x32xf32> to vector<32x32xf32>
    %cst_174 = arith.constant dense<0.000000e+00> : vector<256x32xf32>
    %167 = tpu.matmul %164, %166, %cst_174 {dimension_numbers = #tpu.dot_dimension_numbers<[1], [0], [0], [1], [0, 0, 1, 1], [], []>} : vector<256x32xf32>, vector<32x32xf32>, vector<256x32xf32> -> vector<256x32xf32>
    %168 = arith.addf %162, %167 : vector<256x32xf32>
    %c1_175 = arith.constant 1 : index
    %c2_176 = arith.constant 2 : index
    %c0_177 = arith.constant 0 : index
    %169 = vector.load %arg10[%c1_175, %c2_176, %c0_177] : memref<18x18x32xf32, #tpu.memory_space<vmem>>, vector<16x16x32xf32>
    %170 = vector.shape_cast %169 : vector<16x16x32xf32> to vector<256x32xf32>
    %c5_178 = arith.constant 5 : index
    %c0_179 = arith.constant 0 : index
    %c0_180 = arith.constant 0 : index
    %171 = vector.load %arg6[%c5_178, %c0_179, %c0_180] : memref<9x32x32xf32, #tpu.memory_space<vmem>>, vector<1x32x32xf32>
    %172 = vector.shape_cast %171 : vector<1x32x32xf32> to vector<32x32xf32>
    %cst_181 = arith.constant dense<0.000000e+00> : vector<256x32xf32>
    %173 = tpu.matmul %170, %172, %cst_181 {dimension_numbers = #tpu.dot_dimension_numbers<[1], [0], [0], [1], [0, 0, 1, 1], [], []>} : vector<256x32xf32>, vector<32x32xf32>, vector<256x32xf32> -> vector<256x32xf32>
    %174 = arith.addf %168, %173 : vector<256x32xf32>
    %c2_182 = arith.constant 2 : index
    %c0_183 = arith.constant 0 : index
    %c0_184 = arith.constant 0 : index
    %175 = vector.load %arg10[%c2_182, %c0_183, %c0_184] : memref<18x18x32xf32, #tpu.memory_space<vmem>>, vector<16x16x32xf32>
    %176 = vector.shape_cast %175 : vector<16x16x32xf32> to vector<256x32xf32>
    %c6_185 = arith.constant 6 : index
    %c0_186 = arith.constant 0 : index
    %c0_187 = arith.constant 0 : index
    %177 = vector.load %arg6[%c6_185, %c0_186, %c0_187] : memref<9x32x32xf32, #tpu.memory_space<vmem>>, vector<1x32x32xf32>
    %178 = vector.shape_cast %177 : vector<1x32x32xf32> to vector<32x32xf32>
    %cst_188 = arith.constant dense<0.000000e+00> : vector<256x32xf32>
    %179 = tpu.matmul %176, %178, %cst_188 {dimension_numbers = #tpu.dot_dimension_numbers<[1], [0], [0], [1], [0, 0, 1, 1], [], []>} : vector<256x32xf32>, vector<32x32xf32>, vector<256x32xf32> -> vector<256x32xf32>
    %180 = arith.addf %174, %179 : vector<256x32xf32>
    %c2_189 = arith.constant 2 : index
    %c1_190 = arith.constant 1 : index
    %c0_191 = arith.constant 0 : index
    %181 = vector.load %arg10[%c2_189, %c1_190, %c0_191] : memref<18x18x32xf32, #tpu.memory_space<vmem>>, vector<16x16x32xf32>
    %182 = vector.shape_cast %181 : vector<16x16x32xf32> to vector<256x32xf32>
    %c7_192 = arith.constant 7 : index
    %c0_193 = arith.constant 0 : index
    %c0_194 = arith.constant 0 : index
    %183 = vector.load %arg6[%c7_192, %c0_193, %c0_194] : memref<9x32x32xf32, #tpu.memory_space<vmem>>, vector<1x32x32xf32>
    %184 = vector.shape_cast %183 : vector<1x32x32xf32> to vector<32x32xf32>
    %cst_195 = arith.constant dense<0.000000e+00> : vector<256x32xf32>
    %185 = tpu.matmul %182, %184, %cst_195 {dimension_numbers = #tpu.dot_dimension_numbers<[1], [0], [0], [1], [0, 0, 1, 1], [], []>} : vector<256x32xf32>, vector<32x32xf32>, vector<256x32xf32> -> vector<256x32xf32>
    %186 = arith.addf %180, %185 : vector<256x32xf32>
    %c2_196 = arith.constant 2 : index
    %c2_197 = arith.constant 2 : index
    %c0_198 = arith.constant 0 : index
    %187 = vector.load %arg10[%c2_196, %c2_197, %c0_198] : memref<18x18x32xf32, #tpu.memory_space<vmem>>, vector<16x16x32xf32>
    %188 = vector.shape_cast %187 : vector<16x16x32xf32> to vector<256x32xf32>
    %c8_199 = arith.constant 8 : index
    %c0_200 = arith.constant 0 : index
    %c0_201 = arith.constant 0 : index
    %189 = vector.load %arg6[%c8_199, %c0_200, %c0_201] : memref<9x32x32xf32, #tpu.memory_space<vmem>>, vector<1x32x32xf32>
    %190 = vector.shape_cast %189 : vector<1x32x32xf32> to vector<32x32xf32>
    %cst_202 = arith.constant dense<0.000000e+00> : vector<256x32xf32>
    %191 = tpu.matmul %188, %190, %cst_202 {dimension_numbers = #tpu.dot_dimension_numbers<[1], [0], [0], [1], [0, 0, 1, 1], [], []>} : vector<256x32xf32>, vector<32x32xf32>, vector<256x32xf32> -> vector<256x32xf32>
    %192 = arith.addf %186, %191 : vector<256x32xf32>
    %193 = vector.extract_strided_slice %123 {offsets = [2, 0], sizes = [1, 32], strides = [1, 1]} : vector<4x32xf32> to vector<1x32xf32>
    %194 = vector.broadcast %193 : vector<1x32xf32> to vector<256x32xf32>
    %195 = arith.addf %192, %194 : vector<256x32xf32>
    %cst_203 = arith.constant 0.000000e+00 : f32
    %196 = vector.broadcast %cst_203 : f32 to vector<256x32xf32>
    %197 = arith.cmpf ogt, %195, %196 : vector<256x32xf32>
    %198 = vector.extract_strided_slice %123 {offsets = [3, 0], sizes = [1, 32], strides = [1, 1]} : vector<4x32xf32> to vector<1x32xf32>
    %199 = vector.broadcast %198 : vector<1x32xf32> to vector<256x32xf32>
    %200 = arith.mulf %199, %195 : vector<256x32xf32>
    %201 = arith.select %197, %195, %200 : vector<256x32xi1>, vector<256x32xf32>
    %202 = tpu.transpose %201, [1, 0] : vector<256x32xf32> -> vector<32x256xf32>
    %c0_204 = arith.constant 0 : index
    %c0_205 = arith.constant 0 : index
    %c0_206 = arith.constant 0 : index
    %203 = vector.load %arg8[%c0_204, %c0_205, %c0_206] : memref<1x32x256xf32, #tpu.memory_space<vmem>>, vector<1x32x256xf32>
    %204 = vector.shape_cast %203 : vector<1x32x256xf32> to vector<32x256xf32>
    %205 = vector.shape_cast %202 : vector<32x256xf32> to vector<1x32x256xf32>
    tpu.vector_store %arg8[%c0_204, %c0_205, %c0_206], %205 {strides = array<i32>} : memref<1x32x256xf32, #tpu.memory_space<vmem>>, vector<1x32x256xf32>,
    return
  }
  func.func @transform_0(%arg0: i32) -> (i32, i32, i32, i32) {
    %c0_i32 = arith.constant 0 : i32
    %c0_i32_0 = arith.constant 0 : i32
    %c0_i32_1 = arith.constant 0 : i32
    %c0_i32_2 = arith.constant 0 : i32
    return %arg0, %c0_i32, %c0_i32_0, %c0_i32_1 : i32, i32, i32, i32
  }
  func.func @transform_1(%arg0: i32) -> (i32, i32, i32, i32) {
    %c0_i32 = arith.constant 0 : i32
    %c0_i32_0 = arith.constant 0 : i32
    %c0_i32_1 = arith.constant 0 : i32
    %c0_i32_2 = arith.constant 0 : i32
    return %arg0, %c0_i32, %c0_i32_0, %c0_i32_1 : i32, i32, i32, i32
  }
  func.func @transform_2(%arg0: i32) -> (i32, i32) {
    %c0_i32 = arith.constant 0 : i32
    %c0_i32_0 = arith.constant 0 : i32
    %c0_i32_1 = arith.constant 0 : i32
    return %c0_i32, %c0_i32_0 : i32, i32
  }
  func.func @transform_3(%arg0: i32) -> (i32, i32) {
    %c0_i32 = arith.constant 0 : i32
    %c0_i32_0 = arith.constant 0 : i32
    %c0_i32_1 = arith.constant 0 : i32
    return %c0_i32, %c0_i32_0 : i32, i32
  }
  func.func @transform_4(%arg0: i32) -> (i32, i32, i32) {
    %c0_i32 = arith.constant 0 : i32
    %c0_i32_0 = arith.constant 0 : i32
    %c0_i32_1 = arith.constant 0 : i32
    %c0_i32_2 = arith.constant 0 : i32
    return %c0_i32, %c0_i32_0, %c0_i32_1 : i32, i32, i32
  }
  func.func @transform_5(%arg0: i32) -> (i32, i32, i32) {
    %c0_i32 = arith.constant 0 : i32
    %c0_i32_0 = arith.constant 0 : i32
    %c0_i32_1 = arith.constant 0 : i32
    %c0_i32_2 = arith.constant 0 : i32
    return %c0_i32, %c0_i32_0, %c0_i32_1 : i32, i32, i32
  }
  func.func @transform_6(%arg0: i32) -> (i32, i32) {
    %c0_i32 = arith.constant 0 : i32
    %c0_i32_0 = arith.constant 0 : i32
    %c0_i32_1 = arith.constant 0 : i32
    return %c0_i32, %c0_i32_0 : i32, i32
  }
  func.func @transform_7(%arg0: i32) -> (i32, i32, i32) {
    %c0_i32 = arith.constant 0 : i32
    %c0_i32_0 = arith.constant 0 : i32
    %c0_i32_1 = arith.constant 0 : i32
    return %arg0, %c0_i32, %c0_i32_0 : i32, i32, i32
  }
}

</mosaic_0001>

<llo_original>
// kernel: tpu_custom_call.1
$region0: #{tpu_custom_call.1}
  #allocation0 [shape = 'u32[]', space=smem, size = 0x4, offset = 0x4, fixed_abs, tag = 'smem constant byte address 0x4 - core index']
  #allocation1 [shape = 'u32[144,128]{1,0:T(1,128)}', space=vmem, size = 0x12000, scoped, tag = 'internal scratch']
  #allocation2 [shape = 'f32[20,20,32]{2,1,0:T(8,128)}', space=vmem, size = 0x3c000, scoped, tag = 'scratch operand']
  #allocation3 [shape = 'f32[18,18,32]{2,1,0:T(8,128)}', space=vmem, size = 0x36000, scoped, tag = 'scratch operand']
  %s0 = inlined_call_operand.hbm [shape: f32[2,16,16,128], index: 0, kind: input, shape index: {}]
  %s1 = inlined_call_operand.hbm [shape: f32[2,16,16,128], index: 1, kind: input, shape index: {}]
  %s2 = inlined_call_operand.vmem [shape: f32[128,32], index: 2, kind: input, shape index: {}]
  %s3 = inlined_call_operand.vmem [shape: f32[128,32], index: 3, kind: input, shape index: {}]
  %s4 = inlined_call_operand.hbm [shape: f32[18,32,32], index: 4, kind: input, shape index: {}]
  %s5 = inlined_call_operand.vmem [shape: f32[9,32,32], index: 5, kind: input, shape index: {}]
  %s6 = inlined_call_operand.vmem [shape: f32[4,32], index: 6, kind: input, shape index: {}]
  %s7 = inlined_call_operand.hbm [shape: f32[2,32,256], index: 7, kind: output, shape index: {}]
  %s8 = sld [smem:[#allocation0]]
  $region73: #{tpu_custom_call.1} parent=0
    _
  %s10 = ssub.s32 1, %s8
  %s11 = scalar_select 0, %s10, %s8
  $region1: #{tpu_custom_call.1} parent=0
    #allocation4 [shape = 'u8[262144]{0}', space=vmem, size = 0x40000, scoped, tag = 'input window, operand 0']
    #allocation5 [shape = 's32[2]{0}', space=sflag, size = 0x8, scoped, tag = 'scoped memory for tpu_custom_call.1']
    #allocation6 [shape = 's32[2]{0}', space=sflag, size = 0x8, scoped, tag = 'scoped memory for tpu_custom_call.1']
    #allocation7 [shape = 'u8[262144]{0}', space=vmem, size = 0x40000, scoped, tag = 'input window, operand 1']
    #allocation8 [shape = 's32[2]{0}', space=sflag, size = 0x8, scoped, tag = 'scoped memory for tpu_custom_call.1']
    #allocation9 [shape = 'u8[294912]{0}', space=vmem, size = 0x48000, scoped, tag = 'input window, operand 4, single buffered']
    #allocation10 [shape = 'u8[65536]{0}', space=vmem, size = 0x10000, scoped, tag = 'output window, operand 0']
    %12 = vsyncpa [#allocation5], 0
    %s13 = scalar_lea.sflag [#allocation5], 1
    %14 = vsyncpa %s13, 0
    %15 = vsyncpa [#allocation8], 0
    %s16 = scalar_lea.sflag [#allocation8], 1
    %17 = vsyncpa %s16, 0
    %18 = vsyncpa [#allocation6], 0
    %s19 = scalar_lea.sflag [#allocation6], 1
    %20 = vsyncpa %s19, 0
    loop: start=0, step=1, limit=4
    $region2: #{tpu_custom_call.1} parent=1 // loop_pre_header
      _
    $region3: #{tpu_custom_call.1} parent=1 // loop_header
      %s22 = sphi 0, %s26
      %p23 = scmp.ge.s32.totalorder %s22, 4
      %s32 = sphi 0, %s34
      %s35 = sphi 0, %s32
      %s36 = sphi 0, %s35
      %s52 = sphi 0, %s36
      %s58 = sphi 0, %s60
      %s61 = sphi 0, %s58
      %s62 = sphi 0, %s61
      %s78 = sphi 0, %s62
      %s82 = sphi 0, %s82
      %s84 = sphi 0, %s82
      %s85 = sphi 0, %s84
      %s99 = sphi 0, %s85
      %s103 = sphi 0, %s103
      %s105 = sphi 0, %s103
      %s106 = sphi 0, %s105
      %s120 = sphi 0, %s106
      %s124 = sphi 0, %s124
      %s126 = sphi 0, %s124
      %s127 = sphi 0, %s126
      %s141 = sphi 0, %s127
      %s145 = sphi 0, %s145
      %s147 = sphi 0, %s145
      %s148 = sphi 0, %s147
      %s162 = sphi 0, %s148
      %s166 = sphi 0, %s166
      %s168 = sphi 0, %s166
      %s169 = sphi 0, %s168
      %s183 = sphi 0, %s169
      %s189 = sphi 0, %s191
      %s192 = sphi 0, %s189
      %s193 = sphi 0, %s192
      %s209 = sphi 0, %s193
    $region4: #{tpu_custom_call.1} parent=1 // loop_header_branch
      %25 = sbr.rel (%p23) target = $region8
    $region5: #{tpu_custom_call.1} parent=1 // loop_body
      %s27 = ssub.s32 %s22, 1
      %s28 = ssub.s32 %s22, 2
      %s29 = sadd.s32 %s22, 1
      %s30 = ssub.s32 %s22, %s29
      %p31 = scmp.eq.s32.totalorder %s30, 0
      %s33 = sadd.s32 %s32, 1
      %s34 = scalar_select %p31, %s32, %s33
      %p37 = pneg %p31
      %p38 = scmp.eq.s32.totalorder %s22, 1
      %p39 = por %p37, %p38
      %p40 = scmp.ne.s32.totalorder %s32, %s35
      %p41 = scmp.eq.s32.totalorder %s22, 0
      %p42 = por %p40, %p41
      %p43 = scmp.ne.s32.totalorder %s32, %s35
      %p44 = scmp.eq.s32.totalorder %s27, 1
      %p45 = por %p43, %p44
      %p46 = scmp.ne.s32.totalorder %s35, %s36
      %p47 = scmp.eq.s32.totalorder %s27, 0
      %p48 = por %p46, %p47
      %p49 = scmp.ne.s32.totalorder %s35, %s36
      %p50 = scmp.eq.s32.totalorder %s28, 1
      %p51 = por %p49, %p50
      %p53 = scmp.ne.s32.totalorder %s36, %s52
      %p54 = scmp.eq.s32.totalorder %s28, 0
      %p55 = por %p53, %p54
      %s56 = ssub.s32 %s22, %s29
      %p57 = scmp.eq.s32.totalorder %s56, 0
      %s59 = sadd.s32 %s58, 1
      %s60 = scalar_select %p57, %s58, %s59
      %p63 = pneg %p57
      %p64 = scmp.eq.s32.totalorder %s22, 1
      %p65 = por %p63, %p64
      %p66 = scmp.ne.s32.totalorder %s58, %s61
      %p67 = scmp.eq.s32.totalorder %s22, 0
      %p68 = por %p66, %p67
      %p69 = scmp.ne.s32.totalorder %s58, %s61
      %p70 = scmp.eq.s32.totalorder %s27, 1
      %p71 = por %p69, %p70
      %p72 = scmp.ne.s32.totalorder %s61, %s62
      %p73 = scmp.eq.s32.totalorder %s27, 0
      %p74 = por %p72, %p73
      %p75 = scmp.ne.s32.totalorder %s61, %s62
      %p76 = scmp.eq.s32.totalorder %s28, 1
      %p77 = por %p75, %p76
      %p79 = scmp.ne.s32.totalorder %s62, %s78
      %p80 = scmp.eq.s32.totalorder %s28, 0
      %p81 = por %p79, %p80
      %s83 = sadd.s32 %s82, 1
      %p86 = scmp.eq.s32.totalorder %s22, 1
      %p87 = scmp.ne.s32.totalorder %s82, %s84
      %p88 = scmp.eq.s32.totalorder %s22, 0
      %p89 = por %p87, %p88
      %p90 = scmp.ne.s32.totalorder %s82, %s84
      %p91 = scmp.eq.s32.totalorder %s27, 1
      %p92 = por %p90, %p91
      %p93 = scmp.ne.s32.totalorder %s84, %s85
      %p94 = scmp.eq.s32.totalorder %s27, 0
      %p95 = por %p93, %p94
      %p96 = scmp.ne.s32.totalorder %s84, %s85
      %p97 = scmp.eq.s32.totalorder %s28, 1
      %p98 = por %p96, %p97
      %p100 = scmp.ne.s32.totalorder %s85, %s99
      %p101 = scmp.eq.s32.totalorder %s28, 0
      %p102 = por %p100, %p101
      %s104 = sadd.s32 %s103, 1
      %p107 = scmp.eq.s32.totalorder %s22, 1
      %p108 = scmp.ne.s32.totalorder %s103, %s105
      %p109 = scmp.eq.s32.totalorder %s22, 0
      %p110 = por %p108, %p109
      %p111 = scmp.ne.s32.totalorder %s103, %s105
      %p112 = scmp.eq.s32.totalorder %s27, 1
      %p113 = por %p111, %p112
      %p114 = scmp.ne.s32.totalorder %s105, %s106
      %p115 = scmp.eq.s32.totalorder %s27, 0
      %p116 = por %p114, %p115
      %p117 = scmp.ne.s32.totalorder %s105, %s106
      %p118 = scmp.eq.s32.totalorder %s28, 1
      %p119 = por %p117, %p118
      %p121 = scmp.ne.s32.totalorder %s106, %s120
      %p122 = scmp.eq.s32.totalorder %s28, 0
      %p123 = por %p121, %p122
      %s125 = sadd.s32 %s124, 1
      %p128 = scmp.eq.s32.totalorder %s22, 1
      %p129 = scmp.ne.s32.totalorder %s124, %s126
      %p130 = scmp.eq.s32.totalorder %s22, 0
      %p131 = por %p129, %p130
      %p132 = scmp.ne.s32.totalorder %s124, %s126
      %p133 = scmp.eq.s32.totalorder %s27, 1
      %p134 = por %p132, %p133
      %p135 = scmp.ne.s32.totalorder %s126, %s127
      %p136 = scmp.eq.s32.totalorder %s27, 0
      %p137 = por %p135, %p136
      %p138 = scmp.ne.s32.totalorder %s126, %s127
      %p139 = scmp.eq.s32.totalorder %s28, 1
      %p140 = por %p138, %p139
      %p142 = scmp.ne.s32.totalorder %s127, %s141
      %p143 = scmp.eq.s32.totalorder %s28, 0
      %p144 = por %p142, %p143
      %s146 = sadd.s32 %s145, 1
      %p149 = scmp.eq.s32.totalorder %s22, 1
      %p150 = scmp.ne.s32.totalorder %s145, %s147
      %p151 = scmp.eq.s32.totalorder %s22, 0
      %p152 = por %p150, %p151
      %p153 = scmp.ne.s32.totalorder %s145, %s147
      %p154 = scmp.eq.s32.totalorder %s27, 1
      %p155 = por %p153, %p154
      %p156 = scmp.ne.s32.totalorder %s147, %s148
      %p157 = scmp.eq.s32.totalorder %s27, 0
      %p158 = por %p156, %p157
      %p159 = scmp.ne.s32.totalorder %s147, %s148
      %p160 = scmp.eq.s32.totalorder %s28, 1
      %p161 = por %p159, %p160
      %p163 = scmp.ne.s32.totalorder %s148, %s162
      %p164 = scmp.eq.s32.totalorder %s28, 0
      %p165 = por %p163, %p164
      %s167 = sadd.s32 %s166, 1
      %p170 = scmp.eq.s32.totalorder %s22, 1
      %p171 = scmp.ne.s32.totalorder %s166, %s168
      %p172 = scmp.eq.s32.totalorder %s22, 0
      %p173 = por %p171, %p172
      %p174 = scmp.ne.s32.totalorder %s166, %s168
      %p175 = scmp.eq.s32.totalorder %s27, 1
      %p176 = por %p174, %p175
      %p177 = scmp.ne.s32.totalorder %s168, %s169
      %p178 = scmp.eq.s32.totalorder %s27, 0
      %p179 = por %p177, %p178
      %p180 = scmp.ne.s32.totalorder %s168, %s169
      %p181 = scmp.eq.s32.totalorder %s28, 1
      %p182 = por %p180, %p181
      %p184 = scmp.ne.s32.totalorder %s169, %s183
      %p185 = scmp.eq.s32.totalorder %s28, 0
      %p186 = por %p184, %p185
      %s187 = ssub.s32 %s22, %s29
      %p188 = scmp.eq.s32.totalorder %s187, 0
      %s190 = sadd.s32 %s189, 1
      %s191 = scalar_select %p188, %s189, %s190
      %p194 = pneg %p188
      %p195 = scmp.eq.s32.totalorder %s22, 1
      %p196 = por %p194, %p195
      %p197 = scmp.ne.s32.totalorder %s189, %s192
      %p198 = scmp.eq.s32.totalorder %s22, 0
      %p199 = por %p197, %p198
      %p200 = scmp.ne.s32.totalorder %s189, %s192
      %p201 = scmp.eq.s32.totalorder %s27, 1
      %p202 = por %p200, %p201
      %p203 = scmp.ne.s32.totalorder %s192, %s193
      %p204 = scmp.eq.s32.totalorder %s27, 0
      %p205 = por %p203, %p204
      %p206 = scmp.ne.s32.totalorder %s192, %s193
      %p207 = scmp.eq.s32.totalorder %s28, 1
      %p208 = por %p206, %p207
      %p210 = scmp.ne.s32.totalorder %s193, %s209
      %p211 = scmp.eq.s32.totalorder %s28, 0
      %p212 = por %p210, %p211
      %p213 = scmp.le.s32.totalorder 1, %s22
      %p214 = scmp.lt.s32.totalorder %s22, 3
      %p215 = pnand %p213, %p214
      %p216 = pneg %p215
      // Predicated region
      $region9: #{tpu_custom_call.1} parent=5 // pred_check
        _
      $region10: #{tpu_custom_call.1} parent=5 // pred_check_branch
        %218 = sbr.rel (%p215) target = $region12
      $region11: #{tpu_custom_call.1} parent=5 // pred_region
        %s219 = ssub.s32 %s22, 1
        // Predicated region
        $region13: #{tpu_custom_call.1} parent=11 // pred_check
          %p220 = pneg %p95
        $region14: #{tpu_custom_call.1} parent=11 // pred_check_branch
          %222 = sbr.rel (%p220) target = $region16
        $region15: #{tpu_custom_call.1} parent=11 // pred_region
          _
        $region16: #{tpu_custom_call.1} parent=11 // pred_fallthru
          _
        // Predicated region
        $region17: #{tpu_custom_call.1} parent=11 // pred_check
          %p223 = pneg %p116
        $region18: #{tpu_custom_call.1} parent=11 // pred_check_branch
          %225 = sbr.rel (%p223) target = $region20
        $region19: #{tpu_custom_call.1} parent=11 // pred_region
          _
        $region20: #{tpu_custom_call.1} parent=11 // pred_fallthru
          _
        // Predicated region
        $region21: #{tpu_custom_call.1} parent=11 // pred_check
          %p226 = pneg %p137
        $region22: #{tpu_custom_call.1} parent=11 // pred_check_branch
          %228 = sbr.rel (%p226) target = $region24
        $region23: #{tpu_custom_call.1} parent=11 // pred_region
          %s230 = ssub.s32 9216, 9216
          %231 = vsyncadd [#allocation8], %s230
          %s232 = sshll.u32 [#allocation9], 4
          %s233 = int_to_ptr.vmem [resolvable:$true] %s232
          %238 = dma.hbm_to_vmem [thread:$0]  %s4, 9216, %s233, [#allocation8], 128, 128, 8
        $region24: #{tpu_custom_call.1} parent=11 // pred_fallthru
          _
        // Predicated region
        $region25: #{tpu_custom_call.1} parent=11 // pred_check
          %p239 = pneg %p158
        $region26: #{tpu_custom_call.1} parent=11 // pred_check_branch
          %241 = sbr.rel (%p239) target = $region28
        $region27: #{tpu_custom_call.1} parent=11 // pred_region
          _
        $region28: #{tpu_custom_call.1} parent=11 // pred_fallthru
          _
        // Predicated region
        $region29: #{tpu_custom_call.1} parent=11 // pred_check
          %p242 = pneg %p179
        $region30: #{tpu_custom_call.1} parent=11 // pred_check_branch
          %244 = sbr.rel (%p242) target = $region32
        $region31: #{tpu_custom_call.1} parent=11 // pred_region
          _
        $region32: #{tpu_custom_call.1} parent=11 // pred_fallthru
          _
      $region12: #{tpu_custom_call.1} parent=5 // pred_fallthru
        _
      %p245 = scmp.lt.s32.totalorder %s22, 2
      // Predicated region
      $region33: #{tpu_custom_call.1} parent=5 // pred_check
        %p246 = pneg %p245
      $region34: #{tpu_custom_call.1} parent=5 // pred_check_branch
        %248 = sbr.rel (%p246) target = $region36
      $region35: #{tpu_custom_call.1} parent=5 // pred_region
        // Predicated region
        $region37: #{tpu_custom_call.1} parent=35 // pred_check
          %p249 = pneg %p42
        $region38: #{tpu_custom_call.1} parent=35 // pred_check_branch
          %251 = sbr.rel (%p249) target = $region40
        $region39: #{tpu_custom_call.1} parent=35 // pred_region
          %s252 = sand.u32 %s32, 1
          %s253 = scalar_lea.sflag [#allocation5], %s252
          %s254 = sand.u32 %s32, 1
          %s255 = smul.addr %s254, 256
          %s256 = scalar_lea.vmem [#allocation4], %s255
          %s258 = ssub.s32 4096, 4096
          %259 = vsyncadd %s253, %s258
          %s260 = smul.addr %s22, 32
          %s261 = smul.addr %s260, 128
          %s262 = scalar_lea.hbm %s0, %s261
          %s263 = sshll.u32 %s256, 4
          %s264 = int_to_ptr.vmem [resolvable:$true] %s263
          %269 = dma.hbm_to_vmem [thread:$0]  %s262, 4096, %s264, %s253, 128, 128, 8
        $region40: #{tpu_custom_call.1} parent=35 // pred_fallthru
          _
        // Predicated region
        $region41: #{tpu_custom_call.1} parent=35 // pred_check
          %p270 = pneg %p68
        $region42: #{tpu_custom_call.1} parent=35 // pred_check_branch
          %272 = sbr.rel (%p270) target = $region44
        $region43: #{tpu_custom_call.1} parent=35 // pred_region
          %s273 = sand.u32 %s22, 1
          %s274 = scalar_lea.sflag [#allocation8], %s273
          %s275 = sand.u32 %s58, 1
          %s276 = smul.addr %s275, 256
          %s277 = scalar_lea.vmem [#allocation7], %s276
          %s279 = ssub.s32 4096, 4096
          %280 = vsyncadd %s274, %s279
          %s281 = smul.addr %s22, 32
          %s282 = smul.addr %s281, 128
          %s283 = scalar_lea.hbm %s1, %s282
          %s284 = sshll.u32 %s277, 4
          %s285 = int_to_ptr.vmem [resolvable:$true] %s284
          %290 = dma.hbm_to_vmem [thread:$0]  %s283, 4096, %s285, %s274, 128, 128, 8
        $region44: #{tpu_custom_call.1} parent=35 // pred_fallthru
          _
      $region36: #{tpu_custom_call.1} parent=5 // pred_fallthru
        _
      %p291 = scmp.le.s32.totalorder 1, %s22
      %p292 = scmp.lt.s32.totalorder %s22, 3
      %p293 = pnand %p291, %p292
      %p294 = pneg %p293
      // Predicated region
      $region45: #{tpu_custom_call.1} parent=5 // pred_check
        _
      $region46: #{tpu_custom_call.1} parent=5 // pred_check_branch
        %296 = sbr.rel (%p293) target = $region48
      $region47: #{tpu_custom_call.1} parent=5 // pred_region
        %s297 = ssub.s32 %s22, 1
        %s298 = sand.u32 %s35, 1
        %s299 = scalar_lea.sflag [#allocation5], %s298
        %s300 = sand.u32 %s35, 1
        %s301 = smul.addr %s300, 256
        %s302 = scalar_lea.vmem [#allocation4], %s301
        // Predicated region
        $region49: #{tpu_custom_call.1} parent=47 // pred_check
          %p303 = pneg %p48
        $region50: #{tpu_custom_call.1} parent=47 // pred_check_branch
          %305 = sbr.rel (%p303) target = $region52
        $region51: #{tpu_custom_call.1} parent=47 // pred_region
          %306 = dma.done %s299, 4096
        $region52: #{tpu_custom_call.1} parent=47 // pred_fallthru
          _
        %s307 = sand.u32 %s27, 1
        %s308 = scalar_lea.sflag [#allocation8], %s307
        %s309 = sand.u32 %s61, 1
        %s310 = smul.addr %s309, 256
        %s311 = scalar_lea.vmem [#allocation7], %s310
        // Predicated region
        $region53: #{tpu_custom_call.1} parent=47 // pred_check
          %p312 = pneg %p74
        $region54: #{tpu_custom_call.1} parent=47 // pred_check_branch
          %314 = sbr.rel (%p312) target = $region56
        $region55: #{tpu_custom_call.1} parent=47 // pred_region
          %315 = dma.done %s308, 4096
        $region56: #{tpu_custom_call.1} parent=47 // pred_fallthru
          _
        // Predicated region
        $region57: #{tpu_custom_call.1} parent=47 // pred_check
          %p316 = pneg %p137
        $region58: #{tpu_custom_call.1} parent=47 // pred_check_branch
          %318 = sbr.rel (%p316) target = $region60
        $region59: #{tpu_custom_call.1} parent=47 // pred_region
          %319 = dma.done [#allocation8], 9216
        $region60: #{tpu_custom_call.1} parent=47 // pred_fallthru
          _
        %s320 = sand.u32 %s35, 1
        %s321 = scalar_lea.sflag [#allocation5], %s320
        %s322 = sand.u32 %s35, 1
        %s323 = smul.addr %s322, 256
        %s324 = scalar_lea.vmem [#allocation4], %s323
        %p325 = pneg %p48
        %p326 = pneg %p45
        %s327 = sand.u32 %s27, 1
        %s328 = scalar_lea.sflag [#allocation8], %s327
        %s329 = sand.u32 %s61, 1
        %s330 = smul.addr %s329, 256
        %s331 = scalar_lea.vmem [#allocation7], %s330
        %p332 = pneg %p74
        %p333 = pneg %p71
        %p334 = pneg %p95
        %p335 = pneg %p92
        %p336 = pneg %p116
        %p337 = pneg %p113
        %p338 = pneg %p137
        %p339 = pneg %p134
        %p340 = pneg %p158
        %p341 = pneg %p155
        %p342 = pneg %p179
        %p343 = pneg %p176
        %p344 = pneg %p205
        %p345 = pneg %p202
        %s346 = sand.u32 %s192, 1
        %s347 = scalar_lea.sflag [#allocation6], %s346
        %s348 = sand.u32 %s192, 1
        %s349 = smul.addr %s348, 64
        %s350 = scalar_lea.vmem [#allocation10], %s349
        %v351 = vld [vmem:[%s302] sm:$0xff]
        %v352 = vld [vmem:[%s302 + $0x8] sm:$0xff]
        %v353 = vld [vmem:[%s302 + $0x10] sm:$0xff]
        %v354 = vld [vmem:[%s302 + $0x18] sm:$0xff]
        %v355 = vld [vmem:[%s302 + $0x20] sm:$0xff]
        %v356 = vld [vmem:[%s302 + $0x28] sm:$0xff]
        %v357 = vld [vmem:[%s302 + $0x30] sm:$0xff]
        %v358 = vld [vmem:[%s302 + $0x38] sm:$0xff]
        %v359 = vld [vmem:[%s302 + $0x40] sm:$0xff]
        %v360 = vld [vmem:[%s302 + $0x48] sm:$0xff]
        %v361 = vld [vmem:[%s302 + $0x50] sm:$0xff]
        %v362 = vld [vmem:[%s302 + $0x58] sm:$0xff]
        %v363 = vld [vmem:[%s302 + $0x60] sm:$0xff]
        %v364 = vld [vmem:[%s302 + $0x68] sm:$0xff]
        %v365 = vld [vmem:[%s302 + $0x70] sm:$0xff]
        %v366 = vld [vmem:[%s302 + $0x78] sm:$0xff]
        %v367 = vld [vmem:[%s302 + $0x80] sm:$0xff]
        %v368 = vld [vmem:[%s302 + $0x88] sm:$0xff]
        %v369 = vld [vmem:[%s302 + $0x90] sm:$0xff]
        %v370 = vld [vmem:[%s302 + $0x98] sm:$0xff]
        %v371 = vld [vmem:[%s302 + $0xa0] sm:$0xff]
        %v372 = vld [vmem:[%s302 + $0xa8] sm:$0xff]
        %v373 = vld [vmem:[%s302 + $0xb0] sm:$0xff]
        %v374 = vld [vmem:[%s302 + $0xb8] sm:$0xff]
        %v375 = vld [vmem:[%s302 + $0xc0] sm:$0xff]
        %v376 = vld [vmem:[%s302 + $0xc8] sm:$0xff]
        %v377 = vld [vmem:[%s302 + $0xd0] sm:$0xff]
        %v378 = vld [vmem:[%s302 + $0xd8] sm:$0xff]
        %v379 = vld [vmem:[%s302 + $0xe0] sm:$0xff]
        %v380 = vld [vmem:[%s302 + $0xe8] sm:$0xff]
        %v381 = vld [vmem:[%s302 + $0xf0] sm:$0xff]
        %v382 = vld [vmem:[%s302 + $0xf8] sm:$0xff]
        %v383 = vld [vmem:[%s2] sm:$0xff]
        %v384 = vld [vmem:[%s2 + $0x8] sm:$0xff]
        %v385 = vld [vmem:[%s2 + $0x10] sm:$0xff]
        %v386 = vld [vmem:[%s2 + $0x18] sm:$0xff]
        %v387 = vld [vmem:[%s2 + $0x20] sm:$0xff]
        %v388 = vld [vmem:[%s2 + $0x28] sm:$0xff]
        %v389 = vld [vmem:[%s2 + $0x30] sm:$0xff]
        %v390 = vld [vmem:[%s2 + $0x38] sm:$0xff]
        %v391 = vld [vmem:[%s2 + $0x40] sm:$0xff]
        %v392 = vld [vmem:[%s2 + $0x48] sm:$0xff]
        %v393 = vld [vmem:[%s2 + $0x50] sm:$0xff]
        %v394 = vld [vmem:[%s2 + $0x58] sm:$0xff]
        %v395 = vld [vmem:[%s2 + $0x60] sm:$0xff]
        %v396 = vld [vmem:[%s2 + $0x68] sm:$0xff]
        %v397 = vld [vmem:[%s2 + $0x70] sm:$0xff]
        %v398 = vld [vmem:[%s2 + $0x78] sm:$0xff]
        %399 = vmatprep.subr.mxu0 0.0
        %400 = vmatpush1.msra.mxu0 %v383
        %401 = vmatprep.subr.mxu0 0.0
        %402 = vmatpush1.msra.mxu0 %v384
        %403 = vmatprep.subr.mxu0 0.0
        %404 = vmatpush1.msra.mxu0 %v385
        %405 = vmatprep.subr.mxu0 0.0
        %406 = vmatpush1.msra.mxu0 %v386
        %407 = vmatprep.subr.mxu0 0.0
        %408 = vmatpush1.msra.mxu0 %v387
        %409 = vmatprep.subr.mxu0 0.0
        %410 = vmatpush1.msra.mxu0 %v388
        %411 = vmatprep.subr.mxu0 0.0
        %412 = vmatpush1.msra.mxu0 %v389
        %413 = vmatprep.subr.mxu0 0.0
        %414 = vmatpush1.msra.mxu0 %v390
        %415 = vmatprep.subr.mxu0 0.0
        %416 = vmatpush1.msra.mxu0 %v391
        %417 = vmatprep.subr.mxu0 0.0
        %418 = vmatpush1.msra.mxu0 %v392
        %419 = vmatprep.subr.mxu0 0.0
        %420 = vmatpush1.msra.mxu0 %v393
        %421 = vmatprep.subr.mxu0 0.0
        %422 = vmatpush1.msra.mxu0 %v394
        %423 = vmatprep.subr.mxu0 0.0
        %424 = vmatpush1.msra.mxu0 %v395
        %425 = vmatprep.subr.mxu0 0.0
        %426 = vmatpush1.msra.mxu0 %v396
        %427 = vmatprep.subr.mxu0 0.0
        %428 = vmatpush1.msra.mxu0 %v397
        %429 = vmatprep.subr.mxu0 0.0
        %430 = vmatpush1.msra.mxu0 %v398
        %431 = vmatprep.subr.mxu0 0.0
        %432 = vmatpush1.msra.mxu0 0.0
        %433 = vmatprep.subr.mxu0 0.0
        %434 = vmatpush1.msra.mxu0 0.0
        %435 = vmatprep.subr.mxu0 0.0
        %436 = vmatpush1.msra.mxu0 0.0
        %437 = vmatprep.subr.mxu0 0.0
        %438 = vmatpush1.msra.mxu0 0.0
        %439 = vmatprep.subr.mxu0 0.0
        %440 = vmatpush1.msra.mxu0 0.0
        %441 = vmatprep.subr.mxu0 0.0
        %442 = vmatpush1.msra.mxu0 0.0
        %443 = vmatprep.subr.mxu0 0.0
        %444 = vmatpush1.msra.mxu0 0.0
        %445 = vmatprep.subr.mxu0 0.0
        %446 = vmatpush1.msra.mxu0 0.0
        %447 = vmatprep.subr.mxu0 0.0
        %448 = vmatpush1.msra.mxu0 0.0
        %449 = vmatprep.subr.mxu0 0.0
        %450 = vmatpush1.msra.mxu0 0.0
        %451 = vmatprep.subr.mxu0 0.0
        %452 = vmatpush1.msra.mxu0 0.0
        %453 = vmatprep.subr.mxu0 0.0
        %454 = vmatpush1.msra.mxu0 0.0
        %455 = vmatprep.subr.mxu0 0.0
        %456 = vmatpush1.msra.mxu0 0.0
        %457 = vmatprep.subr.mxu0 0.0
        %458 = vmatpush1.msra.mxu0 0.0
        %459 = vmatprep.subr.mxu0 0.0
        %460 = vmatpush1.msra.mxu0 0.0
        %461 = vmatprep.subr.mxu0 0.0
        %462 = vmatpush1.msra.mxu0 0.0
        %463 = vmatprep.mubr.f32.mxu0 0.0
        %464 = vmatmul.mubr.f32.gmra.mrb[0].mxu0 %v351
        %v465 = vpop.f32.mrb[0].mxu0
        %v466 = vadd.f32 0.0, %v465
        %v467 = vpop.f32.mrb[0].mxu0
        %468 = vmatprep.mubr.f32.mxu0 0.0
        %469 = vmatmul.mubr.f32.gmra.mrb[0].mxu0 %v352
        %v470 = vpop.f32.mrb[0].mxu0
        %v471 = vadd.f32 0.0, %v470
        %v472 = vpop.f32.mrb[0].mxu0
        %473 = vmatprep.mubr.f32.mxu0 0.0
        %474 = vmatmul.mubr.f32.gmra.mrb[0].mxu0 %v353
        %v475 = vpop.f32.mrb[0].mxu0
        %v476 = vadd.f32 0.0, %v475
        %v477 = vpop.f32.mrb[0].mxu0
        %478 = vmatprep.mubr.f32.mxu0 0.0
        %479 = vmatmul.mubr.f32.gmra.mrb[0].mxu0 %v354
        %v480 = vpop.f32.mrb[0].mxu0
        %v481 = vadd.f32 0.0, %v480
        %v482 = vpop.f32.mrb[0].mxu0
        %483 = vmatprep.mubr.f32.mxu0 0.0
        %484 = vmatmul.mubr.f32.gmra.mrb[0].mxu0 %v355
        %v485 = vpop.f32.mrb[0].mxu0
        %v486 = vadd.f32 0.0, %v485
        %v487 = vpop.f32.mrb[0].mxu0
        %488 = vmatprep.mubr.f32.mxu0 0.0
        %489 = vmatmul.mubr.f32.gmra.mrb[0].mxu0 %v356
        %v490 = vpop.f32.mrb[0].mxu0
        %v491 = vadd.f32 0.0, %v490
        %v492 = vpop.f32.mrb[0].mxu0
        %493 = vmatprep.mubr.f32.mxu0 0.0
        %494 = vmatmul.mubr.f32.gmra.mrb[0].mxu0 %v357
        %v495 = vpop.f32.mrb[0].mxu0
        %v496 = vadd.f32 0.0, %v495
        %v497 = vpop.f32.mrb[0].mxu0
        %498 = vmatprep.mubr.f32.mxu0 0.0
        %499 = vmatmul.mubr.f32.gmra.mrb[0].mxu0 %v358
        %v500 = vpop.f32.mrb[0].mxu0
        %v501 = vadd.f32 0.0, %v500
        %v502 = vpop.f32.mrb[0].mxu0
        %503 = vmatprep.mubr.f32.mxu0 0.0
        %504 = vmatmul.mubr.f32.gmra.mrb[0].mxu0 %v359
        %v505 = vpop.f32.mrb[0].mxu0
        %v506 = vadd.f32 0.0, %v505
        %v507 = vpop.f32.mrb[0].mxu0
        %508 = vmatprep.mubr.f32.mxu0 0.0
        %509 = vmatmul.mubr.f32.gmra.mrb[0].mxu0 %v360
        %v510 = vpop.f32.mrb[0].mxu0
        %v511 = vadd.f32 0.0, %v510
        %v512 = vpop.f32.mrb[0].mxu0
        %513 = vmatprep.mubr.f32.mxu0 0.0
        %514 = vmatmul.mubr.f32.gmra.mrb[0].mxu0 %v361
        %v515 = vpop.f32.mrb[0].mxu0
        %v516 = vadd.f32 0.0, %v515
        %v517 = vpop.f32.mrb[0].mxu0
        %518 = vmatprep.mubr.f32.mxu0 0.0
        %519 = vmatmul.mubr.f32.gmra.mrb[0].mxu0 %v362
        %v520 = vpop.f32.mrb[0].mxu0
        %v521 = vadd.f32 0.0, %v520
        %v522 = vpop.f32.mrb[0].mxu0
        %523 = vmatprep.mubr.f32.mxu0 0.0
        %524 = vmatmul.mubr.f32.gmra.mrb[0].mxu0 %v363
        %v525 = vpop.f32.mrb[0].mxu0
        %v526 = vadd.f32 0.0, %v525
        %v527 = vpop.f32.mrb[0].mxu0
        %528 = vmatprep.mubr.f32.mxu0 0.0
        %529 = vmatmul.mubr.f32.gmra.mrb[0].mxu0 %v364
        %v530 = vpop.f32.mrb[0].mxu0
        %v531 = vadd.f32 0.0, %v530
        %v532 = vpop.f32.mrb[0].mxu0
        %533 = vmatprep.mubr.f32.mxu0 0.0
        %534 = vmatmul.mubr.f32.gmra.mrb[0].mxu0 %v365
        %v535 = vpop.f32.mrb[0].mxu0
        %v536 = vadd.f32 0.0, %v535
        %v537 = vpop.f32.mrb[0].mxu0
        %538 = vmatprep.mubr.f32.mxu0 0.0
        %539 = vmatmul.mubr.f32.gmra.mrb[0].mxu0 %v366
        %v540 = vpop.f32.mrb[0].mxu0
        %v541 = vadd.f32 0.0, %v540
        %v542 = vpop.f32.mrb[0].mxu0
        %543 = vmatprep.mubr.f32.mxu0 0.0
        %544 = vmatmul.mubr.f32.gmra.mrb[0].mxu0 %v367
        %v545 = vpop.f32.mrb[0].mxu0
        %v546 = vadd.f32 0.0, %v545
        %v547 = vpop.f32.mrb[0].mxu0
        %548 = vmatprep.mubr.f32.mxu0 0.0
        %549 = vmatmul.mubr.f32.gmra.mrb[0].mxu0 %v368
        %v550 = vpop.f32.mrb[0].mxu0
        %v551 = vadd.f32 0.0, %v550
        %v552 = vpop.f32.mrb[0].mxu0
        %553 = vmatprep.mubr.f32.mxu0 0.0
        %554 = vmatmul.mubr.f32.gmra.mrb[0].mxu0 %v369
        %v555 = vpop.f32.mrb[0].mxu0
        %v556 = vadd.f32 0.0, %v555
        %v557 = vpop.f32.mrb[0].mxu0
        %558 = vmatprep.mubr.f32.mxu0 0.0
        %559 = vmatmul.mubr.f32.gmra.mrb[0].mxu0 %v370
        %v560 = vpop.f32.mrb[0].mxu0
        %v561 = vadd.f32 0.0, %v560
        %v562 = vpop.f32.mrb[0].mxu0
        %563 = vmatprep.mubr.f32.mxu0 0.0
        %564 = vmatmul.mubr.f32.gmra.mrb[0].mxu0 %v371
        %v565 = vpop.f32.mrb[0].mxu0
        %v566 = vadd.f32 0.0, %v565
        %v567 = vpop.f32.mrb[0].mxu0
        %568 = vmatprep.mubr.f32.mxu0 0.0
        %569 = vmatmul.mubr.f32.gmra.mrb[0].mxu0 %v372
        %v570 = vpop.f32.mrb[0].mxu0
        %v571 = vadd.f32 0.0, %v570
        %v572 = vpop.f32.mrb[0].mxu0
        %573 = vmatprep.mubr.f32.mxu0 0.0
        %574 = vmatmul.mubr.f32.gmra.mrb[0].mxu0 %v373
        %v575 = vpop.f32.mrb[0].mxu0
        %v576 = vadd.f32 0.0, %v575
        %v577 = vpop.f32.mrb[0].mxu0
        %578 = vmatprep.mubr.f32.mxu0 0.0
        %579 = vmatmul.mubr.f32.gmra.mrb[0].mxu0 %v374
        %v580 = vpop.f32.mrb[0].mxu0
        %v581 = vadd.f32 0.0, %v580
        %v582 = vpop.f32.mrb[0].mxu0
        %583 = vmatprep.mubr.f32.mxu0 0.0
        %584 = vmatmul.mubr.f32.gmra.mrb[0].mxu0 %v375
        %v585 = vpop.f32.mrb[0].mxu0
        %v586 = vadd.f32 0.0, %v585
        %v587 = vpop.f32.mrb[0].mxu0
        %588 = vmatprep.mubr.f32.mxu0 0.0
        %589 = vmatmul.mubr.f32.gmra.mrb[0].mxu0 %v376
        %v590 = vpop.f32.mrb[0].mxu0
        %v591 = vadd.f32 0.0, %v590
        %v592 = vpop.f32.mrb[0].mxu0
        %593 = vmatprep.mubr.f32.mxu0 0.0
        %594 = vmatmul.mubr.f32.gmra.mrb[0].mxu0 %v377
        %v595 = vpop.f32.mrb[0].mxu0
        %v596 = vadd.f32 0.0, %v595
        %v597 = vpop.f32.mrb[0].mxu0
        %598 = vmatprep.mubr.f32.mxu0 0.0
        %599 = vmatmul.mubr.f32.gmra.mrb[0].mxu0 %v378
        %v600 = vpop.f32.mrb[0].mxu0
        %v601 = vadd.f32 0.0, %v600
        %v602 = vpop.f32.mrb[0].mxu0
        %603 = vmatprep.mubr.f32.mxu0 0.0
        %604 = vmatmul.mubr.f32.gmra.mrb[0].mxu0 %v379
        %v605 = vpop.f32.mrb[0].mxu0
        %v606 = vadd.f32 0.0, %v605
        %v607 = vpop.f32.mrb[0].mxu0
        %608 = vmatprep.mubr.f32.mxu0 0.0
        %609 = vmatmul.mubr.f32.gmra.mrb[0].mxu0 %v380
        %v610 = vpop.f32.mrb[0].mxu0
        %v611 = vadd.f32 0.0, %v610
        %v612 = vpop.f32.mrb[0].mxu0
        %613 = vmatprep.mubr.f32.mxu0 0.0
        %614 = vmatmul.mubr.f32.gmra.mrb[0].mxu0 %v381
        %v615 = vpop.f32.mrb[0].mxu0
        %v616 = vadd.f32 0.0, %v615
        %v617 = vpop.f32.mrb[0].mxu0
        %618 = vmatprep.mubr.f32.mxu0 0.0
        %619 = vmatmul.mubr.f32.gmra.mrb[0].mxu0 %v382
        %v620 = vpop.f32.mrb[0].mxu0
        %v621 = vadd.f32 0.0, %v620
        %v622 = vpop.f32.mrb[0].mxu0
        %623 = vdwg.mxu0
        %v624 = vld [vmem:[%s311] sm:$0xff]
        %v625 = vld [vmem:[%s311 + $0x8] sm:$0xff]
        %v626 = vld [vmem:[%s311 + $0x10] sm:$0xff]
        %v627 = vld [vmem:[%s311 + $0x18] sm:$0xff]
        %v628 = vld [vmem:[%s311 + $0x20] sm:$0xff]
        %v629 = vld [vmem:[%s311 + $0x28] sm:$0xff]
        %v630 = vld [vmem:[%s311 + $0x30] sm:$0xff]
        %v631 = vld [vmem:[%s311 + $0x38] sm:$0xff]
        %v632 = vld [vmem:[%s311 + $0x40] sm:$0xff]
        %v633 = vld [vmem:[%s311 + $0x48] sm:$0xff]
        %v634 = vld [vmem:[%s311 + $0x50] sm:$0xff]
        %v635 = vld [vmem:[%s311 + $0x58] sm:$0xff]
        %v636 = vld [vmem:[%s311 + $0x60] sm:$0xff]
        %v637 = vld [vmem:[%s311 + $0x68] sm:$0xff]
        %v638 = vld [vmem:[%s311 + $0x70] sm:$0xff]
        %v639 = vld [vmem:[%s311 + $0x78] sm:$0xff]
        %v640 = vld [vmem:[%s311 + $0x80] sm:$0xff]
        %v641 = vld [vmem:[%s311 + $0x88] sm:$0xff]
        %v642 = vld [vmem:[%s311 + $0x90] sm:$0xff]
        %v643 = vld [vmem:[%s311 + $0x98] sm:$0xff]
        %v644 = vld [vmem:[%s311 + $0xa0] sm:$0xff]
        %v645 = vld [vmem:[%s311 + $0xa8] sm:$0xff]
        %v646 = vld [vmem:[%s311 + $0xb0] sm:$0xff]
        %v647 = vld [vmem:[%s311 + $0xb8] sm:$0xff]
        %v648 = vld [vmem:[%s311 + $0xc0] sm:$0xff]
        %v649 = vld [vmem:[%s311 + $0xc8] sm:$0xff]
        %v650 = vld [vmem:[%s311 + $0xd0] sm:$0xff]
        %v651 = vld [vmem:[%s311 + $0xd8] sm:$0xff]
        %v652 = vld [vmem:[%s311 + $0xe0] sm:$0xff]
        %v653 = vld [vmem:[%s311 + $0xe8] sm:$0xff]
        %v654 = vld [vmem:[%s311 + $0xf0] sm:$0xff]
        %v655 = vld [vmem:[%s311 + $0xf8] sm:$0xff]
        %v656 = vld [vmem:[%s3] sm:$0xff]
        %v657 = vld [vmem:[%s3 + $0x8] sm:$0xff]
        %v658 = vld [vmem:[%s3 + $0x10] sm:$0xff]
        %v659 = vld [vmem:[%s3 + $0x18] sm:$0xff]
        %v660 = vld [vmem:[%s3 + $0x20] sm:$0xff]
        %v661 = vld [vmem:[%s3 + $0x28] sm:$0xff]
        %v662 = vld [vmem:[%s3 + $0x30] sm:$0xff]
        %v663 = vld [vmem:[%s3 + $0x38] sm:$0xff]
        %v664 = vld [vmem:[%s3 + $0x40] sm:$0xff]
        %v665 = vld [vmem:[%s3 + $0x48] sm:$0xff]
        %v666 = vld [vmem:[%s3 + $0x50] sm:$0xff]
        %v667 = vld [vmem:[%s3 + $0x58] sm:$0xff]
        %v668 = vld [vmem:[%s3 + $0x60] sm:$0xff]
        %v669 = vld [vmem:[%s3 + $0x68] sm:$0xff]
        %v670 = vld [vmem:[%s3 + $0x70] sm:$0xff]
        %v671 = vld [vmem:[%s3 + $0x78] sm:$0xff]
        %672 = vmatprep.subr.mxu0 0.0
        %673 = vmatpush1.msra.mxu0 %v656
        %674 = vmatprep.subr.mxu0 0.0
        %675 = vmatpush1.msra.mxu0 %v657
        %676 = vmatprep.subr.mxu0 0.0
        %677 = vmatpush1.msra.mxu0 %v658
        %678 = vmatprep.subr.mxu0 0.0
        %679 = vmatpush1.msra.mxu0 %v659
        %680 = vmatprep.subr.mxu0 0.0
        %681 = vmatpush1.msra.mxu0 %v660
        %682 = vmatprep.subr.mxu0 0.0
        %683 = vmatpush1.msra.mxu0 %v661
        %684 = vmatprep.subr.mxu0 0.0
        %685 = vmatpush1.msra.mxu0 %v662
        %686 = vmatprep.subr.mxu0 0.0
        %687 = vmatpush1.msra.mxu0 %v663
        %688 = vmatprep.subr.mxu0 0.0
        %689 = vmatpush1.msra.mxu0 %v664
        %690 = vmatprep.subr.mxu0 0.0
        %691 = vmatpush1.msra.mxu0 %v665
        %692 = vmatprep.subr.mxu0 0.0
        %693 = vmatpush1.msra.mxu0 %v666
        %694 = vmatprep.subr.mxu0 0.0
        %695 = vmatpush1.msra.mxu0 %v667
        %696 = vmatprep.subr.mxu0 0.0
        %697 = vmatpush1.msra.mxu0 %v668
        %698 = vmatprep.subr.mxu0 0.0
        %699 = vmatpush1.msra.mxu0 %v669
        %700 = vmatprep.subr.mxu0 0.0
        %701 = vmatpush1.msra.mxu0 %v670
        %702 = vmatprep.subr.mxu0 0.0
        %703 = vmatpush1.msra.mxu0 %v671
        %704 = vmatprep.subr.mxu0 0.0
        %705 = vmatpush1.msra.mxu0 0.0
        %706 = vmatprep.subr.mxu0 0.0
        %707 = vmatpush1.msra.mxu0 0.0
        %708 = vmatprep.subr.mxu0 0.0
        %709 = vmatpush1.msra.mxu0 0.0
        %710 = vmatprep.subr.mxu0 0.0
        %711 = vmatpush1.msra.mxu0 0.0
        %712 = vmatprep.subr.mxu0 0.0
        %713 = vmatpush1.msra.mxu0 0.0
        %714 = vmatprep.subr.mxu0 0.0
        %715 = vmatpush1.msra.mxu0 0.0
        %716 = vmatprep.subr.mxu0 0.0
        %717 = vmatpush1.msra.mxu0 0.0
        %718 = vmatprep.subr.mxu0 0.0
        %719 = vmatpush1.msra.mxu0 0.0
        %720 = vmatprep.subr.mxu0 0.0
        %721 = vmatpush1.msra.mxu0 0.0
        %722 = vmatprep.subr.mxu0 0.0
        %723 = vmatpush1.msra.mxu0 0.0
        %724 = vmatprep.subr.mxu0 0.0
        %725 = vmatpush1.msra.mxu0 0.0
        %726 = vmatprep.subr.mxu0 0.0
        %727 = vmatpush1.msra.mxu0 0.0
        %728 = vmatprep.subr.mxu0 0.0
        %729 = vmatpush1.msra.mxu0 0.0
        %730 = vmatprep.subr.mxu0 0.0
        %731 = vmatpush1.msra.mxu0 0.0
        %732 = vmatprep.subr.mxu0 0.0
        %733 = vmatpush1.msra.mxu0 0.0
        %734 = vmatprep.subr.mxu0 0.0
        %735 = vmatpush1.msra.mxu0 0.0
        %736 = vmatprep.mubr.f32.mxu0 0.0
        %737 = vmatmul.mubr.f32.gmra.mrb[0].mxu0 %v624
        %v738 = vpop.f32.mrb[0].mxu0
        %v739 = vadd.f32 0.0, %v738
        %v740 = vpop.f32.mrb[0].mxu0
        %741 = vmatprep.mubr.f32.mxu0 0.0
        %742 = vmatmul.mubr.f32.gmra.mrb[0].mxu0 %v625
        %v743 = vpop.f32.mrb[0].mxu0
        %v744 = vadd.f32 0.0, %v743
        %v745 = vpop.f32.mrb[0].mxu0
        %746 = vmatprep.mubr.f32.mxu0 0.0
        %747 = vmatmul.mubr.f32.gmra.mrb[0].mxu0 %v626
        %v748 = vpop.f32.mrb[0].mxu0
        %v749 = vadd.f32 0.0, %v748
        %v750 = vpop.f32.mrb[0].mxu0
        %751 = vmatprep.mubr.f32.mxu0 0.0
        %752 = vmatmul.mubr.f32.gmra.mrb[0].mxu0 %v627
        %v753 = vpop.f32.mrb[0].mxu0
        %v754 = vadd.f32 0.0, %v753
        %v755 = vpop.f32.mrb[0].mxu0
        %756 = vmatprep.mubr.f32.mxu0 0.0
        %757 = vmatmul.mubr.f32.gmra.mrb[0].mxu0 %v628
        %v758 = vpop.f32.mrb[0].mxu0
        %v759 = vadd.f32 0.0, %v758
        %v760 = vpop.f32.mrb[0].mxu0
        %761 = vmatprep.mubr.f32.mxu0 0.0
        %762 = vmatmul.mubr.f32.gmra.mrb[0].mxu0 %v629
        %v763 = vpop.f32.mrb[0].mxu0
        %v764 = vadd.f32 0.0, %v763
        %v765 = vpop.f32.mrb[0].mxu0
        %766 = vmatprep.mubr.f32.mxu0 0.0
        %767 = vmatmul.mubr.f32.gmra.mrb[0].mxu0 %v630
        %v768 = vpop.f32.mrb[0].mxu0
        %v769 = vadd.f32 0.0, %v768
        %v770 = vpop.f32.mrb[0].mxu0
        %771 = vmatprep.mubr.f32.mxu0 0.0
        %772 = vmatmul.mubr.f32.gmra.mrb[0].mxu0 %v631
        %v773 = vpop.f32.mrb[0].mxu0
        %v774 = vadd.f32 0.0, %v773
        %v775 = vpop.f32.mrb[0].mxu0
        %776 = vmatprep.mubr.f32.mxu0 0.0
        %777 = vmatmul.mubr.f32.gmra.mrb[0].mxu0 %v632
        %v778 = vpop.f32.mrb[0].mxu0
        %v779 = vadd.f32 0.0, %v778
        %v780 = vpop.f32.mrb[0].mxu0
        %781 = vmatprep.mubr.f32.mxu0 0.0
        %782 = vmatmul.mubr.f32.gmra.mrb[0].mxu0 %v633
        %v783 = vpop.f32.mrb[0].mxu0
        %v784 = vadd.f32 0.0, %v783
        %v785 = vpop.f32.mrb[0].mxu0
        %786 = vmatprep.mubr.f32.mxu0 0.0
        %787 = vmatmul.mubr.f32.gmra.mrb[0].mxu0 %v634
        %v788 = vpop.f32.mrb[0].mxu0
        %v789 = vadd.f32 0.0, %v788
        %v790 = vpop.f32.mrb[0].mxu0
        %791 = vmatprep.mubr.f32.mxu0 0.0
        %792 = vmatmul.mubr.f32.gmra.mrb[0].mxu0 %v635
        %v793 = vpop.f32.mrb[0].mxu0
        %v794 = vadd.f32 0.0, %v793
        %v795 = vpop.f32.mrb[0].mxu0
        %796 = vmatprep.mubr.f32.mxu0 0.0
        %797 = vmatmul.mubr.f32.gmra.mrb[0].mxu0 %v636
        %v798 = vpop.f32.mrb[0].mxu0
        %v799 = vadd.f32 0.0, %v798
        %v800 = vpop.f32.mrb[0].mxu0
        %801 = vmatprep.mubr.f32.mxu0 0.0
        %802 = vmatmul.mubr.f32.gmra.mrb[0].mxu0 %v637
        %v803 = vpop.f32.mrb[0].mxu0
        %v804 = vadd.f32 0.0, %v803
        %v805 = vpop.f32.mrb[0].mxu0
        %806 = vmatprep.mubr.f32.mxu0 0.0
        %807 = vmatmul.mubr.f32.gmra.mrb[0].mxu0 %v638
        %v808 = vpop.f32.mrb[0].mxu0
        %v809 = vadd.f32 0.0, %v808
        %v810 = vpop.f32.mrb[0].mxu0
        %811 = vmatprep.mubr.f32.mxu0 0.0
        %812 = vmatmul.mubr.f32.gmra.mrb[0].mxu0 %v639
        %v813 = vpop.f32.mrb[0].mxu0
        %v814 = vadd.f32 0.0, %v813
        %v815 = vpop.f32.mrb[0].mxu0
        %816 = vmatprep.mubr.f32.mxu0 0.0
        %817 = vmatmul.mubr.f32.gmra.mrb[0].mxu0 %v640
        %v818 = vpop.f32.mrb[0].mxu0
        %v819 = vadd.f32 0.0, %v818
        %v820 = vpop.f32.mrb[0].mxu0
        %821 = vmatprep.mubr.f32.mxu0 0.0
        %822 = vmatmul.mubr.f32.gmra.mrb[0].mxu0 %v641
        %v823 = vpop.f32.mrb[0].mxu0
        %v824 = vadd.f32 0.0, %v823
        %v825 = vpop.f32.mrb[0].mxu0
        %826 = vmatprep.mubr.f32.mxu0 0.0
        %827 = vmatmul.mubr.f32.gmra.mrb[0].mxu0 %v642
        %v828 = vpop.f32.mrb[0].mxu0
        %v829 = vadd.f32 0.0, %v828
        %v830 = vpop.f32.mrb[0].mxu0
        %831 = vmatprep.mubr.f32.mxu0 0.0
        %832 = vmatmul.mubr.f32.gmra.mrb[0].mxu0 %v643
        %v833 = vpop.f32.mrb[0].mxu0
        %v834 = vadd.f32 0.0, %v833
        %v835 = vpop.f32.mrb[0].mxu0
        %836 = vmatprep.mubr.f32.mxu0 0.0
        %837 = vmatmul.mubr.f32.gmra.mrb[0].mxu0 %v644
        %v838 = vpop.f32.mrb[0].mxu0
        %v839 = vadd.f32 0.0, %v838
        %v840 = vpop.f32.mrb[0].mxu0
        %841 = vmatprep.mubr.f32.mxu0 0.0
        %842 = vmatmul.mubr.f32.gmra.mrb[0].mxu0 %v645
        %v843 = vpop.f32.mrb[0].mxu0
        %v844 = vadd.f32 0.0, %v843
        %v845 = vpop.f32.mrb[0].mxu0
        %846 = vmatprep.mubr.f32.mxu0 0.0
        %847 = vmatmul.mubr.f32.gmra.mrb[0].mxu0 %v646
        %v848 = vpop.f32.mrb[0].mxu0
        %v849 = vadd.f32 0.0, %v848
        %v850 = vpop.f32.mrb[0].mxu0
        %851 = vmatprep.mubr.f32.mxu0 0.0
        %852 = vmatmul.mubr.f32.gmra.mrb[0].mxu0 %v647
        %v853 = vpop.f32.mrb[0].mxu0
        %v854 = vadd.f32 0.0, %v853
        %v855 = vpop.f32.mrb[0].mxu0
        %856 = vmatprep.mubr.f32.mxu0 0.0
        %857 = vmatmul.mubr.f32.gmra.mrb[0].mxu0 %v648
        %v858 = vpop.f32.mrb[0].mxu0
        %v859 = vadd.f32 0.0, %v858
        %v860 = vpop.f32.mrb[0].mxu0
        %861 = vmatprep.mubr.f32.mxu0 0.0
        %862 = vmatmul.mubr.f32.gmra.mrb[0].mxu0 %v649
        %v863 = vpop.f32.mrb[0].mxu0
        %v864 = vadd.f32 0.0, %v863
        %v865 = vpop.f32.mrb[0].mxu0
        %866 = vmatprep.mubr.f32.mxu0 0.0
        %867 = vmatmul.mubr.f32.gmra.mrb[0].mxu0 %v650
        %v868 = vpop.f32.mrb[0].mxu0
        %v869 = vadd.f32 0.0, %v868
        %v870 = vpop.f32.mrb[0].mxu0
        %871 = vmatprep.mubr.f32.mxu0 0.0
        %872 = vmatmul.mubr.f32.gmra.mrb[0].mxu0 %v651
        %v873 = vpop.f32.mrb[0].mxu0
        %v874 = vadd.f32 0.0, %v873
        %v875 = vpop.f32.mrb[0].mxu0
        %876 = vmatprep.mubr.f32.mxu0 0.0
        %877 = vmatmul.mubr.f32.gmra.mrb[0].mxu0 %v652
        %v878 = vpop.f32.mrb[0].mxu0
        %v879 = vadd.f32 0.0, %v878
        %v880 = vpop.f32.mrb[0].mxu0
        %881 = vmatprep.mubr.f32.mxu0 0.0
        %882 = vmatmul.mubr.f32.gmra.mrb[0].mxu0 %v653
        %v883 = vpop.f32.mrb[0].mxu0
        %v884 = vadd.f32 0.0, %v883
        %v885 = vpop.f32.mrb[0].mxu0
        %886 = vmatprep.mubr.f32.mxu0 0.0
        %887 = vmatmul.mubr.f32.gmra.mrb[0].mxu0 %v654
        %v888 = vpop.f32.mrb[0].mxu0
        %v889 = vadd.f32 0.0, %v888
        %v890 = vpop.f32.mrb[0].mxu0
        %891 = vmatprep.mubr.f32.mxu0 0.0
        %892 = vmatmul.mubr.f32.gmra.mrb[0].mxu0 %v655
        %v893 = vpop.f32.mrb[0].mxu0
        %v894 = vadd.f32 0.0, %v893
        %v895 = vpop.f32.mrb[0].mxu0
        %896 = vdwg.mxu0
        %vm897 = vcmask 261120
        %898 = vst.msk [vmem:[#allocation2] sm:$0xff] %vm897, 0.0
        %899 = vst.msk [vmem:[#allocation2 + $0x8] sm:$0xff] %vm897, 0.0
        %vm900 = vcmask 257024
        %901 = vst.msk [vmem:[#allocation2 + $0x10] sm:$0xf] %vm900, 0.0
        %902 = vst.msk [vmem:[#allocation2 + $0x18] sm:$0xff] %vm897, 0.0
        %903 = vst.msk [vmem:[#allocation2 + $0x20] sm:$0xff] %vm897, 0.0
        %904 = vst.msk [vmem:[#allocation2 + $0x28] sm:$0xf] %vm900, 0.0
        %905 = vst.msk [vmem:[#allocation2 + $0x30] sm:$0xff] %vm897, 0.0
        %906 = vst.msk [vmem:[#allocation2 + $0x38] sm:$0xff] %vm897, 0.0
        %907 = vst.msk [vmem:[#allocation2 + $0x40] sm:$0xf] %vm900, 0.0
        %908 = vst.msk [vmem:[#allocation2 + $0x48] sm:$0xff] %vm897, 0.0
        %909 = vst.msk [vmem:[#allocation2 + $0x50] sm:$0xff] %vm897, 0.0
        %910 = vst.msk [vmem:[#allocation2 + $0x58] sm:$0xf] %vm900, 0.0
        %911 = vst.msk [vmem:[#allocation2 + $0x60] sm:$0xff] %vm897, 0.0
        %912 = vst.msk [vmem:[#allocation2 + $0x68] sm:$0xff] %vm897, 0.0
        %913 = vst.msk [vmem:[#allocation2 + $0x70] sm:$0xf] %vm900, 0.0
        %914 = vst.msk [vmem:[#allocation2 + $0x78] sm:$0xff] %vm897, 0.0
        %915 = vst.msk [vmem:[#allocation2 + $0x80] sm:$0xff] %vm897, 0.0
        %916 = vst.msk [vmem:[#allocation2 + $0x88] sm:$0xf] %vm900, 0.0
        %917 = vst.msk [vmem:[#allocation2 + $0x90] sm:$0xff] %vm897, 0.0
        %918 = vst.msk [vmem:[#allocation2 + $0x98] sm:$0xff] %vm897, 0.0
        %919 = vst.msk [vmem:[#allocation2 + $0xa0] sm:$0xf] %vm900, 0.0
        %920 = vst.msk [vmem:[#allocation2 + $0xa8] sm:$0xff] %vm897, 0.0
        %921 = vst.msk [vmem:[#allocation2 + $0xb0] sm:$0xff] %vm897, 0.0
        %922 = vst.msk [vmem:[#allocation2 + $0xb8] sm:$0xf] %vm900, 0.0
        %923 = vst.msk [vmem:[#allocation2 + $0xc0] sm:$0xff] %vm897, 0.0
        %924 = vst.msk [vmem:[#allocation2 + $0xc8] sm:$0xff] %vm897, 0.0
        %925 = vst.msk [vmem:[#allocation2 + $0xd0] sm:$0xf] %vm900, 0.0
        %926 = vst.msk [vmem:[#allocation2 + $0xd8] sm:$0xff] %vm897, 0.0
        %927 = vst.msk [vmem:[#allocation2 + $0xe0] sm:$0xff] %vm897, 0.0
        %928 = vst.msk [vmem:[#allocation2 + $0xe8] sm:$0xf] %vm900, 0.0
        %929 = vst.msk [vmem:[#allocation2 + $0xf0] sm:$0xff] %vm897, 0.0
        %930 = vst.msk [vmem:[#allocation2 + $0xf8] sm:$0xff] %vm897, 0.0
        %931 = vst.msk [vmem:[#allocation2 + $0x100] sm:$0xf] %vm900, 0.0
        %932 = vst.msk [vmem:[#allocation2 + $0x108] sm:$0xff] %vm897, 0.0
        %933 = vst.msk [vmem:[#allocation2 + $0x110] sm:$0xff] %vm897, 0.0
        %934 = vst.msk [vmem:[#allocation2 + $0x118] sm:$0xf] %vm900, 0.0
        %935 = vst.msk [vmem:[#allocation2 + $0x120] sm:$0xff] %vm897, 0.0
        %936 = vst.msk [vmem:[#allocation2 + $0x128] sm:$0xff] %vm897, 0.0
        %937 = vst.msk [vmem:[#allocation2 + $0x130] sm:$0xf] %vm900, 0.0
        %938 = vst.msk [vmem:[#allocation2 + $0x138] sm:$0xff] %vm897, 0.0
        %939 = vst.msk [vmem:[#allocation2 + $0x140] sm:$0xff] %vm897, 0.0
        %940 = vst.msk [vmem:[#allocation2 + $0x148] sm:$0xf] %vm900, 0.0
        %941 = vst.msk [vmem:[#allocation2 + $0x150] sm:$0xff] %vm897, 0.0
        %942 = vst.msk [vmem:[#allocation2 + $0x158] sm:$0xff] %vm897, 0.0
        %943 = vst.msk [vmem:[#allocation2 + $0x160] sm:$0xf] %vm900, 0.0
        %944 = vst.msk [vmem:[#allocation2 + $0x168] sm:$0xff] %vm897, 0.0
        %945 = vst.msk [vmem:[#allocation2 + $0x170] sm:$0xff] %vm897, 0.0
        %946 = vst.msk [vmem:[#allocation2 + $0x178] sm:$0xf] %vm900, 0.0
        %947 = vst.msk [vmem:[#allocation2 + $0x180] sm:$0xff] %vm897, 0.0
        %948 = vst.msk [vmem:[#allocation2 + $0x188] sm:$0xff] %vm897, 0.0
        %949 = vst.msk [vmem:[#allocation2 + $0x190] sm:$0xf] %vm900, 0.0
        %950 = vst.msk [vmem:[#allocation2 + $0x198] sm:$0xff] %vm897, 0.0
        %951 = vst.msk [vmem:[#allocation2 + $0x1a0] sm:$0xff] %vm897, 0.0
        %952 = vst.msk [vmem:[#allocation2 + $0x1a8] sm:$0xf] %vm900, 0.0
        %953 = vst.msk [vmem:[#allocation2 + $0x1b0] sm:$0xff] %vm897, 0.0
        %954 = vst.msk [vmem:[#allocation2 + $0x1b8] sm:$0xff] %vm897, 0.0
        %955 = vst.msk [vmem:[#allocation2 + $0x1c0] sm:$0xf] %vm900, 0.0
        %956 = vst.msk [vmem:[#allocation2 + $0x1c8] sm:$0xff] %vm897, 0.0
        %957 = vst.msk [vmem:[#allocation2 + $0x1d0] sm:$0xff] %vm897, 0.0
        %958 = vst.msk [vmem:[#allocation2 + $0x1d8] sm:$0xf] %vm900, 0.0
        %s959 = scalar_lea.vmem [#allocation2], 48
        %960 = vst.msk [vmem:[%s959 + $0x2] sm:$0xff] %vm897, %v466
        %961 = vst.msk [vmem:[%s959 + $0xa] sm:$0xff] %vm897, %v471
        %962 = vst.msk [vmem:[%s959 + $0x1a] sm:$0xff] %vm897, %v476
        %963 = vst.msk [vmem:[%s959 + $0x22] sm:$0xff] %vm897, %v481
        %964 = vst.msk [vmem:[%s959 + $0x32] sm:$0xff] %vm897, %v486
        %965 = vst.msk [vmem:[%s959 + $0x3a] sm:$0xff] %vm897, %v491
        %966 = vst.msk [vmem:[%s959 + $0x4a] sm:$0xff] %vm897, %v496
        %967 = vst.msk [vmem:[%s959 + $0x52] sm:$0xff] %vm897, %v501
        %968 = vst.msk [vmem:[%s959 + $0x62] sm:$0xff] %vm897, %v506
        %969 = vst.msk [vmem:[%s959 + $0x6a] sm:$0xff] %vm897, %v511
        %970 = vst.msk [vmem:[%s959 + $0x7a] sm:$0xff] %vm897, %v516
        %971 = vst.msk [vmem:[%s959 + $0x82] sm:$0xff] %vm897, %v521
        %972 = vst.msk [vmem:[%s959 + $0x92] sm:$0xff] %vm897, %v526
        %973 = vst.msk [vmem:[%s959 + $0x9a] sm:$0xff] %vm897, %v531
        %974 = vst.msk [vmem:[%s959 + $0xaa] sm:$0xff] %vm897, %v536
        %975 = vst.msk [vmem:[%s959 + $0xb2] sm:$0xff] %vm897, %v541
        %976 = vst.msk [vmem:[%s959 + $0xc2] sm:$0xff] %vm897, %v546
        %977 = vst.msk [vmem:[%s959 + $0xca] sm:$0xff] %vm897, %v551
        %978 = vst.msk [vmem:[%s959 + $0xda] sm:$0xff] %vm897, %v556
        %979 = vst.msk [vmem:[%s959 + $0xe2] sm:$0xff] %vm897, %v561
        %980 = vst.msk [vmem:[%s959 + $0xf2] sm:$0xff] %vm897, %v566
        %981 = vst.msk [vmem:[%s959 + $0xfa] sm:$0xff] %vm897, %v571
        %982 = vst.msk [vmem:[%s959 + $0x10a] sm:$0xff] %vm897, %v576
        %983 = vst.msk [vmem:[%s959 + $0x112] sm:$0xff] %vm897, %v581
        %984 = vst.msk [vmem:[%s959 + $0x122] sm:$0xff] %vm897, %v586
        %985 = vst.msk [vmem:[%s959 + $0x12a] sm:$0xff] %vm897, %v591
        %986 = vst.msk [vmem:[%s959 + $0x13a] sm:$0xff] %vm897, %v596
        %987 = vst.msk [vmem:[%s959 + $0x142] sm:$0xff] %vm897, %v601
        %988 = vst.msk [vmem:[%s959 + $0x152] sm:$0xff] %vm897, %v606
        %989 = vst.msk [vmem:[%s959 + $0x15a] sm:$0xff] %vm897, %v611
        %990 = vst.msk [vmem:[%s959 + $0x16a] sm:$0xff] %vm897, %v616
        %991 = vst.msk [vmem:[%s959 + $0x172] sm:$0xff] %vm897, %v621
        %s992 = scalar_lea.vmem [#allocation2], 24
        %v993 = vld [vmem:[%s992 + $0x1] sm:$0xff]
        %v994 = vld [vmem:[%s992 + $0x9] sm:$0xff]
        %v995 = vld [vmem:[%s992 + $0x19] sm:$0xff]
        %v996 = vld [vmem:[%s992 + $0x21] sm:$0xff]
        %v997 = vld [vmem:[%s992 + $0x31] sm:$0xff]
        %v998 = vld [vmem:[%s992 + $0x39] sm:$0xff]
        %v999 = vld [vmem:[%s992 + $0x49] sm:$0xff]
        %v1000 = vld [vmem:[%s992 + $0x51] sm:$0xff]
        %v1001 = vld [vmem:[%s992 + $0x61] sm:$0xff]
        %v1002 = vld [vmem:[%s992 + $0x69] sm:$0xff]
        %v1003 = vld [vmem:[%s992 + $0x79] sm:$0xff]
        %v1004 = vld [vmem:[%s992 + $0x81] sm:$0xff]
        %v1005 = vld [vmem:[%s992 + $0x91] sm:$0xff]
        %v1006 = vld [vmem:[%s992 + $0x99] sm:$0xff]
        %v1007 = vld [vmem:[%s992 + $0xa9] sm:$0xff]
        %v1008 = vld [vmem:[%s992 + $0xb1] sm:$0xff]
        %v1009 = vld [vmem:[%s992 + $0xc1] sm:$0xff]
        %v1010 = vld [vmem:[%s992 + $0xc9] sm:$0xff]
        %v1011 = vld [vmem:[%s992 + $0xd9] sm:$0xff]
        %v1012 = vld [vmem:[%s992 + $0xe1] sm:$0xff]
        %v1013 = vld [vmem:[%s992 + $0xf1] sm:$0xff]
        %v1014 = vld [vmem:[%s992 + $0xf9] sm:$0xff]
        %v1015 = vld [vmem:[%s992 + $0x109] sm:$0xff]
        %v1016 = vld [vmem:[%s992 + $0x111] sm:$0xff]
        %v1017 = vld [vmem:[%s992 + $0x121] sm:$0xff]
        %v1018 = vld [vmem:[%s992 + $0x129] sm:$0xff]
        %v1019 = vld [vmem:[%s992 + $0x139] sm:$0xff]
        %v1020 = vld [vmem:[%s992 + $0x141] sm:$0xff]
        %v1021 = vld [vmem:[%s992 + $0x151] sm:$0xff]
        %v1022 = vld [vmem:[%s992 + $0x159] sm:$0xff]
        %v1023 = vld [vmem:[%s992 + $0x169] sm:$0xff]
        %v1024 = vld [vmem:[%s992 + $0x171] sm:$0xff]
        %v1025 = vld [vmem:[#allocation9] sm:$0xff]
        %v1026 = vld [vmem:[#allocation9 + $0x8] sm:$0xff]
        %v1027 = vld [vmem:[#allocation9 + $0x10] sm:$0xff]
        %v1028 = vld [vmem:[#allocation9 + $0x18] sm:$0xff]
        %v1029 = vld [vmem:[#allocation2] sm:$0xff]
        %v1030 = vld [vmem:[#allocation2 + $0x8] sm:$0xff]
        %v1031 = vld [vmem:[#allocation2 + $0x18] sm:$0xff]
        %v1032 = vld [vmem:[#allocation2 + $0x20] sm:$0xff]
        %v1033 = vld [vmem:[#allocation2 + $0x30] sm:$0xff]
        %v1034 = vld [vmem:[#allocation2 + $0x38] sm:$0xff]
        %v1035 = vld [vmem:[#allocation2 + $0x48] sm:$0xff]
        %v1036 = vld [vmem:[#allocation2 + $0x50] sm:$0xff]
        %v1037 = vld [vmem:[#allocation2 + $0x60] sm:$0xff]
        %v1038 = vld [vmem:[#allocation2 + $0x68] sm:$0xff]
        %v1039 = vld [vmem:[#allocation2 + $0x78] sm:$0xff]
        %v1040 = vld [vmem:[#allocation2 + $0x80] sm:$0xff]
        %v1041 = vld [vmem:[#allocation2 + $0x90] sm:$0xff]
        %v1042 = vld [vmem:[#allocation2 + $0x98] sm:$0xff]
        %v1043 = vld [vmem:[#allocation2 + $0xa8] sm:$0xff]
        %v1044 = vld [vmem:[#allocation2 + $0xb0] sm:$0xff]
        %v1045 = vld [vmem:[#allocation2 + $0xc0] sm:$0xff]
        %v1046 = vld [vmem:[#allocation2 + $0xc8] sm:$0xff]
        %v1047 = vld [vmem:[#allocation2 + $0xd8] sm:$0xff]
        %v1048 = vld [vmem:[#allocation2 + $0xe0] sm:$0xff]
        %v1049 = vld [vmem:[#allocation2 + $0xf0] sm:$0xff]
        %v1050 = vld [vmem:[#allocation2 + $0xf8] sm:$0xff]
        %v1051 = vld [vmem:[#allocation2 + $0x108] sm:$0xff]
        %v1052 = vld [vmem:[#allocation2 + $0x110] sm:$0xff]
        %v1053 = vld [vmem:[#allocation2 + $0x120] sm:$0xff]
        %v1054 = vld [vmem:[#allocation2 + $0x128] sm:$0xff]
        %v1055 = vld [vmem:[#allocation2 + $0x138] sm:$0xff]
        %v1056 = vld [vmem:[#allocation2 + $0x140] sm:$0xff]
        %v1057 = vld [vmem:[#allocation2 + $0x150] sm:$0xff]
        %v1058 = vld [vmem:[#allocation2 + $0x158] sm:$0xff]
        %v1059 = vld [vmem:[#allocation2 + $0x168] sm:$0xff]
        %v1060 = vld [vmem:[#allocation2 + $0x170] sm:$0xff]
        %s1061 = scalar_lea.vmem [#allocation9], 288
        %v1062 = vld [vmem:[%s1061] sm:$0xff]
        %v1063 = vld [vmem:[%s1061 + $0x8] sm:$0xff]
        %v1064 = vld [vmem:[%s1061 + $0x10] sm:$0xff]
        %v1065 = vld [vmem:[%s1061 + $0x18] sm:$0xff]
        %v1067 = vsel %vm897, %v1029, 0
        %v1070 = vsel %vm897, %v1030, 0
        %v1073 = vsel %vm897, %v1031, 0
        %v1076 = vsel %vm897, %v1032, 0
        %v1079 = vsel %vm897, %v1033, 0
        %v1082 = vsel %vm897, %v1034, 0
        %v1085 = vsel %vm897, %v1035, 0
        %v1088 = vsel %vm897, %v1036, 0
        %v1091 = vsel %vm897, %v1037, 0
        %v1094 = vsel %vm897, %v1038, 0
        %v1097 = vsel %vm897, %v1039, 0
        %v1100 = vsel %vm897, %v1040, 0
        %v1103 = vsel %vm897, %v1041, 0
        %v1106 = vsel %vm897, %v1042, 0
        %v1109 = vsel %vm897, %v1043, 0
        %v1112 = vsel %vm897, %v1044, 0
        %v1115 = vsel %vm897, %v1045, 0
        %v1118 = vsel %vm897, %v1046, 0
        %v1121 = vsel %vm897, %v1047, 0
        %v1124 = vsel %vm897, %v1048, 0
        %v1127 = vsel %vm897, %v1049, 0
        %v1130 = vsel %vm897, %v1050, 0
        %v1133 = vsel %vm897, %v1051, 0
        %v1136 = vsel %vm897, %v1052, 0
        %v1139 = vsel %vm897, %v1053, 0
        %v1142 = vsel %vm897, %v1054, 0
        %v1145 = vsel %vm897, %v1055, 0
        %v1148 = vsel %vm897, %v1056, 0
        %v1151 = vsel %vm897, %v1057, 0
        %v1154 = vsel %vm897, %v1058, 0
        %v1157 = vsel %vm897, %v1059, 0
        %v1160 = vsel %vm897, %v1060, 0
        %1162 = vmatprep.subr.mxu0 0.0
        %1163 = vmatpush1.msra.mxu0 %v1062
        %1164 = vmatprep.subr.mxu0 0.0
        %1165 = vmatpush1.msra.mxu0 %v1063
        %1166 = vmatprep.subr.mxu0 0.0
        %1167 = vmatpush1.msra.mxu0 %v1064
        %1168 = vmatprep.subr.mxu0 0.0
        %1169 = vmatpush1.msra.mxu0 %v1065
        %1170 = vmatprep.subr.mxu0 0.0
        %1171 = vmatpush1.msra.mxu0 0.0
        %1172 = vmatprep.subr.mxu0 0.0
        %1173 = vmatpush1.msra.mxu0 0.0
        %1174 = vmatprep.subr.mxu0 0.0
        %1175 = vmatpush1.msra.mxu0 0.0
        %1176 = vmatprep.subr.mxu0 0.0
        %1177 = vmatpush1.msra.mxu0 0.0
        %1178 = vmatprep.subr.mxu0 0.0
        %1179 = vmatpush1.msra.mxu0 0.0
        %1180 = vmatprep.subr.mxu0 0.0
        %1181 = vmatpush1.msra.mxu0 0.0
        %1182 = vmatprep.subr.mxu0 0.0
        %1183 = vmatpush1.msra.mxu0 0.0
        %1184 = vmatprep.subr.mxu0 0.0
        %1185 = vmatpush1.msra.mxu0 0.0
        %1186 = vmatprep.subr.mxu0 0.0
        %1187 = vmatpush1.msra.mxu0 0.0
        %1188 = vmatprep.subr.mxu0 0.0
        %1189 = vmatpush1.msra.mxu0 0.0
        %1190 = vmatprep.subr.mxu0 0.0
        %1191 = vmatpush1.msra.mxu0 0.0
        %1192 = vmatprep.subr.mxu0 0.0
        %1193 = vmatpush1.msra.mxu0 0.0
        %1194 = vmatprep.subr.mxu0 0.0
        %1195 = vmatpush1.msra.mxu0 0.0
        %1196 = vmatprep.subr.mxu0 0.0
        %1197 = vmatpush1.msra.mxu0 0.0
        %1198 = vmatprep.subr.mxu0 0.0
        %1199 = vmatpush1.msra.mxu0 0.0
        %1200 = vmatprep.subr.mxu0 0.0
        %1201 = vmatpush1.msra.mxu0 0.0
        %1202 = vmatprep.subr.mxu0 0.0
        %1203 = vmatpush1.msra.mxu0 0.0
        %1204 = vmatprep.subr.mxu0 0.0
        %1205 = vmatpush1.msra.mxu0 0.0
        %1206 = vmatprep.subr.mxu0 0.0
        %1207 = vmatpush1.msra.mxu0 0.0
        %1208 = vmatprep.subr.mxu0 0.0
        %1209 = vmatpush1.msra.mxu0 0.0
        %1210 = vmatprep.subr.mxu0 0.0
        %1211 = vmatpush1.msra.mxu0 0.0
        %1212 = vmatprep.subr.mxu0 0.0
        %1213 = vmatpush1.msra.mxu0 0.0
        %1214 = vmatprep.subr.mxu0 0.0
        %1215 = vmatpush1.msra.mxu0 0.0
        %1216 = vmatprep.subr.mxu0 0.0
        %1217 = vmatpush1.msra.mxu0 0.0
        %1218 = vmatprep.subr.mxu0 0.0
        %1219 = vmatpush1.msra.mxu0 0.0
        %1220 = vmatprep.subr.mxu0 0.0
        %1221 = vmatpush1.msra.mxu0 0.0
        %1222 = vmatprep.subr.mxu0 0.0
        %1223 = vmatpush1.msra.mxu0 0.0
        %1224 = vmatprep.subr.mxu0 0.0
        %1225 = vmatpush1.msra.mxu0 0.0
        %1226 = vmatprep.mubr.f32.mxu0 0.0
        %1227 = vmatmul.mubr.f32.gmra.mrb[0].mxu0 %v1067
        %v1228 = vpop.f32.mrb[0].mxu0
        %v1229 = vadd.f32 0.0, %v1228
        %v1230 = vpop.f32.mrb[0].mxu0
        %1231 = vmatprep.mubr.f32.mxu0 0.0
        %1232 = vmatmul.mubr.f32.gmra.mrb[0].mxu0 %v1070
        %v1233 = vpop.f32.mrb[0].mxu0
        %v1234 = vadd.f32 0.0, %v1233
        %v1235 = vpop.f32.mrb[0].mxu0
        %1236 = vmatprep.mubr.f32.mxu0 0.0
        %1237 = vmatmul.mubr.f32.gmra.mrb[0].mxu0 %v1073
        %v1238 = vpop.f32.mrb[0].mxu0
        %v1239 = vadd.f32 0.0, %v1238
        %v1240 = vpop.f32.mrb[0].mxu0
        %1241 = vmatprep.mubr.f32.mxu0 0.0
        %1242 = vmatmul.mubr.f32.gmra.mrb[0].mxu0 %v1076
        %v1243 = vpop.f32.mrb[0].mxu0
        %v1244 = vadd.f32 0.0, %v1243
        %v1245 = vpop.f32.mrb[0].mxu0
        %1246 = vmatprep.mubr.f32.mxu0 0.0
        %1247 = vmatmul.mubr.f32.gmra.mrb[0].mxu0 %v1079
        %v1248 = vpop.f32.mrb[0].mxu0
        %v1249 = vadd.f32 0.0, %v1248
        %v1250 = vpop.f32.mrb[0].mxu0
        %1251 = vmatprep.mubr.f32.mxu0 0.0
        %1252 = vmatmul.mubr.f32.gmra.mrb[0].mxu0 %v1082
        %v1253 = vpop.f32.mrb[0].mxu0
        %v1254 = vadd.f32 0.0, %v1253
        %v1255 = vpop.f32.mrb[0].mxu0
        %1256 = vmatprep.mubr.f32.mxu0 0.0
        %1257 = vmatmul.mubr.f32.gmra.mrb[0].mxu0 %v1085
        %v1258 = vpop.f32.mrb[0].mxu0
        %v1259 = vadd.f32 0.0, %v1258
        %v1260 = vpop.f32.mrb[0].mxu0
        %1261 = vmatprep.mubr.f32.mxu0 0.0
        %1262 = vmatmul.mubr.f32.gmra.mrb[0].mxu0 %v1088
        %v1263 = vpop.f32.mrb[0].mxu0
        %v1264 = vadd.f32 0.0, %v1263
        %v1265 = vpop.f32.mrb[0].mxu0
        %1266 = vmatprep.mubr.f32.mxu0 0.0
        %1267 = vmatmul.mubr.f32.gmra.mrb[0].mxu0 %v1091
        %v1268 = vpop.f32.mrb[0].mxu0
        %v1269 = vadd.f32 0.0, %v1268
        %v1270 = vpop.f32.mrb[0].mxu0
        %1271 = vmatprep.mubr.f32.mxu0 0.0
        %1272 = vmatmul.mubr.f32.gmra.mrb[0].mxu0 %v1094
        %v1273 = vpop.f32.mrb[0].mxu0
        %v1274 = vadd.f32 0.0, %v1273
        %v1275 = vpop.f32.mrb[0].mxu0
        %1276 = vmatprep.mubr.f32.mxu0 0.0
        %1277 = vmatmul.mubr.f32.gmra.mrb[0].mxu0 %v1097
        %v1278 = vpop.f32.mrb[0].mxu0
        %v1279 = vadd.f32 0.0, %v1278
        %v1280 = vpop.f32.mrb[0].mxu0
        %1281 = vmatprep.mubr.f32.mxu0 0.0
        %1282 = vmatmul.mubr.f32.gmra.mrb[0].mxu0 %v1100
        %v1283 = vpop.f32.mrb[0].mxu0
        %v1284 = vadd.f32 0.0, %v1283
        %v1285 = vpop.f32.mrb[0].mxu0
        %1286 = vmatprep.mubr.f32.mxu0 0.0
        %1287 = vmatmul.mubr.f32.gmra.mrb[0].mxu0 %v1103
        %v1288 = vpop.f32.mrb[0].mxu0
        %v1289 = vadd.f32 0.0, %v1288
        %v1290 = vpop.f32.mrb[0].mxu0
        %1291 = vmatprep.mubr.f32.mxu0 0.0
        %1292 = vmatmul.mubr.f32.gmra.mrb[0].mxu0 %v1106
        %v1293 = vpop.f32.mrb[0].mxu0
        %v1294 = vadd.f32 0.0, %v1293
        %v1295 = vpop.f32.mrb[0].mxu0
        %1296 = vmatprep.mubr.f32.mxu0 0.0
        %1297 = vmatmul.mubr.f32.gmra.mrb[0].mxu0 %v1109
        %v1298 = vpop.f32.mrb[0].mxu0
        %v1299 = vadd.f32 0.0, %v1298
        %v1300 = vpop.f32.mrb[0].mxu0
        %1301 = vmatprep.mubr.f32.mxu0 0.0
        %1302 = vmatmul.mubr.f32.gmra.mrb[0].mxu0 %v1112
        %v1303 = vpop.f32.mrb[0].mxu0
        %v1304 = vadd.f32 0.0, %v1303
        %v1305 = vpop.f32.mrb[0].mxu0
        %1306 = vmatprep.mubr.f32.mxu0 0.0
        %1307 = vmatmul.mubr.f32.gmra.mrb[0].mxu0 %v1115
        %v1308 = vpop.f32.mrb[0].mxu0
        %v1309 = vadd.f32 0.0, %v1308
        %v1310 = vpop.f32.mrb[0].mxu0
        %1311 = vmatprep.mubr.f32.mxu0 0.0
        %1312 = vmatmul.mubr.f32.gmra.mrb[0].mxu0 %v1118
        %v1313 = vpop.f32.mrb[0].mxu0
        %v1314 = vadd.f32 0.0, %v1313
        %v1315 = vpop.f32.mrb[0].mxu0
        %1316 = vmatprep.mubr.f32.mxu0 0.0
        %1317 = vmatmul.mubr.f32.gmra.mrb[0].mxu0 %v1121
        %v1318 = vpop.f32.mrb[0].mxu0
        %v1319 = vadd.f32 0.0, %v1318
        %v1320 = vpop.f32.mrb[0].mxu0
        %1321 = vmatprep.mubr.f32.mxu0 0.0
        %1322 = vmatmul.mubr.f32.gmra.mrb[0].mxu0 %v1124
        %v1323 = vpop.f32.mrb[0].mxu0
        %v1324 = vadd.f32 0.0, %v1323
        %v1325 = vpop.f32.mrb[0].mxu0
        %1326 = vmatprep.mubr.f32.mxu0 0.0
        %1327 = vmatmul.mubr.f32.gmra.mrb[0].mxu0 %v1127
        %v1328 = vpop.f32.mrb[0].mxu0
        %v1329 = vadd.f32 0.0, %v1328
        %v1330 = vpop.f32.mrb[0].mxu0
        %1331 = vmatprep.mubr.f32.mxu0 0.0
        %1332 = vmatmul.mubr.f32.gmra.mrb[0].mxu0 %v1130
        %v1333 = vpop.f32.mrb[0].mxu0
        %v1334 = vadd.f32 0.0, %v1333
        %v1335 = vpop.f32.mrb[0].mxu0
        %1336 = vmatprep.mubr.f32.mxu0 0.0
        %1337 = vmatmul.mubr.f32.gmra.mrb[0].mxu0 %v1133
        %v1338 = vpop.f32.mrb[0].mxu0
        %v1339 = vadd.f32 0.0, %v1338
        %v1340 = vpop.f32.mrb[0].mxu0
        %1341 = vmatprep.mubr.f32.mxu0 0.0
        %1342 = vmatmul.mubr.f32.gmra.mrb[0].mxu0 %v1136
        %v1343 = vpop.f32.mrb[0].mxu0
        %v1344 = vadd.f32 0.0, %v1343
        %v1345 = vpop.f32.mrb[0].mxu0
        %1346 = vmatprep.mubr.f32.mxu0 0.0
        %1347 = vmatmul.mubr.f32.gmra.mrb[0].mxu0 %v1139
        %v1348 = vpop.f32.mrb[0].mxu0
        %v1349 = vadd.f32 0.0, %v1348
        %v1350 = vpop.f32.mrb[0].mxu0
        %1351 = vmatprep.mubr.f32.mxu0 0.0
        %1352 = vmatmul.mubr.f32.gmra.mrb[0].mxu0 %v1142
        %v1353 = vpop.f32.mrb[0].mxu0
        %v1354 = vadd.f32 0.0, %v1353
        %v1355 = vpop.f32.mrb[0].mxu0
        %1356 = vmatprep.mubr.f32.mxu0 0.0
        %1357 = vmatmul.mubr.f32.gmra.mrb[0].mxu0 %v1145
        %v1358 = vpop.f32.mrb[0].mxu0
        %v1359 = vadd.f32 0.0, %v1358
        %v1360 = vpop.f32.mrb[0].mxu0
        %1361 = vmatprep.mubr.f32.mxu0 0.0
        %1362 = vmatmul.mubr.f32.gmra.mrb[0].mxu0 %v1148
        %v1363 = vpop.f32.mrb[0].mxu0
        %v1364 = vadd.f32 0.0, %v1363
        %v1365 = vpop.f32.mrb[0].mxu0
        %1366 = vmatprep.mubr.f32.mxu0 0.0
        %1367 = vmatmul.mubr.f32.gmra.mrb[0].mxu0 %v1151
        %v1368 = vpop.f32.mrb[0].mxu0
        %v1369 = vadd.f32 0.0, %v1368
        %v1370 = vpop.f32.mrb[0].mxu0
        %1371 = vmatprep.mubr.f32.mxu0 0.0
        %1372 = vmatmul.mubr.f32.gmra.mrb[0].mxu0 %v1154
        %v1373 = vpop.f32.mrb[0].mxu0
        %v1374 = vadd.f32 0.0, %v1373
        %v1375 = vpop.f32.mrb[0].mxu0
        %1376 = vmatprep.mubr.f32.mxu0 0.0
        %1377 = vmatmul.mubr.f32.gmra.mrb[0].mxu0 %v1157
        %v1378 = vpop.f32.mrb[0].mxu0
        %v1379 = vadd.f32 0.0, %v1378
        %v1380 = vpop.f32.mrb[0].mxu0
        %1381 = vmatprep.mubr.f32.mxu0 0.0
        %1382 = vmatmul.mubr.f32.gmra.mrb[0].mxu0 %v1160
        %v1383 = vpop.f32.mrb[0].mxu0
        %v1384 = vadd.f32 0.0, %v1383
        %v1385 = vpop.f32.mrb[0].mxu0
        %1386 = vdwg.mxu0
        %v1388 = vsel %vm897, %v993, 0
        %v1391 = vsel %vm897, %v994, 0
        %v1394 = vsel %vm897, %v995, 0
        %v1397 = vsel %vm897, %v996, 0
        %v1400 = vsel %vm897, %v997, 0
        %v1403 = vsel %vm897, %v998, 0
        %v1406 = vsel %vm897, %v999, 0
        %v1409 = vsel %vm897, %v1000, 0
        %v1412 = vsel %vm897, %v1001, 0
        %v1415 = vsel %vm897, %v1002, 0
        %v1418 = vsel %vm897, %v1003, 0
        %v1421 = vsel %vm897, %v1004, 0
        %v1424 = vsel %vm897, %v1005, 0
        %v1427 = vsel %vm897, %v1006, 0
        %v1430 = vsel %vm897, %v1007, 0
        %v1433 = vsel %vm897, %v1008, 0
        %v1436 = vsel %vm897, %v1009, 0
        %v1439 = vsel %vm897, %v1010, 0
        %v1442 = vsel %vm897, %v1011, 0
        %v1445 = vsel %vm897, %v1012, 0
        %v1448 = vsel %vm897, %v1013, 0
        %v1451 = vsel %vm897, %v1014, 0
        %v1454 = vsel %vm897, %v1015, 0
        %v1457 = vsel %vm897, %v1016, 0
        %v1460 = vsel %vm897, %v1017, 0
        %v1463 = vsel %vm897, %v1018, 0
        %v1466 = vsel %vm897, %v1019, 0
        %v1469 = vsel %vm897, %v1020, 0
        %v1472 = vsel %vm897, %v1021, 0
        %v1475 = vsel %vm897, %v1022, 0
        %v1478 = vsel %vm897, %v1023, 0
        %v1481 = vsel %vm897, %v1024, 0
        %1483 = vmatprep.subr.mxu0 0.0
        %1484 = vmatpush1.msra.mxu0 %v1025
        %1485 = vmatprep.subr.mxu0 0.0
        %1486 = vmatpush1.msra.mxu0 %v1026
        %1487 = vmatprep.subr.mxu0 0.0
        %1488 = vmatpush1.msra.mxu0 %v1027
        %1489 = vmatprep.subr.mxu0 0.0
        %1490 = vmatpush1.msra.mxu0 %v1028
        %1491 = vmatprep.subr.mxu0 0.0
        %1492 = vmatpush1.msra.mxu0 0.0
        %1493 = vmatprep.subr.mxu0 0.0
        %1494 = vmatpush1.msra.mxu0 0.0
        %1495 = vmatprep.subr.mxu0 0.0
        %1496 = vmatpush1.msra.mxu0 0.0
        %1497 = vmatprep.subr.mxu0 0.0
        %1498 = vmatpush1.msra.mxu0 0.0
        %1499 = vmatprep.subr.mxu0 0.0
        %1500 = vmatpush1.msra.mxu0 0.0
        %1501 = vmatprep.subr.mxu0 0.0
        %1502 = vmatpush1.msra.mxu0 0.0
        %1503 = vmatprep.subr.mxu0 0.0
        %1504 = vmatpush1.msra.mxu0 0.0
        %1505 = vmatprep.subr.mxu0 0.0
        %1506 = vmatpush1.msra.mxu0 0.0
        %1507 = vmatprep.subr.mxu0 0.0
        %1508 = vmatpush1.msra.mxu0 0.0
        %1509 = vmatprep.subr.mxu0 0.0
        %1510 = vmatpush1.msra.mxu0 0.0
        %1511 = vmatprep.subr.mxu0 0.0
        %1512 = vmatpush1.msra.mxu0 0.0
        %1513 = vmatprep.subr.mxu0 0.0
        %1514 = vmatpush1.msra.mxu0 0.0
        %1515 = vmatprep.subr.mxu0 0.0
        %1516 = vmatpush1.msra.mxu0 0.0
        %1517 = vmatprep.subr.mxu0 0.0
        %1518 = vmatpush1.msra.mxu0 0.0
        %1519 = vmatprep.subr.mxu0 0.0
        %1520 = vmatpush1.msra.mxu0 0.0
        %1521 = vmatprep.subr.mxu0 0.0
        %1522 = vmatpush1.msra.mxu0 0.0
        %1523 = vmatprep.subr.mxu0 0.0
        %1524 = vmatpush1.msra.mxu0 0.0
        %1525 = vmatprep.subr.mxu0 0.0
        %1526 = vmatpush1.msra.mxu0 0.0
        %1527 = vmatprep.subr.mxu0 0.0
        %1528 = vmatpush1.msra.mxu0 0.0
        %1529 = vmatprep.subr.mxu0 0.0
        %1530 = vmatpush1.msra.mxu0 0.0
        %1531 = vmatprep.subr.mxu0 0.0
        %1532 = vmatpush1.msra.mxu0 0.0
        %1533 = vmatprep.subr.mxu0 0.0
        %1534 = vmatpush1.msra.mxu0 0.0
        %1535 = vmatprep.subr.mxu0 0.0
        %1536 = vmatpush1.msra.mxu0 0.0
        %1537 = vmatprep.subr.mxu0 0.0
        %1538 = vmatpush1.msra.mxu0 0.0
        %1539 = vmatprep.subr.mxu0 0.0
        %1540 = vmatpush1.msra.mxu0 0.0
        %1541 = vmatprep.subr.mxu0 0.0
        %1542 = vmatpush1.msra.mxu0 0.0
        %1543 = vmatprep.subr.mxu0 0.0
        %1544 = vmatpush1.msra.mxu0 0.0
        %1545 = vmatprep.subr.mxu0 0.0
        %1546 = vmatpush1.msra.mxu0 0.0
        %1547 = vmatprep.mubr.f32.mxu0 0.0
        %1548 = vmatmul.mubr.f32.gmra.mrb[0].mxu0 %v1388
        %v1549 = vpop.f32.mrb[0].mxu0
        %v1550 = vadd.f32 %v1229, %v1549
        %v1551 = vpop.f32.mrb[0].mxu0
        %1552 = vmatprep.mubr.f32.mxu0 0.0
        %1553 = vmatmul.mubr.f32.gmra.mrb[0].mxu0 %v1391
        %v1554 = vpop.f32.mrb[0].mxu0
        %v1555 = vadd.f32 %v1234, %v1554
        %v1556 = vpop.f32.mrb[0].mxu0
        %1557 = vmatprep.mubr.f32.mxu0 0.0
        %1558 = vmatmul.mubr.f32.gmra.mrb[0].mxu0 %v1394
        %v1559 = vpop.f32.mrb[0].mxu0
        %v1560 = vadd.f32 %v1239, %v1559
        %v1561 = vpop.f32.mrb[0].mxu0
        %1562 = vmatprep.mubr.f32.mxu0 0.0
        %1563 = vmatmul.mubr.f32.gmra.mrb[0].mxu0 %v1397
        %v1564 = vpop.f32.mrb[0].mxu0
        %v1565 = vadd.f32 %v1244, %v1564
        %v1566 = vpop.f32.mrb[0].mxu0
        %1567 = vmatprep.mubr.f32.mxu0 0.0
        %1568 = vmatmul.mubr.f32.gmra.mrb[0].mxu0 %v1400
        %v1569 = vpop.f32.mrb[0].mxu0
        %v1570 = vadd.f32 %v1249, %v1569
        %v1571 = vpop.f32.mrb[0].mxu0
        %1572 = vmatprep.mubr.f32.mxu0 0.0
        %1573 = vmatmul.mubr.f32.gmra.mrb[0].mxu0 %v1403
        %v1574 = vpop.f32.mrb[0].mxu0
        %v1575 = vadd.f32 %v1254, %v1574
        %v1576 = vpop.f32.mrb[0].mxu0
        %1577 = vmatprep.mubr.f32.mxu0 0.0
        %1578 = vmatmul.mubr.f32.gmra.mrb[0].mxu0 %v1406
        %v1579 = vpop.f32.mrb[0].mxu0
        %v1580 = vadd.f32 %v1259, %v1579
        %v1581 = vpop.f32.mrb[0].mxu0
        %1582 = vmatprep.mubr.f32.mxu0 0.0
        %1583 = vmatmul.mubr.f32.gmra.mrb[0].mxu0 %v1409
        %v1584 = vpop.f32.mrb[0].mxu0
        %v1585 = vadd.f32 %v1264, %v1584
        %v1586 = vpop.f32.mrb[0].mxu0
        %1587 = vmatprep.mubr.f32.mxu0 0.0
        %1588 = vmatmul.mubr.f32.gmra.mrb[0].mxu0 %v1412
        %v1589 = vpop.f32.mrb[0].mxu0
        %v1590 = vadd.f32 %v1269, %v1589
        %v1591 = vpop.f32.mrb[0].mxu0
        %1592 = vmatprep.mubr.f32.mxu0 0.0
        %1593 = vmatmul.mubr.f32.gmra.mrb[0].mxu0 %v1415
        %v1594 = vpop.f32.mrb[0].mxu0
        %v1595 = vadd.f32 %v1274, %v1594
        %v1596 = vpop.f32.mrb[0].mxu0
        %1597 = vmatprep.mubr.f32.mxu0 0.0
        %1598 = vmatmul.mubr.f32.gmra.mrb[0].mxu0 %v1418
        %v1599 = vpop.f32.mrb[0].mxu0
        %v1600 = vadd.f32 %v1279, %v1599
        %v1601 = vpop.f32.mrb[0].mxu0
        %1602 = vmatprep.mubr.f32.mxu0 0.0
        %1603 = vmatmul.mubr.f32.gmra.mrb[0].mxu0 %v1421
        %v1604 = vpop.f32.mrb[0].mxu0
        %v1605 = vadd.f32 %v1284, %v1604
        %v1606 = vpop.f32.mrb[0].mxu0
        %1607 = vmatprep.mubr.f32.mxu0 0.0
        %1608 = vmatmul.mubr.f32.gmra.mrb[0].mxu0 %v1424
        %v1609 = vpop.f32.mrb[0].mxu0
        %v1610 = vadd.f32 %v1289, %v1609
        %v1611 = vpop.f32.mrb[0].mxu0
        %1612 = vmatprep.mubr.f32.mxu0 0.0
        %1613 = vmatmul.mubr.f32.gmra.mrb[0].mxu0 %v1427
        %v1614 = vpop.f32.mrb[0].mxu0
        %v1615 = vadd.f32 %v1294, %v1614
        %v1616 = vpop.f32.mrb[0].mxu0
        %1617 = vmatprep.mubr.f32.mxu0 0.0
        %1618 = vmatmul.mubr.f32.gmra.mrb[0].mxu0 %v1430
        %v1619 = vpop.f32.mrb[0].mxu0
        %v1620 = vadd.f32 %v1299, %v1619
        %v1621 = vpop.f32.mrb[0].mxu0
        %1622 = vmatprep.mubr.f32.mxu0 0.0
        %1623 = vmatmul.mubr.f32.gmra.mrb[0].mxu0 %v1433
        %v1624 = vpop.f32.mrb[0].mxu0
        %v1625 = vadd.f32 %v1304, %v1624
        %v1626 = vpop.f32.mrb[0].mxu0
        %1627 = vmatprep.mubr.f32.mxu0 0.0
        %1628 = vmatmul.mubr.f32.gmra.mrb[0].mxu0 %v1436
        %v1629 = vpop.f32.mrb[0].mxu0
        %v1630 = vadd.f32 %v1309, %v1629
        %v1631 = vpop.f32.mrb[0].mxu0
        %1632 = vmatprep.mubr.f32.mxu0 0.0
        %1633 = vmatmul.mubr.f32.gmra.mrb[0].mxu0 %v1439
        %v1634 = vpop.f32.mrb[0].mxu0
        %v1635 = vadd.f32 %v1314, %v1634
        %v1636 = vpop.f32.mrb[0].mxu0
        %1637 = vmatprep.mubr.f32.mxu0 0.0
        %1638 = vmatmul.mubr.f32.gmra.mrb[0].mxu0 %v1442
        %v1639 = vpop.f32.mrb[0].mxu0
        %v1640 = vadd.f32 %v1319, %v1639
        %v1641 = vpop.f32.mrb[0].mxu0
        %1642 = vmatprep.mubr.f32.mxu0 0.0
        %1643 = vmatmul.mubr.f32.gmra.mrb[0].mxu0 %v1445
        %v1644 = vpop.f32.mrb[0].mxu0
        %v1645 = vadd.f32 %v1324, %v1644
        %v1646 = vpop.f32.mrb[0].mxu0
        %1647 = vmatprep.mubr.f32.mxu0 0.0
        %1648 = vmatmul.mubr.f32.gmra.mrb[0].mxu0 %v1448
        %v1649 = vpop.f32.mrb[0].mxu0
        %v1650 = vadd.f32 %v1329, %v1649
        %v1651 = vpop.f32.mrb[0].mxu0
        %1652 = vmatprep.mubr.f32.mxu0 0.0
        %1653 = vmatmul.mubr.f32.gmra.mrb[0].mxu0 %v1451
        %v1654 = vpop.f32.mrb[0].mxu0
        %v1655 = vadd.f32 %v1334, %v1654
        %v1656 = vpop.f32.mrb[0].mxu0
        %1657 = vmatprep.mubr.f32.mxu0 0.0
        %1658 = vmatmul.mubr.f32.gmra.mrb[0].mxu0 %v1454
        %v1659 = vpop.f32.mrb[0].mxu0
        %v1660 = vadd.f32 %v1339, %v1659
        %v1661 = vpop.f32.mrb[0].mxu0
        %1662 = vmatprep.mubr.f32.mxu0 0.0
        %1663 = vmatmul.mubr.f32.gmra.mrb[0].mxu0 %v1457
        %v1664 = vpop.f32.mrb[0].mxu0
        %v1665 = vadd.f32 %v1344, %v1664
        %v1666 = vpop.f32.mrb[0].mxu0
        %1667 = vmatprep.mubr.f32.mxu0 0.0
        %1668 = vmatmul.mubr.f32.gmra.mrb[0].mxu0 %v1460
        %v1669 = vpop.f32.mrb[0].mxu0
        %v1670 = vadd.f32 %v1349, %v1669
        %v1671 = vpop.f32.mrb[0].mxu0
        %1672 = vmatprep.mubr.f32.mxu0 0.0
        %1673 = vmatmul.mubr.f32.gmra.mrb[0].mxu0 %v1463
        %v1674 = vpop.f32.mrb[0].mxu0
        %v1675 = vadd.f32 %v1354, %v1674
        %v1676 = vpop.f32.mrb[0].mxu0
        %1677 = vmatprep.mubr.f32.mxu0 0.0
        %1678 = vmatmul.mubr.f32.gmra.mrb[0].mxu0 %v1466
        %v1679 = vpop.f32.mrb[0].mxu0
        %v1680 = vadd.f32 %v1359, %v1679
        %v1681 = vpop.f32.mrb[0].mxu0
        %1682 = vmatprep.mubr.f32.mxu0 0.0
        %1683 = vmatmul.mubr.f32.gmra.mrb[0].mxu0 %v1469
        %v1684 = vpop.f32.mrb[0].mxu0
        %v1685 = vadd.f32 %v1364, %v1684
        %v1686 = vpop.f32.mrb[0].mxu0
        %1687 = vmatprep.mubr.f32.mxu0 0.0
        %1688 = vmatmul.mubr.f32.gmra.mrb[0].mxu0 %v1472
        %v1689 = vpop.f32.mrb[0].mxu0
        %v1690 = vadd.f32 %v1369, %v1689
        %v1691 = vpop.f32.mrb[0].mxu0
        %1692 = vmatprep.mubr.f32.mxu0 0.0
        %1693 = vmatmul.mubr.f32.gmra.mrb[0].mxu0 %v1475
        %v1694 = vpop.f32.mrb[0].mxu0
        %v1695 = vadd.f32 %v1374, %v1694
        %v1696 = vpop.f32.mrb[0].mxu0
        %1697 = vmatprep.mubr.f32.mxu0 0.0
        %1698 = vmatmul.mubr.f32.gmra.mrb[0].mxu0 %v1478
        %v1699 = vpop.f32.mrb[0].mxu0
        %v1700 = vadd.f32 %v1379, %v1699
        %v1701 = vpop.f32.mrb[0].mxu0
        %1702 = vmatprep.mubr.f32.mxu0 0.0
        %1703 = vmatmul.mubr.f32.gmra.mrb[0].mxu0 %v1481
        %v1704 = vpop.f32.mrb[0].mxu0
        %v1705 = vadd.f32 %v1384, %v1704
        %v1706 = vpop.f32.mrb[0].mxu0
        %1707 = vdwg.mxu0
        %v1708 = vld [vmem:[%s992 + $0x2] sm:$0xff]
        %v1709 = vld [vmem:[%s992 + $0xa] sm:$0xff]
        %v1710 = vld [vmem:[%s992 + $0x1a] sm:$0xff]
        %v1711 = vld [vmem:[%s992 + $0x22] sm:$0xff]
        %v1712 = vld [vmem:[%s992 + $0x32] sm:$0xff]
        %v1713 = vld [vmem:[%s992 + $0x3a] sm:$0xff]
        %v1714 = vld [vmem:[%s992 + $0x4a] sm:$0xff]
        %v1715 = vld [vmem:[%s992 + $0x52] sm:$0xff]
        %v1716 = vld [vmem:[%s992 + $0x62] sm:$0xff]
        %v1717 = vld [vmem:[%s992 + $0x6a] sm:$0xff]
        %v1718 = vld [vmem:[%s992 + $0x7a] sm:$0xff]
        %v1719 = vld [vmem:[%s992 + $0x82] sm:$0xff]
        %v1720 = vld [vmem:[%s992 + $0x92] sm:$0xff]
        %v1721 = vld [vmem:[%s992 + $0x9a] sm:$0xff]
        %v1722 = vld [vmem:[%s992 + $0xaa] sm:$0xff]
        %v1723 = vld [vmem:[%s992 + $0xb2] sm:$0xff]
        %v1724 = vld [vmem:[%s992 + $0xc2] sm:$0xff]
        %v1725 = vld [vmem:[%s992 + $0xca] sm:$0xff]
        %v1726 = vld [vmem:[%s992 + $0xda] sm:$0xff]
        %v1727 = vld [vmem:[%s992 + $0xe2] sm:$0xff]
        %v1728 = vld [vmem:[%s992 + $0xf2] sm:$0xff]
        %v1729 = vld [vmem:[%s992 + $0xfa] sm:$0xff]
        %v1730 = vld [vmem:[%s992 + $0x10a] sm:$0xff]
        %v1731 = vld [vmem:[%s992 + $0x112] sm:$0xff]
        %v1732 = vld [vmem:[%s992 + $0x122] sm:$0xff]
        %v1733 = vld [vmem:[%s992 + $0x12a] sm:$0xff]
        %v1734 = vld [vmem:[%s992 + $0x13a] sm:$0xff]
        %v1735 = vld [vmem:[%s992 + $0x142] sm:$0xff]
        %v1736 = vld [vmem:[%s992 + $0x152] sm:$0xff]
        %v1737 = vld [vmem:[%s992 + $0x15a] sm:$0xff]
        %v1738 = vld [vmem:[%s992 + $0x16a] sm:$0xff]
        %v1739 = vld [vmem:[%s992 + $0x172] sm:$0xff]
        %s1740 = scalar_lea.vmem [#allocation9], 32
        %v1741 = vld [vmem:[%s1740] sm:$0xff]
        %v1742 = vld [vmem:[%s1740 + $0x8] sm:$0xff]
        %v1743 = vld [vmem:[%s1740 + $0x10] sm:$0xff]
        %v1744 = vld [vmem:[%s1740 + $0x18] sm:$0xff]
        %v1746 = vsel %vm897, %v1708, 0
        %v1749 = vsel %vm897, %v1709, 0
        %v1752 = vsel %vm897, %v1710, 0
        %v1755 = vsel %vm897, %v1711, 0
        %v1758 = vsel %vm897, %v1712, 0
        %v1761 = vsel %vm897, %v1713, 0
        %v1764 = vsel %vm897, %v1714, 0
        %v1767 = vsel %vm897, %v1715, 0
        %v1770 = vsel %vm897, %v1716, 0
        %v1773 = vsel %vm897, %v1717, 0
        %v1776 = vsel %vm897, %v1718, 0
        %v1779 = vsel %vm897, %v1719, 0
        %v1782 = vsel %vm897, %v1720, 0
        %v1785 = vsel %vm897, %v1721, 0
        %v1788 = vsel %vm897, %v1722, 0
        %v1791 = vsel %vm897, %v1723, 0
        %v1794 = vsel %vm897, %v1724, 0
        %v1797 = vsel %vm897, %v1725, 0
        %v1800 = vsel %vm897, %v1726, 0
        %v1803 = vsel %vm897, %v1727, 0
        %v1806 = vsel %vm897, %v1728, 0
        %v1809 = vsel %vm897, %v1729, 0
        %v1812 = vsel %vm897, %v1730, 0
        %v1815 = vsel %vm897, %v1731, 0
        %v1818 = vsel %vm897, %v1732, 0
        %v1821 = vsel %vm897, %v1733, 0
        %v1824 = vsel %vm897, %v1734, 0
        %v1827 = vsel %vm897, %v1735, 0
        %v1830 = vsel %vm897, %v1736, 0
        %v1833 = vsel %vm897, %v1737, 0
        %v1836 = vsel %vm897, %v1738, 0
        %v1839 = vsel %vm897, %v1739, 0
        %1841 = vmatprep.subr.mxu0 0.0
        %1842 = vmatpush1.msra.mxu0 %v1741
        %1843 = vmatprep.subr.mxu0 0.0
        %1844 = vmatpush1.msra.mxu0 %v1742
        %1845 = vmatprep.subr.mxu0 0.0
        %1846 = vmatpush1.msra.mxu0 %v1743
        %1847 = vmatprep.subr.mxu0 0.0
        %1848 = vmatpush1.msra.mxu0 %v1744
        %1849 = vmatprep.subr.mxu0 0.0
        %1850 = vmatpush1.msra.mxu0 0.0
        %1851 = vmatprep.subr.mxu0 0.0
        %1852 = vmatpush1.msra.mxu0 0.0
        %1853 = vmatprep.subr.mxu0 0.0
        %1854 = vmatpush1.msra.mxu0 0.0
        %1855 = vmatprep.subr.mxu0 0.0
        %1856 = vmatpush1.msra.mxu0 0.0
        %1857 = vmatprep.subr.mxu0 0.0
        %1858 = vmatpush1.msra.mxu0 0.0
        %1859 = vmatprep.subr.mxu0 0.0
        %1860 = vmatpush1.msra.mxu0 0.0
        %1861 = vmatprep.subr.mxu0 0.0
        %1862 = vmatpush1.msra.mxu0 0.0
        %1863 = vmatprep.subr.mxu0 0.0
        %1864 = vmatpush1.msra.mxu0 0.0
        %1865 = vmatprep.subr.mxu0 0.0
        %1866 = vmatpush1.msra.mxu0 0.0
        %1867 = vmatprep.subr.mxu0 0.0
        %1868 = vmatpush1.msra.mxu0 0.0
        %1869 = vmatprep.subr.mxu0 0.0
        %1870 = vmatpush1.msra.mxu0 0.0
        %1871 = vmatprep.subr.mxu0 0.0
        %1872 = vmatpush1.msra.mxu0 0.0
        %1873 = vmatprep.subr.mxu0 0.0
        %1874 = vmatpush1.msra.mxu0 0.0
        %1875 = vmatprep.subr.mxu0 0.0
        %1876 = vmatpush1.msra.mxu0 0.0
        %1877 = vmatprep.subr.mxu0 0.0
        %1878 = vmatpush1.msra.mxu0 0.0
        %1879 = vmatprep.subr.mxu0 0.0
        %1880 = vmatpush1.msra.mxu0 0.0
        %1881 = vmatprep.subr.mxu0 0.0
        %1882 = vmatpush1.msra.mxu0 0.0
        %1883 = vmatprep.subr.mxu0 0.0
        %1884 = vmatpush1.msra.mxu0 0.0
        %1885 = vmatprep.subr.mxu0 0.0
        %1886 = vmatpush1.msra.mxu0 0.0
        %1887 = vmatprep.subr.mxu0 0.0
        %1888 = vmatpush1.msra.mxu0 0.0
        %1889 = vmatprep.subr.mxu0 0.0
        %1890 = vmatpush1.msra.mxu0 0.0
        %1891 = vmatprep.subr.mxu0 0.0
        %1892 = vmatpush1.msra.mxu0 0.0
        %1893 = vmatprep.subr.mxu0 0.0
        %1894 = vmatpush1.msra.mxu0 0.0
        %1895 = vmatprep.subr.mxu0 0.0
        %1896 = vmatpush1.msra.mxu0 0.0
        %1897 = vmatprep.subr.mxu0 0.0
        %1898 = vmatpush1.msra.mxu0 0.0
        %1899 = vmatprep.subr.mxu0 0.0
        %1900 = vmatpush1.msra.mxu0 0.0
        %1901 = vmatprep.subr.mxu0 0.0
        %1902 = vmatpush1.msra.mxu0 0.0
        %1903 = vmatprep.subr.mxu0 0.0
        %1904 = vmatpush1.msra.mxu0 0.0
        %1905 = vmatprep.mubr.f32.mxu0 0.0
        %1906 = vmatmul.mubr.f32.gmra.mrb[0].mxu0 %v1746
        %v1907 = vpop.f32.mrb[0].mxu0
        %v1908 = vadd.f32 0.0, %v1907
        %v1909 = vpop.f32.mrb[0].mxu0
        %1910 = vmatprep.mubr.f32.mxu0 0.0
        %1911 = vmatmul.mubr.f32.gmra.mrb[0].mxu0 %v1749
        %v1912 = vpop.f32.mrb[0].mxu0
        %v1913 = vadd.f32 0.0, %v1912
        %v1914 = vpop.f32.mrb[0].mxu0
        %1915 = vmatprep.mubr.f32.mxu0 0.0
        %1916 = vmatmul.mubr.f32.gmra.mrb[0].mxu0 %v1752
        %v1917 = vpop.f32.mrb[0].mxu0
        %v1918 = vadd.f32 0.0, %v1917
        %v1919 = vpop.f32.mrb[0].mxu0
        %1920 = vmatprep.mubr.f32.mxu0 0.0
        %1921 = vmatmul.mubr.f32.gmra.mrb[0].mxu0 %v1755
        %v1922 = vpop.f32.mrb[0].mxu0
        %v1923 = vadd.f32 0.0, %v1922
        %v1924 = vpop.f32.mrb[0].mxu0
        %1925 = vmatprep.mubr.f32.mxu0 0.0
        %1926 = vmatmul.mubr.f32.gmra.mrb[0].mxu0 %v1758
        %v1927 = vpop.f32.mrb[0].mxu0
        %v1928 = vadd.f32 0.0, %v1927
        %v1929 = vpop.f32.mrb[0].mxu0
        %1930 = vmatprep.mubr.f32.mxu0 0.0
        %1931 = vmatmul.mubr.f32.gmra.mrb[0].mxu0 %v1761
        %v1932 = vpop.f32.mrb[0].mxu0
        %v1933 = vadd.f32 0.0, %v1932
        %v1934 = vpop.f32.mrb[0].mxu0
        %1935 = vmatprep.mubr.f32.mxu0 0.0
        %1936 = vmatmul.mubr.f32.gmra.mrb[0].mxu0 %v1764
        %v1937 = vpop.f32.mrb[0].mxu0
        %v1938 = vadd.f32 0.0, %v1937
        %v1939 = vpop.f32.mrb[0].mxu0
        %1940 = vmatprep.mubr.f32.mxu0 0.0
        %1941 = vmatmul.mubr.f32.gmra.mrb[0].mxu0 %v1767
        %v1942 = vpop.f32.mrb[0].mxu0
        %v1943 = vadd.f32 0.0, %v1942
        %v1944 = vpop.f32.mrb[0].mxu0
        %1945 = vmatprep.mubr.f32.mxu0 0.0
        %1946 = vmatmul.mubr.f32.gmra.mrb[0].mxu0 %v1770
        %v1947 = vpop.f32.mrb[0].mxu0
        %v1948 = vadd.f32 0.0, %v1947
        %v1949 = vpop.f32.mrb[0].mxu0
        %1950 = vmatprep.mubr.f32.mxu0 0.0
        %1951 = vmatmul.mubr.f32.gmra.mrb[0].mxu0 %v1773
        %v1952 = vpop.f32.mrb[0].mxu0
        %v1953 = vadd.f32 0.0, %v1952
        %v1954 = vpop.f32.mrb[0].mxu0
        %1955 = vmatprep.mubr.f32.mxu0 0.0
        %1956 = vmatmul.mubr.f32.gmra.mrb[0].mxu0 %v1776
        %v1957 = vpop.f32.mrb[0].mxu0
        %v1958 = vadd.f32 0.0, %v1957
        %v1959 = vpop.f32.mrb[0].mxu0
        %1960 = vmatprep.mubr.f32.mxu0 0.0
        %1961 = vmatmul.mubr.f32.gmra.mrb[0].mxu0 %v1779
        %v1962 = vpop.f32.mrb[0].mxu0
        %v1963 = vadd.f32 0.0, %v1962
        %v1964 = vpop.f32.mrb[0].mxu0
        %1965 = vmatprep.mubr.f32.mxu0 0.0
        %1966 = vmatmul.mubr.f32.gmra.mrb[0].mxu0 %v1782
        %v1967 = vpop.f32.mrb[0].mxu0
        %v1968 = vadd.f32 0.0, %v1967
        %v1969 = vpop.f32.mrb[0].mxu0
        %1970 = vmatprep.mubr.f32.mxu0 0.0
        %1971 = vmatmul.mubr.f32.gmra.mrb[0].mxu0 %v1785
        %v1972 = vpop.f32.mrb[0].mxu0
        %v1973 = vadd.f32 0.0, %v1972
        %v1974 = vpop.f32.mrb[0].mxu0
        %1975 = vmatprep.mubr.f32.mxu0 0.0
        %1976 = vmatmul.mubr.f32.gmra.mrb[0].mxu0 %v1788
        %v1977 = vpop.f32.mrb[0].mxu0
        %v1978 = vadd.f32 0.0, %v1977
        %v1979 = vpop.f32.mrb[0].mxu0
        %1980 = vmatprep.mubr.f32.mxu0 0.0
        %1981 = vmatmul.mubr.f32.gmra.mrb[0].mxu0 %v1791
        %v1982 = vpop.f32.mrb[0].mxu0
        %v1983 = vadd.f32 0.0, %v1982
        %v1984 = vpop.f32.mrb[0].mxu0
        %1985 = vmatprep.mubr.f32.mxu0 0.0
        %1986 = vmatmul.mubr.f32.gmra.mrb[0].mxu0 %v1794
        %v1987 = vpop.f32.mrb[0].mxu0
        %v1988 = vadd.f32 0.0, %v1987
        %v1989 = vpop.f32.mrb[0].mxu0
        %1990 = vmatprep.mubr.f32.mxu0 0.0
        %1991 = vmatmul.mubr.f32.gmra.mrb[0].mxu0 %v1797
        %v1992 = vpop.f32.mrb[0].mxu0
        %v1993 = vadd.f32 0.0, %v1992
        %v1994 = vpop.f32.mrb[0].mxu0
        %1995 = vmatprep.mubr.f32.mxu0 0.0
        %1996 = vmatmul.mubr.f32.gmra.mrb[0].mxu0 %v1800
        %v1997 = vpop.f32.mrb[0].mxu0
        %v1998 = vadd.f32 0.0, %v1997
        %v1999 = vpop.f32.mrb[0].mxu0
        %2000 = vmatprep.mubr.f32.mxu0 0.0
        %2001 = vmatmul.mubr.f32.gmra.mrb[0].mxu0 %v1803
        %v2002 = vpop.f32.mrb[0].mxu0
        %v2003 = vadd.f32 0.0, %v2002
        %v2004 = vpop.f32.mrb[0].mxu0
        %2005 = vmatprep.mubr.f32.mxu0 0.0
        %2006 = vmatmul.mubr.f32.gmra.mrb[0].mxu0 %v1806
        %v2007 = vpop.f32.mrb[0].mxu0
        %v2008 = vadd.f32 0.0, %v2007
        %v2009 = vpop.f32.mrb[0].mxu0
        %2010 = vmatprep.mubr.f32.mxu0 0.0
        %2011 = vmatmul.mubr.f32.gmra.mrb[0].mxu0 %v1809
        %v2012 = vpop.f32.mrb[0].mxu0
        %v2013 = vadd.f32 0.0, %v2012
        %v2014 = vpop.f32.mrb[0].mxu0
        %2015 = vmatprep.mubr.f32.mxu0 0.0
        %2016 = vmatmul.mubr.f32.gmra.mrb[0].mxu0 %v1812
        %v2017 = vpop.f32.mrb[0].mxu0
        %v2018 = vadd.f32 0.0, %v2017
        %v2019 = vpop.f32.mrb[0].mxu0
        %2020 = vmatprep.mubr.f32.mxu0 0.0
        %2021 = vmatmul.mubr.f32.gmra.mrb[0].mxu0 %v1815
        %v2022 = vpop.f32.mrb[0].mxu0
        %v2023 = vadd.f32 0.0, %v2022
        %v2024 = vpop.f32.mrb[0].mxu0
        %2025 = vmatprep.mubr.f32.mxu0 0.0
        %2026 = vmatmul.mubr.f32.gmra.mrb[0].mxu0 %v1818
        %v2027 = vpop.f32.mrb[0].mxu0
        %v2028 = vadd.f32 0.0, %v2027
        %v2029 = vpop.f32.mrb[0].mxu0
        %2030 = vmatprep.mubr.f32.mxu0 0.0
        %2031 = vmatmul.mubr.f32.gmra.mrb[0].mxu0 %v1821
        %v2032 = vpop.f32.mrb[0].mxu0
        %v2033 = vadd.f32 0.0, %v2032
        %v2034 = vpop.f32.mrb[0].mxu0
        %2035 = vmatprep.mubr.f32.mxu0 0.0
        %2036 = vmatmul.mubr.f32.gmra.mrb[0].mxu0 %v1824
        %v2037 = vpop.f32.mrb[0].mxu0
        %v2038 = vadd.f32 0.0, %v2037
        %v2039 = vpop.f32.mrb[0].mxu0
        %2040 = vmatprep.mubr.f32.mxu0 0.0
        %2041 = vmatmul.mubr.f32.gmra.mrb[0].mxu0 %v1827
        %v2042 = vpop.f32.mrb[0].mxu0
        %v2043 = vadd.f32 0.0, %v2042
        %v2044 = vpop.f32.mrb[0].mxu0
        %2045 = vmatprep.mubr.f32.mxu0 0.0
        %2046 = vmatmul.mubr.f32.gmra.mrb[0].mxu0 %v1830
        %v2047 = vpop.f32.mrb[0].mxu0
        %v2048 = vadd.f32 0.0, %v2047
        %v2049 = vpop.f32.mrb[0].mxu0
        %2050 = vmatprep.mubr.f32.mxu0 0.0
        %2051 = vmatmul.mubr.f32.gmra.mrb[0].mxu0 %v1833
        %v2052 = vpop.f32.mrb[0].mxu0
        %v2053 = vadd.f32 0.0, %v2052
        %v2054 = vpop.f32.mrb[0].mxu0
        %2055 = vmatprep.mubr.f32.mxu0 0.0
        %2056 = vmatmul.mubr.f32.gmra.mrb[0].mxu0 %v1836
        %v2057 = vpop.f32.mrb[0].mxu0
        %v2058 = vadd.f32 0.0, %v2057
        %v2059 = vpop.f32.mrb[0].mxu0
        %2060 = vmatprep.mubr.f32.mxu0 0.0
        %2061 = vmatmul.mubr.f32.gmra.mrb[0].mxu0 %v1839
        %v2062 = vpop.f32.mrb[0].mxu0
        %v2063 = vadd.f32 0.0, %v2062
        %v2064 = vpop.f32.mrb[0].mxu0
        %2065 = vdwg.mxu0
        %v2066 = vadd.f32 %v1550, %v1908
        %v2067 = vadd.f32 %v1555, %v1913
        %v2068 = vadd.f32 %v1560, %v1918
        %v2069 = vadd.f32 %v1565, %v1923
        %v2070 = vadd.f32 %v1570, %v1928
        %v2071 = vadd.f32 %v1575, %v1933
        %v2072 = vadd.f32 %v1580, %v1938
        %v2073 = vadd.f32 %v1585, %v1943
        %v2074 = vadd.f32 %v1590, %v1948
        %v2075 = vadd.f32 %v1595, %v1953
        %v2076 = vadd.f32 %v1600, %v1958
        %v2077 = vadd.f32 %v1605, %v1963
        %v2078 = vadd.f32 %v1610, %v1968
        %v2079 = vadd.f32 %v1615, %v1973
        %v2080 = vadd.f32 %v1620, %v1978
        %v2081 = vadd.f32 %v1625, %v1983
        %v2082 = vadd.f32 %v1630, %v1988
        %v2083 = vadd.f32 %v1635, %v1993
        %v2084 = vadd.f32 %v1640, %v1998
        %v2085 = vadd.f32 %v1645, %v2003
        %v2086 = vadd.f32 %v1650, %v2008
        %v2087 = vadd.f32 %v1655, %v2013
        %v2088 = vadd.f32 %v1660, %v2018
        %v2089 = vadd.f32 %v1665, %v2023
        %v2090 = vadd.f32 %v1670, %v2028
        %v2091 = vadd.f32 %v1675, %v2033
        %v2092 = vadd.f32 %v1680, %v2038
        %v2093 = vadd.f32 %v1685, %v2043
        %v2094 = vadd.f32 %v1690, %v2048
        %v2095 = vadd.f32 %v1695, %v2053
        %v2096 = vadd.f32 %v1700, %v2058
        %v2097 = vadd.f32 %v1705, %v2063
        %v2098 = vld [vmem:[#allocation2 + $0x2] sm:$0xff]
        %v2099 = vld [vmem:[#allocation2 + $0xa] sm:$0xff]
        %v2100 = vld [vmem:[#allocation2 + $0x1a] sm:$0xff]
        %v2101 = vld [vmem:[#allocation2 + $0x22] sm:$0xff]
        %v2102 = vld [vmem:[#allocation2 + $0x32] sm:$0xff]
        %v2103 = vld [vmem:[#allocation2 + $0x3a] sm:$0xff]
        %v2104 = vld [vmem:[#allocation2 + $0x4a] sm:$0xff]
        %v2105 = vld [vmem:[#allocation2 + $0x52] sm:$0xff]
        %v2106 = vld [vmem:[#allocation2 + $0x62] sm:$0xff]
        %v2107 = vld [vmem:[#allocation2 + $0x6a] sm:$0xff]
        %v2108 = vld [vmem:[#allocation2 + $0x7a] sm:$0xff]
        %v2109 = vld [vmem:[#allocation2 + $0x82] sm:$0xff]
        %v2110 = vld [vmem:[#allocation2 + $0x92] sm:$0xff]
        %v2111 = vld [vmem:[#allocation2 + $0x9a] sm:$0xff]
        %v2112 = vld [vmem:[#allocation2 + $0xaa] sm:$0xff]
        %v2113 = vld [vmem:[#allocation2 + $0xb2] sm:$0xff]
        %v2114 = vld [vmem:[#allocation2 + $0xc2] sm:$0xff]
        %v2115 = vld [vmem:[#allocation2 + $0xca] sm:$0xff]
        %v2116 = vld [vmem:[#allocation2 + $0xda] sm:$0xff]
        %v2117 = vld [vmem:[#allocation2 + $0xe2] sm:$0xff]
        %v2118 = vld [vmem:[#allocation2 + $0xf2] sm:$0xff]
        %v2119 = vld [vmem:[#allocation2 + $0xfa] sm:$0xff]
        %v2120 = vld [vmem:[#allocation2 + $0x10a] sm:$0xff]
        %v2121 = vld [vmem:[#allocation2 + $0x112] sm:$0xff]
        %v2122 = vld [vmem:[#allocation2 + $0x122] sm:$0xff]
        %v2123 = vld [vmem:[#allocation2 + $0x12a] sm:$0xff]
        %v2124 = vld [vmem:[#allocation2 + $0x13a] sm:$0xff]
        %v2125 = vld [vmem:[#allocation2 + $0x142] sm:$0xff]
        %v2126 = vld [vmem:[#allocation2 + $0x152] sm:$0xff]
        %v2127 = vld [vmem:[#allocation2 + $0x15a] sm:$0xff]
        %v2128 = vld [vmem:[#allocation2 + $0x16a] sm:$0xff]
        %v2129 = vld [vmem:[#allocation2 + $0x172] sm:$0xff]
        %s2130 = scalar_lea.vmem [#allocation9], 320
        %v2131 = vld [vmem:[%s2130] sm:$0xff]
        %v2132 = vld [vmem:[%s2130 + $0x8] sm:$0xff]
        %v2133 = vld [vmem:[%s2130 + $0x10] sm:$0xff]
        %v2134 = vld [vmem:[%s2130 + $0x18] sm:$0xff]
        %v2136 = vsel %vm897, %v2098, 0
        %v2139 = vsel %vm897, %v2099, 0
        %v2142 = vsel %vm897, %v2100, 0
        %v2145 = vsel %vm897, %v2101, 0
        %v2148 = vsel %vm897, %v2102, 0
        %v2151 = vsel %vm897, %v2103, 0
        %v2154 = vsel %vm897, %v2104, 0
        %v2157 = vsel %vm897, %v2105, 0
        %v2160 = vsel %vm897, %v2106, 0
        %v2163 = vsel %vm897, %v2107, 0
        %v2166 = vsel %vm897, %v2108, 0
        %v2169 = vsel %vm897, %v2109, 0
        %v2172 = vsel %vm897, %v2110, 0
        %v2175 = vsel %vm897, %v2111, 0
        %v2178 = vsel %vm897, %v2112, 0
        %v2181 = vsel %vm897, %v2113, 0
        %v2184 = vsel %vm897, %v2114, 0
        %v2187 = vsel %vm897, %v2115, 0
        %v2190 = vsel %vm897, %v2116, 0
        %v2193 = vsel %vm897, %v2117, 0
        %v2196 = vsel %vm897, %v2118, 0
        %v2199 = vsel %vm897, %v2119, 0
        %v2202 = vsel %vm897, %v2120, 0
        %v2205 = vsel %vm897, %v2121, 0
        %v2208 = vsel %vm897, %v2122, 0
        %v2211 = vsel %vm897, %v2123, 0
        %v2214 = vsel %vm897, %v2124, 0
        %v2217 = vsel %vm897, %v2125, 0
        %v2220 = vsel %vm897, %v2126, 0
        %v2223 = vsel %vm897, %v2127, 0
        %v2226 = vsel %vm897, %v2128, 0
        %v2229 = vsel %vm897, %v2129, 0
        %2231 = vmatprep.subr.mxu0 0.0
        %2232 = vmatpush1.msra.mxu0 %v2131
        %2233 = vmatprep.subr.mxu0 0.0
        %2234 = vmatpush1.msra.mxu0 %v2132
        %2235 = vmatprep.subr.mxu0 0.0
        %2236 = vmatpush1.msra.mxu0 %v2133
        %2237 = vmatprep.subr.mxu0 0.0
        %2238 = vmatpush1.msra.mxu0 %v2134
        %2239 = vmatprep.subr.mxu0 0.0
        %2240 = vmatpush1.msra.mxu0 0.0
        %2241 = vmatprep.subr.mxu0 0.0
        %2242 = vmatpush1.msra.mxu0 0.0
        %2243 = vmatprep.subr.mxu0 0.0
        %2244 = vmatpush1.msra.mxu0 0.0
        %2245 = vmatprep.subr.mxu0 0.0
        %2246 = vmatpush1.msra.mxu0 0.0
        %2247 = vmatprep.subr.mxu0 0.0
        %2248 = vmatpush1.msra.mxu0 0.0
        %2249 = vmatprep.subr.mxu0 0.0
        %2250 = vmatpush1.msra.mxu0 0.0
        %2251 = vmatprep.subr.mxu0 0.0
        %2252 = vmatpush1.msra.mxu0 0.0
        %2253 = vmatprep.subr.mxu0 0.0
        %2254 = vmatpush1.msra.mxu0 0.0
        %2255 = vmatprep.subr.mxu0 0.0
        %2256 = vmatpush1.msra.mxu0 0.0
        %2257 = vmatprep.subr.mxu0 0.0
        %2258 = vmatpush1.msra.mxu0 0.0
        %2259 = vmatprep.subr.mxu0 0.0
        %2260 = vmatpush1.msra.mxu0 0.0
        %2261 = vmatprep.subr.mxu0 0.0
        %2262 = vmatpush1.msra.mxu0 0.0
        %2263 = vmatprep.subr.mxu0 0.0
        %2264 = vmatpush1.msra.mxu0 0.0
        %2265 = vmatprep.subr.mxu0 0.0
        %2266 = vmatpush1.msra.mxu0 0.0
        %2267 = vmatprep.subr.mxu0 0.0
        %2268 = vmatpush1.msra.mxu0 0.0
        %2269 = vmatprep.subr.mxu0 0.0
        %2270 = vmatpush1.msra.mxu0 0.0
        %2271 = vmatprep.subr.mxu0 0.0
        %2272 = vmatpush1.msra.mxu0 0.0
        %2273 = vmatprep.subr.mxu0 0.0
        %2274 = vmatpush1.msra.mxu0 0.0
        %2275 = vmatprep.subr.mxu0 0.0
        %2276 = vmatpush1.msra.mxu0 0.0
        %2277 = vmatprep.subr.mxu0 0.0
        %2278 = vmatpush1.msra.mxu0 0.0
        %2279 = vmatprep.subr.mxu0 0.0
        %2280 = vmatpush1.msra.mxu0 0.0
        %2281 = vmatprep.subr.mxu0 0.0
        %2282 = vmatpush1.msra.mxu0 0.0
        %2283 = vmatprep.subr.mxu0 0.0
        %2284 = vmatpush1.msra.mxu0 0.0
        %2285 = vmatprep.subr.mxu0 0.0
        %2286 = vmatpush1.msra.mxu0 0.0
        %2287 = vmatprep.subr.mxu0 0.0
        %2288 = vmatpush1.msra.mxu0 0.0
        %2289 = vmatprep.subr.mxu0 0.0
        %2290 = vmatpush1.msra.mxu0 0.0
        %2291 = vmatprep.subr.mxu0 0.0
        %2292 = vmatpush1.msra.mxu0 0.0
        %2293 = vmatprep.subr.mxu0 0.0
        %2294 = vmatpush1.msra.mxu0 0.0
        %2295 = vmatprep.mubr.f32.mxu0 0.0
        %2296 = vmatmul.mubr.f32.gmra.mrb[0].mxu0 %v2136
        %v2297 = vpop.f32.mrb[0].mxu0
        %v2298 = vadd.f32 0.0, %v2297
        %v2299 = vpop.f32.mrb[0].mxu0
        %2300 = vmatprep.mubr.f32.mxu0 0.0
        %2301 = vmatmul.mubr.f32.gmra.mrb[0].mxu0 %v2139
        %v2302 = vpop.f32.mrb[0].mxu0
        %v2303 = vadd.f32 0.0, %v2302
        %v2304 = vpop.f32.mrb[0].mxu0
        %2305 = vmatprep.mubr.f32.mxu0 0.0
        %2306 = vmatmul.mubr.f32.gmra.mrb[0].mxu0 %v2142
        %v2307 = vpop.f32.mrb[0].mxu0
        %v2308 = vadd.f32 0.0, %v2307
        %v2309 = vpop.f32.mrb[0].mxu0
        %2310 = vmatprep.mubr.f32.mxu0 0.0
        %2311 = vmatmul.mubr.f32.gmra.mrb[0].mxu0 %v2145
        %v2312 = vpop.f32.mrb[0].mxu0
        %v2313 = vadd.f32 0.0, %v2312
        %v2314 = vpop.f32.mrb[0].mxu0
        %2315 = vmatprep.mubr.f32.mxu0 0.0
        %2316 = vmatmul.mubr.f32.gmra.mrb[0].mxu0 %v2148
        %v2317 = vpop.f32.mrb[0].mxu0
        %v2318 = vadd.f32 0.0, %v2317
        %v2319 = vpop.f32.mrb[0].mxu0
        %2320 = vmatprep.mubr.f32.mxu0 0.0
        %2321 = vmatmul.mubr.f32.gmra.mrb[0].mxu0 %v2151
        %v2322 = vpop.f32.mrb[0].mxu0
        %v2323 = vadd.f32 0.0, %v2322
        %v2324 = vpop.f32.mrb[0].mxu0
        %2325 = vmatprep.mubr.f32.mxu0 0.0
        %2326 = vmatmul.mubr.f32.gmra.mrb[0].mxu0 %v2154
        %v2327 = vpop.f32.mrb[0].mxu0
        %v2328 = vadd.f32 0.0, %v2327
        %v2329 = vpop.f32.mrb[0].mxu0
        %2330 = vmatprep.mubr.f32.mxu0 0.0
        %2331 = vmatmul.mubr.f32.gmra.mrb[0].mxu0 %v2157
        %v2332 = vpop.f32.mrb[0].mxu0
        %v2333 = vadd.f32 0.0, %v2332
        %v2334 = vpop.f32.mrb[0].mxu0
        %2335 = vmatprep.mubr.f32.mxu0 0.0
        %2336 = vmatmul.mubr.f32.gmra.mrb[0].mxu0 %v2160
        %v2337 = vpop.f32.mrb[0].mxu0
        %v2338 = vadd.f32 0.0, %v2337
        %v2339 = vpop.f32.mrb[0].mxu0
        %2340 = vmatprep.mubr.f32.mxu0 0.0
        %2341 = vmatmul.mubr.f32.gmra.mrb[0].mxu0 %v2163
        %v2342 = vpop.f32.mrb[0].mxu0
        %v2343 = vadd.f32 0.0, %v2342
        %v2344 = vpop.f32.mrb[0].mxu0
        %2345 = vmatprep.mubr.f32.mxu0 0.0
        %2346 = vmatmul.mubr.f32.gmra.mrb[0].mxu0 %v2166
        %v2347 = vpop.f32.mrb[0].mxu0
        %v2348 = vadd.f32 0.0, %v2347
        %v2349 = vpop.f32.mrb[0].mxu0
        %2350 = vmatprep.mubr.f32.mxu0 0.0
        %2351 = vmatmul.mubr.f32.gmra.mrb[0].mxu0 %v2169
        %v2352 = vpop.f32.mrb[0].mxu0
        %v2353 = vadd.f32 0.0, %v2352
        %v2354 = vpop.f32.mrb[0].mxu0
        %2355 = vmatprep.mubr.f32.mxu0 0.0
        %2356 = vmatmul.mubr.f32.gmra.mrb[0].mxu0 %v2172
        %v2357 = vpop.f32.mrb[0].mxu0
        %v2358 = vadd.f32 0.0, %v2357
        %v2359 = vpop.f32.mrb[0].mxu0
        %2360 = vmatprep.mubr.f32.mxu0 0.0
        %2361 = vmatmul.mubr.f32.gmra.mrb[0].mxu0 %v2175
        %v2362 = vpop.f32.mrb[0].mxu0
        %v2363 = vadd.f32 0.0, %v2362
        %v2364 = vpop.f32.mrb[0].mxu0
        %2365 = vmatprep.mubr.f32.mxu0 0.0
        %2366 = vmatmul.mubr.f32.gmra.mrb[0].mxu0 %v2178
        %v2367 = vpop.f32.mrb[0].mxu0
        %v2368 = vadd.f32 0.0, %v2367
        %v2369 = vpop.f32.mrb[0].mxu0
        %2370 = vmatprep.mubr.f32.mxu0 0.0
        %2371 = vmatmul.mubr.f32.gmra.mrb[0].mxu0 %v2181
        %v2372 = vpop.f32.mrb[0].mxu0
        %v2373 = vadd.f32 0.0, %v2372
        %v2374 = vpop.f32.mrb[0].mxu0
        %2375 = vmatprep.mubr.f32.mxu0 0.0
        %2376 = vmatmul.mubr.f32.gmra.mrb[0].mxu0 %v2184
        %v2377 = vpop.f32.mrb[0].mxu0
        %v2378 = vadd.f32 0.0, %v2377
        %v2379 = vpop.f32.mrb[0].mxu0
        %2380 = vmatprep.mubr.f32.mxu0 0.0
        %2381 = vmatmul.mubr.f32.gmra.mrb[0].mxu0 %v2187
        %v2382 = vpop.f32.mrb[0].mxu0
        %v2383 = vadd.f32 0.0, %v2382
        %v2384 = vpop.f32.mrb[0].mxu0
        %2385 = vmatprep.mubr.f32.mxu0 0.0
        %2386 = vmatmul.mubr.f32.gmra.mrb[0].mxu0 %v2190
        %v2387 = vpop.f32.mrb[0].mxu0
        %v2388 = vadd.f32 0.0, %v2387
        %v2389 = vpop.f32.mrb[0].mxu0
        %2390 = vmatprep.mubr.f32.mxu0 0.0
        %2391 = vmatmul.mubr.f32.gmra.mrb[0].mxu0 %v2193
        %v2392 = vpop.f32.mrb[0].mxu0
        %v2393 = vadd.f32 0.0, %v2392
        %v2394 = vpop.f32.mrb[0].mxu0
        %2395 = vmatprep.mubr.f32.mxu0 0.0
        %2396 = vmatmul.mubr.f32.gmra.mrb[0].mxu0 %v2196
        %v2397 = vpop.f32.mrb[0].mxu0
        %v2398 = vadd.f32 0.0, %v2397
        %v2399 = vpop.f32.mrb[0].mxu0
        %2400 = vmatprep.mubr.f32.mxu0 0.0
        %2401 = vmatmul.mubr.f32.gmra.mrb[0].mxu0 %v2199
        %v2402 = vpop.f32.mrb[0].mxu0
        %v2403 = vadd.f32 0.0, %v2402
        %v2404 = vpop.f32.mrb[0].mxu0
        %2405 = vmatprep.mubr.f32.mxu0 0.0
        %2406 = vmatmul.mubr.f32.gmra.mrb[0].mxu0 %v2202
        %v2407 = vpop.f32.mrb[0].mxu0
        %v2408 = vadd.f32 0.0, %v2407
        %v2409 = vpop.f32.mrb[0].mxu0
        %2410 = vmatprep.mubr.f32.mxu0 0.0
        %2411 = vmatmul.mubr.f32.gmra.mrb[0].mxu0 %v2205
        %v2412 = vpop.f32.mrb[0].mxu0
        %v2413 = vadd.f32 0.0, %v2412
        %v2414 = vpop.f32.mrb[0].mxu0
        %2415 = vmatprep.mubr.f32.mxu0 0.0
        %2416 = vmatmul.mubr.f32.gmra.mrb[0].mxu0 %v2208
        %v2417 = vpop.f32.mrb[0].mxu0
        %v2418 = vadd.f32 0.0, %v2417
        %v2419 = vpop.f32.mrb[0].mxu0
        %2420 = vmatprep.mubr.f32.mxu0 0.0
        %2421 = vmatmul.mubr.f32.gmra.mrb[0].mxu0 %v2211
        %v2422 = vpop.f32.mrb[0].mxu0
        %v2423 = vadd.f32 0.0, %v2422
        %v2424 = vpop.f32.mrb[0].mxu0
        %2425 = vmatprep.mubr.f32.mxu0 0.0
        %2426 = vmatmul.mubr.f32.gmra.mrb[0].mxu0 %v2214
        %v2427 = vpop.f32.mrb[0].mxu0
        %v2428 = vadd.f32 0.0, %v2427
        %v2429 = vpop.f32.mrb[0].mxu0
        %2430 = vmatprep.mubr.f32.mxu0 0.0
        %2431 = vmatmul.mubr.f32.gmra.mrb[0].mxu0 %v2217
        %v2432 = vpop.f32.mrb[0].mxu0
        %v2433 = vadd.f32 0.0, %v2432
        %v2434 = vpop.f32.mrb[0].mxu0
        %2435 = vmatprep.mubr.f32.mxu0 0.0
        %2436 = vmatmul.mubr.f32.gmra.mrb[0].mxu0 %v2220
        %v2437 = vpop.f32.mrb[0].mxu0
        %v2438 = vadd.f32 0.0, %v2437
        %v2439 = vpop.f32.mrb[0].mxu0
        %2440 = vmatprep.mubr.f32.mxu0 0.0
        %2441 = vmatmul.mubr.f32.gmra.mrb[0].mxu0 %v2223
        %v2442 = vpop.f32.mrb[0].mxu0
        %v2443 = vadd.f32 0.0, %v2442
        %v2444 = vpop.f32.mrb[0].mxu0
        %2445 = vmatprep.mubr.f32.mxu0 0.0
        %2446 = vmatmul.mubr.f32.gmra.mrb[0].mxu0 %v2226
        %v2447 = vpop.f32.mrb[0].mxu0
        %v2448 = vadd.f32 0.0, %v2447
        %v2449 = vpop.f32.mrb[0].mxu0
        %2450 = vmatprep.mubr.f32.mxu0 0.0
        %2451 = vmatmul.mubr.f32.gmra.mrb[0].mxu0 %v2229
        %v2452 = vpop.f32.mrb[0].mxu0
        %v2453 = vadd.f32 0.0, %v2452
        %v2454 = vpop.f32.mrb[0].mxu0
        %2455 = vdwg.mxu0
        %v2456 = vadd.f32 %v2066, %v2298
        %v2457 = vadd.f32 %v2067, %v2303
        %v2458 = vadd.f32 %v2068, %v2308
        %v2459 = vadd.f32 %v2069, %v2313
        %v2460 = vadd.f32 %v2070, %v2318
        %v2461 = vadd.f32 %v2071, %v2323
        %v2462 = vadd.f32 %v2072, %v2328
        %v2463 = vadd.f32 %v2073, %v2333
        %v2464 = vadd.f32 %v2074, %v2338
        %v2465 = vadd.f32 %v2075, %v2343
        %v2466 = vadd.f32 %v2076, %v2348
        %v2467 = vadd.f32 %v2077, %v2353
        %v2468 = vadd.f32 %v2078, %v2358
        %v2469 = vadd.f32 %v2079, %v2363
        %v2470 = vadd.f32 %v2080, %v2368
        %v2471 = vadd.f32 %v2081, %v2373
        %v2472 = vadd.f32 %v2082, %v2378
        %v2473 = vadd.f32 %v2083, %v2383
        %v2474 = vadd.f32 %v2084, %v2388
        %v2475 = vadd.f32 %v2085, %v2393
        %v2476 = vadd.f32 %v2086, %v2398
        %v2477 = vadd.f32 %v2087, %v2403
        %v2478 = vadd.f32 %v2088, %v2408
        %v2479 = vadd.f32 %v2089, %v2413
        %v2480 = vadd.f32 %v2090, %v2418
        %v2481 = vadd.f32 %v2091, %v2423
        %v2482 = vadd.f32 %v2092, %v2428
        %v2483 = vadd.f32 %v2093, %v2433
        %v2484 = vadd.f32 %v2094, %v2438
        %v2485 = vadd.f32 %v2095, %v2443
        %v2486 = vadd.f32 %v2096, %v2448
        %v2487 = vadd.f32 %v2097, %v2453
        %v2488 = vld [vmem:[%s992 + $0x3] sm:$0xff]
        %v2489 = vld [vmem:[%s992 + $0xb] sm:$0xff]
        %v2490 = vld [vmem:[%s992 + $0x1b] sm:$0xff]
        %v2491 = vld [vmem:[%s992 + $0x23] sm:$0xff]
        %v2492 = vld [vmem:[%s992 + $0x33] sm:$0xff]
        %v2493 = vld [vmem:[%s992 + $0x3b] sm:$0xff]
        %v2494 = vld [vmem:[%s992 + $0x4b] sm:$0xff]
        %v2495 = vld [vmem:[%s992 + $0x53] sm:$0xff]
        %v2496 = vld [vmem:[%s992 + $0x63] sm:$0xff]
        %v2497 = vld [vmem:[%s992 + $0x6b] sm:$0xff]
        %v2498 = vld [vmem:[%s992 + $0x7b] sm:$0xff]
        %v2499 = vld [vmem:[%s992 + $0x83] sm:$0xff]
        %v2500 = vld [vmem:[%s992 + $0x93] sm:$0xff]
        %v2501 = vld [vmem:[%s992 + $0x9b] sm:$0xff]
        %v2502 = vld [vmem:[%s992 + $0xab] sm:$0xff]
        %v2503 = vld [vmem:[%s992 + $0xb3] sm:$0xff]
        %v2504 = vld [vmem:[%s992 + $0xc3] sm:$0xff]
        %v2505 = vld [vmem:[%s992 + $0xcb] sm:$0xff]
        %v2506 = vld [vmem:[%s992 + $0xdb] sm:$0xff]
        %v2507 = vld [vmem:[%s992 + $0xe3] sm:$0xff]
        %v2508 = vld [vmem:[%s992 + $0xf3] sm:$0xff]
        %v2509 = vld [vmem:[%s992 + $0xfb] sm:$0xff]
        %v2510 = vld [vmem:[%s992 + $0x10b] sm:$0xff]
        %v2511 = vld [vmem:[%s992 + $0x113] sm:$0xff]
        %v2512 = vld [vmem:[%s992 + $0x123] sm:$0xff]
        %v2513 = vld [vmem:[%s992 + $0x12b] sm:$0xff]
        %v2514 = vld [vmem:[%s992 + $0x13b] sm:$0xff]
        %v2515 = vld [vmem:[%s992 + $0x143] sm:$0xff]
        %v2516 = vld [vmem:[%s992 + $0x153] sm:$0xff]
        %v2517 = vld [vmem:[%s992 + $0x15b] sm:$0xff]
        %v2518 = vld [vmem:[%s992 + $0x16b] sm:$0xff]
        %v2519 = vld [vmem:[%s992 + $0x173] sm:$0xff]
        %s2520 = scalar_lea.vmem [#allocation9], 64
        %v2521 = vld [vmem:[%s2520] sm:$0xff]
        %v2522 = vld [vmem:[%s2520 + $0x8] sm:$0xff]
        %v2523 = vld [vmem:[%s2520 + $0x10] sm:$0xff]
        %v2524 = vld [vmem:[%s2520 + $0x18] sm:$0xff]
        %v2526 = vsel %vm897, %v2488, 0
        %v2529 = vsel %vm897, %v2489, 0
        %v2532 = vsel %vm897, %v2490, 0
        %v2535 = vsel %vm897, %v2491, 0
        %v2538 = vsel %vm897, %v2492, 0
        %v2541 = vsel %vm897, %v2493, 0
        %v2544 = vsel %vm897, %v2494, 0
        %v2547 = vsel %vm897, %v2495, 0
        %v2550 = vsel %vm897, %v2496, 0
        %v2553 = vsel %vm897, %v2497, 0
        %v2556 = vsel %vm897, %v2498, 0
        %v2559 = vsel %vm897, %v2499, 0
        %v2562 = vsel %vm897, %v2500, 0
        %v2565 = vsel %vm897, %v2501, 0
        %v2568 = vsel %vm897, %v2502, 0
        %v2571 = vsel %vm897, %v2503, 0
        %v2574 = vsel %vm897, %v2504, 0
        %v2577 = vsel %vm897, %v2505, 0
        %v2580 = vsel %vm897, %v2506, 0
        %v2583 = vsel %vm897, %v2507, 0
        %v2586 = vsel %vm897, %v2508, 0
        %v2589 = vsel %vm897, %v2509, 0
        %v2592 = vsel %vm897, %v2510, 0
        %v2595 = vsel %vm897, %v2511, 0
        %v2598 = vsel %vm897, %v2512, 0
        %v2601 = vsel %vm897, %v2513, 0
        %v2604 = vsel %vm897, %v2514, 0
        %v2607 = vsel %vm897, %v2515, 0
        %v2610 = vsel %vm897, %v2516, 0
        %v2613 = vsel %vm897, %v2517, 0
        %v2616 = vsel %vm897, %v2518, 0
        %v2619 = vsel %vm897, %v2519, 0
        %2621 = vmatprep.subr.mxu0 0.0
        %2622 = vmatpush1.msra.mxu0 %v2521
        %2623 = vmatprep.subr.mxu0 0.0
        %2624 = vmatpush1.msra.mxu0 %v2522
        %2625 = vmatprep.subr.mxu0 0.0
        %2626 = vmatpush1.msra.mxu0 %v2523
        %2627 = vmatprep.subr.mxu0 0.0
        %2628 = vmatpush1.msra.mxu0 %v2524
        %2629 = vmatprep.subr.mxu0 0.0
        %2630 = vmatpush1.msra.mxu0 0.0
        %2631 = vmatprep.subr.mxu0 0.0
        %2632 = vmatpush1.msra.mxu0 0.0
        %2633 = vmatprep.subr.mxu0 0.0
        %2634 = vmatpush1.msra.mxu0 0.0
        %2635 = vmatprep.subr.mxu0 0.0
        %2636 = vmatpush1.msra.mxu0 0.0
        %2637 = vmatprep.subr.mxu0 0.0
        %2638 = vmatpush1.msra.mxu0 0.0
        %2639 = vmatprep.subr.mxu0 0.0
        %2640 = vmatpush1.msra.mxu0 0.0
        %2641 = vmatprep.subr.mxu0 0.0
        %2642 = vmatpush1.msra.mxu0 0.0
        %2643 = vmatprep.subr.mxu0 0.0
        %2644 = vmatpush1.msra.mxu0 0.0
        %2645 = vmatprep.subr.mxu0 0.0
        %2646 = vmatpush1.msra.mxu0 0.0
        %2647 = vmatprep.subr.mxu0 0.0
        %2648 = vmatpush1.msra.mxu0 0.0
        %2649 = vmatprep.subr.mxu0 0.0
        %2650 = vmatpush1.msra.mxu0 0.0
        %2651 = vmatprep.subr.mxu0 0.0
        %2652 = vmatpush1.msra.mxu0 0.0
        %2653 = vmatprep.subr.mxu0 0.0
        %2654 = vmatpush1.msra.mxu0 0.0
        %2655 = vmatprep.subr.mxu0 0.0
        %2656 = vmatpush1.msra.mxu0 0.0
        %2657 = vmatprep.subr.mxu0 0.0
        %2658 = vmatpush1.msra.mxu0 0.0
        %2659 = vmatprep.subr.mxu0 0.0
        %2660 = vmatpush1.msra.mxu0 0.0
        %2661 = vmatprep.subr.mxu0 0.0
        %2662 = vmatpush1.msra.mxu0 0.0
        %2663 = vmatprep.subr.mxu0 0.0
        %2664 = vmatpush1.msra.mxu0 0.0
        %2665 = vmatprep.subr.mxu0 0.0
        %2666 = vmatpush1.msra.mxu0 0.0
        %2667 = vmatprep.subr.mxu0 0.0
        %2668 = vmatpush1.msra.mxu0 0.0
        %2669 = vmatprep.subr.mxu0 0.0
        %2670 = vmatpush1.msra.mxu0 0.0
        %2671 = vmatprep.subr.mxu0 0.0
        %2672 = vmatpush1.msra.mxu0 0.0
        %2673 = vmatprep.subr.mxu0 0.0
        %2674 = vmatpush1.msra.mxu0 0.0
        %2675 = vmatprep.subr.mxu0 0.0
        %2676 = vmatpush1.msra.mxu0 0.0
        %2677 = vmatprep.subr.mxu0 0.0
        %2678 = vmatpush1.msra.mxu0 0.0
        %2679 = vmatprep.subr.mxu0 0.0
        %2680 = vmatpush1.msra.mxu0 0.0
        %2681 = vmatprep.subr.mxu0 0.0
        %2682 = vmatpush1.msra.mxu0 0.0
        %2683 = vmatprep.subr.mxu0 0.0
        %2684 = vmatpush1.msra.mxu0 0.0
        %2685 = vmatprep.mubr.f32.mxu0 0.0
        %2686 = vmatmul.mubr.f32.gmra.mrb[0].mxu0 %v2526
        %v2687 = vpop.f32.mrb[0].mxu0
        %v2688 = vadd.f32 0.0, %v2687
        %v2689 = vpop.f32.mrb[0].mxu0
        %2690 = vmatprep.mubr.f32.mxu0 0.0
        %2691 = vmatmul.mubr.f32.gmra.mrb[0].mxu0 %v2529
        %v2692 = vpop.f32.mrb[0].mxu0
        %v2693 = vadd.f32 0.0, %v2692
        %v2694 = vpop.f32.mrb[0].mxu0
        %2695 = vmatprep.mubr.f32.mxu0 0.0
        %2696 = vmatmul.mubr.f32.gmra.mrb[0].mxu0 %v2532
        %v2697 = vpop.f32.mrb[0].mxu0
        %v2698 = vadd.f32 0.0, %v2697
        %v2699 = vpop.f32.mrb[0].mxu0
        %2700 = vmatprep.mubr.f32.mxu0 0.0
        %2701 = vmatmul.mubr.f32.gmra.mrb[0].mxu0 %v2535
        %v2702 = vpop.f32.mrb[0].mxu0
        %v2703 = vadd.f32 0.0, %v2702
        %v2704 = vpop.f32.mrb[0].mxu0
        %2705 = vmatprep.mubr.f32.mxu0 0.0
        %2706 = vmatmul.mubr.f32.gmra.mrb[0].mxu0 %v2538
        %v2707 = vpop.f32.mrb[0].mxu0
        %v2708 = vadd.f32 0.0, %v2707
        %v2709 = vpop.f32.mrb[0].mxu0
        %2710 = vmatprep.mubr.f32.mxu0 0.0
        %2711 = vmatmul.mubr.f32.gmra.mrb[0].mxu0 %v2541
        %v2712 = vpop.f32.mrb[0].mxu0
        %v2713 = vadd.f32 0.0, %v2712
        %v2714 = vpop.f32.mrb[0].mxu0
        %2715 = vmatprep.mubr.f32.mxu0 0.0
        %2716 = vmatmul.mubr.f32.gmra.mrb[0].mxu0 %v2544
        %v2717 = vpop.f32.mrb[0].mxu0
        %v2718 = vadd.f32 0.0, %v2717
        %v2719 = vpop.f32.mrb[0].mxu0
        %2720 = vmatprep.mubr.f32.mxu0 0.0
        %2721 = vmatmul.mubr.f32.gmra.mrb[0].mxu0 %v2547
        %v2722 = vpop.f32.mrb[0].mxu0
        %v2723 = vadd.f32 0.0, %v2722
        %v2724 = vpop.f32.mrb[0].mxu0
        %2725 = vmatprep.mubr.f32.mxu0 0.0
        %2726 = vmatmul.mubr.f32.gmra.mrb[0].mxu0 %v2550
        %v2727 = vpop.f32.mrb[0].mxu0
        %v2728 = vadd.f32 0.0, %v2727
        %v2729 = vpop.f32.mrb[0].mxu0
        %2730 = vmatprep.mubr.f32.mxu0 0.0
        %2731 = vmatmul.mubr.f32.gmra.mrb[0].mxu0 %v2553
        %v2732 = vpop.f32.mrb[0].mxu0
        %v2733 = vadd.f32 0.0, %v2732
        %v2734 = vpop.f32.mrb[0].mxu0
        %2735 = vmatprep.mubr.f32.mxu0 0.0
        %2736 = vmatmul.mubr.f32.gmra.mrb[0].mxu0 %v2556
        %v2737 = vpop.f32.mrb[0].mxu0
        %v2738 = vadd.f32 0.0, %v2737
        %v2739 = vpop.f32.mrb[0].mxu0
        %2740 = vmatprep.mubr.f32.mxu0 0.0
        %2741 = vmatmul.mubr.f32.gmra.mrb[0].mxu0 %v2559
        %v2742 = vpop.f32.mrb[0].mxu0
        %v2743 = vadd.f32 0.0, %v2742
        %v2744 = vpop.f32.mrb[0].mxu0
        %2745 = vmatprep.mubr.f32.mxu0 0.0
        %2746 = vmatmul.mubr.f32.gmra.mrb[0].mxu0 %v2562
        %v2747 = vpop.f32.mrb[0].mxu0
        %v2748 = vadd.f32 0.0, %v2747
        %v2749 = vpop.f32.mrb[0].mxu0
        %2750 = vmatprep.mubr.f32.mxu0 0.0
        %2751 = vmatmul.mubr.f32.gmra.mrb[0].mxu0 %v2565
        %v2752 = vpop.f32.mrb[0].mxu0
        %v2753 = vadd.f32 0.0, %v2752
        %v2754 = vpop.f32.mrb[0].mxu0
        %2755 = vmatprep.mubr.f32.mxu0 0.0
        %2756 = vmatmul.mubr.f32.gmra.mrb[0].mxu0 %v2568
        %v2757 = vpop.f32.mrb[0].mxu0
        %v2758 = vadd.f32 0.0, %v2757
        %v2759 = vpop.f32.mrb[0].mxu0
        %2760 = vmatprep.mubr.f32.mxu0 0.0
        %2761 = vmatmul.mubr.f32.gmra.mrb[0].mxu0 %v2571
        %v2762 = vpop.f32.mrb[0].mxu0
        %v2763 = vadd.f32 0.0, %v2762
        %v2764 = vpop.f32.mrb[0].mxu0
        %2765 = vmatprep.mubr.f32.mxu0 0.0
        %2766 = vmatmul.mubr.f32.gmra.mrb[0].mxu0 %v2574
        %v2767 = vpop.f32.mrb[0].mxu0
        %v2768 = vadd.f32 0.0, %v2767
        %v2769 = vpop.f32.mrb[0].mxu0
        %2770 = vmatprep.mubr.f32.mxu0 0.0
        %2771 = vmatmul.mubr.f32.gmra.mrb[0].mxu0 %v2577
        %v2772 = vpop.f32.mrb[0].mxu0
        %v2773 = vadd.f32 0.0, %v2772
        %v2774 = vpop.f32.mrb[0].mxu0
        %2775 = vmatprep.mubr.f32.mxu0 0.0
        %2776 = vmatmul.mubr.f32.gmra.mrb[0].mxu0 %v2580
        %v2777 = vpop.f32.mrb[0].mxu0
        %v2778 = vadd.f32 0.0, %v2777
        %v2779 = vpop.f32.mrb[0].mxu0
        %2780 = vmatprep.mubr.f32.mxu0 0.0
        %2781 = vmatmul.mubr.f32.gmra.mrb[0].mxu0 %v2583
        %v2782 = vpop.f32.mrb[0].mxu0
        %v2783 = vadd.f32 0.0, %v2782
        %v2784 = vpop.f32.mrb[0].mxu0
        %2785 = vmatprep.mubr.f32.mxu0 0.0
        %2786 = vmatmul.mubr.f32.gmra.mrb[0].mxu0 %v2586
        %v2787 = vpop.f32.mrb[0].mxu0
        %v2788 = vadd.f32 0.0, %v2787
        %v2789 = vpop.f32.mrb[0].mxu0
        %2790 = vmatprep.mubr.f32.mxu0 0.0
        %2791 = vmatmul.mubr.f32.gmra.mrb[0].mxu0 %v2589
        %v2792 = vpop.f32.mrb[0].mxu0
        %v2793 = vadd.f32 0.0, %v2792
        %v2794 = vpop.f32.mrb[0].mxu0
        %2795 = vmatprep.mubr.f32.mxu0 0.0
        %2796 = vmatmul.mubr.f32.gmra.mrb[0].mxu0 %v2592
        %v2797 = vpop.f32.mrb[0].mxu0
        %v2798 = vadd.f32 0.0, %v2797
        %v2799 = vpop.f32.mrb[0].mxu0
        %2800 = vmatprep.mubr.f32.mxu0 0.0
        %2801 = vmatmul.mubr.f32.gmra.mrb[0].mxu0 %v2595
        %v2802 = vpop.f32.mrb[0].mxu0
        %v2803 = vadd.f32 0.0, %v2802
        %v2804 = vpop.f32.mrb[0].mxu0
        %2805 = vmatprep.mubr.f32.mxu0 0.0
        %2806 = vmatmul.mubr.f32.gmra.mrb[0].mxu0 %v2598
        %v2807 = vpop.f32.mrb[0].mxu0
        %v2808 = vadd.f32 0.0, %v2807
        %v2809 = vpop.f32.mrb[0].mxu0
        %2810 = vmatprep.mubr.f32.mxu0 0.0
        %2811 = vmatmul.mubr.f32.gmra.mrb[0].mxu0 %v2601
        %v2812 = vpop.f32.mrb[0].mxu0
        %v2813 = vadd.f32 0.0, %v2812
        %v2814 = vpop.f32.mrb[0].mxu0
        %2815 = vmatprep.mubr.f32.mxu0 0.0
        %2816 = vmatmul.mubr.f32.gmra.mrb[0].mxu0 %v2604
        %v2817 = vpop.f32.mrb[0].mxu0
        %v2818 = vadd.f32 0.0, %v2817
        %v2819 = vpop.f32.mrb[0].mxu0
        %2820 = vmatprep.mubr.f32.mxu0 0.0
        %2821 = vmatmul.mubr.f32.gmra.mrb[0].mxu0 %v2607
        %v2822 = vpop.f32.mrb[0].mxu0
        %v2823 = vadd.f32 0.0, %v2822
        %v2824 = vpop.f32.mrb[0].mxu0
        %2825 = vmatprep.mubr.f32.mxu0 0.0
        %2826 = vmatmul.mubr.f32.gmra.mrb[0].mxu0 %v2610
        %v2827 = vpop.f32.mrb[0].mxu0
        %v2828 = vadd.f32 0.0, %v2827
        %v2829 = vpop.f32.mrb[0].mxu0
        %2830 = vmatprep.mubr.f32.mxu0 0.0
        %2831 = vmatmul.mubr.f32.gmra.mrb[0].mxu0 %v2613
        %v2832 = vpop.f32.mrb[0].mxu0
        %v2833 = vadd.f32 0.0, %v2832
        %v2834 = vpop.f32.mrb[0].mxu0
        %2835 = vmatprep.mubr.f32.mxu0 0.0
        %2836 = vmatmul.mubr.f32.gmra.mrb[0].mxu0 %v2616
        %v2837 = vpop.f32.mrb[0].mxu0
        %v2838 = vadd.f32 0.0, %v2837
        %v2839 = vpop.f32.mrb[0].mxu0
        %2840 = vmatprep.mubr.f32.mxu0 0.0
        %2841 = vmatmul.mubr.f32.gmra.mrb[0].mxu0 %v2619
        %v2842 = vpop.f32.mrb[0].mxu0
        %v2843 = vadd.f32 0.0, %v2842
        %v2844 = vpop.f32.mrb[0].mxu0
        %2845 = vdwg.mxu0
        %v2846 = vadd.f32 %v2456, %v2688
        %v2847 = vadd.f32 %v2457, %v2693
        %v2848 = vadd.f32 %v2458, %v2698
        %v2849 = vadd.f32 %v2459, %v2703
        %v2850 = vadd.f32 %v2460, %v2708
        %v2851 = vadd.f32 %v2461, %v2713
        %v2852 = vadd.f32 %v2462, %v2718
        %v2853 = vadd.f32 %v2463, %v2723
        %v2854 = vadd.f32 %v2464, %v2728
        %v2855 = vadd.f32 %v2465, %v2733
        %v2856 = vadd.f32 %v2466, %v2738
        %v2857 = vadd.f32 %v2467, %v2743
        %v2858 = vadd.f32 %v2468, %v2748
        %v2859 = vadd.f32 %v2469, %v2753
        %v2860 = vadd.f32 %v2470, %v2758
        %v2861 = vadd.f32 %v2471, %v2763
        %v2862 = vadd.f32 %v2472, %v2768
        %v2863 = vadd.f32 %v2473, %v2773
        %v2864 = vadd.f32 %v2474, %v2778
        %v2865 = vadd.f32 %v2475, %v2783
        %v2866 = vadd.f32 %v2476, %v2788
        %v2867 = vadd.f32 %v2477, %v2793
        %v2868 = vadd.f32 %v2478, %v2798
        %v2869 = vadd.f32 %v2479, %v2803
        %v2870 = vadd.f32 %v2480, %v2808
        %v2871 = vadd.f32 %v2481, %v2813
        %v2872 = vadd.f32 %v2482, %v2818
        %v2873 = vadd.f32 %v2483, %v2823
        %v2874 = vadd.f32 %v2484, %v2828
        %v2875 = vadd.f32 %v2485, %v2833
        %v2876 = vadd.f32 %v2486, %v2838
        %v2877 = vadd.f32 %v2487, %v2843
        %v2878 = vld [vmem:[#allocation2 + $0x4] sm:$0xff]
        %v2879 = vld [vmem:[#allocation2 + $0xc] sm:$0xff]
        %v2880 = vld [vmem:[#allocation2 + $0x1c] sm:$0xff]
        %v2881 = vld [vmem:[#allocation2 + $0x24] sm:$0xff]
        %v2882 = vld [vmem:[#allocation2 + $0x34] sm:$0xff]
        %v2883 = vld [vmem:[#allocation2 + $0x3c] sm:$0xff]
        %v2884 = vld [vmem:[#allocation2 + $0x4c] sm:$0xff]
        %v2885 = vld [vmem:[#allocation2 + $0x54] sm:$0xff]
        %v2886 = vld [vmem:[#allocation2 + $0x64] sm:$0xff]
        %v2887 = vld [vmem:[#allocation2 + $0x6c] sm:$0xff]
        %v2888 = vld [vmem:[#allocation2 + $0x7c] sm:$0xff]
        %v2889 = vld [vmem:[#allocation2 + $0x84] sm:$0xff]
        %v2890 = vld [vmem:[#allocation2 + $0x94] sm:$0xff]
        %v2891 = vld [vmem:[#allocation2 + $0x9c] sm:$0xff]
        %v2892 = vld [vmem:[#allocation2 + $0xac] sm:$0xff]
        %v2893 = vld [vmem:[#allocation2 + $0xb4] sm:$0xff]
        %v2894 = vld [vmem:[#allocation2 + $0xc4] sm:$0xff]
        %v2895 = vld [vmem:[#allocation2 + $0xcc] sm:$0xff]
        %v2896 = vld [vmem:[#allocation2 + $0xdc] sm:$0xff]
        %v2897 = vld [vmem:[#allocation2 + $0xe4] sm:$0xff]
        %v2898 = vld [vmem:[#allocation2 + $0xf4] sm:$0xff]
        %v2899 = vld [vmem:[#allocation2 + $0xfc] sm:$0xff]
        %v2900 = vld [vmem:[#allocation2 + $0x10c] sm:$0xff]
        %v2901 = vld [vmem:[#allocation2 + $0x114] sm:$0xff]
        %v2902 = vld [vmem:[#allocation2 + $0x124] sm:$0xff]
        %v2903 = vld [vmem:[#allocation2 + $0x12c] sm:$0xff]
        %v2904 = vld [vmem:[#allocation2 + $0x13c] sm:$0xff]
        %v2905 = vld [vmem:[#allocation2 + $0x144] sm:$0xff]
        %v2906 = vld [vmem:[#allocation2 + $0x154] sm:$0xff]
        %v2907 = vld [vmem:[#allocation2 + $0x15c] sm:$0xff]
        %v2908 = vld [vmem:[#allocation2 + $0x16c] sm:$0xff]
        %v2909 = vld [vmem:[#allocation2 + $0x174] sm:$0xff]
        %s2910 = scalar_lea.vmem [#allocation9], 352
        %v2911 = vld [vmem:[%s2910] sm:$0xff]
        %v2912 = vld [vmem:[%s2910 + $0x8] sm:$0xff]
        %v2913 = vld [vmem:[%s2910 + $0x10] sm:$0xff]
        %v2914 = vld [vmem:[%s2910 + $0x18] sm:$0xff]
        %v2916 = vsel %vm897, %v2878, 0
        %v2919 = vsel %vm897, %v2879, 0
        %v2922 = vsel %vm897, %v2880, 0
        %v2925 = vsel %vm897, %v2881, 0
        %v2928 = vsel %vm897, %v2882, 0
        %v2931 = vsel %vm897, %v2883, 0
        %v2934 = vsel %vm897, %v2884, 0
        %v2937 = vsel %vm897, %v2885, 0
        %v2940 = vsel %vm897, %v2886, 0
        %v2943 = vsel %vm897, %v2887, 0
        %v2946 = vsel %vm897, %v2888, 0
        %v2949 = vsel %vm897, %v2889, 0
        %v2952 = vsel %vm897, %v2890, 0
        %v2955 = vsel %vm897, %v2891, 0
        %v2958 = vsel %vm897, %v2892, 0
        %v2961 = vsel %vm897, %v2893, 0
        %v2964 = vsel %vm897, %v2894, 0
        %v2967 = vsel %vm897, %v2895, 0
        %v2970 = vsel %vm897, %v2896, 0
        %v2973 = vsel %vm897, %v2897, 0
        %v2976 = vsel %vm897, %v2898, 0
        %v2979 = vsel %vm897, %v2899, 0
        %v2982 = vsel %vm897, %v2900, 0
        %v2985 = vsel %vm897, %v2901, 0
        %v2988 = vsel %vm897, %v2902, 0
        %v2991 = vsel %vm897, %v2903, 0
        %v2994 = vsel %vm897, %v2904, 0
        %v2997 = vsel %vm897, %v2905, 0
        %v3000 = vsel %vm897, %v2906, 0
        %v3003 = vsel %vm897, %v2907, 0
        %v3006 = vsel %vm897, %v2908, 0
        %v3009 = vsel %vm897, %v2909, 0
        %3011 = vmatprep.subr.mxu0 0.0
        %3012 = vmatpush1.msra.mxu0 %v2911
        %3013 = vmatprep.subr.mxu0 0.0
        %3014 = vmatpush1.msra.mxu0 %v2912
        %3015 = vmatprep.subr.mxu0 0.0
        %3016 = vmatpush1.msra.mxu0 %v2913
        %3017 = vmatprep.subr.mxu0 0.0
        %3018 = vmatpush1.msra.mxu0 %v2914
        %3019 = vmatprep.subr.mxu0 0.0
        %3020 = vmatpush1.msra.mxu0 0.0
        %3021 = vmatprep.subr.mxu0 0.0
        %3022 = vmatpush1.msra.mxu0 0.0
        %3023 = vmatprep.subr.mxu0 0.0
        %3024 = vmatpush1.msra.mxu0 0.0
        %3025 = vmatprep.subr.mxu0 0.0
        %3026 = vmatpush1.msra.mxu0 0.0
        %3027 = vmatprep.subr.mxu0 0.0
        %3028 = vmatpush1.msra.mxu0 0.0
        %3029 = vmatprep.subr.mxu0 0.0
        %3030 = vmatpush1.msra.mxu0 0.0
        %3031 = vmatprep.subr.mxu0 0.0
        %3032 = vmatpush1.msra.mxu0 0.0
        %3033 = vmatprep.subr.mxu0 0.0
        %3034 = vmatpush1.msra.mxu0 0.0
        %3035 = vmatprep.subr.mxu0 0.0
        %3036 = vmatpush1.msra.mxu0 0.0
        %3037 = vmatprep.subr.mxu0 0.0
        %3038 = vmatpush1.msra.mxu0 0.0
        %3039 = vmatprep.subr.mxu0 0.0
        %3040 = vmatpush1.msra.mxu0 0.0
        %3041 = vmatprep.subr.mxu0 0.0
        %3042 = vmatpush1.msra.mxu0 0.0
        %3043 = vmatprep.subr.mxu0 0.0
        %3044 = vmatpush1.msra.mxu0 0.0
        %3045 = vmatprep.subr.mxu0 0.0
        %3046 = vmatpush1.msra.mxu0 0.0
        %3047 = vmatprep.subr.mxu0 0.0
        %3048 = vmatpush1.msra.mxu0 0.0
        %3049 = vmatprep.subr.mxu0 0.0
        %3050 = vmatpush1.msra.mxu0 0.0
        %3051 = vmatprep.subr.mxu0 0.0
        %3052 = vmatpush1.msra.mxu0 0.0
        %3053 = vmatprep.subr.mxu0 0.0
        %3054 = vmatpush1.msra.mxu0 0.0
        %3055 = vmatprep.subr.mxu0 0.0
        %3056 = vmatpush1.msra.mxu0 0.0
        %3057 = vmatprep.subr.mxu0 0.0
        %3058 = vmatpush1.msra.mxu0 0.0
        %3059 = vmatprep.subr.mxu0 0.0
        %3060 = vmatpush1.msra.mxu0 0.0
        %3061 = vmatprep.subr.mxu0 0.0
        %3062 = vmatpush1.msra.mxu0 0.0
        %3063 = vmatprep.subr.mxu0 0.0
        %3064 = vmatpush1.msra.mxu0 0.0
        %3065 = vmatprep.subr.mxu0 0.0
        %3066 = vmatpush1.msra.mxu0 0.0
        %3067 = vmatprep.subr.mxu0 0.0
        %3068 = vmatpush1.msra.mxu0 0.0
        %3069 = vmatprep.subr.mxu0 0.0
        %3070 = vmatpush1.msra.mxu0 0.0
        %3071 = vmatprep.subr.mxu0 0.0
        %3072 = vmatpush1.msra.mxu0 0.0
        %3073 = vmatprep.subr.mxu0 0.0
        %3074 = vmatpush1.msra.mxu0 0.0
        %3075 = vmatprep.mubr.f32.mxu0 0.0
        %3076 = vmatmul.mubr.f32.gmra.mrb[0].mxu0 %v2916
        %v3077 = vpop.f32.mrb[0].mxu0
        %v3078 = vadd.f32 0.0, %v3077
        %v3079 = vpop.f32.mrb[0].mxu0
        %3080 = vmatprep.mubr.f32.mxu0 0.0
        %3081 = vmatmul.mubr.f32.gmra.mrb[0].mxu0 %v2919
        %v3082 = vpop.f32.mrb[0].mxu0
        %v3083 = vadd.f32 0.0, %v3082
        %v3084 = vpop.f32.mrb[0].mxu0
        %3085 = vmatprep.mubr.f32.mxu0 0.0
        %3086 = vmatmul.mubr.f32.gmra.mrb[0].mxu0 %v2922
        %v3087 = vpop.f32.mrb[0].mxu0
        %v3088 = vadd.f32 0.0, %v3087
        %v3089 = vpop.f32.mrb[0].mxu0
        %3090 = vmatprep.mubr.f32.mxu0 0.0
        %3091 = vmatmul.mubr.f32.gmra.mrb[0].mxu0 %v2925
        %v3092 = vpop.f32.mrb[0].mxu0
        %v3093 = vadd.f32 0.0, %v3092
        %v3094 = vpop.f32.mrb[0].mxu0
        %3095 = vmatprep.mubr.f32.mxu0 0.0
        %3096 = vmatmul.mubr.f32.gmra.mrb[0].mxu0 %v2928
        %v3097 = vpop.f32.mrb[0].mxu0
        %v3098 = vadd.f32 0.0, %v3097
        %v3099 = vpop.f32.mrb[0].mxu0
        %3100 = vmatprep.mubr.f32.mxu0 0.0
        %3101 = vmatmul.mubr.f32.gmra.mrb[0].mxu0 %v2931
        %v3102 = vpop.f32.mrb[0].mxu0
        %v3103 = vadd.f32 0.0, %v3102
        %v3104 = vpop.f32.mrb[0].mxu0
        %3105 = vmatprep.mubr.f32.mxu0 0.0
        %3106 = vmatmul.mubr.f32.gmra.mrb[0].mxu0 %v2934
        %v3107 = vpop.f32.mrb[0].mxu0
        %v3108 = vadd.f32 0.0, %v3107
        %v3109 = vpop.f32.mrb[0].mxu0
        %3110 = vmatprep.mubr.f32.mxu0 0.0
        %3111 = vmatmul.mubr.f32.gmra.mrb[0].mxu0 %v2937
        %v3112 = vpop.f32.mrb[0].mxu0
        %v3113 = vadd.f32 0.0, %v3112
        %v3114 = vpop.f32.mrb[0].mxu0
        %3115 = vmatprep.mubr.f32.mxu0 0.0
        %3116 = vmatmul.mubr.f32.gmra.mrb[0].mxu0 %v2940
        %v3117 = vpop.f32.mrb[0].mxu0
        %v3118 = vadd.f32 0.0, %v3117
        %v3119 = vpop.f32.mrb[0].mxu0
        %3120 = vmatprep.mubr.f32.mxu0 0.0
        %3121 = vmatmul.mubr.f32.gmra.mrb[0].mxu0 %v2943
        %v3122 = vpop.f32.mrb[0].mxu0
        %v3123 = vadd.f32 0.0, %v3122
        %v3124 = vpop.f32.mrb[0].mxu0
        %3125 = vmatprep.mubr.f32.mxu0 0.0
        %3126 = vmatmul.mubr.f32.gmra.mrb[0].mxu0 %v2946
        %v3127 = vpop.f32.mrb[0].mxu0
        %v3128 = vadd.f32 0.0, %v3127
        %v3129 = vpop.f32.mrb[0].mxu0
        %3130 = vmatprep.mubr.f32.mxu0 0.0
        %3131 = vmatmul.mubr.f32.gmra.mrb[0].mxu0 %v2949
        %v3132 = vpop.f32.mrb[0].mxu0
        %v3133 = vadd.f32 0.0, %v3132
        %v3134 = vpop.f32.mrb[0].mxu0
        %3135 = vmatprep.mubr.f32.mxu0 0.0
        %3136 = vmatmul.mubr.f32.gmra.mrb[0].mxu0 %v2952
        %v3137 = vpop.f32.mrb[0].mxu0
        %v3138 = vadd.f32 0.0, %v3137
        %v3139 = vpop.f32.mrb[0].mxu0
        %3140 = vmatprep.mubr.f32.mxu0 0.0
        %3141 = vmatmul.mubr.f32.gmra.mrb[0].mxu0 %v2955
        %v3142 = vpop.f32.mrb[0].mxu0
        %v3143 = vadd.f32 0.0, %v3142
        %v3144 = vpop.f32.mrb[0].mxu0
        %3145 = vmatprep.mubr.f32.mxu0 0.0
        %3146 = vmatmul.mubr.f32.gmra.mrb[0].mxu0 %v2958
        %v3147 = vpop.f32.mrb[0].mxu0
        %v3148 = vadd.f32 0.0, %v3147
        %v3149 = vpop.f32.mrb[0].mxu0
        %3150 = vmatprep.mubr.f32.mxu0 0.0
        %3151 = vmatmul.mubr.f32.gmra.mrb[0].mxu0 %v2961
        %v3152 = vpop.f32.mrb[0].mxu0
        %v3153 = vadd.f32 0.0, %v3152
        %v3154 = vpop.f32.mrb[0].mxu0
        %3155 = vmatprep.mubr.f32.mxu0 0.0
        %3156 = vmatmul.mubr.f32.gmra.mrb[0].mxu0 %v2964
        %v3157 = vpop.f32.mrb[0].mxu0
        %v3158 = vadd.f32 0.0, %v3157
        %v3159 = vpop.f32.mrb[0].mxu0
        %3160 = vmatprep.mubr.f32.mxu0 0.0
        %3161 = vmatmul.mubr.f32.gmra.mrb[0].mxu0 %v2967
        %v3162 = vpop.f32.mrb[0].mxu0
        %v3163 = vadd.f32 0.0, %v3162
        %v3164 = vpop.f32.mrb[0].mxu0
        %3165 = vmatprep.mubr.f32.mxu0 0.0
        %3166 = vmatmul.mubr.f32.gmra.mrb[0].mxu0 %v2970
        %v3167 = vpop.f32.mrb[0].mxu0
        %v3168 = vadd.f32 0.0, %v3167
        %v3169 = vpop.f32.mrb[0].mxu0
        %3170 = vmatprep.mubr.f32.mxu0 0.0
        %3171 = vmatmul.mubr.f32.gmra.mrb[0].mxu0 %v2973
        %v3172 = vpop.f32.mrb[0].mxu0
        %v3173 = vadd.f32 0.0, %v3172
        %v3174 = vpop.f32.mrb[0].mxu0
        %3175 = vmatprep.mubr.f32.mxu0 0.0
        %3176 = vmatmul.mubr.f32.gmra.mrb[0].mxu0 %v2976
        %v3177 = vpop.f32.mrb[0].mxu0
        %v3178 = vadd.f32 0.0, %v3177
        %v3179 = vpop.f32.mrb[0].mxu0
        %3180 = vmatprep.mubr.f32.mxu0 0.0
        %3181 = vmatmul.mubr.f32.gmra.mrb[0].mxu0 %v2979
        %v3182 = vpop.f32.mrb[0].mxu0
        %v3183 = vadd.f32 0.0, %v3182
        %v3184 = vpop.f32.mrb[0].mxu0
        %3185 = vmatprep.mubr.f32.mxu0 0.0
        %3186 = vmatmul.mubr.f32.gmra.mrb[0].mxu0 %v2982
        %v3187 = vpop.f32.mrb[0].mxu0
        %v3188 = vadd.f32 0.0, %v3187
        %v3189 = vpop.f32.mrb[0].mxu0
        %3190 = vmatprep.mubr.f32.mxu0 0.0
        %3191 = vmatmul.mubr.f32.gmra.mrb[0].mxu0 %v2985
        %v3192 = vpop.f32.mrb[0].mxu0
        %v3193 = vadd.f32 0.0, %v3192
        %v3194 = vpop.f32.mrb[0].mxu0
        %3195 = vmatprep.mubr.f32.mxu0 0.0
        %3196 = vmatmul.mubr.f32.gmra.mrb[0].mxu0 %v2988
        %v3197 = vpop.f32.mrb[0].mxu0
        %v3198 = vadd.f32 0.0, %v3197
        %v3199 = vpop.f32.mrb[0].mxu0
        %3200 = vmatprep.mubr.f32.mxu0 0.0
        %3201 = vmatmul.mubr.f32.gmra.mrb[0].mxu0 %v2991
        %v3202 = vpop.f32.mrb[0].mxu0
        %v3203 = vadd.f32 0.0, %v3202
        %v3204 = vpop.f32.mrb[0].mxu0
        %3205 = vmatprep.mubr.f32.mxu0 0.0
        %3206 = vmatmul.mubr.f32.gmra.mrb[0].mxu0 %v2994
        %v3207 = vpop.f32.mrb[0].mxu0
        %v3208 = vadd.f32 0.0, %v3207
        %v3209 = vpop.f32.mrb[0].mxu0
        %3210 = vmatprep.mubr.f32.mxu0 0.0
        %3211 = vmatmul.mubr.f32.gmra.mrb[0].mxu0 %v2997
        %v3212 = vpop.f32.mrb[0].mxu0
        %v3213 = vadd.f32 0.0, %v3212
        %v3214 = vpop.f32.mrb[0].mxu0
        %3215 = vmatprep.mubr.f32.mxu0 0.0
        %3216 = vmatmul.mubr.f32.gmra.mrb[0].mxu0 %v3000
        %v3217 = vpop.f32.mrb[0].mxu0
        %v3218 = vadd.f32 0.0, %v3217
        %v3219 = vpop.f32.mrb[0].mxu0
        %3220 = vmatprep.mubr.f32.mxu0 0.0
        %3221 = vmatmul.mubr.f32.gmra.mrb[0].mxu0 %v3003
        %v3222 = vpop.f32.mrb[0].mxu0
        %v3223 = vadd.f32 0.0, %v3222
        %v3224 = vpop.f32.mrb[0].mxu0
        %3225 = vmatprep.mubr.f32.mxu0 0.0
        %3226 = vmatmul.mubr.f32.gmra.mrb[0].mxu0 %v3006
        %v3227 = vpop.f32.mrb[0].mxu0
        %v3228 = vadd.f32 0.0, %v3227
        %v3229 = vpop.f32.mrb[0].mxu0
        %3230 = vmatprep.mubr.f32.mxu0 0.0
        %3231 = vmatmul.mubr.f32.gmra.mrb[0].mxu0 %v3009
        %v3232 = vpop.f32.mrb[0].mxu0
        %v3233 = vadd.f32 0.0, %v3232
        %v3234 = vpop.f32.mrb[0].mxu0
        %3235 = vdwg.mxu0
        %v3236 = vadd.f32 %v2846, %v3078
        %v3237 = vadd.f32 %v2847, %v3083
        %v3238 = vadd.f32 %v2848, %v3088
        %v3239 = vadd.f32 %v2849, %v3093
        %v3240 = vadd.f32 %v2850, %v3098
        %v3241 = vadd.f32 %v2851, %v3103
        %v3242 = vadd.f32 %v2852, %v3108
        %v3243 = vadd.f32 %v2853, %v3113
        %v3244 = vadd.f32 %v2854, %v3118
        %v3245 = vadd.f32 %v2855, %v3123
        %v3246 = vadd.f32 %v2856, %v3128
        %v3247 = vadd.f32 %v2857, %v3133
        %v3248 = vadd.f32 %v2858, %v3138
        %v3249 = vadd.f32 %v2859, %v3143
        %v3250 = vadd.f32 %v2860, %v3148
        %v3251 = vadd.f32 %v2861, %v3153
        %v3252 = vadd.f32 %v2862, %v3158
        %v3253 = vadd.f32 %v2863, %v3163
        %v3254 = vadd.f32 %v2864, %v3168
        %v3255 = vadd.f32 %v2865, %v3173
        %v3256 = vadd.f32 %v2866, %v3178
        %v3257 = vadd.f32 %v2867, %v3183
        %v3258 = vadd.f32 %v2868, %v3188
        %v3259 = vadd.f32 %v2869, %v3193
        %v3260 = vadd.f32 %v2870, %v3198
        %v3261 = vadd.f32 %v2871, %v3203
        %v3262 = vadd.f32 %v2872, %v3208
        %v3263 = vadd.f32 %v2873, %v3213
        %v3264 = vadd.f32 %v2874, %v3218
        %v3265 = vadd.f32 %v2875, %v3223
        %v3266 = vadd.f32 %v2876, %v3228
        %v3267 = vadd.f32 %v2877, %v3233
        %v3268 = vld [vmem:[%s959 + $0x1] sm:$0xff]
        %v3269 = vld [vmem:[%s959 + $0x9] sm:$0xff]
        %v3270 = vld [vmem:[%s959 + $0x19] sm:$0xff]
        %v3271 = vld [vmem:[%s959 + $0x21] sm:$0xff]
        %v3272 = vld [vmem:[%s959 + $0x31] sm:$0xff]
        %v3273 = vld [vmem:[%s959 + $0x39] sm:$0xff]
        %v3274 = vld [vmem:[%s959 + $0x49] sm:$0xff]
        %v3275 = vld [vmem:[%s959 + $0x51] sm:$0xff]
        %v3276 = vld [vmem:[%s959 + $0x61] sm:$0xff]
        %v3277 = vld [vmem:[%s959 + $0x69] sm:$0xff]
        %v3278 = vld [vmem:[%s959 + $0x79] sm:$0xff]
        %v3279 = vld [vmem:[%s959 + $0x81] sm:$0xff]
        %v3280 = vld [vmem:[%s959 + $0x91] sm:$0xff]
        %v3281 = vld [vmem:[%s959 + $0x99] sm:$0xff]
        %v3282 = vld [vmem:[%s959 + $0xa9] sm:$0xff]
        %v3283 = vld [vmem:[%s959 + $0xb1] sm:$0xff]
        %v3284 = vld [vmem:[%s959 + $0xc1] sm:$0xff]
        %v3285 = vld [vmem:[%s959 + $0xc9] sm:$0xff]
        %v3286 = vld [vmem:[%s959 + $0xd9] sm:$0xff]
        %v3287 = vld [vmem:[%s959 + $0xe1] sm:$0xff]
        %v3288 = vld [vmem:[%s959 + $0xf1] sm:$0xff]
        %v3289 = vld [vmem:[%s959 + $0xf9] sm:$0xff]
        %v3290 = vld [vmem:[%s959 + $0x109] sm:$0xff]
        %v3291 = vld [vmem:[%s959 + $0x111] sm:$0xff]
        %v3292 = vld [vmem:[%s959 + $0x121] sm:$0xff]
        %v3293 = vld [vmem:[%s959 + $0x129] sm:$0xff]
        %v3294 = vld [vmem:[%s959 + $0x139] sm:$0xff]
        %v3295 = vld [vmem:[%s959 + $0x141] sm:$0xff]
        %v3296 = vld [vmem:[%s959 + $0x151] sm:$0xff]
        %v3297 = vld [vmem:[%s959 + $0x159] sm:$0xff]
        %v3298 = vld [vmem:[%s959 + $0x169] sm:$0xff]
        %v3299 = vld [vmem:[%s959 + $0x171] sm:$0xff]
        %s3300 = scalar_lea.vmem [#allocation9], 96
        %v3301 = vld [vmem:[%s3300] sm:$0xff]
        %v3302 = vld [vmem:[%s3300 + $0x8] sm:$0xff]
        %v3303 = vld [vmem:[%s3300 + $0x10] sm:$0xff]
        %v3304 = vld [vmem:[%s3300 + $0x18] sm:$0xff]
        %v3306 = vsel %vm897, %v3268, 0
        %v3309 = vsel %vm897, %v3269, 0
        %v3312 = vsel %vm897, %v3270, 0
        %v3315 = vsel %vm897, %v3271, 0
        %v3318 = vsel %vm897, %v3272, 0
        %v3321 = vsel %vm897, %v3273, 0
        %v3324 = vsel %vm897, %v3274, 0
        %v3327 = vsel %vm897, %v3275, 0
        %v3330 = vsel %vm897, %v3276, 0
        %v3333 = vsel %vm897, %v3277, 0
        %v3336 = vsel %vm897, %v3278, 0
        %v3339 = vsel %vm897, %v3279, 0
        %v3342 = vsel %vm897, %v3280, 0
        %v3345 = vsel %vm897, %v3281, 0
        %v3348 = vsel %vm897, %v3282, 0
        %v3351 = vsel %vm897, %v3283, 0
        %v3354 = vsel %vm897, %v3284, 0
        %v3357 = vsel %vm897, %v3285, 0
        %v3360 = vsel %vm897, %v3286, 0
        %v3363 = vsel %vm897, %v3287, 0
        %v3366 = vsel %vm897, %v3288, 0
        %v3369 = vsel %vm897, %v3289, 0
        %v3372 = vsel %vm897, %v3290, 0
        %v3375 = vsel %vm897, %v3291, 0
        %v3378 = vsel %vm897, %v3292, 0
        %v3381 = vsel %vm897, %v3293, 0
        %v3384 = vsel %vm897, %v3294, 0
        %v3387 = vsel %vm897, %v3295, 0
        %v3390 = vsel %vm897, %v3296, 0
        %v3393 = vsel %vm897, %v3297, 0
        %v3396 = vsel %vm897, %v3298, 0
        %v3399 = vsel %vm897, %v3299, 0
        %3401 = vmatprep.subr.mxu0 0.0
        %3402 = vmatpush1.msra.mxu0 %v3301
        %3403 = vmatprep.subr.mxu0 0.0
        %3404 = vmatpush1.msra.mxu0 %v3302
        %3405 = vmatprep.subr.mxu0 0.0
        %3406 = vmatpush1.msra.mxu0 %v3303
        %3407 = vmatprep.subr.mxu0 0.0
        %3408 = vmatpush1.msra.mxu0 %v3304
        %3409 = vmatprep.subr.mxu0 0.0
        %3410 = vmatpush1.msra.mxu0 0.0
        %3411 = vmatprep.subr.mxu0 0.0
        %3412 = vmatpush1.msra.mxu0 0.0
        %3413 = vmatprep.subr.mxu0 0.0
        %3414 = vmatpush1.msra.mxu0 0.0
        %3415 = vmatprep.subr.mxu0 0.0
        %3416 = vmatpush1.msra.mxu0 0.0
        %3417 = vmatprep.subr.mxu0 0.0
        %3418 = vmatpush1.msra.mxu0 0.0
        %3419 = vmatprep.subr.mxu0 0.0
        %3420 = vmatpush1.msra.mxu0 0.0
        %3421 = vmatprep.subr.mxu0 0.0
        %3422 = vmatpush1.msra.mxu0 0.0
        %3423 = vmatprep.subr.mxu0 0.0
        %3424 = vmatpush1.msra.mxu0 0.0
        %3425 = vmatprep.subr.mxu0 0.0
        %3426 = vmatpush1.msra.mxu0 0.0
        %3427 = vmatprep.subr.mxu0 0.0
        %3428 = vmatpush1.msra.mxu0 0.0
        %3429 = vmatprep.subr.mxu0 0.0
        %3430 = vmatpush1.msra.mxu0 0.0
        %3431 = vmatprep.subr.mxu0 0.0
        %3432 = vmatpush1.msra.mxu0 0.0
        %3433 = vmatprep.subr.mxu0 0.0
        %3434 = vmatpush1.msra.mxu0 0.0
        %3435 = vmatprep.subr.mxu0 0.0
        %3436 = vmatpush1.msra.mxu0 0.0
        %3437 = vmatprep.subr.mxu0 0.0
        %3438 = vmatpush1.msra.mxu0 0.0
        %3439 = vmatprep.subr.mxu0 0.0
        %3440 = vmatpush1.msra.mxu0 0.0
        %3441 = vmatprep.subr.mxu0 0.0
        %3442 = vmatpush1.msra.mxu0 0.0
        %3443 = vmatprep.subr.mxu0 0.0
        %3444 = vmatpush1.msra.mxu0 0.0
        %3445 = vmatprep.subr.mxu0 0.0
        %3446 = vmatpush1.msra.mxu0 0.0
        %3447 = vmatprep.subr.mxu0 0.0
        %3448 = vmatpush1.msra.mxu0 0.0
        %3449 = vmatprep.subr.mxu0 0.0
        %3450 = vmatpush1.msra.mxu0 0.0
        %3451 = vmatprep.subr.mxu0 0.0
        %3452 = vmatpush1.msra.mxu0 0.0
        %3453 = vmatprep.subr.mxu0 0.0
        %3454 = vmatpush1.msra.mxu0 0.0
        %3455 = vmatprep.subr.mxu0 0.0
        %3456 = vmatpush1.msra.mxu0 0.0
        %3457 = vmatprep.subr.mxu0 0.0
        %3458 = vmatpush1.msra.mxu0 0.0
        %3459 = vmatprep.subr.mxu0 0.0
        %3460 = vmatpush1.msra.mxu0 0.0
        %3461 = vmatprep.subr.mxu0 0.0
        %3462 = vmatpush1.msra.mxu0 0.0
        %3463 = vmatprep.subr.mxu0 0.0
        %3464 = vmatpush1.msra.mxu0 0.0
        %3465 = vmatprep.mubr.f32.mxu0 0.0
        %3466 = vmatmul.mubr.f32.gmra.mrb[0].mxu0 %v3306
        %v3467 = vpop.f32.mrb[0].mxu0
        %v3468 = vadd.f32 0.0, %v3467
        %v3469 = vpop.f32.mrb[0].mxu0
        %3470 = vmatprep.mubr.f32.mxu0 0.0
        %3471 = vmatmul.mubr.f32.gmra.mrb[0].mxu0 %v3309
        %v3472 = vpop.f32.mrb[0].mxu0
        %v3473 = vadd.f32 0.0, %v3472
        %v3474 = vpop.f32.mrb[0].mxu0
        %3475 = vmatprep.mubr.f32.mxu0 0.0
        %3476 = vmatmul.mubr.f32.gmra.mrb[0].mxu0 %v3312
        %v3477 = vpop.f32.mrb[0].mxu0
        %v3478 = vadd.f32 0.0, %v3477
        %v3479 = vpop.f32.mrb[0].mxu0
        %3480 = vmatprep.mubr.f32.mxu0 0.0
        %3481 = vmatmul.mubr.f32.gmra.mrb[0].mxu0 %v3315
        %v3482 = vpop.f32.mrb[0].mxu0
        %v3483 = vadd.f32 0.0, %v3482
        %v3484 = vpop.f32.mrb[0].mxu0
        %3485 = vmatprep.mubr.f32.mxu0 0.0
        %3486 = vmatmul.mubr.f32.gmra.mrb[0].mxu0 %v3318
        %v3487 = vpop.f32.mrb[0].mxu0
        %v3488 = vadd.f32 0.0, %v3487
        %v3489 = vpop.f32.mrb[0].mxu0
        %3490 = vmatprep.mubr.f32.mxu0 0.0
        %3491 = vmatmul.mubr.f32.gmra.mrb[0].mxu0 %v3321
        %v3492 = vpop.f32.mrb[0].mxu0
        %v3493 = vadd.f32 0.0, %v3492
        %v3494 = vpop.f32.mrb[0].mxu0
        %3495 = vmatprep.mubr.f32.mxu0 0.0
        %3496 = vmatmul.mubr.f32.gmra.mrb[0].mxu0 %v3324
        %v3497 = vpop.f32.mrb[0].mxu0
        %v3498 = vadd.f32 0.0, %v3497
        %v3499 = vpop.f32.mrb[0].mxu0
        %3500 = vmatprep.mubr.f32.mxu0 0.0
        %3501 = vmatmul.mubr.f32.gmra.mrb[0].mxu0 %v3327
        %v3502 = vpop.f32.mrb[0].mxu0
        %v3503 = vadd.f32 0.0, %v3502
        %v3504 = vpop.f32.mrb[0].mxu0
        %3505 = vmatprep.mubr.f32.mxu0 0.0
        %3506 = vmatmul.mubr.f32.gmra.mrb[0].mxu0 %v3330
        %v3507 = vpop.f32.mrb[0].mxu0
        %v3508 = vadd.f32 0.0, %v3507
        %v3509 = vpop.f32.mrb[0].mxu0
        %3510 = vmatprep.mubr.f32.mxu0 0.0
        %3511 = vmatmul.mubr.f32.gmra.mrb[0].mxu0 %v3333
        %v3512 = vpop.f32.mrb[0].mxu0
        %v3513 = vadd.f32 0.0, %v3512
        %v3514 = vpop.f32.mrb[0].mxu0
        %3515 = vmatprep.mubr.f32.mxu0 0.0
        %3516 = vmatmul.mubr.f32.gmra.mrb[0].mxu0 %v3336
        %v3517 = vpop.f32.mrb[0].mxu0
        %v3518 = vadd.f32 0.0, %v3517
        %v3519 = vpop.f32.mrb[0].mxu0
        %3520 = vmatprep.mubr.f32.mxu0 0.0
        %3521 = vmatmul.mubr.f32.gmra.mrb[0].mxu0 %v3339
        %v3522 = vpop.f32.mrb[0].mxu0
        %v3523 = vadd.f32 0.0, %v3522
        %v3524 = vpop.f32.mrb[0].mxu0
        %3525 = vmatprep.mubr.f32.mxu0 0.0
        %3526 = vmatmul.mubr.f32.gmra.mrb[0].mxu0 %v3342
        %v3527 = vpop.f32.mrb[0].mxu0
        %v3528 = vadd.f32 0.0, %v3527
        %v3529 = vpop.f32.mrb[0].mxu0
        %3530 = vmatprep.mubr.f32.mxu0 0.0
        %3531 = vmatmul.mubr.f32.gmra.mrb[0].mxu0 %v3345
        %v3532 = vpop.f32.mrb[0].mxu0
        %v3533 = vadd.f32 0.0, %v3532
        %v3534 = vpop.f32.mrb[0].mxu0
        %3535 = vmatprep.mubr.f32.mxu0 0.0
        %3536 = vmatmul.mubr.f32.gmra.mrb[0].mxu0 %v3348
        %v3537 = vpop.f32.mrb[0].mxu0
        %v3538 = vadd.f32 0.0, %v3537
        %v3539 = vpop.f32.mrb[0].mxu0
        %3540 = vmatprep.mubr.f32.mxu0 0.0
        %3541 = vmatmul.mubr.f32.gmra.mrb[0].mxu0 %v3351
        %v3542 = vpop.f32.mrb[0].mxu0
        %v3543 = vadd.f32 0.0, %v3542
        %v3544 = vpop.f32.mrb[0].mxu0
        %3545 = vmatprep.mubr.f32.mxu0 0.0
        %3546 = vmatmul.mubr.f32.gmra.mrb[0].mxu0 %v3354
        %v3547 = vpop.f32.mrb[0].mxu0
        %v3548 = vadd.f32 0.0, %v3547
        %v3549 = vpop.f32.mrb[0].mxu0
        %3550 = vmatprep.mubr.f32.mxu0 0.0
        %3551 = vmatmul.mubr.f32.gmra.mrb[0].mxu0 %v3357
        %v3552 = vpop.f32.mrb[0].mxu0
        %v3553 = vadd.f32 0.0, %v3552
        %v3554 = vpop.f32.mrb[0].mxu0
        %3555 = vmatprep.mubr.f32.mxu0 0.0
        %3556 = vmatmul.mubr.f32.gmra.mrb[0].mxu0 %v3360
        %v3557 = vpop.f32.mrb[0].mxu0
        %v3558 = vadd.f32 0.0, %v3557
        %v3559 = vpop.f32.mrb[0].mxu0
        %3560 = vmatprep.mubr.f32.mxu0 0.0
        %3561 = vmatmul.mubr.f32.gmra.mrb[0].mxu0 %v3363
        %v3562 = vpop.f32.mrb[0].mxu0
        %v3563 = vadd.f32 0.0, %v3562
        %v3564 = vpop.f32.mrb[0].mxu0
        %3565 = vmatprep.mubr.f32.mxu0 0.0
        %3566 = vmatmul.mubr.f32.gmra.mrb[0].mxu0 %v3366
        %v3567 = vpop.f32.mrb[0].mxu0
        %v3568 = vadd.f32 0.0, %v3567
        %v3569 = vpop.f32.mrb[0].mxu0
        %3570 = vmatprep.mubr.f32.mxu0 0.0
        %3571 = vmatmul.mubr.f32.gmra.mrb[0].mxu0 %v3369
        %v3572 = vpop.f32.mrb[0].mxu0
        %v3573 = vadd.f32 0.0, %v3572
        %v3574 = vpop.f32.mrb[0].mxu0
        %3575 = vmatprep.mubr.f32.mxu0 0.0
        %3576 = vmatmul.mubr.f32.gmra.mrb[0].mxu0 %v3372
        %v3577 = vpop.f32.mrb[0].mxu0
        %v3578 = vadd.f32 0.0, %v3577
        %v3579 = vpop.f32.mrb[0].mxu0
        %3580 = vmatprep.mubr.f32.mxu0 0.0
        %3581 = vmatmul.mubr.f32.gmra.mrb[0].mxu0 %v3375
        %v3582 = vpop.f32.mrb[0].mxu0
        %v3583 = vadd.f32 0.0, %v3582
        %v3584 = vpop.f32.mrb[0].mxu0
        %3585 = vmatprep.mubr.f32.mxu0 0.0
        %3586 = vmatmul.mubr.f32.gmra.mrb[0].mxu0 %v3378
        %v3587 = vpop.f32.mrb[0].mxu0
        %v3588 = vadd.f32 0.0, %v3587
        %v3589 = vpop.f32.mrb[0].mxu0
        %3590 = vmatprep.mubr.f32.mxu0 0.0
        %3591 = vmatmul.mubr.f32.gmra.mrb[0].mxu0 %v3381
        %v3592 = vpop.f32.mrb[0].mxu0
        %v3593 = vadd.f32 0.0, %v3592
        %v3594 = vpop.f32.mrb[0].mxu0
        %3595 = vmatprep.mubr.f32.mxu0 0.0
        %3596 = vmatmul.mubr.f32.gmra.mrb[0].mxu0 %v3384
        %v3597 = vpop.f32.mrb[0].mxu0
        %v3598 = vadd.f32 0.0, %v3597
        %v3599 = vpop.f32.mrb[0].mxu0
        %3600 = vmatprep.mubr.f32.mxu0 0.0
        %3601 = vmatmul.mubr.f32.gmra.mrb[0].mxu0 %v3387
        %v3602 = vpop.f32.mrb[0].mxu0
        %v3603 = vadd.f32 0.0, %v3602
        %v3604 = vpop.f32.mrb[0].mxu0
        %3605 = vmatprep.mubr.f32.mxu0 0.0
        %3606 = vmatmul.mubr.f32.gmra.mrb[0].mxu0 %v3390
        %v3607 = vpop.f32.mrb[0].mxu0
        %v3608 = vadd.f32 0.0, %v3607
        %v3609 = vpop.f32.mrb[0].mxu0
        %3610 = vmatprep.mubr.f32.mxu0 0.0
        %3611 = vmatmul.mubr.f32.gmra.mrb[0].mxu0 %v3393
        %v3612 = vpop.f32.mrb[0].mxu0
        %v3613 = vadd.f32 0.0, %v3612
        %v3614 = vpop.f32.mrb[0].mxu0
        %3615 = vmatprep.mubr.f32.mxu0 0.0
        %3616 = vmatmul.mubr.f32.gmra.mrb[0].mxu0 %v3396
        %v3617 = vpop.f32.mrb[0].mxu0
        %v3618 = vadd.f32 0.0, %v3617
        %v3619 = vpop.f32.mrb[0].mxu0
        %3620 = vmatprep.mubr.f32.mxu0 0.0
        %3621 = vmatmul.mubr.f32.gmra.mrb[0].mxu0 %v3399
        %v3622 = vpop.f32.mrb[0].mxu0
        %v3623 = vadd.f32 0.0, %v3622
        %v3624 = vpop.f32.mrb[0].mxu0
        %3625 = vdwg.mxu0
        %v3626 = vadd.f32 %v3236, %v3468
        %v3627 = vadd.f32 %v3237, %v3473
        %v3628 = vadd.f32 %v3238, %v3478
        %v3629 = vadd.f32 %v3239, %v3483
        %v3630 = vadd.f32 %v3240, %v3488
        %v3631 = vadd.f32 %v3241, %v3493
        %v3632 = vadd.f32 %v3242, %v3498
        %v3633 = vadd.f32 %v3243, %v3503
        %v3634 = vadd.f32 %v3244, %v3508
        %v3635 = vadd.f32 %v3245, %v3513
        %v3636 = vadd.f32 %v3246, %v3518
        %v3637 = vadd.f32 %v3247, %v3523
        %v3638 = vadd.f32 %v3248, %v3528
        %v3639 = vadd.f32 %v3249, %v3533
        %v3640 = vadd.f32 %v3250, %v3538
        %v3641 = vadd.f32 %v3251, %v3543
        %v3642 = vadd.f32 %v3252, %v3548
        %v3643 = vadd.f32 %v3253, %v3553
        %v3644 = vadd.f32 %v3254, %v3558
        %v3645 = vadd.f32 %v3255, %v3563
        %v3646 = vadd.f32 %v3256, %v3568
        %v3647 = vadd.f32 %v3257, %v3573
        %v3648 = vadd.f32 %v3258, %v3578
        %v3649 = vadd.f32 %v3259, %v3583
        %v3650 = vadd.f32 %v3260, %v3588
        %v3651 = vadd.f32 %v3261, %v3593
        %v3652 = vadd.f32 %v3262, %v3598
        %v3653 = vadd.f32 %v3263, %v3603
        %v3654 = vadd.f32 %v3264, %v3608
        %v3655 = vadd.f32 %v3265, %v3613
        %v3656 = vadd.f32 %v3266, %v3618
        %v3657 = vadd.f32 %v3267, %v3623
        %v3658 = vld [vmem:[%s959] sm:$0xff]
        %v3659 = vld [vmem:[%s959 + $0x8] sm:$0xff]
        %v3660 = vld [vmem:[%s959 + $0x18] sm:$0xff]
        %v3661 = vld [vmem:[%s959 + $0x20] sm:$0xff]
        %v3662 = vld [vmem:[%s959 + $0x30] sm:$0xff]
        %v3663 = vld [vmem:[%s959 + $0x38] sm:$0xff]
        %v3664 = vld [vmem:[%s959 + $0x48] sm:$0xff]
        %v3665 = vld [vmem:[%s959 + $0x50] sm:$0xff]
        %v3666 = vld [vmem:[%s959 + $0x60] sm:$0xff]
        %v3667 = vld [vmem:[%s959 + $0x68] sm:$0xff]
        %v3668 = vld [vmem:[%s959 + $0x78] sm:$0xff]
        %v3669 = vld [vmem:[%s959 + $0x80] sm:$0xff]
        %v3670 = vld [vmem:[%s959 + $0x90] sm:$0xff]
        %v3671 = vld [vmem:[%s959 + $0x98] sm:$0xff]
        %v3672 = vld [vmem:[%s959 + $0xa8] sm:$0xff]
        %v3673 = vld [vmem:[%s959 + $0xb0] sm:$0xff]
        %v3674 = vld [vmem:[%s959 + $0xc0] sm:$0xff]
        %v3675 = vld [vmem:[%s959 + $0xc8] sm:$0xff]
        %v3676 = vld [vmem:[%s959 + $0xd8] sm:$0xff]
        %v3677 = vld [vmem:[%s959 + $0xe0] sm:$0xff]
        %v3678 = vld [vmem:[%s959 + $0xf0] sm:$0xff]
        %v3679 = vld [vmem:[%s959 + $0xf8] sm:$0xff]
        %v3680 = vld [vmem:[%s959 + $0x108] sm:$0xff]
        %v3681 = vld [vmem:[%s959 + $0x110] sm:$0xff]
        %v3682 = vld [vmem:[%s959 + $0x120] sm:$0xff]
        %v3683 = vld [vmem:[%s959 + $0x128] sm:$0xff]
        %v3684 = vld [vmem:[%s959 + $0x138] sm:$0xff]
        %v3685 = vld [vmem:[%s959 + $0x140] sm:$0xff]
        %v3686 = vld [vmem:[%s959 + $0x150] sm:$0xff]
        %v3687 = vld [vmem:[%s959 + $0x158] sm:$0xff]
        %v3688 = vld [vmem:[%s959 + $0x168] sm:$0xff]
        %v3689 = vld [vmem:[%s959 + $0x170] sm:$0xff]
        %s3690 = scalar_lea.vmem [#allocation9], 384
        %v3691 = vld [vmem:[%s3690] sm:$0xff]
        %v3692 = vld [vmem:[%s3690 + $0x8] sm:$0xff]
        %v3693 = vld [vmem:[%s3690 + $0x10] sm:$0xff]
        %v3694 = vld [vmem:[%s3690 + $0x18] sm:$0xff]
        %v3696 = vsel %vm897, %v3658, 0
        %v3699 = vsel %vm897, %v3659, 0
        %v3702 = vsel %vm897, %v3660, 0
        %v3705 = vsel %vm897, %v3661, 0
        %v3708 = vsel %vm897, %v3662, 0
        %v3711 = vsel %vm897, %v3663, 0
        %v3714 = vsel %vm897, %v3664, 0
        %v3717 = vsel %vm897, %v3665, 0
        %v3720 = vsel %vm897, %v3666, 0
        %v3723 = vsel %vm897, %v3667, 0
        %v3726 = vsel %vm897, %v3668, 0
        %v3729 = vsel %vm897, %v3669, 0
        %v3732 = vsel %vm897, %v3670, 0
        %v3735 = vsel %vm897, %v3671, 0
        %v3738 = vsel %vm897, %v3672, 0
        %v3741 = vsel %vm897, %v3673, 0
        %v3744 = vsel %vm897, %v3674, 0
        %v3747 = vsel %vm897, %v3675, 0
        %v3750 = vsel %vm897, %v3676, 0
        %v3753 = vsel %vm897, %v3677, 0
        %v3756 = vsel %vm897, %v3678, 0
        %v3759 = vsel %vm897, %v3679, 0
        %v3762 = vsel %vm897, %v3680, 0
        %v3765 = vsel %vm897, %v3681, 0
        %v3768 = vsel %vm897, %v3682, 0
        %v3771 = vsel %vm897, %v3683, 0
        %v3774 = vsel %vm897, %v3684, 0
        %v3777 = vsel %vm897, %v3685, 0
        %v3780 = vsel %vm897, %v3686, 0
        %v3783 = vsel %vm897, %v3687, 0
        %v3786 = vsel %vm897, %v3688, 0
        %v3789 = vsel %vm897, %v3689, 0
        %3791 = vmatprep.subr.mxu0 0.0
        %3792 = vmatpush1.msra.mxu0 %v3691
        %3793 = vmatprep.subr.mxu0 0.0
        %3794 = vmatpush1.msra.mxu0 %v3692
        %3795 = vmatprep.subr.mxu0 0.0
        %3796 = vmatpush1.msra.mxu0 %v3693
        %3797 = vmatprep.subr.mxu0 0.0
        %3798 = vmatpush1.msra.mxu0 %v3694
        %3799 = vmatprep.subr.mxu0 0.0
        %3800 = vmatpush1.msra.mxu0 0.0
        %3801 = vmatprep.subr.mxu0 0.0
        %3802 = vmatpush1.msra.mxu0 0.0
        %3803 = vmatprep.subr.mxu0 0.0
        %3804 = vmatpush1.msra.mxu0 0.0
        %3805 = vmatprep.subr.mxu0 0.0
        %3806 = vmatpush1.msra.mxu0 0.0
        %3807 = vmatprep.subr.mxu0 0.0
        %3808 = vmatpush1.msra.mxu0 0.0
        %3809 = vmatprep.subr.mxu0 0.0
        %3810 = vmatpush1.msra.mxu0 0.0
        %3811 = vmatprep.subr.mxu0 0.0
        %3812 = vmatpush1.msra.mxu0 0.0
        %3813 = vmatprep.subr.mxu0 0.0
        %3814 = vmatpush1.msra.mxu0 0.0
        %3815 = vmatprep.subr.mxu0 0.0
        %3816 = vmatpush1.msra.mxu0 0.0
        %3817 = vmatprep.subr.mxu0 0.0
        %3818 = vmatpush1.msra.mxu0 0.0
        %3819 = vmatprep.subr.mxu0 0.0
        %3820 = vmatpush1.msra.mxu0 0.0
        %3821 = vmatprep.subr.mxu0 0.0
        %3822 = vmatpush1.msra.mxu0 0.0
        %3823 = vmatprep.subr.mxu0 0.0
        %3824 = vmatpush1.msra.mxu0 0.0
        %3825 = vmatprep.subr.mxu0 0.0
        %3826 = vmatpush1.msra.mxu0 0.0
        %3827 = vmatprep.subr.mxu0 0.0
        %3828 = vmatpush1.msra.mxu0 0.0
        %3829 = vmatprep.subr.mxu0 0.0
        %3830 = vmatpush1.msra.mxu0 0.0
        %3831 = vmatprep.subr.mxu0 0.0
        %3832 = vmatpush1.msra.mxu0 0.0
        %3833 = vmatprep.subr.mxu0 0.0
        %3834 = vmatpush1.msra.mxu0 0.0
        %3835 = vmatprep.subr.mxu0 0.0
        %3836 = vmatpush1.msra.mxu0 0.0
        %3837 = vmatprep.subr.mxu0 0.0
        %3838 = vmatpush1.msra.mxu0 0.0
        %3839 = vmatprep.subr.mxu0 0.0
        %3840 = vmatpush1.msra.mxu0 0.0
        %3841 = vmatprep.subr.mxu0 0.0
        %3842 = vmatpush1.msra.mxu0 0.0
        %3843 = vmatprep.subr.mxu0 0.0
        %3844 = vmatpush1.msra.mxu0 0.0
        %3845 = vmatprep.subr.mxu0 0.0
        %3846 = vmatpush1.msra.mxu0 0.0
        %3847 = vmatprep.subr.mxu0 0.0
        %3848 = vmatpush1.msra.mxu0 0.0
        %3849 = vmatprep.subr.mxu0 0.0
        %3850 = vmatpush1.msra.mxu0 0.0
        %3851 = vmatprep.subr.mxu0 0.0
        %3852 = vmatpush1.msra.mxu0 0.0
        %3853 = vmatprep.subr.mxu0 0.0
        %3854 = vmatpush1.msra.mxu0 0.0
        %3855 = vmatprep.mubr.f32.mxu0 0.0
        %3856 = vmatmul.mubr.f32.gmra.mrb[0].mxu0 %v3696
        %v3857 = vpop.f32.mrb[0].mxu0
        %v3858 = vadd.f32 0.0, %v3857
        %v3859 = vpop.f32.mrb[0].mxu0
        %3860 = vmatprep.mubr.f32.mxu0 0.0
        %3861 = vmatmul.mubr.f32.gmra.mrb[0].mxu0 %v3699
        %v3862 = vpop.f32.mrb[0].mxu0
        %v3863 = vadd.f32 0.0, %v3862
        %v3864 = vpop.f32.mrb[0].mxu0
        %3865 = vmatprep.mubr.f32.mxu0 0.0
        %3866 = vmatmul.mubr.f32.gmra.mrb[0].mxu0 %v3702
        %v3867 = vpop.f32.mrb[0].mxu0
        %v3868 = vadd.f32 0.0, %v3867
        %v3869 = vpop.f32.mrb[0].mxu0
        %3870 = vmatprep.mubr.f32.mxu0 0.0
        %3871 = vmatmul.mubr.f32.gmra.mrb[0].mxu0 %v3705
        %v3872 = vpop.f32.mrb[0].mxu0
        %v3873 = vadd.f32 0.0, %v3872
        %v3874 = vpop.f32.mrb[0].mxu0
        %3875 = vmatprep.mubr.f32.mxu0 0.0
        %3876 = vmatmul.mubr.f32.gmra.mrb[0].mxu0 %v3708
        %v3877 = vpop.f32.mrb[0].mxu0
        %v3878 = vadd.f32 0.0, %v3877
        %v3879 = vpop.f32.mrb[0].mxu0
        %3880 = vmatprep.mubr.f32.mxu0 0.0
        %3881 = vmatmul.mubr.f32.gmra.mrb[0].mxu0 %v3711
        %v3882 = vpop.f32.mrb[0].mxu0
        %v3883 = vadd.f32 0.0, %v3882
        %v3884 = vpop.f32.mrb[0].mxu0
        %3885 = vmatprep.mubr.f32.mxu0 0.0
        %3886 = vmatmul.mubr.f32.gmra.mrb[0].mxu0 %v3714
        %v3887 = vpop.f32.mrb[0].mxu0
        %v3888 = vadd.f32 0.0, %v3887
        %v3889 = vpop.f32.mrb[0].mxu0
        %3890 = vmatprep.mubr.f32.mxu0 0.0
        %3891 = vmatmul.mubr.f32.gmra.mrb[0].mxu0 %v3717
        %v3892 = vpop.f32.mrb[0].mxu0
        %v3893 = vadd.f32 0.0, %v3892
        %v3894 = vpop.f32.mrb[0].mxu0
        %3895 = vmatprep.mubr.f32.mxu0 0.0
        %3896 = vmatmul.mubr.f32.gmra.mrb[0].mxu0 %v3720
        %v3897 = vpop.f32.mrb[0].mxu0
        %v3898 = vadd.f32 0.0, %v3897
        %v3899 = vpop.f32.mrb[0].mxu0
        %3900 = vmatprep.mubr.f32.mxu0 0.0
        %3901 = vmatmul.mubr.f32.gmra.mrb[0].mxu0 %v3723
        %v3902 = vpop.f32.mrb[0].mxu0
        %v3903 = vadd.f32 0.0, %v3902
        %v3904 = vpop.f32.mrb[0].mxu0
        %3905 = vmatprep.mubr.f32.mxu0 0.0
        %3906 = vmatmul.mubr.f32.gmra.mrb[0].mxu0 %v3726
        %v3907 = vpop.f32.mrb[0].mxu0
        %v3908 = vadd.f32 0.0, %v3907
        %v3909 = vpop.f32.mrb[0].mxu0
        %3910 = vmatprep.mubr.f32.mxu0 0.0
        %3911 = vmatmul.mubr.f32.gmra.mrb[0].mxu0 %v3729
        %v3912 = vpop.f32.mrb[0].mxu0
        %v3913 = vadd.f32 0.0, %v3912
        %v3914 = vpop.f32.mrb[0].mxu0
        %3915 = vmatprep.mubr.f32.mxu0 0.0
        %3916 = vmatmul.mubr.f32.gmra.mrb[0].mxu0 %v3732
        %v3917 = vpop.f32.mrb[0].mxu0
        %v3918 = vadd.f32 0.0, %v3917
        %v3919 = vpop.f32.mrb[0].mxu0
        %3920 = vmatprep.mubr.f32.mxu0 0.0
        %3921 = vmatmul.mubr.f32.gmra.mrb[0].mxu0 %v3735
        %v3922 = vpop.f32.mrb[0].mxu0
        %v3923 = vadd.f32 0.0, %v3922
        %v3924 = vpop.f32.mrb[0].mxu0
        %3925 = vmatprep.mubr.f32.mxu0 0.0
        %3926 = vmatmul.mubr.f32.gmra.mrb[0].mxu0 %v3738
        %v3927 = vpop.f32.mrb[0].mxu0
        %v3928 = vadd.f32 0.0, %v3927
        %v3929 = vpop.f32.mrb[0].mxu0
        %3930 = vmatprep.mubr.f32.mxu0 0.0
        %3931 = vmatmul.mubr.f32.gmra.mrb[0].mxu0 %v3741
        %v3932 = vpop.f32.mrb[0].mxu0
        %v3933 = vadd.f32 0.0, %v3932
        %v3934 = vpop.f32.mrb[0].mxu0
        %3935 = vmatprep.mubr.f32.mxu0 0.0
        %3936 = vmatmul.mubr.f32.gmra.mrb[0].mxu0 %v3744
        %v3937 = vpop.f32.mrb[0].mxu0
        %v3938 = vadd.f32 0.0, %v3937
        %v3939 = vpop.f32.mrb[0].mxu0
        %3940 = vmatprep.mubr.f32.mxu0 0.0
        %3941 = vmatmul.mubr.f32.gmra.mrb[0].mxu0 %v3747
        %v3942 = vpop.f32.mrb[0].mxu0
        %v3943 = vadd.f32 0.0, %v3942
        %v3944 = vpop.f32.mrb[0].mxu0
        %3945 = vmatprep.mubr.f32.mxu0 0.0
        %3946 = vmatmul.mubr.f32.gmra.mrb[0].mxu0 %v3750
        %v3947 = vpop.f32.mrb[0].mxu0
        %v3948 = vadd.f32 0.0, %v3947
        %v3949 = vpop.f32.mrb[0].mxu0
        %3950 = vmatprep.mubr.f32.mxu0 0.0
        %3951 = vmatmul.mubr.f32.gmra.mrb[0].mxu0 %v3753
        %v3952 = vpop.f32.mrb[0].mxu0
        %v3953 = vadd.f32 0.0, %v3952
        %v3954 = vpop.f32.mrb[0].mxu0
        %3955 = vmatprep.mubr.f32.mxu0 0.0
        %3956 = vmatmul.mubr.f32.gmra.mrb[0].mxu0 %v3756
        %v3957 = vpop.f32.mrb[0].mxu0
        %v3958 = vadd.f32 0.0, %v3957
        %v3959 = vpop.f32.mrb[0].mxu0
        %3960 = vmatprep.mubr.f32.mxu0 0.0
        %3961 = vmatmul.mubr.f32.gmra.mrb[0].mxu0 %v3759
        %v3962 = vpop.f32.mrb[0].mxu0
        %v3963 = vadd.f32 0.0, %v3962
        %v3964 = vpop.f32.mrb[0].mxu0
        %3965 = vmatprep.mubr.f32.mxu0 0.0
        %3966 = vmatmul.mubr.f32.gmra.mrb[0].mxu0 %v3762
        %v3967 = vpop.f32.mrb[0].mxu0
        %v3968 = vadd.f32 0.0, %v3967
        %v3969 = vpop.f32.mrb[0].mxu0
        %3970 = vmatprep.mubr.f32.mxu0 0.0
        %3971 = vmatmul.mubr.f32.gmra.mrb[0].mxu0 %v3765
        %v3972 = vpop.f32.mrb[0].mxu0
        %v3973 = vadd.f32 0.0, %v3972
        %v3974 = vpop.f32.mrb[0].mxu0
        %3975 = vmatprep.mubr.f32.mxu0 0.0
        %3976 = vmatmul.mubr.f32.gmra.mrb[0].mxu0 %v3768
        %v3977 = vpop.f32.mrb[0].mxu0
        %v3978 = vadd.f32 0.0, %v3977
        %v3979 = vpop.f32.mrb[0].mxu0
        %3980 = vmatprep.mubr.f32.mxu0 0.0
        %3981 = vmatmul.mubr.f32.gmra.mrb[0].mxu0 %v3771
        %v3982 = vpop.f32.mrb[0].mxu0
        %v3983 = vadd.f32 0.0, %v3982
        %v3984 = vpop.f32.mrb[0].mxu0
        %3985 = vmatprep.mubr.f32.mxu0 0.0
        %3986 = vmatmul.mubr.f32.gmra.mrb[0].mxu0 %v3774
        %v3987 = vpop.f32.mrb[0].mxu0
        %v3988 = vadd.f32 0.0, %v3987
        %v3989 = vpop.f32.mrb[0].mxu0
        %3990 = vmatprep.mubr.f32.mxu0 0.0
        %3991 = vmatmul.mubr.f32.gmra.mrb[0].mxu0 %v3777
        %v3992 = vpop.f32.mrb[0].mxu0
        %v3993 = vadd.f32 0.0, %v3992
        %v3994 = vpop.f32.mrb[0].mxu0
        %3995 = vmatprep.mubr.f32.mxu0 0.0
        %3996 = vmatmul.mubr.f32.gmra.mrb[0].mxu0 %v3780
        %v3997 = vpop.f32.mrb[0].mxu0
        %v3998 = vadd.f32 0.0, %v3997
        %v3999 = vpop.f32.mrb[0].mxu0
        %4000 = vmatprep.mubr.f32.mxu0 0.0
        %4001 = vmatmul.mubr.f32.gmra.mrb[0].mxu0 %v3783
        %v4002 = vpop.f32.mrb[0].mxu0
        %v4003 = vadd.f32 0.0, %v4002
        %v4004 = vpop.f32.mrb[0].mxu0
        %4005 = vmatprep.mubr.f32.mxu0 0.0
        %4006 = vmatmul.mubr.f32.gmra.mrb[0].mxu0 %v3786
        %v4007 = vpop.f32.mrb[0].mxu0
        %v4008 = vadd.f32 0.0, %v4007
        %v4009 = vpop.f32.mrb[0].mxu0
        %4010 = vmatprep.mubr.f32.mxu0 0.0
        %4011 = vmatmul.mubr.f32.gmra.mrb[0].mxu0 %v3789
        %v4012 = vpop.f32.mrb[0].mxu0
        %v4013 = vadd.f32 0.0, %v4012
        %v4014 = vpop.f32.mrb[0].mxu0
        %4015 = vdwg.mxu0
        %v4016 = vadd.f32 %v3626, %v3858
        %v4017 = vadd.f32 %v3627, %v3863
        %v4018 = vadd.f32 %v3628, %v3868
        %v4019 = vadd.f32 %v3629, %v3873
        %v4020 = vadd.f32 %v3630, %v3878
        %v4021 = vadd.f32 %v3631, %v3883
        %v4022 = vadd.f32 %v3632, %v3888
        %v4023 = vadd.f32 %v3633, %v3893
        %v4024 = vadd.f32 %v3634, %v3898
        %v4025 = vadd.f32 %v3635, %v3903
        %v4026 = vadd.f32 %v3636, %v3908
        %v4027 = vadd.f32 %v3637, %v3913
        %v4028 = vadd.f32 %v3638, %v3918
        %v4029 = vadd.f32 %v3639, %v3923
        %v4030 = vadd.f32 %v3640, %v3928
        %v4031 = vadd.f32 %v3641, %v3933
        %v4032 = vadd.f32 %v3642, %v3938
        %v4033 = vadd.f32 %v3643, %v3943
        %v4034 = vadd.f32 %v3644, %v3948
        %v4035 = vadd.f32 %v3645, %v3953
        %v4036 = vadd.f32 %v3646, %v3958
        %v4037 = vadd.f32 %v3647, %v3963
        %v4038 = vadd.f32 %v3648, %v3968
        %v4039 = vadd.f32 %v3649, %v3973
        %v4040 = vadd.f32 %v3650, %v3978
        %v4041 = vadd.f32 %v3651, %v3983
        %v4042 = vadd.f32 %v3652, %v3988
        %v4043 = vadd.f32 %v3653, %v3993
        %v4044 = vadd.f32 %v3654, %v3998
        %v4045 = vadd.f32 %v3655, %v4003
        %v4046 = vadd.f32 %v3656, %v4008
        %v4047 = vadd.f32 %v3657, %v4013
        %v4048 = vld [vmem:[%s959 + $0x2] sm:$0xff]
        %v4049 = vld [vmem:[%s959 + $0xa] sm:$0xff]
        %v4050 = vld [vmem:[%s959 + $0x1a] sm:$0xff]
        %v4051 = vld [vmem:[%s959 + $0x22] sm:$0xff]
        %v4052 = vld [vmem:[%s959 + $0x32] sm:$0xff]
        %v4053 = vld [vmem:[%s959 + $0x3a] sm:$0xff]
        %v4054 = vld [vmem:[%s959 + $0x4a] sm:$0xff]
        %v4055 = vld [vmem:[%s959 + $0x52] sm:$0xff]
        %v4056 = vld [vmem:[%s959 + $0x62] sm:$0xff]
        %v4057 = vld [vmem:[%s959 + $0x6a] sm:$0xff]
        %v4058 = vld [vmem:[%s959 + $0x7a] sm:$0xff]
        %v4059 = vld [vmem:[%s959 + $0x82] sm:$0xff]
        %v4060 = vld [vmem:[%s959 + $0x92] sm:$0xff]
        %v4061 = vld [vmem:[%s959 + $0x9a] sm:$0xff]
        %v4062 = vld [vmem:[%s959 + $0xaa] sm:$0xff]
        %v4063 = vld [vmem:[%s959 + $0xb2] sm:$0xff]
        %v4064 = vld [vmem:[%s959 + $0xc2] sm:$0xff]
        %v4065 = vld [vmem:[%s959 + $0xca] sm:$0xff]
        %v4066 = vld [vmem:[%s959 + $0xda] sm:$0xff]
        %v4067 = vld [vmem:[%s959 + $0xe2] sm:$0xff]
        %v4068 = vld [vmem:[%s959 + $0xf2] sm:$0xff]
        %v4069 = vld [vmem:[%s959 + $0xfa] sm:$0xff]
        %v4070 = vld [vmem:[%s959 + $0x10a] sm:$0xff]
        %v4071 = vld [vmem:[%s959 + $0x112] sm:$0xff]
        %v4072 = vld [vmem:[%s959 + $0x122] sm:$0xff]
        %v4073 = vld [vmem:[%s959 + $0x12a] sm:$0xff]
        %v4074 = vld [vmem:[%s959 + $0x13a] sm:$0xff]
        %v4075 = vld [vmem:[%s959 + $0x142] sm:$0xff]
        %v4076 = vld [vmem:[%s959 + $0x152] sm:$0xff]
        %v4077 = vld [vmem:[%s959 + $0x15a] sm:$0xff]
        %v4078 = vld [vmem:[%s959 + $0x16a] sm:$0xff]
        %v4079 = vld [vmem:[%s959 + $0x172] sm:$0xff]
        %s4080 = scalar_lea.vmem [#allocation9], 128
        %v4081 = vld [vmem:[%s4080] sm:$0xff]
        %v4082 = vld [vmem:[%s4080 + $0x8] sm:$0xff]
        %v4083 = vld [vmem:[%s4080 + $0x10] sm:$0xff]
        %v4084 = vld [vmem:[%s4080 + $0x18] sm:$0xff]
        %v4086 = vsel %vm897, %v4048, 0
        %v4089 = vsel %vm897, %v4049, 0
        %v4092 = vsel %vm897, %v4050, 0
        %v4095 = vsel %vm897, %v4051, 0
        %v4098 = vsel %vm897, %v4052, 0
        %v4101 = vsel %vm897, %v4053, 0
        %v4104 = vsel %vm897, %v4054, 0
        %v4107 = vsel %vm897, %v4055, 0
        %v4110 = vsel %vm897, %v4056, 0
        %v4113 = vsel %vm897, %v4057, 0
        %v4116 = vsel %vm897, %v4058, 0
        %v4119 = vsel %vm897, %v4059, 0
        %v4122 = vsel %vm897, %v4060, 0
        %v4125 = vsel %vm897, %v4061, 0
        %v4128 = vsel %vm897, %v4062, 0
        %v4131 = vsel %vm897, %v4063, 0
        %v4134 = vsel %vm897, %v4064, 0
        %v4137 = vsel %vm897, %v4065, 0
        %v4140 = vsel %vm897, %v4066, 0
        %v4143 = vsel %vm897, %v4067, 0
        %v4146 = vsel %vm897, %v4068, 0
        %v4149 = vsel %vm897, %v4069, 0
        %v4152 = vsel %vm897, %v4070, 0
        %v4155 = vsel %vm897, %v4071, 0
        %v4158 = vsel %vm897, %v4072, 0
        %v4161 = vsel %vm897, %v4073, 0
        %v4164 = vsel %vm897, %v4074, 0
        %v4167 = vsel %vm897, %v4075, 0
        %v4170 = vsel %vm897, %v4076, 0
        %v4173 = vsel %vm897, %v4077, 0
        %v4176 = vsel %vm897, %v4078, 0
        %v4179 = vsel %vm897, %v4079, 0
        %4181 = vmatprep.subr.mxu0 0.0
        %4182 = vmatpush1.msra.mxu0 %v4081
        %4183 = vmatprep.subr.mxu0 0.0
        %4184 = vmatpush1.msra.mxu0 %v4082
        %4185 = vmatprep.subr.mxu0 0.0
        %4186 = vmatpush1.msra.mxu0 %v4083
        %4187 = vmatprep.subr.mxu0 0.0
        %4188 = vmatpush1.msra.mxu0 %v4084
        %4189 = vmatprep.subr.mxu0 0.0
        %4190 = vmatpush1.msra.mxu0 0.0
        %4191 = vmatprep.subr.mxu0 0.0
        %4192 = vmatpush1.msra.mxu0 0.0
        %4193 = vmatprep.subr.mxu0 0.0
        %4194 = vmatpush1.msra.mxu0 0.0
        %4195 = vmatprep.subr.mxu0 0.0
        %4196 = vmatpush1.msra.mxu0 0.0
        %4197 = vmatprep.subr.mxu0 0.0
        %4198 = vmatpush1.msra.mxu0 0.0
        %4199 = vmatprep.subr.mxu0 0.0
        %4200 = vmatpush1.msra.mxu0 0.0
        %4201 = vmatprep.subr.mxu0 0.0
        %4202 = vmatpush1.msra.mxu0 0.0
        %4203 = vmatprep.subr.mxu0 0.0
        %4204 = vmatpush1.msra.mxu0 0.0
        %4205 = vmatprep.subr.mxu0 0.0
        %4206 = vmatpush1.msra.mxu0 0.0
        %4207 = vmatprep.subr.mxu0 0.0
        %4208 = vmatpush1.msra.mxu0 0.0
        %4209 = vmatprep.subr.mxu0 0.0
        %4210 = vmatpush1.msra.mxu0 0.0
        %4211 = vmatprep.subr.mxu0 0.0
        %4212 = vmatpush1.msra.mxu0 0.0
        %4213 = vmatprep.subr.mxu0 0.0
        %4214 = vmatpush1.msra.mxu0 0.0
        %4215 = vmatprep.subr.mxu0 0.0
        %4216 = vmatpush1.msra.mxu0 0.0
        %4217 = vmatprep.subr.mxu0 0.0
        %4218 = vmatpush1.msra.mxu0 0.0
        %4219 = vmatprep.subr.mxu0 0.0
        %4220 = vmatpush1.msra.mxu0 0.0
        %4221 = vmatprep.subr.mxu0 0.0
        %4222 = vmatpush1.msra.mxu0 0.0
        %4223 = vmatprep.subr.mxu0 0.0
        %4224 = vmatpush1.msra.mxu0 0.0
        %4225 = vmatprep.subr.mxu0 0.0
        %4226 = vmatpush1.msra.mxu0 0.0
        %4227 = vmatprep.subr.mxu0 0.0
        %4228 = vmatpush1.msra.mxu0 0.0
        %4229 = vmatprep.subr.mxu0 0.0
        %4230 = vmatpush1.msra.mxu0 0.0
        %4231 = vmatprep.subr.mxu0 0.0
        %4232 = vmatpush1.msra.mxu0 0.0
        %4233 = vmatprep.subr.mxu0 0.0
        %4234 = vmatpush1.msra.mxu0 0.0
        %4235 = vmatprep.subr.mxu0 0.0
        %4236 = vmatpush1.msra.mxu0 0.0
        %4237 = vmatprep.subr.mxu0 0.0
        %4238 = vmatpush1.msra.mxu0 0.0
        %4239 = vmatprep.subr.mxu0 0.0
        %4240 = vmatpush1.msra.mxu0 0.0
        %4241 = vmatprep.subr.mxu0 0.0
        %4242 = vmatpush1.msra.mxu0 0.0
        %4243 = vmatprep.subr.mxu0 0.0
        %4244 = vmatpush1.msra.mxu0 0.0
        %4245 = vmatprep.mubr.f32.mxu0 0.0
        %4246 = vmatmul.mubr.f32.gmra.mrb[0].mxu0 %v4086
        %v4247 = vpop.f32.mrb[0].mxu0
        %v4248 = vadd.f32 0.0, %v4247
        %v4249 = vpop.f32.mrb[0].mxu0
        %4250 = vmatprep.mubr.f32.mxu0 0.0
        %4251 = vmatmul.mubr.f32.gmra.mrb[0].mxu0 %v4089
        %v4252 = vpop.f32.mrb[0].mxu0
        %v4253 = vadd.f32 0.0, %v4252
        %v4254 = vpop.f32.mrb[0].mxu0
        %4255 = vmatprep.mubr.f32.mxu0 0.0
        %4256 = vmatmul.mubr.f32.gmra.mrb[0].mxu0 %v4092
        %v4257 = vpop.f32.mrb[0].mxu0
        %v4258 = vadd.f32 0.0, %v4257
        %v4259 = vpop.f32.mrb[0].mxu0
        %4260 = vmatprep.mubr.f32.mxu0 0.0
        %4261 = vmatmul.mubr.f32.gmra.mrb[0].mxu0 %v4095
        %v4262 = vpop.f32.mrb[0].mxu0
        %v4263 = vadd.f32 0.0, %v4262
        %v4264 = vpop.f32.mrb[0].mxu0
        %4265 = vmatprep.mubr.f32.mxu0 0.0
        %4266 = vmatmul.mubr.f32.gmra.mrb[0].mxu0 %v4098
        %v4267 = vpop.f32.mrb[0].mxu0
        %v4268 = vadd.f32 0.0, %v4267
        %v4269 = vpop.f32.mrb[0].mxu0
        %4270 = vmatprep.mubr.f32.mxu0 0.0
        %4271 = vmatmul.mubr.f32.gmra.mrb[0].mxu0 %v4101
        %v4272 = vpop.f32.mrb[0].mxu0
        %v4273 = vadd.f32 0.0, %v4272
        %v4274 = vpop.f32.mrb[0].mxu0
        %4275 = vmatprep.mubr.f32.mxu0 0.0
        %4276 = vmatmul.mubr.f32.gmra.mrb[0].mxu0 %v4104
        %v4277 = vpop.f32.mrb[0].mxu0
        %v4278 = vadd.f32 0.0, %v4277
        %v4279 = vpop.f32.mrb[0].mxu0
        %4280 = vmatprep.mubr.f32.mxu0 0.0
        %4281 = vmatmul.mubr.f32.gmra.mrb[0].mxu0 %v4107
        %v4282 = vpop.f32.mrb[0].mxu0
        %v4283 = vadd.f32 0.0, %v4282
        %v4284 = vpop.f32.mrb[0].mxu0
        %4285 = vmatprep.mubr.f32.mxu0 0.0
        %4286 = vmatmul.mubr.f32.gmra.mrb[0].mxu0 %v4110
        %v4287 = vpop.f32.mrb[0].mxu0
        %v4288 = vadd.f32 0.0, %v4287
        %v4289 = vpop.f32.mrb[0].mxu0
        %4290 = vmatprep.mubr.f32.mxu0 0.0
        %4291 = vmatmul.mubr.f32.gmra.mrb[0].mxu0 %v4113
        %v4292 = vpop.f32.mrb[0].mxu0
        %v4293 = vadd.f32 0.0, %v4292
        %v4294 = vpop.f32.mrb[0].mxu0
        %4295 = vmatprep.mubr.f32.mxu0 0.0
        %4296 = vmatmul.mubr.f32.gmra.mrb[0].mxu0 %v4116
        %v4297 = vpop.f32.mrb[0].mxu0
        %v4298 = vadd.f32 0.0, %v4297
        %v4299 = vpop.f32.mrb[0].mxu0
        %4300 = vmatprep.mubr.f32.mxu0 0.0
        %4301 = vmatmul.mubr.f32.gmra.mrb[0].mxu0 %v4119
        %v4302 = vpop.f32.mrb[0].mxu0
        %v4303 = vadd.f32 0.0, %v4302
        %v4304 = vpop.f32.mrb[0].mxu0
        %4305 = vmatprep.mubr.f32.mxu0 0.0
        %4306 = vmatmul.mubr.f32.gmra.mrb[0].mxu0 %v4122
        %v4307 = vpop.f32.mrb[0].mxu0
        %v4308 = vadd.f32 0.0, %v4307
        %v4309 = vpop.f32.mrb[0].mxu0
        %4310 = vmatprep.mubr.f32.mxu0 0.0
        %4311 = vmatmul.mubr.f32.gmra.mrb[0].mxu0 %v4125
        %v4312 = vpop.f32.mrb[0].mxu0
        %v4313 = vadd.f32 0.0, %v4312
        %v4314 = vpop.f32.mrb[0].mxu0
        %4315 = vmatprep.mubr.f32.mxu0 0.0
        %4316 = vmatmul.mubr.f32.gmra.mrb[0].mxu0 %v4128
        %v4317 = vpop.f32.mrb[0].mxu0
        %v4318 = vadd.f32 0.0, %v4317
        %v4319 = vpop.f32.mrb[0].mxu0
        %4320 = vmatprep.mubr.f32.mxu0 0.0
        %4321 = vmatmul.mubr.f32.gmra.mrb[0].mxu0 %v4131
        %v4322 = vpop.f32.mrb[0].mxu0
        %v4323 = vadd.f32 0.0, %v4322
        %v4324 = vpop.f32.mrb[0].mxu0
        %4325 = vmatprep.mubr.f32.mxu0 0.0
        %4326 = vmatmul.mubr.f32.gmra.mrb[0].mxu0 %v4134
        %v4327 = vpop.f32.mrb[0].mxu0
        %v4328 = vadd.f32 0.0, %v4327
        %v4329 = vpop.f32.mrb[0].mxu0
        %4330 = vmatprep.mubr.f32.mxu0 0.0
        %4331 = vmatmul.mubr.f32.gmra.mrb[0].mxu0 %v4137
        %v4332 = vpop.f32.mrb[0].mxu0
        %v4333 = vadd.f32 0.0, %v4332
        %v4334 = vpop.f32.mrb[0].mxu0
        %4335 = vmatprep.mubr.f32.mxu0 0.0
        %4336 = vmatmul.mubr.f32.gmra.mrb[0].mxu0 %v4140
        %v4337 = vpop.f32.mrb[0].mxu0
        %v4338 = vadd.f32 0.0, %v4337
        %v4339 = vpop.f32.mrb[0].mxu0
        %4340 = vmatprep.mubr.f32.mxu0 0.0
        %4341 = vmatmul.mubr.f32.gmra.mrb[0].mxu0 %v4143
        %v4342 = vpop.f32.mrb[0].mxu0
        %v4343 = vadd.f32 0.0, %v4342
        %v4344 = vpop.f32.mrb[0].mxu0
        %4345 = vmatprep.mubr.f32.mxu0 0.0
        %4346 = vmatmul.mubr.f32.gmra.mrb[0].mxu0 %v4146
        %v4347 = vpop.f32.mrb[0].mxu0
        %v4348 = vadd.f32 0.0, %v4347
        %v4349 = vpop.f32.mrb[0].mxu0
        %4350 = vmatprep.mubr.f32.mxu0 0.0
        %4351 = vmatmul.mubr.f32.gmra.mrb[0].mxu0 %v4149
        %v4352 = vpop.f32.mrb[0].mxu0
        %v4353 = vadd.f32 0.0, %v4352
        %v4354 = vpop.f32.mrb[0].mxu0
        %4355 = vmatprep.mubr.f32.mxu0 0.0
        %4356 = vmatmul.mubr.f32.gmra.mrb[0].mxu0 %v4152
        %v4357 = vpop.f32.mrb[0].mxu0
        %v4358 = vadd.f32 0.0, %v4357
        %v4359 = vpop.f32.mrb[0].mxu0
        %4360 = vmatprep.mubr.f32.mxu0 0.0
        %4361 = vmatmul.mubr.f32.gmra.mrb[0].mxu0 %v4155
        %v4362 = vpop.f32.mrb[0].mxu0
        %v4363 = vadd.f32 0.0, %v4362
        %v4364 = vpop.f32.mrb[0].mxu0
        %4365 = vmatprep.mubr.f32.mxu0 0.0
        %4366 = vmatmul.mubr.f32.gmra.mrb[0].mxu0 %v4158
        %v4367 = vpop.f32.mrb[0].mxu0
        %v4368 = vadd.f32 0.0, %v4367
        %v4369 = vpop.f32.mrb[0].mxu0
        %4370 = vmatprep.mubr.f32.mxu0 0.0
        %4371 = vmatmul.mubr.f32.gmra.mrb[0].mxu0 %v4161
        %v4372 = vpop.f32.mrb[0].mxu0
        %v4373 = vadd.f32 0.0, %v4372
        %v4374 = vpop.f32.mrb[0].mxu0
        %4375 = vmatprep.mubr.f32.mxu0 0.0
        %4376 = vmatmul.mubr.f32.gmra.mrb[0].mxu0 %v4164
        %v4377 = vpop.f32.mrb[0].mxu0
        %v4378 = vadd.f32 0.0, %v4377
        %v4379 = vpop.f32.mrb[0].mxu0
        %4380 = vmatprep.mubr.f32.mxu0 0.0
        %4381 = vmatmul.mubr.f32.gmra.mrb[0].mxu0 %v4167
        %v4382 = vpop.f32.mrb[0].mxu0
        %v4383 = vadd.f32 0.0, %v4382
        %v4384 = vpop.f32.mrb[0].mxu0
        %4385 = vmatprep.mubr.f32.mxu0 0.0
        %4386 = vmatmul.mubr.f32.gmra.mrb[0].mxu0 %v4170
        %v4387 = vpop.f32.mrb[0].mxu0
        %v4388 = vadd.f32 0.0, %v4387
        %v4389 = vpop.f32.mrb[0].mxu0
        %4390 = vmatprep.mubr.f32.mxu0 0.0
        %4391 = vmatmul.mubr.f32.gmra.mrb[0].mxu0 %v4173
        %v4392 = vpop.f32.mrb[0].mxu0
        %v4393 = vadd.f32 0.0, %v4392
        %v4394 = vpop.f32.mrb[0].mxu0
        %4395 = vmatprep.mubr.f32.mxu0 0.0
        %4396 = vmatmul.mubr.f32.gmra.mrb[0].mxu0 %v4176
        %v4397 = vpop.f32.mrb[0].mxu0
        %v4398 = vadd.f32 0.0, %v4397
        %v4399 = vpop.f32.mrb[0].mxu0
        %4400 = vmatprep.mubr.f32.mxu0 0.0
        %4401 = vmatmul.mubr.f32.gmra.mrb[0].mxu0 %v4179
        %v4402 = vpop.f32.mrb[0].mxu0
        %v4403 = vadd.f32 0.0, %v4402
        %v4404 = vpop.f32.mrb[0].mxu0
        %4405 = vdwg.mxu0
        %v4406 = vadd.f32 %v4016, %v4248
        %v4407 = vadd.f32 %v4017, %v4253
        %v4408 = vadd.f32 %v4018, %v4258
        %v4409 = vadd.f32 %v4019, %v4263
        %v4410 = vadd.f32 %v4020, %v4268
        %v4411 = vadd.f32 %v4021, %v4273
        %v4412 = vadd.f32 %v4022, %v4278
        %v4413 = vadd.f32 %v4023, %v4283
        %v4414 = vadd.f32 %v4024, %v4288
        %v4415 = vadd.f32 %v4025, %v4293
        %v4416 = vadd.f32 %v4026, %v4298
        %v4417 = vadd.f32 %v4027, %v4303
        %v4418 = vadd.f32 %v4028, %v4308
        %v4419 = vadd.f32 %v4029, %v4313
        %v4420 = vadd.f32 %v4030, %v4318
        %v4421 = vadd.f32 %v4031, %v4323
        %v4422 = vadd.f32 %v4032, %v4328
        %v4423 = vadd.f32 %v4033, %v4333
        %v4424 = vadd.f32 %v4034, %v4338
        %v4425 = vadd.f32 %v4035, %v4343
        %v4426 = vadd.f32 %v4036, %v4348
        %v4427 = vadd.f32 %v4037, %v4353
        %v4428 = vadd.f32 %v4038, %v4358
        %v4429 = vadd.f32 %v4039, %v4363
        %v4430 = vadd.f32 %v4040, %v4368
        %v4431 = vadd.f32 %v4041, %v4373
        %v4432 = vadd.f32 %v4042, %v4378
        %v4433 = vadd.f32 %v4043, %v4383
        %v4434 = vadd.f32 %v4044, %v4388
        %v4435 = vadd.f32 %v4045, %v4393
        %v4436 = vadd.f32 %v4046, %v4398
        %v4437 = vadd.f32 %v4047, %v4403
        %s4438 = scalar_lea.vmem [#allocation9], 416
        %v4439 = vld [vmem:[%s4438] sm:$0xff]
        %v4440 = vld [vmem:[%s4438 + $0x8] sm:$0xff]
        %v4441 = vld [vmem:[%s4438 + $0x10] sm:$0xff]
        %v4442 = vld [vmem:[%s4438 + $0x18] sm:$0xff]
        %4443 = vmatprep.subr.mxu0 0.0
        %4444 = vmatpush1.msra.mxu0 %v4439
        %4445 = vmatprep.subr.mxu0 0.0
        %4446 = vmatpush1.msra.mxu0 %v4440
        %4447 = vmatprep.subr.mxu0 0.0
        %4448 = vmatpush1.msra.mxu0 %v4441
        %4449 = vmatprep.subr.mxu0 0.0
        %4450 = vmatpush1.msra.mxu0 %v4442
        %4451 = vmatprep.subr.mxu0 0.0
        %4452 = vmatpush1.msra.mxu0 0.0
        %4453 = vmatprep.subr.mxu0 0.0
        %4454 = vmatpush1.msra.mxu0 0.0
        %4455 = vmatprep.subr.mxu0 0.0
        %4456 = vmatpush1.msra.mxu0 0.0
        %4457 = vmatprep.subr.mxu0 0.0
        %4458 = vmatpush1.msra.mxu0 0.0
        %4459 = vmatprep.subr.mxu0 0.0
        %4460 = vmatpush1.msra.mxu0 0.0
        %4461 = vmatprep.subr.mxu0 0.0
        %4462 = vmatpush1.msra.mxu0 0.0
        %4463 = vmatprep.subr.mxu0 0.0
        %4464 = vmatpush1.msra.mxu0 0.0
        %4465 = vmatprep.subr.mxu0 0.0
        %4466 = vmatpush1.msra.mxu0 0.0
        %4467 = vmatprep.subr.mxu0 0.0
        %4468 = vmatpush1.msra.mxu0 0.0
        %4469 = vmatprep.subr.mxu0 0.0
        %4470 = vmatpush1.msra.mxu0 0.0
        %4471 = vmatprep.subr.mxu0 0.0
        %4472 = vmatpush1.msra.mxu0 0.0
        %4473 = vmatprep.subr.mxu0 0.0
        %4474 = vmatpush1.msra.mxu0 0.0
        %4475 = vmatprep.subr.mxu0 0.0
        %4476 = vmatpush1.msra.mxu0 0.0
        %4477 = vmatprep.subr.mxu0 0.0
        %4478 = vmatpush1.msra.mxu0 0.0
        %4479 = vmatprep.subr.mxu0 0.0
        %4480 = vmatpush1.msra.mxu0 0.0
        %4481 = vmatprep.subr.mxu0 0.0
        %4482 = vmatpush1.msra.mxu0 0.0
        %4483 = vmatprep.subr.mxu0 0.0
        %4484 = vmatpush1.msra.mxu0 0.0
        %4485 = vmatprep.subr.mxu0 0.0
        %4486 = vmatpush1.msra.mxu0 0.0
        %4487 = vmatprep.subr.mxu0 0.0
        %4488 = vmatpush1.msra.mxu0 0.0
        %4489 = vmatprep.subr.mxu0 0.0
        %4490 = vmatpush1.msra.mxu0 0.0
        %4491 = vmatprep.subr.mxu0 0.0
        %4492 = vmatpush1.msra.mxu0 0.0
        %4493 = vmatprep.subr.mxu0 0.0
        %4494 = vmatpush1.msra.mxu0 0.0
        %4495 = vmatprep.subr.mxu0 0.0
        %4496 = vmatpush1.msra.mxu0 0.0
        %4497 = vmatprep.subr.mxu0 0.0
        %4498 = vmatpush1.msra.mxu0 0.0
        %4499 = vmatprep.subr.mxu0 0.0
        %4500 = vmatpush1.msra.mxu0 0.0
        %4501 = vmatprep.subr.mxu0 0.0
        %4502 = vmatpush1.msra.mxu0 0.0
        %4503 = vmatprep.subr.mxu0 0.0
        %4504 = vmatpush1.msra.mxu0 0.0
        %4505 = vmatprep.subr.mxu0 0.0
        %4506 = vmatpush1.msra.mxu0 0.0
        %4507 = vmatprep.mubr.f32.mxu0 0.0
        %4508 = vmatmul.mubr.f32.gmra.mrb[0].mxu0 %v4086
        %v4509 = vpop.f32.mrb[0].mxu0
        %v4510 = vadd.f32 0.0, %v4509
        %v4511 = vpop.f32.mrb[0].mxu0
        %4512 = vmatprep.mubr.f32.mxu0 0.0
        %4513 = vmatmul.mubr.f32.gmra.mrb[0].mxu0 %v4089
        %v4514 = vpop.f32.mrb[0].mxu0
        %v4515 = vadd.f32 0.0, %v4514
        %v4516 = vpop.f32.mrb[0].mxu0
        %4517 = vmatprep.mubr.f32.mxu0 0.0
        %4518 = vmatmul.mubr.f32.gmra.mrb[0].mxu0 %v4092
        %v4519 = vpop.f32.mrb[0].mxu0
        %v4520 = vadd.f32 0.0, %v4519
        %v4521 = vpop.f32.mrb[0].mxu0
        %4522 = vmatprep.mubr.f32.mxu0 0.0
        %4523 = vmatmul.mubr.f32.gmra.mrb[0].mxu0 %v4095
        %v4524 = vpop.f32.mrb[0].mxu0
        %v4525 = vadd.f32 0.0, %v4524
        %v4526 = vpop.f32.mrb[0].mxu0
        %4527 = vmatprep.mubr.f32.mxu0 0.0
        %4528 = vmatmul.mubr.f32.gmra.mrb[0].mxu0 %v4098
        %v4529 = vpop.f32.mrb[0].mxu0
        %v4530 = vadd.f32 0.0, %v4529
        %v4531 = vpop.f32.mrb[0].mxu0
        %4532 = vmatprep.mubr.f32.mxu0 0.0
        %4533 = vmatmul.mubr.f32.gmra.mrb[0].mxu0 %v4101
        %v4534 = vpop.f32.mrb[0].mxu0
        %v4535 = vadd.f32 0.0, %v4534
        %v4536 = vpop.f32.mrb[0].mxu0
        %4537 = vmatprep.mubr.f32.mxu0 0.0
        %4538 = vmatmul.mubr.f32.gmra.mrb[0].mxu0 %v4104
        %v4539 = vpop.f32.mrb[0].mxu0
        %v4540 = vadd.f32 0.0, %v4539
        %v4541 = vpop.f32.mrb[0].mxu0
        %4542 = vmatprep.mubr.f32.mxu0 0.0
        %4543 = vmatmul.mubr.f32.gmra.mrb[0].mxu0 %v4107
        %v4544 = vpop.f32.mrb[0].mxu0
        %v4545 = vadd.f32 0.0, %v4544
        %v4546 = vpop.f32.mrb[0].mxu0
        %4547 = vmatprep.mubr.f32.mxu0 0.0
        %4548 = vmatmul.mubr.f32.gmra.mrb[0].mxu0 %v4110
        %v4549 = vpop.f32.mrb[0].mxu0
        %v4550 = vadd.f32 0.0, %v4549
        %v4551 = vpop.f32.mrb[0].mxu0
        %4552 = vmatprep.mubr.f32.mxu0 0.0
        %4553 = vmatmul.mubr.f32.gmra.mrb[0].mxu0 %v4113
        %v4554 = vpop.f32.mrb[0].mxu0
        %v4555 = vadd.f32 0.0, %v4554
        %v4556 = vpop.f32.mrb[0].mxu0
        %4557 = vmatprep.mubr.f32.mxu0 0.0
        %4558 = vmatmul.mubr.f32.gmra.mrb[0].mxu0 %v4116
        %v4559 = vpop.f32.mrb[0].mxu0
        %v4560 = vadd.f32 0.0, %v4559
        %v4561 = vpop.f32.mrb[0].mxu0
        %4562 = vmatprep.mubr.f32.mxu0 0.0
        %4563 = vmatmul.mubr.f32.gmra.mrb[0].mxu0 %v4119
        %v4564 = vpop.f32.mrb[0].mxu0
        %v4565 = vadd.f32 0.0, %v4564
        %v4566 = vpop.f32.mrb[0].mxu0
        %4567 = vmatprep.mubr.f32.mxu0 0.0
        %4568 = vmatmul.mubr.f32.gmra.mrb[0].mxu0 %v4122
        %v4569 = vpop.f32.mrb[0].mxu0
        %v4570 = vadd.f32 0.0, %v4569
        %v4571 = vpop.f32.mrb[0].mxu0
        %4572 = vmatprep.mubr.f32.mxu0 0.0
        %4573 = vmatmul.mubr.f32.gmra.mrb[0].mxu0 %v4125
        %v4574 = vpop.f32.mrb[0].mxu0
        %v4575 = vadd.f32 0.0, %v4574
        %v4576 = vpop.f32.mrb[0].mxu0
        %4577 = vmatprep.mubr.f32.mxu0 0.0
        %4578 = vmatmul.mubr.f32.gmra.mrb[0].mxu0 %v4128
        %v4579 = vpop.f32.mrb[0].mxu0
        %v4580 = vadd.f32 0.0, %v4579
        %v4581 = vpop.f32.mrb[0].mxu0
        %4582 = vmatprep.mubr.f32.mxu0 0.0
        %4583 = vmatmul.mubr.f32.gmra.mrb[0].mxu0 %v4131
        %v4584 = vpop.f32.mrb[0].mxu0
        %v4585 = vadd.f32 0.0, %v4584
        %v4586 = vpop.f32.mrb[0].mxu0
        %4587 = vmatprep.mubr.f32.mxu0 0.0
        %4588 = vmatmul.mubr.f32.gmra.mrb[0].mxu0 %v4134
        %v4589 = vpop.f32.mrb[0].mxu0
        %v4590 = vadd.f32 0.0, %v4589
        %v4591 = vpop.f32.mrb[0].mxu0
        %4592 = vmatprep.mubr.f32.mxu0 0.0
        %4593 = vmatmul.mubr.f32.gmra.mrb[0].mxu0 %v4137
        %v4594 = vpop.f32.mrb[0].mxu0
        %v4595 = vadd.f32 0.0, %v4594
        %v4596 = vpop.f32.mrb[0].mxu0
        %4597 = vmatprep.mubr.f32.mxu0 0.0
        %4598 = vmatmul.mubr.f32.gmra.mrb[0].mxu0 %v4140
        %v4599 = vpop.f32.mrb[0].mxu0
        %v4600 = vadd.f32 0.0, %v4599
        %v4601 = vpop.f32.mrb[0].mxu0
        %4602 = vmatprep.mubr.f32.mxu0 0.0
        %4603 = vmatmul.mubr.f32.gmra.mrb[0].mxu0 %v4143
        %v4604 = vpop.f32.mrb[0].mxu0
        %v4605 = vadd.f32 0.0, %v4604
        %v4606 = vpop.f32.mrb[0].mxu0
        %4607 = vmatprep.mubr.f32.mxu0 0.0
        %4608 = vmatmul.mubr.f32.gmra.mrb[0].mxu0 %v4146
        %v4609 = vpop.f32.mrb[0].mxu0
        %v4610 = vadd.f32 0.0, %v4609
        %v4611 = vpop.f32.mrb[0].mxu0
        %4612 = vmatprep.mubr.f32.mxu0 0.0
        %4613 = vmatmul.mubr.f32.gmra.mrb[0].mxu0 %v4149
        %v4614 = vpop.f32.mrb[0].mxu0
        %v4615 = vadd.f32 0.0, %v4614
        %v4616 = vpop.f32.mrb[0].mxu0
        %4617 = vmatprep.mubr.f32.mxu0 0.0
        %4618 = vmatmul.mubr.f32.gmra.mrb[0].mxu0 %v4152
        %v4619 = vpop.f32.mrb[0].mxu0
        %v4620 = vadd.f32 0.0, %v4619
        %v4621 = vpop.f32.mrb[0].mxu0
        %4622 = vmatprep.mubr.f32.mxu0 0.0
        %4623 = vmatmul.mubr.f32.gmra.mrb[0].mxu0 %v4155
        %v4624 = vpop.f32.mrb[0].mxu0
        %v4625 = vadd.f32 0.0, %v4624
        %v4626 = vpop.f32.mrb[0].mxu0
        %4627 = vmatprep.mubr.f32.mxu0 0.0
        %4628 = vmatmul.mubr.f32.gmra.mrb[0].mxu0 %v4158
        %v4629 = vpop.f32.mrb[0].mxu0
        %v4630 = vadd.f32 0.0, %v4629
        %v4631 = vpop.f32.mrb[0].mxu0
        %4632 = vmatprep.mubr.f32.mxu0 0.0
        %4633 = vmatmul.mubr.f32.gmra.mrb[0].mxu0 %v4161
        %v4634 = vpop.f32.mrb[0].mxu0
        %v4635 = vadd.f32 0.0, %v4634
        %v4636 = vpop.f32.mrb[0].mxu0
        %4637 = vmatprep.mubr.f32.mxu0 0.0
        %4638 = vmatmul.mubr.f32.gmra.mrb[0].mxu0 %v4164
        %v4639 = vpop.f32.mrb[0].mxu0
        %v4640 = vadd.f32 0.0, %v4639
        %v4641 = vpop.f32.mrb[0].mxu0
        %4642 = vmatprep.mubr.f32.mxu0 0.0
        %4643 = vmatmul.mubr.f32.gmra.mrb[0].mxu0 %v4167
        %v4644 = vpop.f32.mrb[0].mxu0
        %v4645 = vadd.f32 0.0, %v4644
        %v4646 = vpop.f32.mrb[0].mxu0
        %4647 = vmatprep.mubr.f32.mxu0 0.0
        %4648 = vmatmul.mubr.f32.gmra.mrb[0].mxu0 %v4170
        %v4649 = vpop.f32.mrb[0].mxu0
        %v4650 = vadd.f32 0.0, %v4649
        %v4651 = vpop.f32.mrb[0].mxu0
        %4652 = vmatprep.mubr.f32.mxu0 0.0
        %4653 = vmatmul.mubr.f32.gmra.mrb[0].mxu0 %v4173
        %v4654 = vpop.f32.mrb[0].mxu0
        %v4655 = vadd.f32 0.0, %v4654
        %v4656 = vpop.f32.mrb[0].mxu0
        %4657 = vmatprep.mubr.f32.mxu0 0.0
        %4658 = vmatmul.mubr.f32.gmra.mrb[0].mxu0 %v4176
        %v4659 = vpop.f32.mrb[0].mxu0
        %v4660 = vadd.f32 0.0, %v4659
        %v4661 = vpop.f32.mrb[0].mxu0
        %4662 = vmatprep.mubr.f32.mxu0 0.0
        %4663 = vmatmul.mubr.f32.gmra.mrb[0].mxu0 %v4179
        %v4664 = vpop.f32.mrb[0].mxu0
        %v4665 = vadd.f32 0.0, %v4664
        %v4666 = vpop.f32.mrb[0].mxu0
        %4667 = vdwg.mxu0
        %v4668 = vadd.f32 %v4406, %v4510
        %v4669 = vadd.f32 %v4407, %v4515
        %v4670 = vadd.f32 %v4408, %v4520
        %v4671 = vadd.f32 %v4409, %v4525
        %v4672 = vadd.f32 %v4410, %v4530
        %v4673 = vadd.f32 %v4411, %v4535
        %v4674 = vadd.f32 %v4412, %v4540
        %v4675 = vadd.f32 %v4413, %v4545
        %v4676 = vadd.f32 %v4414, %v4550
        %v4677 = vadd.f32 %v4415, %v4555
        %v4678 = vadd.f32 %v4416, %v4560
        %v4679 = vadd.f32 %v4417, %v4565
        %v4680 = vadd.f32 %v4418, %v4570
        %v4681 = vadd.f32 %v4419, %v4575
        %v4682 = vadd.f32 %v4420, %v4580
        %v4683 = vadd.f32 %v4421, %v4585
        %v4684 = vadd.f32 %v4422, %v4590
        %v4685 = vadd.f32 %v4423, %v4595
        %v4686 = vadd.f32 %v4424, %v4600
        %v4687 = vadd.f32 %v4425, %v4605
        %v4688 = vadd.f32 %v4426, %v4610
        %v4689 = vadd.f32 %v4427, %v4615
        %v4690 = vadd.f32 %v4428, %v4620
        %v4691 = vadd.f32 %v4429, %v4625
        %v4692 = vadd.f32 %v4430, %v4630
        %v4693 = vadd.f32 %v4431, %v4635
        %v4694 = vadd.f32 %v4432, %v4640
        %v4695 = vadd.f32 %v4433, %v4645
        %v4696 = vadd.f32 %v4434, %v4650
        %v4697 = vadd.f32 %v4435, %v4655
        %v4698 = vadd.f32 %v4436, %v4660
        %v4699 = vadd.f32 %v4437, %v4665
        %v4700 = vld [vmem:[%s959 + $0x3] sm:$0xff]
        %v4701 = vld [vmem:[%s959 + $0xb] sm:$0xff]
        %v4702 = vld [vmem:[%s959 + $0x1b] sm:$0xff]
        %v4703 = vld [vmem:[%s959 + $0x23] sm:$0xff]
        %v4704 = vld [vmem:[%s959 + $0x33] sm:$0xff]
        %v4705 = vld [vmem:[%s959 + $0x3b] sm:$0xff]
        %v4706 = vld [vmem:[%s959 + $0x4b] sm:$0xff]
        %v4707 = vld [vmem:[%s959 + $0x53] sm:$0xff]
        %v4708 = vld [vmem:[%s959 + $0x63] sm:$0xff]
        %v4709 = vld [vmem:[%s959 + $0x6b] sm:$0xff]
        %v4710 = vld [vmem:[%s959 + $0x7b] sm:$0xff]
        %v4711 = vld [vmem:[%s959 + $0x83] sm:$0xff]
        %v4712 = vld [vmem:[%s959 + $0x93] sm:$0xff]
        %v4713 = vld [vmem:[%s959 + $0x9b] sm:$0xff]
        %v4714 = vld [vmem:[%s959 + $0xab] sm:$0xff]
        %v4715 = vld [vmem:[%s959 + $0xb3] sm:$0xff]
        %v4716 = vld [vmem:[%s959 + $0xc3] sm:$0xff]
        %v4717 = vld [vmem:[%s959 + $0xcb] sm:$0xff]
        %v4718 = vld [vmem:[%s959 + $0xdb] sm:$0xff]
        %v4719 = vld [vmem:[%s959 + $0xe3] sm:$0xff]
        %v4720 = vld [vmem:[%s959 + $0xf3] sm:$0xff]
        %v4721 = vld [vmem:[%s959 + $0xfb] sm:$0xff]
        %v4722 = vld [vmem:[%s959 + $0x10b] sm:$0xff]
        %v4723 = vld [vmem:[%s959 + $0x113] sm:$0xff]
        %v4724 = vld [vmem:[%s959 + $0x123] sm:$0xff]
        %v4725 = vld [vmem:[%s959 + $0x12b] sm:$0xff]
        %v4726 = vld [vmem:[%s959 + $0x13b] sm:$0xff]
        %v4727 = vld [vmem:[%s959 + $0x143] sm:$0xff]
        %v4728 = vld [vmem:[%s959 + $0x153] sm:$0xff]
        %v4729 = vld [vmem:[%s959 + $0x15b] sm:$0xff]
        %v4730 = vld [vmem:[%s959 + $0x16b] sm:$0xff]
        %v4731 = vld [vmem:[%s959 + $0x173] sm:$0xff]
        %s4732 = scalar_lea.vmem [#allocation9], 160
        %v4733 = vld [vmem:[%s4732] sm:$0xff]
        %v4734 = vld [vmem:[%s4732 + $0x8] sm:$0xff]
        %v4735 = vld [vmem:[%s4732 + $0x10] sm:$0xff]
        %v4736 = vld [vmem:[%s4732 + $0x18] sm:$0xff]
        %v4738 = vsel %vm897, %v4700, 0
        %v4741 = vsel %vm897, %v4701, 0
        %v4744 = vsel %vm897, %v4702, 0
        %v4747 = vsel %vm897, %v4703, 0
        %v4750 = vsel %vm897, %v4704, 0
        %v4753 = vsel %vm897, %v4705, 0
        %v4756 = vsel %vm897, %v4706, 0
        %v4759 = vsel %vm897, %v4707, 0
        %v4762 = vsel %vm897, %v4708, 0
        %v4765 = vsel %vm897, %v4709, 0
        %v4768 = vsel %vm897, %v4710, 0
        %v4771 = vsel %vm897, %v4711, 0
        %v4774 = vsel %vm897, %v4712, 0
        %v4777 = vsel %vm897, %v4713, 0
        %v4780 = vsel %vm897, %v4714, 0
        %v4783 = vsel %vm897, %v4715, 0
        %v4786 = vsel %vm897, %v4716, 0
        %v4789 = vsel %vm897, %v4717, 0
        %v4792 = vsel %vm897, %v4718, 0
        %v4795 = vsel %vm897, %v4719, 0
        %v4798 = vsel %vm897, %v4720, 0
        %v4801 = vsel %vm897, %v4721, 0
        %v4804 = vsel %vm897, %v4722, 0
        %v4807 = vsel %vm897, %v4723, 0
        %v4810 = vsel %vm897, %v4724, 0
        %v4813 = vsel %vm897, %v4725, 0
        %v4816 = vsel %vm897, %v4726, 0
        %v4819 = vsel %vm897, %v4727, 0
        %v4822 = vsel %vm897, %v4728, 0
        %v4825 = vsel %vm897, %v4729, 0
        %v4828 = vsel %vm897, %v4730, 0
        %v4831 = vsel %vm897, %v4731, 0
        %4833 = vmatprep.subr.mxu0 0.0
        %4834 = vmatpush1.msra.mxu0 %v4733
        %4835 = vmatprep.subr.mxu0 0.0
        %4836 = vmatpush1.msra.mxu0 %v4734
        %4837 = vmatprep.subr.mxu0 0.0
        %4838 = vmatpush1.msra.mxu0 %v4735
        %4839 = vmatprep.subr.mxu0 0.0
        %4840 = vmatpush1.msra.mxu0 %v4736
        %4841 = vmatprep.subr.mxu0 0.0
        %4842 = vmatpush1.msra.mxu0 0.0
        %4843 = vmatprep.subr.mxu0 0.0
        %4844 = vmatpush1.msra.mxu0 0.0
        %4845 = vmatprep.subr.mxu0 0.0
        %4846 = vmatpush1.msra.mxu0 0.0
        %4847 = vmatprep.subr.mxu0 0.0
        %4848 = vmatpush1.msra.mxu0 0.0
        %4849 = vmatprep.subr.mxu0 0.0
        %4850 = vmatpush1.msra.mxu0 0.0
        %4851 = vmatprep.subr.mxu0 0.0
        %4852 = vmatpush1.msra.mxu0 0.0
        %4853 = vmatprep.subr.mxu0 0.0
        %4854 = vmatpush1.msra.mxu0 0.0
        %4855 = vmatprep.subr.mxu0 0.0
        %4856 = vmatpush1.msra.mxu0 0.0
        %4857 = vmatprep.subr.mxu0 0.0
        %4858 = vmatpush1.msra.mxu0 0.0
        %4859 = vmatprep.subr.mxu0 0.0
        %4860 = vmatpush1.msra.mxu0 0.0
        %4861 = vmatprep.subr.mxu0 0.0
        %4862 = vmatpush1.msra.mxu0 0.0
        %4863 = vmatprep.subr.mxu0 0.0
        %4864 = vmatpush1.msra.mxu0 0.0
        %4865 = vmatprep.subr.mxu0 0.0
        %4866 = vmatpush1.msra.mxu0 0.0
        %4867 = vmatprep.subr.mxu0 0.0
        %4868 = vmatpush1.msra.mxu0 0.0
        %4869 = vmatprep.subr.mxu0 0.0
        %4870 = vmatpush1.msra.mxu0 0.0
        %4871 = vmatprep.subr.mxu0 0.0
        %4872 = vmatpush1.msra.mxu0 0.0
        %4873 = vmatprep.subr.mxu0 0.0
        %4874 = vmatpush1.msra.mxu0 0.0
        %4875 = vmatprep.subr.mxu0 0.0
        %4876 = vmatpush1.msra.mxu0 0.0
        %4877 = vmatprep.subr.mxu0 0.0
        %4878 = vmatpush1.msra.mxu0 0.0
        %4879 = vmatprep.subr.mxu0 0.0
        %4880 = vmatpush1.msra.mxu0 0.0
        %4881 = vmatprep.subr.mxu0 0.0
        %4882 = vmatpush1.msra.mxu0 0.0
        %4883 = vmatprep.subr.mxu0 0.0
        %4884 = vmatpush1.msra.mxu0 0.0
        %4885 = vmatprep.subr.mxu0 0.0
        %4886 = vmatpush1.msra.mxu0 0.0
        %4887 = vmatprep.subr.mxu0 0.0
        %4888 = vmatpush1.msra.mxu0 0.0
        %4889 = vmatprep.subr.mxu0 0.0
        %4890 = vmatpush1.msra.mxu0 0.0
        %4891 = vmatprep.subr.mxu0 0.0
        %4892 = vmatpush1.msra.mxu0 0.0
        %4893 = vmatprep.subr.mxu0 0.0
        %4894 = vmatpush1.msra.mxu0 0.0
        %4895 = vmatprep.subr.mxu0 0.0
        %4896 = vmatpush1.msra.mxu0 0.0
        %4897 = vmatprep.mubr.f32.mxu0 0.0
        %4898 = vmatmul.mubr.f32.gmra.mrb[0].mxu0 %v4738
        %v4899 = vpop.f32.mrb[0].mxu0
        %v4900 = vadd.f32 0.0, %v4899
        %v4901 = vpop.f32.mrb[0].mxu0
        %4902 = vmatprep.mubr.f32.mxu0 0.0
        %4903 = vmatmul.mubr.f32.gmra.mrb[0].mxu0 %v4741
        %v4904 = vpop.f32.mrb[0].mxu0
        %v4905 = vadd.f32 0.0, %v4904
        %v4906 = vpop.f32.mrb[0].mxu0
        %4907 = vmatprep.mubr.f32.mxu0 0.0
        %4908 = vmatmul.mubr.f32.gmra.mrb[0].mxu0 %v4744
        %v4909 = vpop.f32.mrb[0].mxu0
        %v4910 = vadd.f32 0.0, %v4909
        %v4911 = vpop.f32.mrb[0].mxu0
        %4912 = vmatprep.mubr.f32.mxu0 0.0
        %4913 = vmatmul.mubr.f32.gmra.mrb[0].mxu0 %v4747
        %v4914 = vpop.f32.mrb[0].mxu0
        %v4915 = vadd.f32 0.0, %v4914
        %v4916 = vpop.f32.mrb[0].mxu0
        %4917 = vmatprep.mubr.f32.mxu0 0.0
        %4918 = vmatmul.mubr.f32.gmra.mrb[0].mxu0 %v4750
        %v4919 = vpop.f32.mrb[0].mxu0
        %v4920 = vadd.f32 0.0, %v4919
        %v4921 = vpop.f32.mrb[0].mxu0
        %4922 = vmatprep.mubr.f32.mxu0 0.0
        %4923 = vmatmul.mubr.f32.gmra.mrb[0].mxu0 %v4753
        %v4924 = vpop.f32.mrb[0].mxu0
        %v4925 = vadd.f32 0.0, %v4924
        %v4926 = vpop.f32.mrb[0].mxu0
        %4927 = vmatprep.mubr.f32.mxu0 0.0
        %4928 = vmatmul.mubr.f32.gmra.mrb[0].mxu0 %v4756
        %v4929 = vpop.f32.mrb[0].mxu0
        %v4930 = vadd.f32 0.0, %v4929
        %v4931 = vpop.f32.mrb[0].mxu0
        %4932 = vmatprep.mubr.f32.mxu0 0.0
        %4933 = vmatmul.mubr.f32.gmra.mrb[0].mxu0 %v4759
        %v4934 = vpop.f32.mrb[0].mxu0
        %v4935 = vadd.f32 0.0, %v4934
        %v4936 = vpop.f32.mrb[0].mxu0
        %4937 = vmatprep.mubr.f32.mxu0 0.0
        %4938 = vmatmul.mubr.f32.gmra.mrb[0].mxu0 %v4762
        %v4939 = vpop.f32.mrb[0].mxu0
        %v4940 = vadd.f32 0.0, %v4939
        %v4941 = vpop.f32.mrb[0].mxu0
        %4942 = vmatprep.mubr.f32.mxu0 0.0
        %4943 = vmatmul.mubr.f32.gmra.mrb[0].mxu0 %v4765
        %v4944 = vpop.f32.mrb[0].mxu0
        %v4945 = vadd.f32 0.0, %v4944
        %v4946 = vpop.f32.mrb[0].mxu0
        %4947 = vmatprep.mubr.f32.mxu0 0.0
        %4948 = vmatmul.mubr.f32.gmra.mrb[0].mxu0 %v4768
        %v4949 = vpop.f32.mrb[0].mxu0
        %v4950 = vadd.f32 0.0, %v4949
        %v4951 = vpop.f32.mrb[0].mxu0
        %4952 = vmatprep.mubr.f32.mxu0 0.0
        %4953 = vmatmul.mubr.f32.gmra.mrb[0].mxu0 %v4771
        %v4954 = vpop.f32.mrb[0].mxu0
        %v4955 = vadd.f32 0.0, %v4954
        %v4956 = vpop.f32.mrb[0].mxu0
        %4957 = vmatprep.mubr.f32.mxu0 0.0
        %4958 = vmatmul.mubr.f32.gmra.mrb[0].mxu0 %v4774
        %v4959 = vpop.f32.mrb[0].mxu0
        %v4960 = vadd.f32 0.0, %v4959
        %v4961 = vpop.f32.mrb[0].mxu0
        %4962 = vmatprep.mubr.f32.mxu0 0.0
        %4963 = vmatmul.mubr.f32.gmra.mrb[0].mxu0 %v4777
        %v4964 = vpop.f32.mrb[0].mxu0
        %v4965 = vadd.f32 0.0, %v4964
        %v4966 = vpop.f32.mrb[0].mxu0
        %4967 = vmatprep.mubr.f32.mxu0 0.0
        %4968 = vmatmul.mubr.f32.gmra.mrb[0].mxu0 %v4780
        %v4969 = vpop.f32.mrb[0].mxu0
        %v4970 = vadd.f32 0.0, %v4969
        %v4971 = vpop.f32.mrb[0].mxu0
        %4972 = vmatprep.mubr.f32.mxu0 0.0
        %4973 = vmatmul.mubr.f32.gmra.mrb[0].mxu0 %v4783
        %v4974 = vpop.f32.mrb[0].mxu0
        %v4975 = vadd.f32 0.0, %v4974
        %v4976 = vpop.f32.mrb[0].mxu0
        %4977 = vmatprep.mubr.f32.mxu0 0.0
        %4978 = vmatmul.mubr.f32.gmra.mrb[0].mxu0 %v4786
        %v4979 = vpop.f32.mrb[0].mxu0
        %v4980 = vadd.f32 0.0, %v4979
        %v4981 = vpop.f32.mrb[0].mxu0
        %4982 = vmatprep.mubr.f32.mxu0 0.0
        %4983 = vmatmul.mubr.f32.gmra.mrb[0].mxu0 %v4789
        %v4984 = vpop.f32.mrb[0].mxu0
        %v4985 = vadd.f32 0.0, %v4984
        %v4986 = vpop.f32.mrb[0].mxu0
        %4987 = vmatprep.mubr.f32.mxu0 0.0
        %4988 = vmatmul.mubr.f32.gmra.mrb[0].mxu0 %v4792
        %v4989 = vpop.f32.mrb[0].mxu0
        %v4990 = vadd.f32 0.0, %v4989
        %v4991 = vpop.f32.mrb[0].mxu0
        %4992 = vmatprep.mubr.f32.mxu0 0.0
        %4993 = vmatmul.mubr.f32.gmra.mrb[0].mxu0 %v4795
        %v4994 = vpop.f32.mrb[0].mxu0
        %v4995 = vadd.f32 0.0, %v4994
        %v4996 = vpop.f32.mrb[0].mxu0
        %4997 = vmatprep.mubr.f32.mxu0 0.0
        %4998 = vmatmul.mubr.f32.gmra.mrb[0].mxu0 %v4798
        %v4999 = vpop.f32.mrb[0].mxu0
        %v5000 = vadd.f32 0.0, %v4999
        %v5001 = vpop.f32.mrb[0].mxu0
        %5002 = vmatprep.mubr.f32.mxu0 0.0
        %5003 = vmatmul.mubr.f32.gmra.mrb[0].mxu0 %v4801
        %v5004 = vpop.f32.mrb[0].mxu0
        %v5005 = vadd.f32 0.0, %v5004
        %v5006 = vpop.f32.mrb[0].mxu0
        %5007 = vmatprep.mubr.f32.mxu0 0.0
        %5008 = vmatmul.mubr.f32.gmra.mrb[0].mxu0 %v4804
        %v5009 = vpop.f32.mrb[0].mxu0
        %v5010 = vadd.f32 0.0, %v5009
        %v5011 = vpop.f32.mrb[0].mxu0
        %5012 = vmatprep.mubr.f32.mxu0 0.0
        %5013 = vmatmul.mubr.f32.gmra.mrb[0].mxu0 %v4807
        %v5014 = vpop.f32.mrb[0].mxu0
        %v5015 = vadd.f32 0.0, %v5014
        %v5016 = vpop.f32.mrb[0].mxu0
        %5017 = vmatprep.mubr.f32.mxu0 0.0
        %5018 = vmatmul.mubr.f32.gmra.mrb[0].mxu0 %v4810
        %v5019 = vpop.f32.mrb[0].mxu0
        %v5020 = vadd.f32 0.0, %v5019
        %v5021 = vpop.f32.mrb[0].mxu0
        %5022 = vmatprep.mubr.f32.mxu0 0.0
        %5023 = vmatmul.mubr.f32.gmra.mrb[0].mxu0 %v4813
        %v5024 = vpop.f32.mrb[0].mxu0
        %v5025 = vadd.f32 0.0, %v5024
        %v5026 = vpop.f32.mrb[0].mxu0
        %5027 = vmatprep.mubr.f32.mxu0 0.0
        %5028 = vmatmul.mubr.f32.gmra.mrb[0].mxu0 %v4816
        %v5029 = vpop.f32.mrb[0].mxu0
        %v5030 = vadd.f32 0.0, %v5029
        %v5031 = vpop.f32.mrb[0].mxu0
        %5032 = vmatprep.mubr.f32.mxu0 0.0
        %5033 = vmatmul.mubr.f32.gmra.mrb[0].mxu0 %v4819
        %v5034 = vpop.f32.mrb[0].mxu0
        %v5035 = vadd.f32 0.0, %v5034
        %v5036 = vpop.f32.mrb[0].mxu0
        %5037 = vmatprep.mubr.f32.mxu0 0.0
        %5038 = vmatmul.mubr.f32.gmra.mrb[0].mxu0 %v4822
        %v5039 = vpop.f32.mrb[0].mxu0
        %v5040 = vadd.f32 0.0, %v5039
        %v5041 = vpop.f32.mrb[0].mxu0
        %5042 = vmatprep.mubr.f32.mxu0 0.0
        %5043 = vmatmul.mubr.f32.gmra.mrb[0].mxu0 %v4825
        %v5044 = vpop.f32.mrb[0].mxu0
        %v5045 = vadd.f32 0.0, %v5044
        %v5046 = vpop.f32.mrb[0].mxu0
        %5047 = vmatprep.mubr.f32.mxu0 0.0
        %5048 = vmatmul.mubr.f32.gmra.mrb[0].mxu0 %v4828
        %v5049 = vpop.f32.mrb[0].mxu0
        %v5050 = vadd.f32 0.0, %v5049
        %v5051 = vpop.f32.mrb[0].mxu0
        %5052 = vmatprep.mubr.f32.mxu0 0.0
        %5053 = vmatmul.mubr.f32.gmra.mrb[0].mxu0 %v4831
        %v5054 = vpop.f32.mrb[0].mxu0
        %v5055 = vadd.f32 0.0, %v5054
        %v5056 = vpop.f32.mrb[0].mxu0
        %5057 = vdwg.mxu0
        %v5058 = vadd.f32 %v4668, %v4900
        %v5059 = vadd.f32 %v4669, %v4905
        %v5060 = vadd.f32 %v4670, %v4910
        %v5061 = vadd.f32 %v4671, %v4915
        %v5062 = vadd.f32 %v4672, %v4920
        %v5063 = vadd.f32 %v4673, %v4925
        %v5064 = vadd.f32 %v4674, %v4930
        %v5065 = vadd.f32 %v4675, %v4935
        %v5066 = vadd.f32 %v4676, %v4940
        %v5067 = vadd.f32 %v4677, %v4945
        %v5068 = vadd.f32 %v4678, %v4950
        %v5069 = vadd.f32 %v4679, %v4955
        %v5070 = vadd.f32 %v4680, %v4960
        %v5071 = vadd.f32 %v4681, %v4965
        %v5072 = vadd.f32 %v4682, %v4970
        %v5073 = vadd.f32 %v4683, %v4975
        %v5074 = vadd.f32 %v4684, %v4980
        %v5075 = vadd.f32 %v4685, %v4985
        %v5076 = vadd.f32 %v4686, %v4990
        %v5077 = vadd.f32 %v4687, %v4995
        %v5078 = vadd.f32 %v4688, %v5000
        %v5079 = vadd.f32 %v4689, %v5005
        %v5080 = vadd.f32 %v4690, %v5010
        %v5081 = vadd.f32 %v4691, %v5015
        %v5082 = vadd.f32 %v4692, %v5020
        %v5083 = vadd.f32 %v4693, %v5025
        %v5084 = vadd.f32 %v4694, %v5030
        %v5085 = vadd.f32 %v4695, %v5035
        %v5086 = vadd.f32 %v4696, %v5040
        %v5087 = vadd.f32 %v4697, %v5045
        %v5088 = vadd.f32 %v4698, %v5050
        %v5089 = vadd.f32 %v4699, %v5055
        %v5090 = vld [vmem:[%s959 + $0x4] sm:$0xff]
        %v5091 = vld [vmem:[%s959 + $0xc] sm:$0xff]
        %v5092 = vld [vmem:[%s959 + $0x1c] sm:$0xff]
        %v5093 = vld [vmem:[%s959 + $0x24] sm:$0xff]
        %v5094 = vld [vmem:[%s959 + $0x34] sm:$0xff]
        %v5095 = vld [vmem:[%s959 + $0x3c] sm:$0xff]
        %v5096 = vld [vmem:[%s959 + $0x4c] sm:$0xff]
        %v5097 = vld [vmem:[%s959 + $0x54] sm:$0xff]
        %v5098 = vld [vmem:[%s959 + $0x64] sm:$0xff]
        %v5099 = vld [vmem:[%s959 + $0x6c] sm:$0xff]
        %v5100 = vld [vmem:[%s959 + $0x7c] sm:$0xff]
        %v5101 = vld [vmem:[%s959 + $0x84] sm:$0xff]
        %v5102 = vld [vmem:[%s959 + $0x94] sm:$0xff]
        %v5103 = vld [vmem:[%s959 + $0x9c] sm:$0xff]
        %v5104 = vld [vmem:[%s959 + $0xac] sm:$0xff]
        %v5105 = vld [vmem:[%s959 + $0xb4] sm:$0xff]
        %v5106 = vld [vmem:[%s959 + $0xc4] sm:$0xff]
        %v5107 = vld [vmem:[%s959 + $0xcc] sm:$0xff]
        %v5108 = vld [vmem:[%s959 + $0xdc] sm:$0xff]
        %v5109 = vld [vmem:[%s959 + $0xe4] sm:$0xff]
        %v5110 = vld [vmem:[%s959 + $0xf4] sm:$0xff]
        %v5111 = vld [vmem:[%s959 + $0xfc] sm:$0xff]
        %v5112 = vld [vmem:[%s959 + $0x10c] sm:$0xff]
        %v5113 = vld [vmem:[%s959 + $0x114] sm:$0xff]
        %v5114 = vld [vmem:[%s959 + $0x124] sm:$0xff]
        %v5115 = vld [vmem:[%s959 + $0x12c] sm:$0xff]
        %v5116 = vld [vmem:[%s959 + $0x13c] sm:$0xff]
        %v5117 = vld [vmem:[%s959 + $0x144] sm:$0xff]
        %v5118 = vld [vmem:[%s959 + $0x154] sm:$0xff]
        %v5119 = vld [vmem:[%s959 + $0x15c] sm:$0xff]
        %v5120 = vld [vmem:[%s959 + $0x16c] sm:$0xff]
        %v5121 = vld [vmem:[%s959 + $0x174] sm:$0xff]
        %s5122 = scalar_lea.vmem [#allocation9], 448
        %v5123 = vld [vmem:[%s5122] sm:$0xff]
        %v5124 = vld [vmem:[%s5122 + $0x8] sm:$0xff]
        %v5125 = vld [vmem:[%s5122 + $0x10] sm:$0xff]
        %v5126 = vld [vmem:[%s5122 + $0x18] sm:$0xff]
        %v5128 = vsel %vm897, %v5090, 0
        %v5131 = vsel %vm897, %v5091, 0
        %v5134 = vsel %vm897, %v5092, 0
        %v5137 = vsel %vm897, %v5093, 0
        %v5140 = vsel %vm897, %v5094, 0
        %v5143 = vsel %vm897, %v5095, 0
        %v5146 = vsel %vm897, %v5096, 0
        %v5149 = vsel %vm897, %v5097, 0
        %v5152 = vsel %vm897, %v5098, 0
        %v5155 = vsel %vm897, %v5099, 0
        %v5158 = vsel %vm897, %v5100, 0
        %v5161 = vsel %vm897, %v5101, 0
        %v5164 = vsel %vm897, %v5102, 0
        %v5167 = vsel %vm897, %v5103, 0
        %v5170 = vsel %vm897, %v5104, 0
        %v5173 = vsel %vm897, %v5105, 0
        %v5176 = vsel %vm897, %v5106, 0
        %v5179 = vsel %vm897, %v5107, 0
        %v5182 = vsel %vm897, %v5108, 0
        %v5185 = vsel %vm897, %v5109, 0
        %v5188 = vsel %vm897, %v5110, 0
        %v5191 = vsel %vm897, %v5111, 0
        %v5194 = vsel %vm897, %v5112, 0
        %v5197 = vsel %vm897, %v5113, 0
        %v5200 = vsel %vm897, %v5114, 0
        %v5203 = vsel %vm897, %v5115, 0
        %v5206 = vsel %vm897, %v5116, 0
        %v5209 = vsel %vm897, %v5117, 0
        %v5212 = vsel %vm897, %v5118, 0
        %v5215 = vsel %vm897, %v5119, 0
        %v5218 = vsel %vm897, %v5120, 0
        %v5221 = vsel %vm897, %v5121, 0
        %5223 = vmatprep.subr.mxu0 0.0
        %5224 = vmatpush1.msra.mxu0 %v5123
        %5225 = vmatprep.subr.mxu0 0.0
        %5226 = vmatpush1.msra.mxu0 %v5124
        %5227 = vmatprep.subr.mxu0 0.0
        %5228 = vmatpush1.msra.mxu0 %v5125
        %5229 = vmatprep.subr.mxu0 0.0
        %5230 = vmatpush1.msra.mxu0 %v5126
        %5231 = vmatprep.subr.mxu0 0.0
        %5232 = vmatpush1.msra.mxu0 0.0
        %5233 = vmatprep.subr.mxu0 0.0
        %5234 = vmatpush1.msra.mxu0 0.0
        %5235 = vmatprep.subr.mxu0 0.0
        %5236 = vmatpush1.msra.mxu0 0.0
        %5237 = vmatprep.subr.mxu0 0.0
        %5238 = vmatpush1.msra.mxu0 0.0
        %5239 = vmatprep.subr.mxu0 0.0
        %5240 = vmatpush1.msra.mxu0 0.0
        %5241 = vmatprep.subr.mxu0 0.0
        %5242 = vmatpush1.msra.mxu0 0.0
        %5243 = vmatprep.subr.mxu0 0.0
        %5244 = vmatpush1.msra.mxu0 0.0
        %5245 = vmatprep.subr.mxu0 0.0
        %5246 = vmatpush1.msra.mxu0 0.0
        %5247 = vmatprep.subr.mxu0 0.0
        %5248 = vmatpush1.msra.mxu0 0.0
        %5249 = vmatprep.subr.mxu0 0.0
        %5250 = vmatpush1.msra.mxu0 0.0
        %5251 = vmatprep.subr.mxu0 0.0
        %5252 = vmatpush1.msra.mxu0 0.0
        %5253 = vmatprep.subr.mxu0 0.0
        %5254 = vmatpush1.msra.mxu0 0.0
        %5255 = vmatprep.subr.mxu0 0.0
        %5256 = vmatpush1.msra.mxu0 0.0
        %5257 = vmatprep.subr.mxu0 0.0
        %5258 = vmatpush1.msra.mxu0 0.0
        %5259 = vmatprep.subr.mxu0 0.0
        %5260 = vmatpush1.msra.mxu0 0.0
        %5261 = vmatprep.subr.mxu0 0.0
        %5262 = vmatpush1.msra.mxu0 0.0
        %5263 = vmatprep.subr.mxu0 0.0
        %5264 = vmatpush1.msra.mxu0 0.0
        %5265 = vmatprep.subr.mxu0 0.0
        %5266 = vmatpush1.msra.mxu0 0.0
        %5267 = vmatprep.subr.mxu0 0.0
        %5268 = vmatpush1.msra.mxu0 0.0
        %5269 = vmatprep.subr.mxu0 0.0
        %5270 = vmatpush1.msra.mxu0 0.0
        %5271 = vmatprep.subr.mxu0 0.0
        %5272 = vmatpush1.msra.mxu0 0.0
        %5273 = vmatprep.subr.mxu0 0.0
        %5274 = vmatpush1.msra.mxu0 0.0
        %5275 = vmatprep.subr.mxu0 0.0
        %5276 = vmatpush1.msra.mxu0 0.0
        %5277 = vmatprep.subr.mxu0 0.0
        %5278 = vmatpush1.msra.mxu0 0.0
        %5279 = vmatprep.subr.mxu0 0.0
        %5280 = vmatpush1.msra.mxu0 0.0
        %5281 = vmatprep.subr.mxu0 0.0
        %5282 = vmatpush1.msra.mxu0 0.0
        %5283 = vmatprep.subr.mxu0 0.0
        %5284 = vmatpush1.msra.mxu0 0.0
        %5285 = vmatprep.subr.mxu0 0.0
        %5286 = vmatpush1.msra.mxu0 0.0
        %5287 = vmatprep.mubr.f32.mxu0 0.0
        %5288 = vmatmul.mubr.f32.gmra.mrb[0].mxu0 %v5128
        %v5289 = vpop.f32.mrb[0].mxu0
        %v5290 = vadd.f32 0.0, %v5289
        %v5291 = vpop.f32.mrb[0].mxu0
        %5292 = vmatprep.mubr.f32.mxu0 0.0
        %5293 = vmatmul.mubr.f32.gmra.mrb[0].mxu0 %v5131
        %v5294 = vpop.f32.mrb[0].mxu0
        %v5295 = vadd.f32 0.0, %v5294
        %v5296 = vpop.f32.mrb[0].mxu0
        %5297 = vmatprep.mubr.f32.mxu0 0.0
        %5298 = vmatmul.mubr.f32.gmra.mrb[0].mxu0 %v5134
        %v5299 = vpop.f32.mrb[0].mxu0
        %v5300 = vadd.f32 0.0, %v5299
        %v5301 = vpop.f32.mrb[0].mxu0
        %5302 = vmatprep.mubr.f32.mxu0 0.0
        %5303 = vmatmul.mubr.f32.gmra.mrb[0].mxu0 %v5137
        %v5304 = vpop.f32.mrb[0].mxu0
        %v5305 = vadd.f32 0.0, %v5304
        %v5306 = vpop.f32.mrb[0].mxu0
        %5307 = vmatprep.mubr.f32.mxu0 0.0
        %5308 = vmatmul.mubr.f32.gmra.mrb[0].mxu0 %v5140
        %v5309 = vpop.f32.mrb[0].mxu0
        %v5310 = vadd.f32 0.0, %v5309
        %v5311 = vpop.f32.mrb[0].mxu0
        %5312 = vmatprep.mubr.f32.mxu0 0.0
        %5313 = vmatmul.mubr.f32.gmra.mrb[0].mxu0 %v5143
        %v5314 = vpop.f32.mrb[0].mxu0
        %v5315 = vadd.f32 0.0, %v5314
        %v5316 = vpop.f32.mrb[0].mxu0
        %5317 = vmatprep.mubr.f32.mxu0 0.0
        %5318 = vmatmul.mubr.f32.gmra.mrb[0].mxu0 %v5146
        %v5319 = vpop.f32.mrb[0].mxu0
        %v5320 = vadd.f32 0.0, %v5319
        %v5321 = vpop.f32.mrb[0].mxu0
        %5322 = vmatprep.mubr.f32.mxu0 0.0
        %5323 = vmatmul.mubr.f32.gmra.mrb[0].mxu0 %v5149
        %v5324 = vpop.f32.mrb[0].mxu0
        %v5325 = vadd.f32 0.0, %v5324
        %v5326 = vpop.f32.mrb[0].mxu0
        %5327 = vmatprep.mubr.f32.mxu0 0.0
        %5328 = vmatmul.mubr.f32.gmra.mrb[0].mxu0 %v5152
        %v5329 = vpop.f32.mrb[0].mxu0
        %v5330 = vadd.f32 0.0, %v5329
        %v5331 = vpop.f32.mrb[0].mxu0
        %5332 = vmatprep.mubr.f32.mxu0 0.0
        %5333 = vmatmul.mubr.f32.gmra.mrb[0].mxu0 %v5155
        %v5334 = vpop.f32.mrb[0].mxu0
        %v5335 = vadd.f32 0.0, %v5334
        %v5336 = vpop.f32.mrb[0].mxu0
        %5337 = vmatprep.mubr.f32.mxu0 0.0
        %5338 = vmatmul.mubr.f32.gmra.mrb[0].mxu0 %v5158
        %v5339 = vpop.f32.mrb[0].mxu0
        %v5340 = vadd.f32 0.0, %v5339
        %v5341 = vpop.f32.mrb[0].mxu0
        %5342 = vmatprep.mubr.f32.mxu0 0.0
        %5343 = vmatmul.mubr.f32.gmra.mrb[0].mxu0 %v5161
        %v5344 = vpop.f32.mrb[0].mxu0
        %v5345 = vadd.f32 0.0, %v5344
        %v5346 = vpop.f32.mrb[0].mxu0
        %5347 = vmatprep.mubr.f32.mxu0 0.0
        %5348 = vmatmul.mubr.f32.gmra.mrb[0].mxu0 %v5164
        %v5349 = vpop.f32.mrb[0].mxu0
        %v5350 = vadd.f32 0.0, %v5349
        %v5351 = vpop.f32.mrb[0].mxu0
        %5352 = vmatprep.mubr.f32.mxu0 0.0
        %5353 = vmatmul.mubr.f32.gmra.mrb[0].mxu0 %v5167
        %v5354 = vpop.f32.mrb[0].mxu0
        %v5355 = vadd.f32 0.0, %v5354
        %v5356 = vpop.f32.mrb[0].mxu0
        %5357 = vmatprep.mubr.f32.mxu0 0.0
        %5358 = vmatmul.mubr.f32.gmra.mrb[0].mxu0 %v5170
        %v5359 = vpop.f32.mrb[0].mxu0
        %v5360 = vadd.f32 0.0, %v5359
        %v5361 = vpop.f32.mrb[0].mxu0
        %5362 = vmatprep.mubr.f32.mxu0 0.0
        %5363 = vmatmul.mubr.f32.gmra.mrb[0].mxu0 %v5173
        %v5364 = vpop.f32.mrb[0].mxu0
        %v5365 = vadd.f32 0.0, %v5364
        %v5366 = vpop.f32.mrb[0].mxu0
        %5367 = vmatprep.mubr.f32.mxu0 0.0
        %5368 = vmatmul.mubr.f32.gmra.mrb[0].mxu0 %v5176
        %v5369 = vpop.f32.mrb[0].mxu0
        %v5370 = vadd.f32 0.0, %v5369
        %v5371 = vpop.f32.mrb[0].mxu0
        %5372 = vmatprep.mubr.f32.mxu0 0.0
        %5373 = vmatmul.mubr.f32.gmra.mrb[0].mxu0 %v5179
        %v5374 = vpop.f32.mrb[0].mxu0
        %v5375 = vadd.f32 0.0, %v5374
        %v5376 = vpop.f32.mrb[0].mxu0
        %5377 = vmatprep.mubr.f32.mxu0 0.0
        %5378 = vmatmul.mubr.f32.gmra.mrb[0].mxu0 %v5182
        %v5379 = vpop.f32.mrb[0].mxu0
        %v5380 = vadd.f32 0.0, %v5379
        %v5381 = vpop.f32.mrb[0].mxu0
        %5382 = vmatprep.mubr.f32.mxu0 0.0
        %5383 = vmatmul.mubr.f32.gmra.mrb[0].mxu0 %v5185
        %v5384 = vpop.f32.mrb[0].mxu0
        %v5385 = vadd.f32 0.0, %v5384
        %v5386 = vpop.f32.mrb[0].mxu0
        %5387 = vmatprep.mubr.f32.mxu0 0.0
        %5388 = vmatmul.mubr.f32.gmra.mrb[0].mxu0 %v5188
        %v5389 = vpop.f32.mrb[0].mxu0
        %v5390 = vadd.f32 0.0, %v5389
        %v5391 = vpop.f32.mrb[0].mxu0
        %5392 = vmatprep.mubr.f32.mxu0 0.0
        %5393 = vmatmul.mubr.f32.gmra.mrb[0].mxu0 %v5191
        %v5394 = vpop.f32.mrb[0].mxu0
        %v5395 = vadd.f32 0.0, %v5394
        %v5396 = vpop.f32.mrb[0].mxu0
        %5397 = vmatprep.mubr.f32.mxu0 0.0
        %5398 = vmatmul.mubr.f32.gmra.mrb[0].mxu0 %v5194
        %v5399 = vpop.f32.mrb[0].mxu0
        %v5400 = vadd.f32 0.0, %v5399
        %v5401 = vpop.f32.mrb[0].mxu0
        %5402 = vmatprep.mubr.f32.mxu0 0.0
        %5403 = vmatmul.mubr.f32.gmra.mrb[0].mxu0 %v5197
        %v5404 = vpop.f32.mrb[0].mxu0
        %v5405 = vadd.f32 0.0, %v5404
        %v5406 = vpop.f32.mrb[0].mxu0
        %5407 = vmatprep.mubr.f32.mxu0 0.0
        %5408 = vmatmul.mubr.f32.gmra.mrb[0].mxu0 %v5200
        %v5409 = vpop.f32.mrb[0].mxu0
        %v5410 = vadd.f32 0.0, %v5409
        %v5411 = vpop.f32.mrb[0].mxu0
        %5412 = vmatprep.mubr.f32.mxu0 0.0
        %5413 = vmatmul.mubr.f32.gmra.mrb[0].mxu0 %v5203
        %v5414 = vpop.f32.mrb[0].mxu0
        %v5415 = vadd.f32 0.0, %v5414
        %v5416 = vpop.f32.mrb[0].mxu0
        %5417 = vmatprep.mubr.f32.mxu0 0.0
        %5418 = vmatmul.mubr.f32.gmra.mrb[0].mxu0 %v5206
        %v5419 = vpop.f32.mrb[0].mxu0
        %v5420 = vadd.f32 0.0, %v5419
        %v5421 = vpop.f32.mrb[0].mxu0
        %5422 = vmatprep.mubr.f32.mxu0 0.0
        %5423 = vmatmul.mubr.f32.gmra.mrb[0].mxu0 %v5209
        %v5424 = vpop.f32.mrb[0].mxu0
        %v5425 = vadd.f32 0.0, %v5424
        %v5426 = vpop.f32.mrb[0].mxu0
        %5427 = vmatprep.mubr.f32.mxu0 0.0
        %5428 = vmatmul.mubr.f32.gmra.mrb[0].mxu0 %v5212
        %v5429 = vpop.f32.mrb[0].mxu0
        %v5430 = vadd.f32 0.0, %v5429
        %v5431 = vpop.f32.mrb[0].mxu0
        %5432 = vmatprep.mubr.f32.mxu0 0.0
        %5433 = vmatmul.mubr.f32.gmra.mrb[0].mxu0 %v5215
        %v5434 = vpop.f32.mrb[0].mxu0
        %v5435 = vadd.f32 0.0, %v5434
        %v5436 = vpop.f32.mrb[0].mxu0
        %5437 = vmatprep.mubr.f32.mxu0 0.0
        %5438 = vmatmul.mubr.f32.gmra.mrb[0].mxu0 %v5218
        %v5439 = vpop.f32.mrb[0].mxu0
        %v5440 = vadd.f32 0.0, %v5439
        %v5441 = vpop.f32.mrb[0].mxu0
        %5442 = vmatprep.mubr.f32.mxu0 0.0
        %5443 = vmatmul.mubr.f32.gmra.mrb[0].mxu0 %v5221
        %v5444 = vpop.f32.mrb[0].mxu0
        %v5445 = vadd.f32 0.0, %v5444
        %v5446 = vpop.f32.mrb[0].mxu0
        %5447 = vdwg.mxu0
        %v5448 = vadd.f32 %v5058, %v5290
        %v5449 = vadd.f32 %v5059, %v5295
        %v5450 = vadd.f32 %v5060, %v5300
        %v5451 = vadd.f32 %v5061, %v5305
        %v5452 = vadd.f32 %v5062, %v5310
        %v5453 = vadd.f32 %v5063, %v5315
        %v5454 = vadd.f32 %v5064, %v5320
        %v5455 = vadd.f32 %v5065, %v5325
        %v5456 = vadd.f32 %v5066, %v5330
        %v5457 = vadd.f32 %v5067, %v5335
        %v5458 = vadd.f32 %v5068, %v5340
        %v5459 = vadd.f32 %v5069, %v5345
        %v5460 = vadd.f32 %v5070, %v5350
        %v5461 = vadd.f32 %v5071, %v5355
        %v5462 = vadd.f32 %v5072, %v5360
        %v5463 = vadd.f32 %v5073, %v5365
        %v5464 = vadd.f32 %v5074, %v5370
        %v5465 = vadd.f32 %v5075, %v5375
        %v5466 = vadd.f32 %v5076, %v5380
        %v5467 = vadd.f32 %v5077, %v5385
        %v5468 = vadd.f32 %v5078, %v5390
        %v5469 = vadd.f32 %v5079, %v5395
        %v5470 = vadd.f32 %v5080, %v5400
        %v5471 = vadd.f32 %v5081, %v5405
        %v5472 = vadd.f32 %v5082, %v5410
        %v5473 = vadd.f32 %v5083, %v5415
        %v5474 = vadd.f32 %v5084, %v5420
        %v5475 = vadd.f32 %v5085, %v5425
        %v5476 = vadd.f32 %v5086, %v5430
        %v5477 = vadd.f32 %v5087, %v5435
        %v5478 = vadd.f32 %v5088, %v5440
        %v5479 = vadd.f32 %v5089, %v5445
        %s5480 = scalar_lea.vmem [#allocation2], 72
        %v5481 = vld [vmem:[%s5480 + $0x1] sm:$0xff]
        %v5482 = vld [vmem:[%s5480 + $0x9] sm:$0xff]
        %v5483 = vld [vmem:[%s5480 + $0x19] sm:$0xff]
        %v5484 = vld [vmem:[%s5480 + $0x21] sm:$0xff]
        %v5485 = vld [vmem:[%s5480 + $0x31] sm:$0xff]
        %v5486 = vld [vmem:[%s5480 + $0x39] sm:$0xff]
        %v5487 = vld [vmem:[%s5480 + $0x49] sm:$0xff]
        %v5488 = vld [vmem:[%s5480 + $0x51] sm:$0xff]
        %v5489 = vld [vmem:[%s5480 + $0x61] sm:$0xff]
        %v5490 = vld [vmem:[%s5480 + $0x69] sm:$0xff]
        %v5491 = vld [vmem:[%s5480 + $0x79] sm:$0xff]
        %v5492 = vld [vmem:[%s5480 + $0x81] sm:$0xff]
        %v5493 = vld [vmem:[%s5480 + $0x91] sm:$0xff]
        %v5494 = vld [vmem:[%s5480 + $0x99] sm:$0xff]
        %v5495 = vld [vmem:[%s5480 + $0xa9] sm:$0xff]
        %v5496 = vld [vmem:[%s5480 + $0xb1] sm:$0xff]
        %v5497 = vld [vmem:[%s5480 + $0xc1] sm:$0xff]
        %v5498 = vld [vmem:[%s5480 + $0xc9] sm:$0xff]
        %v5499 = vld [vmem:[%s5480 + $0xd9] sm:$0xff]
        %v5500 = vld [vmem:[%s5480 + $0xe1] sm:$0xff]
        %v5501 = vld [vmem:[%s5480 + $0xf1] sm:$0xff]
        %v5502 = vld [vmem:[%s5480 + $0xf9] sm:$0xff]
        %v5503 = vld [vmem:[%s5480 + $0x109] sm:$0xff]
        %v5504 = vld [vmem:[%s5480 + $0x111] sm:$0xff]
        %v5505 = vld [vmem:[%s5480 + $0x121] sm:$0xff]
        %v5506 = vld [vmem:[%s5480 + $0x129] sm:$0xff]
        %v5507 = vld [vmem:[%s5480 + $0x139] sm:$0xff]
        %v5508 = vld [vmem:[%s5480 + $0x141] sm:$0xff]
        %v5509 = vld [vmem:[%s5480 + $0x151] sm:$0xff]
        %v5510 = vld [vmem:[%s5480 + $0x159] sm:$0xff]
        %v5511 = vld [vmem:[%s5480 + $0x169] sm:$0xff]
        %v5512 = vld [vmem:[%s5480 + $0x171] sm:$0xff]
        %s5513 = scalar_lea.vmem [#allocation9], 192
        %v5514 = vld [vmem:[%s5513] sm:$0xff]
        %v5515 = vld [vmem:[%s5513 + $0x8] sm:$0xff]
        %v5516 = vld [vmem:[%s5513 + $0x10] sm:$0xff]
        %v5517 = vld [vmem:[%s5513 + $0x18] sm:$0xff]
        %v5519 = vsel %vm897, %v5481, 0
        %v5522 = vsel %vm897, %v5482, 0
        %v5525 = vsel %vm897, %v5483, 0
        %v5528 = vsel %vm897, %v5484, 0
        %v5531 = vsel %vm897, %v5485, 0
        %v5534 = vsel %vm897, %v5486, 0
        %v5537 = vsel %vm897, %v5487, 0
        %v5540 = vsel %vm897, %v5488, 0
        %v5543 = vsel %vm897, %v5489, 0
        %v5546 = vsel %vm897, %v5490, 0
        %v5549 = vsel %vm897, %v5491, 0
        %v5552 = vsel %vm897, %v5492, 0
        %v5555 = vsel %vm897, %v5493, 0
        %v5558 = vsel %vm897, %v5494, 0
        %v5561 = vsel %vm897, %v5495, 0
        %v5564 = vsel %vm897, %v5496, 0
        %v5567 = vsel %vm897, %v5497, 0
        %v5570 = vsel %vm897, %v5498, 0
        %v5573 = vsel %vm897, %v5499, 0
        %v5576 = vsel %vm897, %v5500, 0
        %v5579 = vsel %vm897, %v5501, 0
        %v5582 = vsel %vm897, %v5502, 0
        %v5585 = vsel %vm897, %v5503, 0
        %v5588 = vsel %vm897, %v5504, 0
        %v5591 = vsel %vm897, %v5505, 0
        %v5594 = vsel %vm897, %v5506, 0
        %v5597 = vsel %vm897, %v5507, 0
        %v5600 = vsel %vm897, %v5508, 0
        %v5603 = vsel %vm897, %v5509, 0
        %v5606 = vsel %vm897, %v5510, 0
        %v5609 = vsel %vm897, %v5511, 0
        %v5612 = vsel %vm897, %v5512, 0
        %5614 = vmatprep.subr.mxu0 0.0
        %5615 = vmatpush1.msra.mxu0 %v5514
        %5616 = vmatprep.subr.mxu0 0.0
        %5617 = vmatpush1.msra.mxu0 %v5515
        %5618 = vmatprep.subr.mxu0 0.0
        %5619 = vmatpush1.msra.mxu0 %v5516
        %5620 = vmatprep.subr.mxu0 0.0
        %5621 = vmatpush1.msra.mxu0 %v5517
        %5622 = vmatprep.subr.mxu0 0.0
        %5623 = vmatpush1.msra.mxu0 0.0
        %5624 = vmatprep.subr.mxu0 0.0
        %5625 = vmatpush1.msra.mxu0 0.0
        %5626 = vmatprep.subr.mxu0 0.0
        %5627 = vmatpush1.msra.mxu0 0.0
        %5628 = vmatprep.subr.mxu0 0.0
        %5629 = vmatpush1.msra.mxu0 0.0
        %5630 = vmatprep.subr.mxu0 0.0
        %5631 = vmatpush1.msra.mxu0 0.0
        %5632 = vmatprep.subr.mxu0 0.0
        %5633 = vmatpush1.msra.mxu0 0.0
        %5634 = vmatprep.subr.mxu0 0.0
        %5635 = vmatpush1.msra.mxu0 0.0
        %5636 = vmatprep.subr.mxu0 0.0
        %5637 = vmatpush1.msra.mxu0 0.0
        %5638 = vmatprep.subr.mxu0 0.0
        %5639 = vmatpush1.msra.mxu0 0.0
        %5640 = vmatprep.subr.mxu0 0.0
        %5641 = vmatpush1.msra.mxu0 0.0
        %5642 = vmatprep.subr.mxu0 0.0
        %5643 = vmatpush1.msra.mxu0 0.0
        %5644 = vmatprep.subr.mxu0 0.0
        %5645 = vmatpush1.msra.mxu0 0.0
        %5646 = vmatprep.subr.mxu0 0.0
        %5647 = vmatpush1.msra.mxu0 0.0
        %5648 = vmatprep.subr.mxu0 0.0
        %5649 = vmatpush1.msra.mxu0 0.0
        %5650 = vmatprep.subr.mxu0 0.0
        %5651 = vmatpush1.msra.mxu0 0.0
        %5652 = vmatprep.subr.mxu0 0.0
        %5653 = vmatpush1.msra.mxu0 0.0
        %5654 = vmatprep.subr.mxu0 0.0
        %5655 = vmatpush1.msra.mxu0 0.0
        %5656 = vmatprep.subr.mxu0 0.0
        %5657 = vmatpush1.msra.mxu0 0.0
        %5658 = vmatprep.subr.mxu0 0.0
        %5659 = vmatpush1.msra.mxu0 0.0
        %5660 = vmatprep.subr.mxu0 0.0
        %5661 = vmatpush1.msra.mxu0 0.0
        %5662 = vmatprep.subr.mxu0 0.0
        %5663 = vmatpush1.msra.mxu0 0.0
        %5664 = vmatprep.subr.mxu0 0.0
        %5665 = vmatpush1.msra.mxu0 0.0
        %5666 = vmatprep.subr.mxu0 0.0
        %5667 = vmatpush1.msra.mxu0 0.0
        %5668 = vmatprep.subr.mxu0 0.0
        %5669 = vmatpush1.msra.mxu0 0.0
        %5670 = vmatprep.subr.mxu0 0.0
        %5671 = vmatpush1.msra.mxu0 0.0
        %5672 = vmatprep.subr.mxu0 0.0
        %5673 = vmatpush1.msra.mxu0 0.0
        %5674 = vmatprep.subr.mxu0 0.0
        %5675 = vmatpush1.msra.mxu0 0.0
        %5676 = vmatprep.subr.mxu0 0.0
        %5677 = vmatpush1.msra.mxu0 0.0
        %5678 = vmatprep.mubr.f32.mxu0 0.0
        %5679 = vmatmul.mubr.f32.gmra.mrb[0].mxu0 %v5519
        %v5680 = vpop.f32.mrb[0].mxu0
        %v5681 = vadd.f32 0.0, %v5680
        %v5682 = vpop.f32.mrb[0].mxu0
        %5683 = vmatprep.mubr.f32.mxu0 0.0
        %5684 = vmatmul.mubr.f32.gmra.mrb[0].mxu0 %v5522
        %v5685 = vpop.f32.mrb[0].mxu0
        %v5686 = vadd.f32 0.0, %v5685
        %v5687 = vpop.f32.mrb[0].mxu0
        %5688 = vmatprep.mubr.f32.mxu0 0.0
        %5689 = vmatmul.mubr.f32.gmra.mrb[0].mxu0 %v5525
        %v5690 = vpop.f32.mrb[0].mxu0
        %v5691 = vadd.f32 0.0, %v5690
        %v5692 = vpop.f32.mrb[0].mxu0
        %5693 = vmatprep.mubr.f32.mxu0 0.0
        %5694 = vmatmul.mubr.f32.gmra.mrb[0].mxu0 %v5528
        %v5695 = vpop.f32.mrb[0].mxu0
        %v5696 = vadd.f32 0.0, %v5695
        %v5697 = vpop.f32.mrb[0].mxu0
        %5698 = vmatprep.mubr.f32.mxu0 0.0
        %5699 = vmatmul.mubr.f32.gmra.mrb[0].mxu0 %v5531
        %v5700 = vpop.f32.mrb[0].mxu0
        %v5701 = vadd.f32 0.0, %v5700
        %v5702 = vpop.f32.mrb[0].mxu0
        %5703 = vmatprep.mubr.f32.mxu0 0.0
        %5704 = vmatmul.mubr.f32.gmra.mrb[0].mxu0 %v5534
        %v5705 = vpop.f32.mrb[0].mxu0
        %v5706 = vadd.f32 0.0, %v5705
        %v5707 = vpop.f32.mrb[0].mxu0
        %5708 = vmatprep.mubr.f32.mxu0 0.0
        %5709 = vmatmul.mubr.f32.gmra.mrb[0].mxu0 %v5537
        %v5710 = vpop.f32.mrb[0].mxu0
        %v5711 = vadd.f32 0.0, %v5710
        %v5712 = vpop.f32.mrb[0].mxu0
        %5713 = vmatprep.mubr.f32.mxu0 0.0
        %5714 = vmatmul.mubr.f32.gmra.mrb[0].mxu0 %v5540
        %v5715 = vpop.f32.mrb[0].mxu0
        %v5716 = vadd.f32 0.0, %v5715
        %v5717 = vpop.f32.mrb[0].mxu0
        %5718 = vmatprep.mubr.f32.mxu0 0.0
        %5719 = vmatmul.mubr.f32.gmra.mrb[0].mxu0 %v5543
        %v5720 = vpop.f32.mrb[0].mxu0
        %v5721 = vadd.f32 0.0, %v5720
        %v5722 = vpop.f32.mrb[0].mxu0
        %5723 = vmatprep.mubr.f32.mxu0 0.0
        %5724 = vmatmul.mubr.f32.gmra.mrb[0].mxu0 %v5546
        %v5725 = vpop.f32.mrb[0].mxu0
        %v5726 = vadd.f32 0.0, %v5725
        %v5727 = vpop.f32.mrb[0].mxu0
        %5728 = vmatprep.mubr.f32.mxu0 0.0
        %5729 = vmatmul.mubr.f32.gmra.mrb[0].mxu0 %v5549
        %v5730 = vpop.f32.mrb[0].mxu0
        %v5731 = vadd.f32 0.0, %v5730
        %v5732 = vpop.f32.mrb[0].mxu0
        %5733 = vmatprep.mubr.f32.mxu0 0.0
        %5734 = vmatmul.mubr.f32.gmra.mrb[0].mxu0 %v5552
        %v5735 = vpop.f32.mrb[0].mxu0
        %v5736 = vadd.f32 0.0, %v5735
        %v5737 = vpop.f32.mrb[0].mxu0
        %5738 = vmatprep.mubr.f32.mxu0 0.0
        %5739 = vmatmul.mubr.f32.gmra.mrb[0].mxu0 %v5555
        %v5740 = vpop.f32.mrb[0].mxu0
        %v5741 = vadd.f32 0.0, %v5740
        %v5742 = vpop.f32.mrb[0].mxu0
        %5743 = vmatprep.mubr.f32.mxu0 0.0
        %5744 = vmatmul.mubr.f32.gmra.mrb[0].mxu0 %v5558
        %v5745 = vpop.f32.mrb[0].mxu0
        %v5746 = vadd.f32 0.0, %v5745
        %v5747 = vpop.f32.mrb[0].mxu0
        %5748 = vmatprep.mubr.f32.mxu0 0.0
        %5749 = vmatmul.mubr.f32.gmra.mrb[0].mxu0 %v5561
        %v5750 = vpop.f32.mrb[0].mxu0
        %v5751 = vadd.f32 0.0, %v5750
        %v5752 = vpop.f32.mrb[0].mxu0
        %5753 = vmatprep.mubr.f32.mxu0 0.0
        %5754 = vmatmul.mubr.f32.gmra.mrb[0].mxu0 %v5564
        %v5755 = vpop.f32.mrb[0].mxu0
        %v5756 = vadd.f32 0.0, %v5755
        %v5757 = vpop.f32.mrb[0].mxu0
        %5758 = vmatprep.mubr.f32.mxu0 0.0
        %5759 = vmatmul.mubr.f32.gmra.mrb[0].mxu0 %v5567
        %v5760 = vpop.f32.mrb[0].mxu0
        %v5761 = vadd.f32 0.0, %v5760
        %v5762 = vpop.f32.mrb[0].mxu0
        %5763 = vmatprep.mubr.f32.mxu0 0.0
        %5764 = vmatmul.mubr.f32.gmra.mrb[0].mxu0 %v5570
        %v5765 = vpop.f32.mrb[0].mxu0
        %v5766 = vadd.f32 0.0, %v5765
        %v5767 = vpop.f32.mrb[0].mxu0
        %5768 = vmatprep.mubr.f32.mxu0 0.0
        %5769 = vmatmul.mubr.f32.gmra.mrb[0].mxu0 %v5573
        %v5770 = vpop.f32.mrb[0].mxu0
        %v5771 = vadd.f32 0.0, %v5770
        %v5772 = vpop.f32.mrb[0].mxu0
        %5773 = vmatprep.mubr.f32.mxu0 0.0
        %5774 = vmatmul.mubr.f32.gmra.mrb[0].mxu0 %v5576
        %v5775 = vpop.f32.mrb[0].mxu0
        %v5776 = vadd.f32 0.0, %v5775
        %v5777 = vpop.f32.mrb[0].mxu0
        %5778 = vmatprep.mubr.f32.mxu0 0.0
        %5779 = vmatmul.mubr.f32.gmra.mrb[0].mxu0 %v5579
        %v5780 = vpop.f32.mrb[0].mxu0
        %v5781 = vadd.f32 0.0, %v5780
        %v5782 = vpop.f32.mrb[0].mxu0
        %5783 = vmatprep.mubr.f32.mxu0 0.0
        %5784 = vmatmul.mubr.f32.gmra.mrb[0].mxu0 %v5582
        %v5785 = vpop.f32.mrb[0].mxu0
        %v5786 = vadd.f32 0.0, %v5785
        %v5787 = vpop.f32.mrb[0].mxu0
        %5788 = vmatprep.mubr.f32.mxu0 0.0
        %5789 = vmatmul.mubr.f32.gmra.mrb[0].mxu0 %v5585
        %v5790 = vpop.f32.mrb[0].mxu0
        %v5791 = vadd.f32 0.0, %v5790
        %v5792 = vpop.f32.mrb[0].mxu0
        %5793 = vmatprep.mubr.f32.mxu0 0.0
        %5794 = vmatmul.mubr.f32.gmra.mrb[0].mxu0 %v5588
        %v5795 = vpop.f32.mrb[0].mxu0
        %v5796 = vadd.f32 0.0, %v5795
        %v5797 = vpop.f32.mrb[0].mxu0
        %5798 = vmatprep.mubr.f32.mxu0 0.0
        %5799 = vmatmul.mubr.f32.gmra.mrb[0].mxu0 %v5591
        %v5800 = vpop.f32.mrb[0].mxu0
        %v5801 = vadd.f32 0.0, %v5800
        %v5802 = vpop.f32.mrb[0].mxu0
        %5803 = vmatprep.mubr.f32.mxu0 0.0
        %5804 = vmatmul.mubr.f32.gmra.mrb[0].mxu0 %v5594
        %v5805 = vpop.f32.mrb[0].mxu0
        %v5806 = vadd.f32 0.0, %v5805
        %v5807 = vpop.f32.mrb[0].mxu0
        %5808 = vmatprep.mubr.f32.mxu0 0.0
        %5809 = vmatmul.mubr.f32.gmra.mrb[0].mxu0 %v5597
        %v5810 = vpop.f32.mrb[0].mxu0
        %v5811 = vadd.f32 0.0, %v5810
        %v5812 = vpop.f32.mrb[0].mxu0
        %5813 = vmatprep.mubr.f32.mxu0 0.0
        %5814 = vmatmul.mubr.f32.gmra.mrb[0].mxu0 %v5600
        %v5815 = vpop.f32.mrb[0].mxu0
        %v5816 = vadd.f32 0.0, %v5815
        %v5817 = vpop.f32.mrb[0].mxu0
        %5818 = vmatprep.mubr.f32.mxu0 0.0
        %5819 = vmatmul.mubr.f32.gmra.mrb[0].mxu0 %v5603
        %v5820 = vpop.f32.mrb[0].mxu0
        %v5821 = vadd.f32 0.0, %v5820
        %v5822 = vpop.f32.mrb[0].mxu0
        %5823 = vmatprep.mubr.f32.mxu0 0.0
        %5824 = vmatmul.mubr.f32.gmra.mrb[0].mxu0 %v5606
        %v5825 = vpop.f32.mrb[0].mxu0
        %v5826 = vadd.f32 0.0, %v5825
        %v5827 = vpop.f32.mrb[0].mxu0
        %5828 = vmatprep.mubr.f32.mxu0 0.0
        %5829 = vmatmul.mubr.f32.gmra.mrb[0].mxu0 %v5609
        %v5830 = vpop.f32.mrb[0].mxu0
        %v5831 = vadd.f32 0.0, %v5830
        %v5832 = vpop.f32.mrb[0].mxu0
        %5833 = vmatprep.mubr.f32.mxu0 0.0
        %5834 = vmatmul.mubr.f32.gmra.mrb[0].mxu0 %v5612
        %v5835 = vpop.f32.mrb[0].mxu0
        %v5836 = vadd.f32 0.0, %v5835
        %v5837 = vpop.f32.mrb[0].mxu0
        %5838 = vdwg.mxu0
        %v5839 = vadd.f32 %v5448, %v5681
        %v5840 = vadd.f32 %v5449, %v5686
        %v5841 = vadd.f32 %v5450, %v5691
        %v5842 = vadd.f32 %v5451, %v5696
        %v5843 = vadd.f32 %v5452, %v5701
        %v5844 = vadd.f32 %v5453, %v5706
        %v5845 = vadd.f32 %v5454, %v5711
        %v5846 = vadd.f32 %v5455, %v5716
        %v5847 = vadd.f32 %v5456, %v5721
        %v5848 = vadd.f32 %v5457, %v5726
        %v5849 = vadd.f32 %v5458, %v5731
        %v5850 = vadd.f32 %v5459, %v5736
        %v5851 = vadd.f32 %v5460, %v5741
        %v5852 = vadd.f32 %v5461, %v5746
        %v5853 = vadd.f32 %v5462, %v5751
        %v5854 = vadd.f32 %v5463, %v5756
        %v5855 = vadd.f32 %v5464, %v5761
        %v5856 = vadd.f32 %v5465, %v5766
        %v5857 = vadd.f32 %v5466, %v5771
        %v5858 = vadd.f32 %v5467, %v5776
        %v5859 = vadd.f32 %v5468, %v5781
        %v5860 = vadd.f32 %v5469, %v5786
        %v5861 = vadd.f32 %v5470, %v5791
        %v5862 = vadd.f32 %v5471, %v5796
        %v5863 = vadd.f32 %v5472, %v5801
        %v5864 = vadd.f32 %v5473, %v5806
        %v5865 = vadd.f32 %v5474, %v5811
        %v5866 = vadd.f32 %v5475, %v5816
        %v5867 = vadd.f32 %v5476, %v5821
        %v5868 = vadd.f32 %v5477, %v5826
        %v5869 = vadd.f32 %v5478, %v5831
        %v5870 = vadd.f32 %v5479, %v5836
        %s5871 = scalar_lea.vmem [#allocation2], 96
        %v5872 = vld [vmem:[%s5871] sm:$0xff]
        %v5873 = vld [vmem:[%s5871 + $0x8] sm:$0xff]
        %v5874 = vld [vmem:[%s5871 + $0x18] sm:$0xff]
        %v5875 = vld [vmem:[%s5871 + $0x20] sm:$0xff]
        %v5876 = vld [vmem:[%s5871 + $0x30] sm:$0xff]
        %v5877 = vld [vmem:[%s5871 + $0x38] sm:$0xff]
        %v5878 = vld [vmem:[%s5871 + $0x48] sm:$0xff]
        %v5879 = vld [vmem:[%s5871 + $0x50] sm:$0xff]
        %v5880 = vld [vmem:[%s5871 + $0x60] sm:$0xff]
        %v5881 = vld [vmem:[%s5871 + $0x68] sm:$0xff]
        %v5882 = vld [vmem:[%s5871 + $0x78] sm:$0xff]
        %v5883 = vld [vmem:[%s5871 + $0x80] sm:$0xff]
        %v5884 = vld [vmem:[%s5871 + $0x90] sm:$0xff]
        %v5885 = vld [vmem:[%s5871 + $0x98] sm:$0xff]
        %v5886 = vld [vmem:[%s5871 + $0xa8] sm:$0xff]
        %v5887 = vld [vmem:[%s5871 + $0xb0] sm:$0xff]
        %v5888 = vld [vmem:[%s5871 + $0xc0] sm:$0xff]
        %v5889 = vld [vmem:[%s5871 + $0xc8] sm:$0xff]
        %v5890 = vld [vmem:[%s5871 + $0xd8] sm:$0xff]
        %v5891 = vld [vmem:[%s5871 + $0xe0] sm:$0xff]
        %v5892 = vld [vmem:[%s5871 + $0xf0] sm:$0xff]
        %v5893 = vld [vmem:[%s5871 + $0xf8] sm:$0xff]
        %v5894 = vld [vmem:[%s5871 + $0x108] sm:$0xff]
        %v5895 = vld [vmem:[%s5871 + $0x110] sm:$0xff]
        %v5896 = vld [vmem:[%s5871 + $0x120] sm:$0xff]
        %v5897 = vld [vmem:[%s5871 + $0x128] sm:$0xff]
        %v5898 = vld [vmem:[%s5871 + $0x138] sm:$0xff]
        %v5899 = vld [vmem:[%s5871 + $0x140] sm:$0xff]
        %v5900 = vld [vmem:[%s5871 + $0x150] sm:$0xff]
        %v5901 = vld [vmem:[%s5871 + $0x158] sm:$0xff]
        %v5902 = vld [vmem:[%s5871 + $0x168] sm:$0xff]
        %v5903 = vld [vmem:[%s5871 + $0x170] sm:$0xff]
        %s5904 = scalar_lea.vmem [#allocation9], 480
        %v5905 = vld [vmem:[%s5904] sm:$0xff]
        %v5906 = vld [vmem:[%s5904 + $0x8] sm:$0xff]
        %v5907 = vld [vmem:[%s5904 + $0x10] sm:$0xff]
        %v5908 = vld [vmem:[%s5904 + $0x18] sm:$0xff]
        %v5910 = vsel %vm897, %v5872, 0
        %v5913 = vsel %vm897, %v5873, 0
        %v5916 = vsel %vm897, %v5874, 0
        %v5919 = vsel %vm897, %v5875, 0
        %v5922 = vsel %vm897, %v5876, 0
        %v5925 = vsel %vm897, %v5877, 0
        %v5928 = vsel %vm897, %v5878, 0
        %v5931 = vsel %vm897, %v5879, 0
        %v5934 = vsel %vm897, %v5880, 0
        %v5937 = vsel %vm897, %v5881, 0
        %v5940 = vsel %vm897, %v5882, 0
        %v5943 = vsel %vm897, %v5883, 0
        %v5946 = vsel %vm897, %v5884, 0
        %v5949 = vsel %vm897, %v5885, 0
        %v5952 = vsel %vm897, %v5886, 0
        %v5955 = vsel %vm897, %v5887, 0
        %v5958 = vsel %vm897, %v5888, 0
        %v5961 = vsel %vm897, %v5889, 0
        %v5964 = vsel %vm897, %v5890, 0
        %v5967 = vsel %vm897, %v5891, 0
        %v5970 = vsel %vm897, %v5892, 0
        %v5973 = vsel %vm897, %v5893, 0
        %v5976 = vsel %vm897, %v5894, 0
        %v5979 = vsel %vm897, %v5895, 0
        %v5982 = vsel %vm897, %v5896, 0
        %v5985 = vsel %vm897, %v5897, 0
        %v5988 = vsel %vm897, %v5898, 0
        %v5991 = vsel %vm897, %v5899, 0
        %v5994 = vsel %vm897, %v5900, 0
        %v5997 = vsel %vm897, %v5901, 0
        %v6000 = vsel %vm897, %v5902, 0
        %v6003 = vsel %vm897, %v5903, 0
        %6005 = vmatprep.subr.mxu0 0.0
        %6006 = vmatpush1.msra.mxu0 %v5905
        %6007 = vmatprep.subr.mxu0 0.0
        %6008 = vmatpush1.msra.mxu0 %v5906
        %6009 = vmatprep.subr.mxu0 0.0
        %6010 = vmatpush1.msra.mxu0 %v5907
        %6011 = vmatprep.subr.mxu0 0.0
        %6012 = vmatpush1.msra.mxu0 %v5908
        %6013 = vmatprep.subr.mxu0 0.0
        %6014 = vmatpush1.msra.mxu0 0.0
        %6015 = vmatprep.subr.mxu0 0.0
        %6016 = vmatpush1.msra.mxu0 0.0
        %6017 = vmatprep.subr.mxu0 0.0
        %6018 = vmatpush1.msra.mxu0 0.0
        %6019 = vmatprep.subr.mxu0 0.0
        %6020 = vmatpush1.msra.mxu0 0.0
        %6021 = vmatprep.subr.mxu0 0.0
        %6022 = vmatpush1.msra.mxu0 0.0
        %6023 = vmatprep.subr.mxu0 0.0
        %6024 = vmatpush1.msra.mxu0 0.0
        %6025 = vmatprep.subr.mxu0 0.0
        %6026 = vmatpush1.msra.mxu0 0.0
        %6027 = vmatprep.subr.mxu0 0.0
        %6028 = vmatpush1.msra.mxu0 0.0
        %6029 = vmatprep.subr.mxu0 0.0
        %6030 = vmatpush1.msra.mxu0 0.0
        %6031 = vmatprep.subr.mxu0 0.0
        %6032 = vmatpush1.msra.mxu0 0.0
        %6033 = vmatprep.subr.mxu0 0.0
        %6034 = vmatpush1.msra.mxu0 0.0
        %6035 = vmatprep.subr.mxu0 0.0
        %6036 = vmatpush1.msra.mxu0 0.0
        %6037 = vmatprep.subr.mxu0 0.0
        %6038 = vmatpush1.msra.mxu0 0.0
        %6039 = vmatprep.subr.mxu0 0.0
        %6040 = vmatpush1.msra.mxu0 0.0
        %6041 = vmatprep.subr.mxu0 0.0
        %6042 = vmatpush1.msra.mxu0 0.0
        %6043 = vmatprep.subr.mxu0 0.0
        %6044 = vmatpush1.msra.mxu0 0.0
        %6045 = vmatprep.subr.mxu0 0.0
        %6046 = vmatpush1.msra.mxu0 0.0
        %6047 = vmatprep.subr.mxu0 0.0
        %6048 = vmatpush1.msra.mxu0 0.0
        %6049 = vmatprep.subr.mxu0 0.0
        %6050 = vmatpush1.msra.mxu0 0.0
        %6051 = vmatprep.subr.mxu0 0.0
        %6052 = vmatpush1.msra.mxu0 0.0
        %6053 = vmatprep.subr.mxu0 0.0
        %6054 = vmatpush1.msra.mxu0 0.0
        %6055 = vmatprep.subr.mxu0 0.0
        %6056 = vmatpush1.msra.mxu0 0.0
        %6057 = vmatprep.subr.mxu0 0.0
        %6058 = vmatpush1.msra.mxu0 0.0
        %6059 = vmatprep.subr.mxu0 0.0
        %6060 = vmatpush1.msra.mxu0 0.0
        %6061 = vmatprep.subr.mxu0 0.0
        %6062 = vmatpush1.msra.mxu0 0.0
        %6063 = vmatprep.subr.mxu0 0.0
        %6064 = vmatpush1.msra.mxu0 0.0
        %6065 = vmatprep.subr.mxu0 0.0
        %6066 = vmatpush1.msra.mxu0 0.0
        %6067 = vmatprep.subr.mxu0 0.0
        %6068 = vmatpush1.msra.mxu0 0.0
        %6069 = vmatprep.mubr.f32.mxu0 0.0
        %6070 = vmatmul.mubr.f32.gmra.mrb[0].mxu0 %v5910
        %v6071 = vpop.f32.mrb[0].mxu0
        %v6072 = vadd.f32 0.0, %v6071
        %v6073 = vpop.f32.mrb[0].mxu0
        %6074 = vmatprep.mubr.f32.mxu0 0.0
        %6075 = vmatmul.mubr.f32.gmra.mrb[0].mxu0 %v5913
        %v6076 = vpop.f32.mrb[0].mxu0
        %v6077 = vadd.f32 0.0, %v6076
        %v6078 = vpop.f32.mrb[0].mxu0
        %6079 = vmatprep.mubr.f32.mxu0 0.0
        %6080 = vmatmul.mubr.f32.gmra.mrb[0].mxu0 %v5916
        %v6081 = vpop.f32.mrb[0].mxu0
        %v6082 = vadd.f32 0.0, %v6081
        %v6083 = vpop.f32.mrb[0].mxu0
        %6084 = vmatprep.mubr.f32.mxu0 0.0
        %6085 = vmatmul.mubr.f32.gmra.mrb[0].mxu0 %v5919
        %v6086 = vpop.f32.mrb[0].mxu0
        %v6087 = vadd.f32 0.0, %v6086
        %v6088 = vpop.f32.mrb[0].mxu0
        %6089 = vmatprep.mubr.f32.mxu0 0.0
        %6090 = vmatmul.mubr.f32.gmra.mrb[0].mxu0 %v5922
        %v6091 = vpop.f32.mrb[0].mxu0
        %v6092 = vadd.f32 0.0, %v6091
        %v6093 = vpop.f32.mrb[0].mxu0
        %6094 = vmatprep.mubr.f32.mxu0 0.0
        %6095 = vmatmul.mubr.f32.gmra.mrb[0].mxu0 %v5925
        %v6096 = vpop.f32.mrb[0].mxu0
        %v6097 = vadd.f32 0.0, %v6096
        %v6098 = vpop.f32.mrb[0].mxu0
        %6099 = vmatprep.mubr.f32.mxu0 0.0
        %6100 = vmatmul.mubr.f32.gmra.mrb[0].mxu0 %v5928
        %v6101 = vpop.f32.mrb[0].mxu0
        %v6102 = vadd.f32 0.0, %v6101
        %v6103 = vpop.f32.mrb[0].mxu0
        %6104 = vmatprep.mubr.f32.mxu0 0.0
        %6105 = vmatmul.mubr.f32.gmra.mrb[0].mxu0 %v5931
        %v6106 = vpop.f32.mrb[0].mxu0
        %v6107 = vadd.f32 0.0, %v6106
        %v6108 = vpop.f32.mrb[0].mxu0
        %6109 = vmatprep.mubr.f32.mxu0 0.0
        %6110 = vmatmul.mubr.f32.gmra.mrb[0].mxu0 %v5934
        %v6111 = vpop.f32.mrb[0].mxu0
        %v6112 = vadd.f32 0.0, %v6111
        %v6113 = vpop.f32.mrb[0].mxu0
        %6114 = vmatprep.mubr.f32.mxu0 0.0
        %6115 = vmatmul.mubr.f32.gmra.mrb[0].mxu0 %v5937
        %v6116 = vpop.f32.mrb[0].mxu0
        %v6117 = vadd.f32 0.0, %v6116
        %v6118 = vpop.f32.mrb[0].mxu0
        %6119 = vmatprep.mubr.f32.mxu0 0.0
        %6120 = vmatmul.mubr.f32.gmra.mrb[0].mxu0 %v5940
        %v6121 = vpop.f32.mrb[0].mxu0
        %v6122 = vadd.f32 0.0, %v6121
        %v6123 = vpop.f32.mrb[0].mxu0
        %6124 = vmatprep.mubr.f32.mxu0 0.0
        %6125 = vmatmul.mubr.f32.gmra.mrb[0].mxu0 %v5943
        %v6126 = vpop.f32.mrb[0].mxu0
        %v6127 = vadd.f32 0.0, %v6126
        %v6128 = vpop.f32.mrb[0].mxu0
        %6129 = vmatprep.mubr.f32.mxu0 0.0
        %6130 = vmatmul.mubr.f32.gmra.mrb[0].mxu0 %v5946
        %v6131 = vpop.f32.mrb[0].mxu0
        %v6132 = vadd.f32 0.0, %v6131
        %v6133 = vpop.f32.mrb[0].mxu0
        %6134 = vmatprep.mubr.f32.mxu0 0.0
        %6135 = vmatmul.mubr.f32.gmra.mrb[0].mxu0 %v5949
        %v6136 = vpop.f32.mrb[0].mxu0
        %v6137 = vadd.f32 0.0, %v6136
        %v6138 = vpop.f32.mrb[0].mxu0
        %6139 = vmatprep.mubr.f32.mxu0 0.0
        %6140 = vmatmul.mubr.f32.gmra.mrb[0].mxu0 %v5952
        %v6141 = vpop.f32.mrb[0].mxu0
        %v6142 = vadd.f32 0.0, %v6141
        %v6143 = vpop.f32.mrb[0].mxu0
        %6144 = vmatprep.mubr.f32.mxu0 0.0
        %6145 = vmatmul.mubr.f32.gmra.mrb[0].mxu0 %v5955
        %v6146 = vpop.f32.mrb[0].mxu0
        %v6147 = vadd.f32 0.0, %v6146
        %v6148 = vpop.f32.mrb[0].mxu0
        %6149 = vmatprep.mubr.f32.mxu0 0.0
        %6150 = vmatmul.mubr.f32.gmra.mrb[0].mxu0 %v5958
        %v6151 = vpop.f32.mrb[0].mxu0
        %v6152 = vadd.f32 0.0, %v6151
        %v6153 = vpop.f32.mrb[0].mxu0
        %6154 = vmatprep.mubr.f32.mxu0 0.0
        %6155 = vmatmul.mubr.f32.gmra.mrb[0].mxu0 %v5961
        %v6156 = vpop.f32.mrb[0].mxu0
        %v6157 = vadd.f32 0.0, %v6156
        %v6158 = vpop.f32.mrb[0].mxu0
        %6159 = vmatprep.mubr.f32.mxu0 0.0
        %6160 = vmatmul.mubr.f32.gmra.mrb[0].mxu0 %v5964
        %v6161 = vpop.f32.mrb[0].mxu0
        %v6162 = vadd.f32 0.0, %v6161
        %v6163 = vpop.f32.mrb[0].mxu0
        %6164 = vmatprep.mubr.f32.mxu0 0.0
        %6165 = vmatmul.mubr.f32.gmra.mrb[0].mxu0 %v5967
        %v6166 = vpop.f32.mrb[0].mxu0
        %v6167 = vadd.f32 0.0, %v6166
        %v6168 = vpop.f32.mrb[0].mxu0
        %6169 = vmatprep.mubr.f32.mxu0 0.0
        %6170 = vmatmul.mubr.f32.gmra.mrb[0].mxu0 %v5970
        %v6171 = vpop.f32.mrb[0].mxu0
        %v6172 = vadd.f32 0.0, %v6171
        %v6173 = vpop.f32.mrb[0].mxu0
        %6174 = vmatprep.mubr.f32.mxu0 0.0
        %6175 = vmatmul.mubr.f32.gmra.mrb[0].mxu0 %v5973
        %v6176 = vpop.f32.mrb[0].mxu0
        %v6177 = vadd.f32 0.0, %v6176
        %v6178 = vpop.f32.mrb[0].mxu0
        %6179 = vmatprep.mubr.f32.mxu0 0.0
        %6180 = vmatmul.mubr.f32.gmra.mrb[0].mxu0 %v5976
        %v6181 = vpop.f32.mrb[0].mxu0
        %v6182 = vadd.f32 0.0, %v6181
        %v6183 = vpop.f32.mrb[0].mxu0
        %6184 = vmatprep.mubr.f32.mxu0 0.0
        %6185 = vmatmul.mubr.f32.gmra.mrb[0].mxu0 %v5979
        %v6186 = vpop.f32.mrb[0].mxu0
        %v6187 = vadd.f32 0.0, %v6186
        %v6188 = vpop.f32.mrb[0].mxu0
        %6189 = vmatprep.mubr.f32.mxu0 0.0
        %6190 = vmatmul.mubr.f32.gmra.mrb[0].mxu0 %v5982
        %v6191 = vpop.f32.mrb[0].mxu0
        %v6192 = vadd.f32 0.0, %v6191
        %v6193 = vpop.f32.mrb[0].mxu0
        %6194 = vmatprep.mubr.f32.mxu0 0.0
        %6195 = vmatmul.mubr.f32.gmra.mrb[0].mxu0 %v5985
        %v6196 = vpop.f32.mrb[0].mxu0
        %v6197 = vadd.f32 0.0, %v6196
        %v6198 = vpop.f32.mrb[0].mxu0
        %6199 = vmatprep.mubr.f32.mxu0 0.0
        %6200 = vmatmul.mubr.f32.gmra.mrb[0].mxu0 %v5988
        %v6201 = vpop.f32.mrb[0].mxu0
        %v6202 = vadd.f32 0.0, %v6201
        %v6203 = vpop.f32.mrb[0].mxu0
        %6204 = vmatprep.mubr.f32.mxu0 0.0
        %6205 = vmatmul.mubr.f32.gmra.mrb[0].mxu0 %v5991
        %v6206 = vpop.f32.mrb[0].mxu0
        %v6207 = vadd.f32 0.0, %v6206
        %v6208 = vpop.f32.mrb[0].mxu0
        %6209 = vmatprep.mubr.f32.mxu0 0.0
        %6210 = vmatmul.mubr.f32.gmra.mrb[0].mxu0 %v5994
        %v6211 = vpop.f32.mrb[0].mxu0
        %v6212 = vadd.f32 0.0, %v6211
        %v6213 = vpop.f32.mrb[0].mxu0
        %6214 = vmatprep.mubr.f32.mxu0 0.0
        %6215 = vmatmul.mubr.f32.gmra.mrb[0].mxu0 %v5997
        %v6216 = vpop.f32.mrb[0].mxu0
        %v6217 = vadd.f32 0.0, %v6216
        %v6218 = vpop.f32.mrb[0].mxu0
        %6219 = vmatprep.mubr.f32.mxu0 0.0
        %6220 = vmatmul.mubr.f32.gmra.mrb[0].mxu0 %v6000
        %v6221 = vpop.f32.mrb[0].mxu0
        %v6222 = vadd.f32 0.0, %v6221
        %v6223 = vpop.f32.mrb[0].mxu0
        %6224 = vmatprep.mubr.f32.mxu0 0.0
        %6225 = vmatmul.mubr.f32.gmra.mrb[0].mxu0 %v6003
        %v6226 = vpop.f32.mrb[0].mxu0
        %v6227 = vadd.f32 0.0, %v6226
        %v6228 = vpop.f32.mrb[0].mxu0
        %6229 = vdwg.mxu0
        %v6230 = vadd.f32 %v5839, %v6072
        %v6231 = vadd.f32 %v5840, %v6077
        %v6232 = vadd.f32 %v5841, %v6082
        %v6233 = vadd.f32 %v5842, %v6087
        %v6234 = vadd.f32 %v5843, %v6092
        %v6235 = vadd.f32 %v5844, %v6097
        %v6236 = vadd.f32 %v5845, %v6102
        %v6237 = vadd.f32 %v5846, %v6107
        %v6238 = vadd.f32 %v5847, %v6112
        %v6239 = vadd.f32 %v5848, %v6117
        %v6240 = vadd.f32 %v5849, %v6122
        %v6241 = vadd.f32 %v5850, %v6127
        %v6242 = vadd.f32 %v5851, %v6132
        %v6243 = vadd.f32 %v5852, %v6137
        %v6244 = vadd.f32 %v5853, %v6142
        %v6245 = vadd.f32 %v5854, %v6147
        %v6246 = vadd.f32 %v5855, %v6152
        %v6247 = vadd.f32 %v5856, %v6157
        %v6248 = vadd.f32 %v5857, %v6162
        %v6249 = vadd.f32 %v5858, %v6167
        %v6250 = vadd.f32 %v5859, %v6172
        %v6251 = vadd.f32 %v5860, %v6177
        %v6252 = vadd.f32 %v5861, %v6182
        %v6253 = vadd.f32 %v5862, %v6187
        %v6254 = vadd.f32 %v5863, %v6192
        %v6255 = vadd.f32 %v5864, %v6197
        %v6256 = vadd.f32 %v5865, %v6202
        %v6257 = vadd.f32 %v5866, %v6207
        %v6258 = vadd.f32 %v5867, %v6212
        %v6259 = vadd.f32 %v5868, %v6217
        %v6260 = vadd.f32 %v5869, %v6222
        %v6261 = vadd.f32 %v5870, %v6227
        %v6262 = vld [vmem:[%s5480 + $0x2] sm:$0xff]
        %v6263 = vld [vmem:[%s5480 + $0xa] sm:$0xff]
        %v6264 = vld [vmem:[%s5480 + $0x1a] sm:$0xff]
        %v6265 = vld [vmem:[%s5480 + $0x22] sm:$0xff]
        %v6266 = vld [vmem:[%s5480 + $0x32] sm:$0xff]
        %v6267 = vld [vmem:[%s5480 + $0x3a] sm:$0xff]
        %v6268 = vld [vmem:[%s5480 + $0x4a] sm:$0xff]
        %v6269 = vld [vmem:[%s5480 + $0x52] sm:$0xff]
        %v6270 = vld [vmem:[%s5480 + $0x62] sm:$0xff]
        %v6271 = vld [vmem:[%s5480 + $0x6a] sm:$0xff]
        %v6272 = vld [vmem:[%s5480 + $0x7a] sm:$0xff]
        %v6273 = vld [vmem:[%s5480 + $0x82] sm:$0xff]
        %v6274 = vld [vmem:[%s5480 + $0x92] sm:$0xff]
        %v6275 = vld [vmem:[%s5480 + $0x9a] sm:$0xff]
        %v6276 = vld [vmem:[%s5480 + $0xaa] sm:$0xff]
        %v6277 = vld [vmem:[%s5480 + $0xb2] sm:$0xff]
        %v6278 = vld [vmem:[%s5480 + $0xc2] sm:$0xff]
        %v6279 = vld [vmem:[%s5480 + $0xca] sm:$0xff]
        %v6280 = vld [vmem:[%s5480 + $0xda] sm:$0xff]
        %v6281 = vld [vmem:[%s5480 + $0xe2] sm:$0xff]
        %v6282 = vld [vmem:[%s5480 + $0xf2] sm:$0xff]
        %v6283 = vld [vmem:[%s5480 + $0xfa] sm:$0xff]
        %v6284 = vld [vmem:[%s5480 + $0x10a] sm:$0xff]
        %v6285 = vld [vmem:[%s5480 + $0x112] sm:$0xff]
        %v6286 = vld [vmem:[%s5480 + $0x122] sm:$0xff]
        %v6287 = vld [vmem:[%s5480 + $0x12a] sm:$0xff]
        %v6288 = vld [vmem:[%s5480 + $0x13a] sm:$0xff]
        %v6289 = vld [vmem:[%s5480 + $0x142] sm:$0xff]
        %v6290 = vld [vmem:[%s5480 + $0x152] sm:$0xff]
        %v6291 = vld [vmem:[%s5480 + $0x15a] sm:$0xff]
        %v6292 = vld [vmem:[%s5480 + $0x16a] sm:$0xff]
        %v6293 = vld [vmem:[%s5480 + $0x172] sm:$0xff]
        %s6294 = scalar_lea.vmem [#allocation9], 224
        %v6295 = vld [vmem:[%s6294] sm:$0xff]
        %v6296 = vld [vmem:[%s6294 + $0x8] sm:$0xff]
        %v6297 = vld [vmem:[%s6294 + $0x10] sm:$0xff]
        %v6298 = vld [vmem:[%s6294 + $0x18] sm:$0xff]
        %v6300 = vsel %vm897, %v6262, 0
        %v6303 = vsel %vm897, %v6263, 0
        %v6306 = vsel %vm897, %v6264, 0
        %v6309 = vsel %vm897, %v6265, 0
        %v6312 = vsel %vm897, %v6266, 0
        %v6315 = vsel %vm897, %v6267, 0
        %v6318 = vsel %vm897, %v6268, 0
        %v6321 = vsel %vm897, %v6269, 0
        %v6324 = vsel %vm897, %v6270, 0
        %v6327 = vsel %vm897, %v6271, 0
        %v6330 = vsel %vm897, %v6272, 0
        %v6333 = vsel %vm897, %v6273, 0
        %v6336 = vsel %vm897, %v6274, 0
        %v6339 = vsel %vm897, %v6275, 0
        %v6342 = vsel %vm897, %v6276, 0
        %v6345 = vsel %vm897, %v6277, 0
        %v6348 = vsel %vm897, %v6278, 0
        %v6351 = vsel %vm897, %v6279, 0
        %v6354 = vsel %vm897, %v6280, 0
        %v6357 = vsel %vm897, %v6281, 0
        %v6360 = vsel %vm897, %v6282, 0
        %v6363 = vsel %vm897, %v6283, 0
        %v6366 = vsel %vm897, %v6284, 0
        %v6369 = vsel %vm897, %v6285, 0
        %v6372 = vsel %vm897, %v6286, 0
        %v6375 = vsel %vm897, %v6287, 0
        %v6378 = vsel %vm897, %v6288, 0
        %v6381 = vsel %vm897, %v6289, 0
        %v6384 = vsel %vm897, %v6290, 0
        %v6387 = vsel %vm897, %v6291, 0
        %v6390 = vsel %vm897, %v6292, 0
        %v6393 = vsel %vm897, %v6293, 0
        %6395 = vmatprep.subr.mxu0 0.0
        %6396 = vmatpush1.msra.mxu0 %v6295
        %6397 = vmatprep.subr.mxu0 0.0
        %6398 = vmatpush1.msra.mxu0 %v6296
        %6399 = vmatprep.subr.mxu0 0.0
        %6400 = vmatpush1.msra.mxu0 %v6297
        %6401 = vmatprep.subr.mxu0 0.0
        %6402 = vmatpush1.msra.mxu0 %v6298
        %6403 = vmatprep.subr.mxu0 0.0
        %6404 = vmatpush1.msra.mxu0 0.0
        %6405 = vmatprep.subr.mxu0 0.0
        %6406 = vmatpush1.msra.mxu0 0.0
        %6407 = vmatprep.subr.mxu0 0.0
        %6408 = vmatpush1.msra.mxu0 0.0
        %6409 = vmatprep.subr.mxu0 0.0
        %6410 = vmatpush1.msra.mxu0 0.0
        %6411 = vmatprep.subr.mxu0 0.0
        %6412 = vmatpush1.msra.mxu0 0.0
        %6413 = vmatprep.subr.mxu0 0.0
        %6414 = vmatpush1.msra.mxu0 0.0
        %6415 = vmatprep.subr.mxu0 0.0
        %6416 = vmatpush1.msra.mxu0 0.0
        %6417 = vmatprep.subr.mxu0 0.0
        %6418 = vmatpush1.msra.mxu0 0.0
        %6419 = vmatprep.subr.mxu0 0.0
        %6420 = vmatpush1.msra.mxu0 0.0
        %6421 = vmatprep.subr.mxu0 0.0
        %6422 = vmatpush1.msra.mxu0 0.0
        %6423 = vmatprep.subr.mxu0 0.0
        %6424 = vmatpush1.msra.mxu0 0.0
        %6425 = vmatprep.subr.mxu0 0.0
        %6426 = vmatpush1.msra.mxu0 0.0
        %6427 = vmatprep.subr.mxu0 0.0
        %6428 = vmatpush1.msra.mxu0 0.0
        %6429 = vmatprep.subr.mxu0 0.0
        %6430 = vmatpush1.msra.mxu0 0.0
        %6431 = vmatprep.subr.mxu0 0.0
        %6432 = vmatpush1.msra.mxu0 0.0
        %6433 = vmatprep.subr.mxu0 0.0
        %6434 = vmatpush1.msra.mxu0 0.0
        %6435 = vmatprep.subr.mxu0 0.0
        %6436 = vmatpush1.msra.mxu0 0.0
        %6437 = vmatprep.subr.mxu0 0.0
        %6438 = vmatpush1.msra.mxu0 0.0
        %6439 = vmatprep.subr.mxu0 0.0
        %6440 = vmatpush1.msra.mxu0 0.0
        %6441 = vmatprep.subr.mxu0 0.0
        %6442 = vmatpush1.msra.mxu0 0.0
        %6443 = vmatprep.subr.mxu0 0.0
        %6444 = vmatpush1.msra.mxu0 0.0
        %6445 = vmatprep.subr.mxu0 0.0
        %6446 = vmatpush1.msra.mxu0 0.0
        %6447 = vmatprep.subr.mxu0 0.0
        %6448 = vmatpush1.msra.mxu0 0.0
        %6449 = vmatprep.subr.mxu0 0.0
        %6450 = vmatpush1.msra.mxu0 0.0
        %6451 = vmatprep.subr.mxu0 0.0
        %6452 = vmatpush1.msra.mxu0 0.0
        %6453 = vmatprep.subr.mxu0 0.0
        %6454 = vmatpush1.msra.mxu0 0.0
        %6455 = vmatprep.subr.mxu0 0.0
        %6456 = vmatpush1.msra.mxu0 0.0
        %6457 = vmatprep.subr.mxu0 0.0
        %6458 = vmatpush1.msra.mxu0 0.0
        %6459 = vmatprep.mubr.f32.mxu0 0.0
        %6460 = vmatmul.mubr.f32.gmra.mrb[0].mxu0 %v6300
        %v6461 = vpop.f32.mrb[0].mxu0
        %v6462 = vadd.f32 0.0, %v6461
        %v6463 = vpop.f32.mrb[0].mxu0
        %6464 = vmatprep.mubr.f32.mxu0 0.0
        %6465 = vmatmul.mubr.f32.gmra.mrb[0].mxu0 %v6303
        %v6466 = vpop.f32.mrb[0].mxu0
        %v6467 = vadd.f32 0.0, %v6466
        %v6468 = vpop.f32.mrb[0].mxu0
        %6469 = vmatprep.mubr.f32.mxu0 0.0
        %6470 = vmatmul.mubr.f32.gmra.mrb[0].mxu0 %v6306
        %v6471 = vpop.f32.mrb[0].mxu0
        %v6472 = vadd.f32 0.0, %v6471
        %v6473 = vpop.f32.mrb[0].mxu0
        %6474 = vmatprep.mubr.f32.mxu0 0.0
        %6475 = vmatmul.mubr.f32.gmra.mrb[0].mxu0 %v6309
        %v6476 = vpop.f32.mrb[0].mxu0
        %v6477 = vadd.f32 0.0, %v6476
        %v6478 = vpop.f32.mrb[0].mxu0
        %6479 = vmatprep.mubr.f32.mxu0 0.0
        %6480 = vmatmul.mubr.f32.gmra.mrb[0].mxu0 %v6312
        %v6481 = vpop.f32.mrb[0].mxu0
        %v6482 = vadd.f32 0.0, %v6481
        %v6483 = vpop.f32.mrb[0].mxu0
        %6484 = vmatprep.mubr.f32.mxu0 0.0
        %6485 = vmatmul.mubr.f32.gmra.mrb[0].mxu0 %v6315
        %v6486 = vpop.f32.mrb[0].mxu0
        %v6487 = vadd.f32 0.0, %v6486
        %v6488 = vpop.f32.mrb[0].mxu0
        %6489 = vmatprep.mubr.f32.mxu0 0.0
        %6490 = vmatmul.mubr.f32.gmra.mrb[0].mxu0 %v6318
        %v6491 = vpop.f32.mrb[0].mxu0
        %v6492 = vadd.f32 0.0, %v6491
        %v6493 = vpop.f32.mrb[0].mxu0
        %6494 = vmatprep.mubr.f32.mxu0 0.0
        %6495 = vmatmul.mubr.f32.gmra.mrb[0].mxu0 %v6321
        %v6496 = vpop.f32.mrb[0].mxu0
        %v6497 = vadd.f32 0.0, %v6496
        %v6498 = vpop.f32.mrb[0].mxu0
        %6499 = vmatprep.mubr.f32.mxu0 0.0
        %6500 = vmatmul.mubr.f32.gmra.mrb[0].mxu0 %v6324
        %v6501 = vpop.f32.mrb[0].mxu0
        %v6502 = vadd.f32 0.0, %v6501
        %v6503 = vpop.f32.mrb[0].mxu0
        %6504 = vmatprep.mubr.f32.mxu0 0.0
        %6505 = vmatmul.mubr.f32.gmra.mrb[0].mxu0 %v6327
        %v6506 = vpop.f32.mrb[0].mxu0
        %v6507 = vadd.f32 0.0, %v6506
        %v6508 = vpop.f32.mrb[0].mxu0
        %6509 = vmatprep.mubr.f32.mxu0 0.0
        %6510 = vmatmul.mubr.f32.gmra.mrb[0].mxu0 %v6330
        %v6511 = vpop.f32.mrb[0].mxu0
        %v6512 = vadd.f32 0.0, %v6511
        %v6513 = vpop.f32.mrb[0].mxu0
        %6514 = vmatprep.mubr.f32.mxu0 0.0
        %6515 = vmatmul.mubr.f32.gmra.mrb[0].mxu0 %v6333
        %v6516 = vpop.f32.mrb[0].mxu0
        %v6517 = vadd.f32 0.0, %v6516
        %v6518 = vpop.f32.mrb[0].mxu0
        %6519 = vmatprep.mubr.f32.mxu0 0.0
        %6520 = vmatmul.mubr.f32.gmra.mrb[0].mxu0 %v6336
        %v6521 = vpop.f32.mrb[0].mxu0
        %v6522 = vadd.f32 0.0, %v6521
        %v6523 = vpop.f32.mrb[0].mxu0
        %6524 = vmatprep.mubr.f32.mxu0 0.0
        %6525 = vmatmul.mubr.f32.gmra.mrb[0].mxu0 %v6339
        %v6526 = vpop.f32.mrb[0].mxu0
        %v6527 = vadd.f32 0.0, %v6526
        %v6528 = vpop.f32.mrb[0].mxu0
        %6529 = vmatprep.mubr.f32.mxu0 0.0
        %6530 = vmatmul.mubr.f32.gmra.mrb[0].mxu0 %v6342
        %v6531 = vpop.f32.mrb[0].mxu0
        %v6532 = vadd.f32 0.0, %v6531
        %v6533 = vpop.f32.mrb[0].mxu0
        %6534 = vmatprep.mubr.f32.mxu0 0.0
        %6535 = vmatmul.mubr.f32.gmra.mrb[0].mxu0 %v6345
        %v6536 = vpop.f32.mrb[0].mxu0
        %v6537 = vadd.f32 0.0, %v6536
        %v6538 = vpop.f32.mrb[0].mxu0
        %6539 = vmatprep.mubr.f32.mxu0 0.0
        %6540 = vmatmul.mubr.f32.gmra.mrb[0].mxu0 %v6348
        %v6541 = vpop.f32.mrb[0].mxu0
        %v6542 = vadd.f32 0.0, %v6541
        %v6543 = vpop.f32.mrb[0].mxu0
        %6544 = vmatprep.mubr.f32.mxu0 0.0
        %6545 = vmatmul.mubr.f32.gmra.mrb[0].mxu0 %v6351
        %v6546 = vpop.f32.mrb[0].mxu0
        %v6547 = vadd.f32 0.0, %v6546
        %v6548 = vpop.f32.mrb[0].mxu0
        %6549 = vmatprep.mubr.f32.mxu0 0.0
        %6550 = vmatmul.mubr.f32.gmra.mrb[0].mxu0 %v6354
        %v6551 = vpop.f32.mrb[0].mxu0
        %v6552 = vadd.f32 0.0, %v6551
        %v6553 = vpop.f32.mrb[0].mxu0
        %6554 = vmatprep.mubr.f32.mxu0 0.0
        %6555 = vmatmul.mubr.f32.gmra.mrb[0].mxu0 %v6357
        %v6556 = vpop.f32.mrb[0].mxu0
        %v6557 = vadd.f32 0.0, %v6556
        %v6558 = vpop.f32.mrb[0].mxu0
        %6559 = vmatprep.mubr.f32.mxu0 0.0
        %6560 = vmatmul.mubr.f32.gmra.mrb[0].mxu0 %v6360
        %v6561 = vpop.f32.mrb[0].mxu0
        %v6562 = vadd.f32 0.0, %v6561
        %v6563 = vpop.f32.mrb[0].mxu0
        %6564 = vmatprep.mubr.f32.mxu0 0.0
        %6565 = vmatmul.mubr.f32.gmra.mrb[0].mxu0 %v6363
        %v6566 = vpop.f32.mrb[0].mxu0
        %v6567 = vadd.f32 0.0, %v6566
        %v6568 = vpop.f32.mrb[0].mxu0
        %6569 = vmatprep.mubr.f32.mxu0 0.0
        %6570 = vmatmul.mubr.f32.gmra.mrb[0].mxu0 %v6366
        %v6571 = vpop.f32.mrb[0].mxu0
        %v6572 = vadd.f32 0.0, %v6571
        %v6573 = vpop.f32.mrb[0].mxu0
        %6574 = vmatprep.mubr.f32.mxu0 0.0
        %6575 = vmatmul.mubr.f32.gmra.mrb[0].mxu0 %v6369
        %v6576 = vpop.f32.mrb[0].mxu0
        %v6577 = vadd.f32 0.0, %v6576
        %v6578 = vpop.f32.mrb[0].mxu0
        %6579 = vmatprep.mubr.f32.mxu0 0.0
        %6580 = vmatmul.mubr.f32.gmra.mrb[0].mxu0 %v6372
        %v6581 = vpop.f32.mrb[0].mxu0
        %v6582 = vadd.f32 0.0, %v6581
        %v6583 = vpop.f32.mrb[0].mxu0
        %6584 = vmatprep.mubr.f32.mxu0 0.0
        %6585 = vmatmul.mubr.f32.gmra.mrb[0].mxu0 %v6375
        %v6586 = vpop.f32.mrb[0].mxu0
        %v6587 = vadd.f32 0.0, %v6586
        %v6588 = vpop.f32.mrb[0].mxu0
        %6589 = vmatprep.mubr.f32.mxu0 0.0
        %6590 = vmatmul.mubr.f32.gmra.mrb[0].mxu0 %v6378
        %v6591 = vpop.f32.mrb[0].mxu0
        %v6592 = vadd.f32 0.0, %v6591
        %v6593 = vpop.f32.mrb[0].mxu0
        %6594 = vmatprep.mubr.f32.mxu0 0.0
        %6595 = vmatmul.mubr.f32.gmra.mrb[0].mxu0 %v6381
        %v6596 = vpop.f32.mrb[0].mxu0
        %v6597 = vadd.f32 0.0, %v6596
        %v6598 = vpop.f32.mrb[0].mxu0
        %6599 = vmatprep.mubr.f32.mxu0 0.0
        %6600 = vmatmul.mubr.f32.gmra.mrb[0].mxu0 %v6384
        %v6601 = vpop.f32.mrb[0].mxu0
        %v6602 = vadd.f32 0.0, %v6601
        %v6603 = vpop.f32.mrb[0].mxu0
        %6604 = vmatprep.mubr.f32.mxu0 0.0
        %6605 = vmatmul.mubr.f32.gmra.mrb[0].mxu0 %v6387
        %v6606 = vpop.f32.mrb[0].mxu0
        %v6607 = vadd.f32 0.0, %v6606
        %v6608 = vpop.f32.mrb[0].mxu0
        %6609 = vmatprep.mubr.f32.mxu0 0.0
        %6610 = vmatmul.mubr.f32.gmra.mrb[0].mxu0 %v6390
        %v6611 = vpop.f32.mrb[0].mxu0
        %v6612 = vadd.f32 0.0, %v6611
        %v6613 = vpop.f32.mrb[0].mxu0
        %6614 = vmatprep.mubr.f32.mxu0 0.0
        %6615 = vmatmul.mubr.f32.gmra.mrb[0].mxu0 %v6393
        %v6616 = vpop.f32.mrb[0].mxu0
        %v6617 = vadd.f32 0.0, %v6616
        %v6618 = vpop.f32.mrb[0].mxu0
        %6619 = vdwg.mxu0
        %v6620 = vadd.f32 %v6230, %v6462
        %v6621 = vadd.f32 %v6231, %v6467
        %v6622 = vadd.f32 %v6232, %v6472
        %v6623 = vadd.f32 %v6233, %v6477
        %v6624 = vadd.f32 %v6234, %v6482
        %v6625 = vadd.f32 %v6235, %v6487
        %v6626 = vadd.f32 %v6236, %v6492
        %v6627 = vadd.f32 %v6237, %v6497
        %v6628 = vadd.f32 %v6238, %v6502
        %v6629 = vadd.f32 %v6239, %v6507
        %v6630 = vadd.f32 %v6240, %v6512
        %v6631 = vadd.f32 %v6241, %v6517
        %v6632 = vadd.f32 %v6242, %v6522
        %v6633 = vadd.f32 %v6243, %v6527
        %v6634 = vadd.f32 %v6244, %v6532
        %v6635 = vadd.f32 %v6245, %v6537
        %v6636 = vadd.f32 %v6246, %v6542
        %v6637 = vadd.f32 %v6247, %v6547
        %v6638 = vadd.f32 %v6248, %v6552
        %v6639 = vadd.f32 %v6249, %v6557
        %v6640 = vadd.f32 %v6250, %v6562
        %v6641 = vadd.f32 %v6251, %v6567
        %v6642 = vadd.f32 %v6252, %v6572
        %v6643 = vadd.f32 %v6253, %v6577
        %v6644 = vadd.f32 %v6254, %v6582
        %v6645 = vadd.f32 %v6255, %v6587
        %v6646 = vadd.f32 %v6256, %v6592
        %v6647 = vadd.f32 %v6257, %v6597
        %v6648 = vadd.f32 %v6258, %v6602
        %v6649 = vadd.f32 %v6259, %v6607
        %v6650 = vadd.f32 %v6260, %v6612
        %v6651 = vadd.f32 %v6261, %v6617
        %v6652 = vld [vmem:[%s5871 + $0x2] sm:$0xff]
        %v6653 = vld [vmem:[%s5871 + $0xa] sm:$0xff]
        %v6654 = vld [vmem:[%s5871 + $0x1a] sm:$0xff]
        %v6655 = vld [vmem:[%s5871 + $0x22] sm:$0xff]
        %v6656 = vld [vmem:[%s5871 + $0x32] sm:$0xff]
        %v6657 = vld [vmem:[%s5871 + $0x3a] sm:$0xff]
        %v6658 = vld [vmem:[%s5871 + $0x4a] sm:$0xff]
        %v6659 = vld [vmem:[%s5871 + $0x52] sm:$0xff]
        %v6660 = vld [vmem:[%s5871 + $0x62] sm:$0xff]
        %v6661 = vld [vmem:[%s5871 + $0x6a] sm:$0xff]
        %v6662 = vld [vmem:[%s5871 + $0x7a] sm:$0xff]
        %v6663 = vld [vmem:[%s5871 + $0x82] sm:$0xff]
        %v6664 = vld [vmem:[%s5871 + $0x92] sm:$0xff]
        %v6665 = vld [vmem:[%s5871 + $0x9a] sm:$0xff]
        %v6666 = vld [vmem:[%s5871 + $0xaa] sm:$0xff]
        %v6667 = vld [vmem:[%s5871 + $0xb2] sm:$0xff]
        %v6668 = vld [vmem:[%s5871 + $0xc2] sm:$0xff]
        %v6669 = vld [vmem:[%s5871 + $0xca] sm:$0xff]
        %v6670 = vld [vmem:[%s5871 + $0xda] sm:$0xff]
        %v6671 = vld [vmem:[%s5871 + $0xe2] sm:$0xff]
        %v6672 = vld [vmem:[%s5871 + $0xf2] sm:$0xff]
        %v6673 = vld [vmem:[%s5871 + $0xfa] sm:$0xff]
        %v6674 = vld [vmem:[%s5871 + $0x10a] sm:$0xff]
        %v6675 = vld [vmem:[%s5871 + $0x112] sm:$0xff]
        %v6676 = vld [vmem:[%s5871 + $0x122] sm:$0xff]
        %v6677 = vld [vmem:[%s5871 + $0x12a] sm:$0xff]
        %v6678 = vld [vmem:[%s5871 + $0x13a] sm:$0xff]
        %v6679 = vld [vmem:[%s5871 + $0x142] sm:$0xff]
        %v6680 = vld [vmem:[%s5871 + $0x152] sm:$0xff]
        %v6681 = vld [vmem:[%s5871 + $0x15a] sm:$0xff]
        %v6682 = vld [vmem:[%s5871 + $0x16a] sm:$0xff]
        %v6683 = vld [vmem:[%s5871 + $0x172] sm:$0xff]
        %s6684 = scalar_lea.vmem [#allocation9], 512
        %v6685 = vld [vmem:[%s6684] sm:$0xff]
        %v6686 = vld [vmem:[%s6684 + $0x8] sm:$0xff]
        %v6687 = vld [vmem:[%s6684 + $0x10] sm:$0xff]
        %v6688 = vld [vmem:[%s6684 + $0x18] sm:$0xff]
        %v6690 = vsel %vm897, %v6652, 0
        %v6693 = vsel %vm897, %v6653, 0
        %v6696 = vsel %vm897, %v6654, 0
        %v6699 = vsel %vm897, %v6655, 0
        %v6702 = vsel %vm897, %v6656, 0
        %v6705 = vsel %vm897, %v6657, 0
        %v6708 = vsel %vm897, %v6658, 0
        %v6711 = vsel %vm897, %v6659, 0
        %v6714 = vsel %vm897, %v6660, 0
        %v6717 = vsel %vm897, %v6661, 0
        %v6720 = vsel %vm897, %v6662, 0
        %v6723 = vsel %vm897, %v6663, 0
        %v6726 = vsel %vm897, %v6664, 0
        %v6729 = vsel %vm897, %v6665, 0
        %v6732 = vsel %vm897, %v6666, 0
        %v6735 = vsel %vm897, %v6667, 0
        %v6738 = vsel %vm897, %v6668, 0
        %v6741 = vsel %vm897, %v6669, 0
        %v6744 = vsel %vm897, %v6670, 0
        %v6747 = vsel %vm897, %v6671, 0
        %v6750 = vsel %vm897, %v6672, 0
        %v6753 = vsel %vm897, %v6673, 0
        %v6756 = vsel %vm897, %v6674, 0
        %v6759 = vsel %vm897, %v6675, 0
        %v6762 = vsel %vm897, %v6676, 0
        %v6765 = vsel %vm897, %v6677, 0
        %v6768 = vsel %vm897, %v6678, 0
        %v6771 = vsel %vm897, %v6679, 0
        %v6774 = vsel %vm897, %v6680, 0
        %v6777 = vsel %vm897, %v6681, 0
        %v6780 = vsel %vm897, %v6682, 0
        %v6783 = vsel %vm897, %v6683, 0
        %6785 = vmatprep.subr.mxu0 0.0
        %6786 = vmatpush1.msra.mxu0 %v6685
        %6787 = vmatprep.subr.mxu0 0.0
        %6788 = vmatpush1.msra.mxu0 %v6686
        %6789 = vmatprep.subr.mxu0 0.0
        %6790 = vmatpush1.msra.mxu0 %v6687
        %6791 = vmatprep.subr.mxu0 0.0
        %6792 = vmatpush1.msra.mxu0 %v6688
        %6793 = vmatprep.subr.mxu0 0.0
        %6794 = vmatpush1.msra.mxu0 0.0
        %6795 = vmatprep.subr.mxu0 0.0
        %6796 = vmatpush1.msra.mxu0 0.0
        %6797 = vmatprep.subr.mxu0 0.0
        %6798 = vmatpush1.msra.mxu0 0.0
        %6799 = vmatprep.subr.mxu0 0.0
        %6800 = vmatpush1.msra.mxu0 0.0
        %6801 = vmatprep.subr.mxu0 0.0
        %6802 = vmatpush1.msra.mxu0 0.0
        %6803 = vmatprep.subr.mxu0 0.0
        %6804 = vmatpush1.msra.mxu0 0.0
        %6805 = vmatprep.subr.mxu0 0.0
        %6806 = vmatpush1.msra.mxu0 0.0
        %6807 = vmatprep.subr.mxu0 0.0
        %6808 = vmatpush1.msra.mxu0 0.0
        %6809 = vmatprep.subr.mxu0 0.0
        %6810 = vmatpush1.msra.mxu0 0.0
        %6811 = vmatprep.subr.mxu0 0.0
        %6812 = vmatpush1.msra.mxu0 0.0
        %6813 = vmatprep.subr.mxu0 0.0
        %6814 = vmatpush1.msra.mxu0 0.0
        %6815 = vmatprep.subr.mxu0 0.0
        %6816 = vmatpush1.msra.mxu0 0.0
        %6817 = vmatprep.subr.mxu0 0.0
        %6818 = vmatpush1.msra.mxu0 0.0
        %6819 = vmatprep.subr.mxu0 0.0
        %6820 = vmatpush1.msra.mxu0 0.0
        %6821 = vmatprep.subr.mxu0 0.0
        %6822 = vmatpush1.msra.mxu0 0.0
        %6823 = vmatprep.subr.mxu0 0.0
        %6824 = vmatpush1.msra.mxu0 0.0
        %6825 = vmatprep.subr.mxu0 0.0
        %6826 = vmatpush1.msra.mxu0 0.0
        %6827 = vmatprep.subr.mxu0 0.0
        %6828 = vmatpush1.msra.mxu0 0.0
        %6829 = vmatprep.subr.mxu0 0.0
        %6830 = vmatpush1.msra.mxu0 0.0
        %6831 = vmatprep.subr.mxu0 0.0
        %6832 = vmatpush1.msra.mxu0 0.0
        %6833 = vmatprep.subr.mxu0 0.0
        %6834 = vmatpush1.msra.mxu0 0.0
        %6835 = vmatprep.subr.mxu0 0.0
        %6836 = vmatpush1.msra.mxu0 0.0
        %6837 = vmatprep.subr.mxu0 0.0
        %6838 = vmatpush1.msra.mxu0 0.0
        %6839 = vmatprep.subr.mxu0 0.0
        %6840 = vmatpush1.msra.mxu0 0.0
        %6841 = vmatprep.subr.mxu0 0.0
        %6842 = vmatpush1.msra.mxu0 0.0
        %6843 = vmatprep.subr.mxu0 0.0
        %6844 = vmatpush1.msra.mxu0 0.0
        %6845 = vmatprep.subr.mxu0 0.0
        %6846 = vmatpush1.msra.mxu0 0.0
        %6847 = vmatprep.subr.mxu0 0.0
        %6848 = vmatpush1.msra.mxu0 0.0
        %6849 = vmatprep.mubr.f32.mxu0 0.0
        %6850 = vmatmul.mubr.f32.gmra.mrb[0].mxu0 %v6690
        %v6851 = vpop.f32.mrb[0].mxu0
        %v6852 = vadd.f32 0.0, %v6851
        %v6853 = vpop.f32.mrb[0].mxu0
        %6854 = vmatprep.mubr.f32.mxu0 0.0
        %6855 = vmatmul.mubr.f32.gmra.mrb[0].mxu0 %v6693
        %v6856 = vpop.f32.mrb[0].mxu0
        %v6857 = vadd.f32 0.0, %v6856
        %v6858 = vpop.f32.mrb[0].mxu0
        %6859 = vmatprep.mubr.f32.mxu0 0.0
        %6860 = vmatmul.mubr.f32.gmra.mrb[0].mxu0 %v6696
        %v6861 = vpop.f32.mrb[0].mxu0
        %v6862 = vadd.f32 0.0, %v6861
        %v6863 = vpop.f32.mrb[0].mxu0
        %6864 = vmatprep.mubr.f32.mxu0 0.0
        %6865 = vmatmul.mubr.f32.gmra.mrb[0].mxu0 %v6699
        %v6866 = vpop.f32.mrb[0].mxu0
        %v6867 = vadd.f32 0.0, %v6866
        %v6868 = vpop.f32.mrb[0].mxu0
        %6869 = vmatprep.mubr.f32.mxu0 0.0
        %6870 = vmatmul.mubr.f32.gmra.mrb[0].mxu0 %v6702
        %v6871 = vpop.f32.mrb[0].mxu0
        %v6872 = vadd.f32 0.0, %v6871
        %v6873 = vpop.f32.mrb[0].mxu0
        %6874 = vmatprep.mubr.f32.mxu0 0.0
        %6875 = vmatmul.mubr.f32.gmra.mrb[0].mxu0 %v6705
        %v6876 = vpop.f32.mrb[0].mxu0
        %v6877 = vadd.f32 0.0, %v6876
        %v6878 = vpop.f32.mrb[0].mxu0
        %6879 = vmatprep.mubr.f32.mxu0 0.0
        %6880 = vmatmul.mubr.f32.gmra.mrb[0].mxu0 %v6708
        %v6881 = vpop.f32.mrb[0].mxu0
        %v6882 = vadd.f32 0.0, %v6881
        %v6883 = vpop.f32.mrb[0].mxu0
        %6884 = vmatprep.mubr.f32.mxu0 0.0
        %6885 = vmatmul.mubr.f32.gmra.mrb[0].mxu0 %v6711
        %v6886 = vpop.f32.mrb[0].mxu0
        %v6887 = vadd.f32 0.0, %v6886
        %v6888 = vpop.f32.mrb[0].mxu0
        %6889 = vmatprep.mubr.f32.mxu0 0.0
        %6890 = vmatmul.mubr.f32.gmra.mrb[0].mxu0 %v6714
        %v6891 = vpop.f32.mrb[0].mxu0
        %v6892 = vadd.f32 0.0, %v6891
        %v6893 = vpop.f32.mrb[0].mxu0
        %6894 = vmatprep.mubr.f32.mxu0 0.0
        %6895 = vmatmul.mubr.f32.gmra.mrb[0].mxu0 %v6717
        %v6896 = vpop.f32.mrb[0].mxu0
        %v6897 = vadd.f32 0.0, %v6896
        %v6898 = vpop.f32.mrb[0].mxu0
        %6899 = vmatprep.mubr.f32.mxu0 0.0
        %6900 = vmatmul.mubr.f32.gmra.mrb[0].mxu0 %v6720
        %v6901 = vpop.f32.mrb[0].mxu0
        %v6902 = vadd.f32 0.0, %v6901
        %v6903 = vpop.f32.mrb[0].mxu0
        %6904 = vmatprep.mubr.f32.mxu0 0.0
        %6905 = vmatmul.mubr.f32.gmra.mrb[0].mxu0 %v6723
        %v6906 = vpop.f32.mrb[0].mxu0
        %v6907 = vadd.f32 0.0, %v6906
        %v6908 = vpop.f32.mrb[0].mxu0
        %6909 = vmatprep.mubr.f32.mxu0 0.0
        %6910 = vmatmul.mubr.f32.gmra.mrb[0].mxu0 %v6726
        %v6911 = vpop.f32.mrb[0].mxu0
        %v6912 = vadd.f32 0.0, %v6911
        %v6913 = vpop.f32.mrb[0].mxu0
        %6914 = vmatprep.mubr.f32.mxu0 0.0
        %6915 = vmatmul.mubr.f32.gmra.mrb[0].mxu0 %v6729
        %v6916 = vpop.f32.mrb[0].mxu0
        %v6917 = vadd.f32 0.0, %v6916
        %v6918 = vpop.f32.mrb[0].mxu0
        %6919 = vmatprep.mubr.f32.mxu0 0.0
        %6920 = vmatmul.mubr.f32.gmra.mrb[0].mxu0 %v6732
        %v6921 = vpop.f32.mrb[0].mxu0
        %v6922 = vadd.f32 0.0, %v6921
        %v6923 = vpop.f32.mrb[0].mxu0
        %6924 = vmatprep.mubr.f32.mxu0 0.0
        %6925 = vmatmul.mubr.f32.gmra.mrb[0].mxu0 %v6735
        %v6926 = vpop.f32.mrb[0].mxu0
        %v6927 = vadd.f32 0.0, %v6926
        %v6928 = vpop.f32.mrb[0].mxu0
        %6929 = vmatprep.mubr.f32.mxu0 0.0
        %6930 = vmatmul.mubr.f32.gmra.mrb[0].mxu0 %v6738
        %v6931 = vpop.f32.mrb[0].mxu0
        %v6932 = vadd.f32 0.0, %v6931
        %v6933 = vpop.f32.mrb[0].mxu0
        %6934 = vmatprep.mubr.f32.mxu0 0.0
        %6935 = vmatmul.mubr.f32.gmra.mrb[0].mxu0 %v6741
        %v6936 = vpop.f32.mrb[0].mxu0
        %v6937 = vadd.f32 0.0, %v6936
        %v6938 = vpop.f32.mrb[0].mxu0
        %6939 = vmatprep.mubr.f32.mxu0 0.0
        %6940 = vmatmul.mubr.f32.gmra.mrb[0].mxu0 %v6744
        %v6941 = vpop.f32.mrb[0].mxu0
        %v6942 = vadd.f32 0.0, %v6941
        %v6943 = vpop.f32.mrb[0].mxu0
        %6944 = vmatprep.mubr.f32.mxu0 0.0
        %6945 = vmatmul.mubr.f32.gmra.mrb[0].mxu0 %v6747
        %v6946 = vpop.f32.mrb[0].mxu0
        %v6947 = vadd.f32 0.0, %v6946
        %v6948 = vpop.f32.mrb[0].mxu0
        %6949 = vmatprep.mubr.f32.mxu0 0.0
        %6950 = vmatmul.mubr.f32.gmra.mrb[0].mxu0 %v6750
        %v6951 = vpop.f32.mrb[0].mxu0
        %v6952 = vadd.f32 0.0, %v6951
        %v6953 = vpop.f32.mrb[0].mxu0
        %6954 = vmatprep.mubr.f32.mxu0 0.0
        %6955 = vmatmul.mubr.f32.gmra.mrb[0].mxu0 %v6753
        %v6956 = vpop.f32.mrb[0].mxu0
        %v6957 = vadd.f32 0.0, %v6956
        %v6958 = vpop.f32.mrb[0].mxu0
        %6959 = vmatprep.mubr.f32.mxu0 0.0
        %6960 = vmatmul.mubr.f32.gmra.mrb[0].mxu0 %v6756
        %v6961 = vpop.f32.mrb[0].mxu0
        %v6962 = vadd.f32 0.0, %v6961
        %v6963 = vpop.f32.mrb[0].mxu0
        %6964 = vmatprep.mubr.f32.mxu0 0.0
        %6965 = vmatmul.mubr.f32.gmra.mrb[0].mxu0 %v6759
        %v6966 = vpop.f32.mrb[0].mxu0
        %v6967 = vadd.f32 0.0, %v6966
        %v6968 = vpop.f32.mrb[0].mxu0
        %6969 = vmatprep.mubr.f32.mxu0 0.0
        %6970 = vmatmul.mubr.f32.gmra.mrb[0].mxu0 %v6762
        %v6971 = vpop.f32.mrb[0].mxu0
        %v6972 = vadd.f32 0.0, %v6971
        %v6973 = vpop.f32.mrb[0].mxu0
        %6974 = vmatprep.mubr.f32.mxu0 0.0
        %6975 = vmatmul.mubr.f32.gmra.mrb[0].mxu0 %v6765
        %v6976 = vpop.f32.mrb[0].mxu0
        %v6977 = vadd.f32 0.0, %v6976
        %v6978 = vpop.f32.mrb[0].mxu0
        %6979 = vmatprep.mubr.f32.mxu0 0.0
        %6980 = vmatmul.mubr.f32.gmra.mrb[0].mxu0 %v6768
        %v6981 = vpop.f32.mrb[0].mxu0
        %v6982 = vadd.f32 0.0, %v6981
        %v6983 = vpop.f32.mrb[0].mxu0
        %6984 = vmatprep.mubr.f32.mxu0 0.0
        %6985 = vmatmul.mubr.f32.gmra.mrb[0].mxu0 %v6771
        %v6986 = vpop.f32.mrb[0].mxu0
        %v6987 = vadd.f32 0.0, %v6986
        %v6988 = vpop.f32.mrb[0].mxu0
        %6989 = vmatprep.mubr.f32.mxu0 0.0
        %6990 = vmatmul.mubr.f32.gmra.mrb[0].mxu0 %v6774
        %v6991 = vpop.f32.mrb[0].mxu0
        %v6992 = vadd.f32 0.0, %v6991
        %v6993 = vpop.f32.mrb[0].mxu0
        %6994 = vmatprep.mubr.f32.mxu0 0.0
        %6995 = vmatmul.mubr.f32.gmra.mrb[0].mxu0 %v6777
        %v6996 = vpop.f32.mrb[0].mxu0
        %v6997 = vadd.f32 0.0, %v6996
        %v6998 = vpop.f32.mrb[0].mxu0
        %6999 = vmatprep.mubr.f32.mxu0 0.0
        %7000 = vmatmul.mubr.f32.gmra.mrb[0].mxu0 %v6780
        %v7001 = vpop.f32.mrb[0].mxu0
        %v7002 = vadd.f32 0.0, %v7001
        %v7003 = vpop.f32.mrb[0].mxu0
        %7004 = vmatprep.mubr.f32.mxu0 0.0
        %7005 = vmatmul.mubr.f32.gmra.mrb[0].mxu0 %v6783
        %v7006 = vpop.f32.mrb[0].mxu0
        %v7007 = vadd.f32 0.0, %v7006
        %v7008 = vpop.f32.mrb[0].mxu0
        %7009 = vdwg.mxu0
        %v7010 = vadd.f32 %v6620, %v6852
        %v7011 = vadd.f32 %v6621, %v6857
        %v7012 = vadd.f32 %v6622, %v6862
        %v7013 = vadd.f32 %v6623, %v6867
        %v7014 = vadd.f32 %v6624, %v6872
        %v7015 = vadd.f32 %v6625, %v6877
        %v7016 = vadd.f32 %v6626, %v6882
        %v7017 = vadd.f32 %v6627, %v6887
        %v7018 = vadd.f32 %v6628, %v6892
        %v7019 = vadd.f32 %v6629, %v6897
        %v7020 = vadd.f32 %v6630, %v6902
        %v7021 = vadd.f32 %v6631, %v6907
        %v7022 = vadd.f32 %v6632, %v6912
        %v7023 = vadd.f32 %v6633, %v6917
        %v7024 = vadd.f32 %v6634, %v6922
        %v7025 = vadd.f32 %v6635, %v6927
        %v7026 = vadd.f32 %v6636, %v6932
        %v7027 = vadd.f32 %v6637, %v6937
        %v7028 = vadd.f32 %v6638, %v6942
        %v7029 = vadd.f32 %v6639, %v6947
        %v7030 = vadd.f32 %v6640, %v6952
        %v7031 = vadd.f32 %v6641, %v6957
        %v7032 = vadd.f32 %v6642, %v6962
        %v7033 = vadd.f32 %v6643, %v6967
        %v7034 = vadd.f32 %v6644, %v6972
        %v7035 = vadd.f32 %v6645, %v6977
        %v7036 = vadd.f32 %v6646, %v6982
        %v7037 = vadd.f32 %v6647, %v6987
        %v7038 = vadd.f32 %v6648, %v6992
        %v7039 = vadd.f32 %v6649, %v6997
        %v7040 = vadd.f32 %v6650, %v7002
        %v7041 = vadd.f32 %v6651, %v7007
        %v7042 = vld [vmem:[%s5480 + $0x3] sm:$0xff]
        %v7043 = vld [vmem:[%s5480 + $0xb] sm:$0xff]
        %v7044 = vld [vmem:[%s5480 + $0x1b] sm:$0xff]
        %v7045 = vld [vmem:[%s5480 + $0x23] sm:$0xff]
        %v7046 = vld [vmem:[%s5480 + $0x33] sm:$0xff]
        %v7047 = vld [vmem:[%s5480 + $0x3b] sm:$0xff]
        %v7048 = vld [vmem:[%s5480 + $0x4b] sm:$0xff]
        %v7049 = vld [vmem:[%s5480 + $0x53] sm:$0xff]
        %v7050 = vld [vmem:[%s5480 + $0x63] sm:$0xff]
        %v7051 = vld [vmem:[%s5480 + $0x6b] sm:$0xff]
        %v7052 = vld [vmem:[%s5480 + $0x7b] sm:$0xff]
        %v7053 = vld [vmem:[%s5480 + $0x83] sm:$0xff]
        %v7054 = vld [vmem:[%s5480 + $0x93] sm:$0xff]
        %v7055 = vld [vmem:[%s5480 + $0x9b] sm:$0xff]
        %v7056 = vld [vmem:[%s5480 + $0xab] sm:$0xff]
        %v7057 = vld [vmem:[%s5480 + $0xb3] sm:$0xff]
        %v7058 = vld [vmem:[%s5480 + $0xc3] sm:$0xff]
        %v7059 = vld [vmem:[%s5480 + $0xcb] sm:$0xff]
        %v7060 = vld [vmem:[%s5480 + $0xdb] sm:$0xff]
        %v7061 = vld [vmem:[%s5480 + $0xe3] sm:$0xff]
        %v7062 = vld [vmem:[%s5480 + $0xf3] sm:$0xff]
        %v7063 = vld [vmem:[%s5480 + $0xfb] sm:$0xff]
        %v7064 = vld [vmem:[%s5480 + $0x10b] sm:$0xff]
        %v7065 = vld [vmem:[%s5480 + $0x113] sm:$0xff]
        %v7066 = vld [vmem:[%s5480 + $0x123] sm:$0xff]
        %v7067 = vld [vmem:[%s5480 + $0x12b] sm:$0xff]
        %v7068 = vld [vmem:[%s5480 + $0x13b] sm:$0xff]
        %v7069 = vld [vmem:[%s5480 + $0x143] sm:$0xff]
        %v7070 = vld [vmem:[%s5480 + $0x153] sm:$0xff]
        %v7071 = vld [vmem:[%s5480 + $0x15b] sm:$0xff]
        %v7072 = vld [vmem:[%s5480 + $0x16b] sm:$0xff]
        %v7073 = vld [vmem:[%s5480 + $0x173] sm:$0xff]
        %s7074 = scalar_lea.vmem [#allocation9], 256
        %v7075 = vld [vmem:[%s7074] sm:$0xff]
        %v7076 = vld [vmem:[%s7074 + $0x8] sm:$0xff]
        %v7077 = vld [vmem:[%s7074 + $0x10] sm:$0xff]
        %v7078 = vld [vmem:[%s7074 + $0x18] sm:$0xff]
        %v7080 = vsel %vm897, %v7042, 0
        %v7083 = vsel %vm897, %v7043, 0
        %v7086 = vsel %vm897, %v7044, 0
        %v7089 = vsel %vm897, %v7045, 0
        %v7092 = vsel %vm897, %v7046, 0
        %v7095 = vsel %vm897, %v7047, 0
        %v7098 = vsel %vm897, %v7048, 0
        %v7101 = vsel %vm897, %v7049, 0
        %v7104 = vsel %vm897, %v7050, 0
        %v7107 = vsel %vm897, %v7051, 0
        %v7110 = vsel %vm897, %v7052, 0
        %v7113 = vsel %vm897, %v7053, 0
        %v7116 = vsel %vm897, %v7054, 0
        %v7119 = vsel %vm897, %v7055, 0
        %v7122 = vsel %vm897, %v7056, 0
        %v7125 = vsel %vm897, %v7057, 0
        %v7128 = vsel %vm897, %v7058, 0
        %v7131 = vsel %vm897, %v7059, 0
        %v7134 = vsel %vm897, %v7060, 0
        %v7137 = vsel %vm897, %v7061, 0
        %v7140 = vsel %vm897, %v7062, 0
        %v7143 = vsel %vm897, %v7063, 0
        %v7146 = vsel %vm897, %v7064, 0
        %v7149 = vsel %vm897, %v7065, 0
        %v7152 = vsel %vm897, %v7066, 0
        %v7155 = vsel %vm897, %v7067, 0
        %v7158 = vsel %vm897, %v7068, 0
        %v7161 = vsel %vm897, %v7069, 0
        %v7164 = vsel %vm897, %v7070, 0
        %v7167 = vsel %vm897, %v7071, 0
        %v7170 = vsel %vm897, %v7072, 0
        %v7173 = vsel %vm897, %v7073, 0
        %7175 = vmatprep.subr.mxu0 0.0
        %7176 = vmatpush1.msra.mxu0 %v7075
        %7177 = vmatprep.subr.mxu0 0.0
        %7178 = vmatpush1.msra.mxu0 %v7076
        %7179 = vmatprep.subr.mxu0 0.0
        %7180 = vmatpush1.msra.mxu0 %v7077
        %7181 = vmatprep.subr.mxu0 0.0
        %7182 = vmatpush1.msra.mxu0 %v7078
        %7183 = vmatprep.subr.mxu0 0.0
        %7184 = vmatpush1.msra.mxu0 0.0
        %7185 = vmatprep.subr.mxu0 0.0
        %7186 = vmatpush1.msra.mxu0 0.0
        %7187 = vmatprep.subr.mxu0 0.0
        %7188 = vmatpush1.msra.mxu0 0.0
        %7189 = vmatprep.subr.mxu0 0.0
        %7190 = vmatpush1.msra.mxu0 0.0
        %7191 = vmatprep.subr.mxu0 0.0
        %7192 = vmatpush1.msra.mxu0 0.0
        %7193 = vmatprep.subr.mxu0 0.0
        %7194 = vmatpush1.msra.mxu0 0.0
        %7195 = vmatprep.subr.mxu0 0.0
        %7196 = vmatpush1.msra.mxu0 0.0
        %7197 = vmatprep.subr.mxu0 0.0
        %7198 = vmatpush1.msra.mxu0 0.0
        %7199 = vmatprep.subr.mxu0 0.0
        %7200 = vmatpush1.msra.mxu0 0.0
        %7201 = vmatprep.subr.mxu0 0.0
        %7202 = vmatpush1.msra.mxu0 0.0
        %7203 = vmatprep.subr.mxu0 0.0
        %7204 = vmatpush1.msra.mxu0 0.0
        %7205 = vmatprep.subr.mxu0 0.0
        %7206 = vmatpush1.msra.mxu0 0.0
        %7207 = vmatprep.subr.mxu0 0.0
        %7208 = vmatpush1.msra.mxu0 0.0
        %7209 = vmatprep.subr.mxu0 0.0
        %7210 = vmatpush1.msra.mxu0 0.0
        %7211 = vmatprep.subr.mxu0 0.0
        %7212 = vmatpush1.msra.mxu0 0.0
        %7213 = vmatprep.subr.mxu0 0.0
        %7214 = vmatpush1.msra.mxu0 0.0
        %7215 = vmatprep.subr.mxu0 0.0
        %7216 = vmatpush1.msra.mxu0 0.0
        %7217 = vmatprep.subr.mxu0 0.0
        %7218 = vmatpush1.msra.mxu0 0.0
        %7219 = vmatprep.subr.mxu0 0.0
        %7220 = vmatpush1.msra.mxu0 0.0
        %7221 = vmatprep.subr.mxu0 0.0
        %7222 = vmatpush1.msra.mxu0 0.0
        %7223 = vmatprep.subr.mxu0 0.0
        %7224 = vmatpush1.msra.mxu0 0.0
        %7225 = vmatprep.subr.mxu0 0.0
        %7226 = vmatpush1.msra.mxu0 0.0
        %7227 = vmatprep.subr.mxu0 0.0
        %7228 = vmatpush1.msra.mxu0 0.0
        %7229 = vmatprep.subr.mxu0 0.0
        %7230 = vmatpush1.msra.mxu0 0.0
        %7231 = vmatprep.subr.mxu0 0.0
        %7232 = vmatpush1.msra.mxu0 0.0
        %7233 = vmatprep.subr.mxu0 0.0
        %7234 = vmatpush1.msra.mxu0 0.0
        %7235 = vmatprep.subr.mxu0 0.0
        %7236 = vmatpush1.msra.mxu0 0.0
        %7237 = vmatprep.subr.mxu0 0.0
        %7238 = vmatpush1.msra.mxu0 0.0
        %7239 = vmatprep.mubr.f32.mxu0 0.0
        %7240 = vmatmul.mubr.f32.gmra.mrb[0].mxu0 %v7080
        %v7241 = vpop.f32.mrb[0].mxu0
        %v7242 = vadd.f32 0.0, %v7241
        %v7243 = vpop.f32.mrb[0].mxu0
        %7244 = vmatprep.mubr.f32.mxu0 0.0
        %7245 = vmatmul.mubr.f32.gmra.mrb[0].mxu0 %v7083
        %v7246 = vpop.f32.mrb[0].mxu0
        %v7247 = vadd.f32 0.0, %v7246
        %v7248 = vpop.f32.mrb[0].mxu0
        %7249 = vmatprep.mubr.f32.mxu0 0.0
        %7250 = vmatmul.mubr.f32.gmra.mrb[0].mxu0 %v7086
        %v7251 = vpop.f32.mrb[0].mxu0
        %v7252 = vadd.f32 0.0, %v7251
        %v7253 = vpop.f32.mrb[0].mxu0
        %7254 = vmatprep.mubr.f32.mxu0 0.0
        %7255 = vmatmul.mubr.f32.gmra.mrb[0].mxu0 %v7089
        %v7256 = vpop.f32.mrb[0].mxu0
        %v7257 = vadd.f32 0.0, %v7256
        %v7258 = vpop.f32.mrb[0].mxu0
        %7259 = vmatprep.mubr.f32.mxu0 0.0
        %7260 = vmatmul.mubr.f32.gmra.mrb[0].mxu0 %v7092
        %v7261 = vpop.f32.mrb[0].mxu0
        %v7262 = vadd.f32 0.0, %v7261
        %v7263 = vpop.f32.mrb[0].mxu0
        %7264 = vmatprep.mubr.f32.mxu0 0.0
        %7265 = vmatmul.mubr.f32.gmra.mrb[0].mxu0 %v7095
        %v7266 = vpop.f32.mrb[0].mxu0
        %v7267 = vadd.f32 0.0, %v7266
        %v7268 = vpop.f32.mrb[0].mxu0
        %7269 = vmatprep.mubr.f32.mxu0 0.0
        %7270 = vmatmul.mubr.f32.gmra.mrb[0].mxu0 %v7098
        %v7271 = vpop.f32.mrb[0].mxu0
        %v7272 = vadd.f32 0.0, %v7271
        %v7273 = vpop.f32.mrb[0].mxu0
        %7274 = vmatprep.mubr.f32.mxu0 0.0
        %7275 = vmatmul.mubr.f32.gmra.mrb[0].mxu0 %v7101
        %v7276 = vpop.f32.mrb[0].mxu0
        %v7277 = vadd.f32 0.0, %v7276
        %v7278 = vpop.f32.mrb[0].mxu0
        %7279 = vmatprep.mubr.f32.mxu0 0.0
        %7280 = vmatmul.mubr.f32.gmra.mrb[0].mxu0 %v7104
        %v7281 = vpop.f32.mrb[0].mxu0
        %v7282 = vadd.f32 0.0, %v7281
        %v7283 = vpop.f32.mrb[0].mxu0
        %7284 = vmatprep.mubr.f32.mxu0 0.0
        %7285 = vmatmul.mubr.f32.gmra.mrb[0].mxu0 %v7107
        %v7286 = vpop.f32.mrb[0].mxu0
        %v7287 = vadd.f32 0.0, %v7286
        %v7288 = vpop.f32.mrb[0].mxu0
        %7289 = vmatprep.mubr.f32.mxu0 0.0
        %7290 = vmatmul.mubr.f32.gmra.mrb[0].mxu0 %v7110
        %v7291 = vpop.f32.mrb[0].mxu0
        %v7292 = vadd.f32 0.0, %v7291
        %v7293 = vpop.f32.mrb[0].mxu0
        %7294 = vmatprep.mubr.f32.mxu0 0.0
        %7295 = vmatmul.mubr.f32.gmra.mrb[0].mxu0 %v7113
        %v7296 = vpop.f32.mrb[0].mxu0
        %v7297 = vadd.f32 0.0, %v7296
        %v7298 = vpop.f32.mrb[0].mxu0
        %7299 = vmatprep.mubr.f32.mxu0 0.0
        %7300 = vmatmul.mubr.f32.gmra.mrb[0].mxu0 %v7116
        %v7301 = vpop.f32.mrb[0].mxu0
        %v7302 = vadd.f32 0.0, %v7301
        %v7303 = vpop.f32.mrb[0].mxu0
        %7304 = vmatprep.mubr.f32.mxu0 0.0
        %7305 = vmatmul.mubr.f32.gmra.mrb[0].mxu0 %v7119
        %v7306 = vpop.f32.mrb[0].mxu0
        %v7307 = vadd.f32 0.0, %v7306
        %v7308 = vpop.f32.mrb[0].mxu0
        %7309 = vmatprep.mubr.f32.mxu0 0.0
        %7310 = vmatmul.mubr.f32.gmra.mrb[0].mxu0 %v7122
        %v7311 = vpop.f32.mrb[0].mxu0
        %v7312 = vadd.f32 0.0, %v7311
        %v7313 = vpop.f32.mrb[0].mxu0
        %7314 = vmatprep.mubr.f32.mxu0 0.0
        %7315 = vmatmul.mubr.f32.gmra.mrb[0].mxu0 %v7125
        %v7316 = vpop.f32.mrb[0].mxu0
        %v7317 = vadd.f32 0.0, %v7316
        %v7318 = vpop.f32.mrb[0].mxu0
        %7319 = vmatprep.mubr.f32.mxu0 0.0
        %7320 = vmatmul.mubr.f32.gmra.mrb[0].mxu0 %v7128
        %v7321 = vpop.f32.mrb[0].mxu0
        %v7322 = vadd.f32 0.0, %v7321
        %v7323 = vpop.f32.mrb[0].mxu0
        %7324 = vmatprep.mubr.f32.mxu0 0.0
        %7325 = vmatmul.mubr.f32.gmra.mrb[0].mxu0 %v7131
        %v7326 = vpop.f32.mrb[0].mxu0
        %v7327 = vadd.f32 0.0, %v7326
        %v7328 = vpop.f32.mrb[0].mxu0
        %7329 = vmatprep.mubr.f32.mxu0 0.0
        %7330 = vmatmul.mubr.f32.gmra.mrb[0].mxu0 %v7134
        %v7331 = vpop.f32.mrb[0].mxu0
        %v7332 = vadd.f32 0.0, %v7331
        %v7333 = vpop.f32.mrb[0].mxu0
        %7334 = vmatprep.mubr.f32.mxu0 0.0
        %7335 = vmatmul.mubr.f32.gmra.mrb[0].mxu0 %v7137
        %v7336 = vpop.f32.mrb[0].mxu0
        %v7337 = vadd.f32 0.0, %v7336
        %v7338 = vpop.f32.mrb[0].mxu0
        %7339 = vmatprep.mubr.f32.mxu0 0.0
        %7340 = vmatmul.mubr.f32.gmra.mrb[0].mxu0 %v7140
        %v7341 = vpop.f32.mrb[0].mxu0
        %v7342 = vadd.f32 0.0, %v7341
        %v7343 = vpop.f32.mrb[0].mxu0
        %7344 = vmatprep.mubr.f32.mxu0 0.0
        %7345 = vmatmul.mubr.f32.gmra.mrb[0].mxu0 %v7143
        %v7346 = vpop.f32.mrb[0].mxu0
        %v7347 = vadd.f32 0.0, %v7346
        %v7348 = vpop.f32.mrb[0].mxu0
        %7349 = vmatprep.mubr.f32.mxu0 0.0
        %7350 = vmatmul.mubr.f32.gmra.mrb[0].mxu0 %v7146
        %v7351 = vpop.f32.mrb[0].mxu0
        %v7352 = vadd.f32 0.0, %v7351
        %v7353 = vpop.f32.mrb[0].mxu0
        %7354 = vmatprep.mubr.f32.mxu0 0.0
        %7355 = vmatmul.mubr.f32.gmra.mrb[0].mxu0 %v7149
        %v7356 = vpop.f32.mrb[0].mxu0
        %v7357 = vadd.f32 0.0, %v7356
        %v7358 = vpop.f32.mrb[0].mxu0
        %7359 = vmatprep.mubr.f32.mxu0 0.0
        %7360 = vmatmul.mubr.f32.gmra.mrb[0].mxu0 %v7152
        %v7361 = vpop.f32.mrb[0].mxu0
        %v7362 = vadd.f32 0.0, %v7361
        %v7363 = vpop.f32.mrb[0].mxu0
        %7364 = vmatprep.mubr.f32.mxu0 0.0
        %7365 = vmatmul.mubr.f32.gmra.mrb[0].mxu0 %v7155
        %v7366 = vpop.f32.mrb[0].mxu0
        %v7367 = vadd.f32 0.0, %v7366
        %v7368 = vpop.f32.mrb[0].mxu0
        %7369 = vmatprep.mubr.f32.mxu0 0.0
        %7370 = vmatmul.mubr.f32.gmra.mrb[0].mxu0 %v7158
        %v7371 = vpop.f32.mrb[0].mxu0
        %v7372 = vadd.f32 0.0, %v7371
        %v7373 = vpop.f32.mrb[0].mxu0
        %7374 = vmatprep.mubr.f32.mxu0 0.0
        %7375 = vmatmul.mubr.f32.gmra.mrb[0].mxu0 %v7161
        %v7376 = vpop.f32.mrb[0].mxu0
        %v7377 = vadd.f32 0.0, %v7376
        %v7378 = vpop.f32.mrb[0].mxu0
        %7379 = vmatprep.mubr.f32.mxu0 0.0
        %7380 = vmatmul.mubr.f32.gmra.mrb[0].mxu0 %v7164
        %v7381 = vpop.f32.mrb[0].mxu0
        %v7382 = vadd.f32 0.0, %v7381
        %v7383 = vpop.f32.mrb[0].mxu0
        %7384 = vmatprep.mubr.f32.mxu0 0.0
        %7385 = vmatmul.mubr.f32.gmra.mrb[0].mxu0 %v7167
        %v7386 = vpop.f32.mrb[0].mxu0
        %v7387 = vadd.f32 0.0, %v7386
        %v7388 = vpop.f32.mrb[0].mxu0
        %7389 = vmatprep.mubr.f32.mxu0 0.0
        %7390 = vmatmul.mubr.f32.gmra.mrb[0].mxu0 %v7170
        %v7391 = vpop.f32.mrb[0].mxu0
        %v7392 = vadd.f32 0.0, %v7391
        %v7393 = vpop.f32.mrb[0].mxu0
        %7394 = vmatprep.mubr.f32.mxu0 0.0
        %7395 = vmatmul.mubr.f32.gmra.mrb[0].mxu0 %v7173
        %v7396 = vpop.f32.mrb[0].mxu0
        %v7397 = vadd.f32 0.0, %v7396
        %v7398 = vpop.f32.mrb[0].mxu0
        %7399 = vdwg.mxu0
        %v7400 = vadd.f32 %v7010, %v7242
        %v7401 = vadd.f32 %v7011, %v7247
        %v7402 = vadd.f32 %v7012, %v7252
        %v7403 = vadd.f32 %v7013, %v7257
        %v7404 = vadd.f32 %v7014, %v7262
        %v7405 = vadd.f32 %v7015, %v7267
        %v7406 = vadd.f32 %v7016, %v7272
        %v7407 = vadd.f32 %v7017, %v7277
        %v7408 = vadd.f32 %v7018, %v7282
        %v7409 = vadd.f32 %v7019, %v7287
        %v7410 = vadd.f32 %v7020, %v7292
        %v7411 = vadd.f32 %v7021, %v7297
        %v7412 = vadd.f32 %v7022, %v7302
        %v7413 = vadd.f32 %v7023, %v7307
        %v7414 = vadd.f32 %v7024, %v7312
        %v7415 = vadd.f32 %v7025, %v7317
        %v7416 = vadd.f32 %v7026, %v7322
        %v7417 = vadd.f32 %v7027, %v7327
        %v7418 = vadd.f32 %v7028, %v7332
        %v7419 = vadd.f32 %v7029, %v7337
        %v7420 = vadd.f32 %v7030, %v7342
        %v7421 = vadd.f32 %v7031, %v7347
        %v7422 = vadd.f32 %v7032, %v7352
        %v7423 = vadd.f32 %v7033, %v7357
        %v7424 = vadd.f32 %v7034, %v7362
        %v7425 = vadd.f32 %v7035, %v7367
        %v7426 = vadd.f32 %v7036, %v7372
        %v7427 = vadd.f32 %v7037, %v7377
        %v7428 = vadd.f32 %v7038, %v7382
        %v7429 = vadd.f32 %v7039, %v7387
        %v7430 = vadd.f32 %v7040, %v7392
        %v7431 = vadd.f32 %v7041, %v7397
        %v7432 = vld [vmem:[%s5871 + $0x4] sm:$0xff]
        %v7433 = vld [vmem:[%s5871 + $0xc] sm:$0xff]
        %v7434 = vld [vmem:[%s5871 + $0x1c] sm:$0xff]
        %v7435 = vld [vmem:[%s5871 + $0x24] sm:$0xff]
        %v7436 = vld [vmem:[%s5871 + $0x34] sm:$0xff]
        %v7437 = vld [vmem:[%s5871 + $0x3c] sm:$0xff]
        %v7438 = vld [vmem:[%s5871 + $0x4c] sm:$0xff]
        %v7439 = vld [vmem:[%s5871 + $0x54] sm:$0xff]
        %v7440 = vld [vmem:[%s5871 + $0x64] sm:$0xff]
        %v7441 = vld [vmem:[%s5871 + $0x6c] sm:$0xff]
        %v7442 = vld [vmem:[%s5871 + $0x7c] sm:$0xff]
        %v7443 = vld [vmem:[%s5871 + $0x84] sm:$0xff]
        %v7444 = vld [vmem:[%s5871 + $0x94] sm:$0xff]
        %v7445 = vld [vmem:[%s5871 + $0x9c] sm:$0xff]
        %v7446 = vld [vmem:[%s5871 + $0xac] sm:$0xff]
        %v7447 = vld [vmem:[%s5871 + $0xb4] sm:$0xff]
        %v7448 = vld [vmem:[%s5871 + $0xc4] sm:$0xff]
        %v7449 = vld [vmem:[%s5871 + $0xcc] sm:$0xff]
        %v7450 = vld [vmem:[%s5871 + $0xdc] sm:$0xff]
        %v7451 = vld [vmem:[%s5871 + $0xe4] sm:$0xff]
        %v7452 = vld [vmem:[%s5871 + $0xf4] sm:$0xff]
        %v7453 = vld [vmem:[%s5871 + $0xfc] sm:$0xff]
        %v7454 = vld [vmem:[%s5871 + $0x10c] sm:$0xff]
        %v7455 = vld [vmem:[%s5871 + $0x114] sm:$0xff]
        %v7456 = vld [vmem:[%s5871 + $0x124] sm:$0xff]
        %v7457 = vld [vmem:[%s5871 + $0x12c] sm:$0xff]
        %v7458 = vld [vmem:[%s5871 + $0x13c] sm:$0xff]
        %v7459 = vld [vmem:[%s5871 + $0x144] sm:$0xff]
        %v7460 = vld [vmem:[%s5871 + $0x154] sm:$0xff]
        %v7461 = vld [vmem:[%s5871 + $0x15c] sm:$0xff]
        %v7462 = vld [vmem:[%s5871 + $0x16c] sm:$0xff]
        %v7463 = vld [vmem:[%s5871 + $0x174] sm:$0xff]
        %s7464 = scalar_lea.vmem [#allocation9], 544
        %v7465 = vld [vmem:[%s7464] sm:$0xff]
        %v7466 = vld [vmem:[%s7464 + $0x8] sm:$0xff]
        %v7467 = vld [vmem:[%s7464 + $0x10] sm:$0xff]
        %v7468 = vld [vmem:[%s7464 + $0x18] sm:$0xff]
        %v7470 = vsel %vm897, %v7432, 0
        %v7473 = vsel %vm897, %v7433, 0
        %v7476 = vsel %vm897, %v7434, 0
        %v7479 = vsel %vm897, %v7435, 0
        %v7482 = vsel %vm897, %v7436, 0
        %v7485 = vsel %vm897, %v7437, 0
        %v7488 = vsel %vm897, %v7438, 0
        %v7491 = vsel %vm897, %v7439, 0
        %v7494 = vsel %vm897, %v7440, 0
        %v7497 = vsel %vm897, %v7441, 0
        %v7500 = vsel %vm897, %v7442, 0
        %v7503 = vsel %vm897, %v7443, 0
        %v7506 = vsel %vm897, %v7444, 0
        %v7509 = vsel %vm897, %v7445, 0
        %v7512 = vsel %vm897, %v7446, 0
        %v7515 = vsel %vm897, %v7447, 0
        %v7518 = vsel %vm897, %v7448, 0
        %v7521 = vsel %vm897, %v7449, 0
        %v7524 = vsel %vm897, %v7450, 0
        %v7527 = vsel %vm897, %v7451, 0
        %v7530 = vsel %vm897, %v7452, 0
        %v7533 = vsel %vm897, %v7453, 0
        %v7536 = vsel %vm897, %v7454, 0
        %v7539 = vsel %vm897, %v7455, 0
        %v7542 = vsel %vm897, %v7456, 0
        %v7545 = vsel %vm897, %v7457, 0
        %v7548 = vsel %vm897, %v7458, 0
        %v7551 = vsel %vm897, %v7459, 0
        %v7554 = vsel %vm897, %v7460, 0
        %v7557 = vsel %vm897, %v7461, 0
        %v7560 = vsel %vm897, %v7462, 0
        %v7563 = vsel %vm897, %v7463, 0
        %7565 = vmatprep.subr.mxu0 0.0
        %7566 = vmatpush1.msra.mxu0 %v7465
        %7567 = vmatprep.subr.mxu0 0.0
        %7568 = vmatpush1.msra.mxu0 %v7466
        %7569 = vmatprep.subr.mxu0 0.0
        %7570 = vmatpush1.msra.mxu0 %v7467
        %7571 = vmatprep.subr.mxu0 0.0
        %7572 = vmatpush1.msra.mxu0 %v7468
        %7573 = vmatprep.subr.mxu0 0.0
        %7574 = vmatpush1.msra.mxu0 0.0
        %7575 = vmatprep.subr.mxu0 0.0
        %7576 = vmatpush1.msra.mxu0 0.0
        %7577 = vmatprep.subr.mxu0 0.0
        %7578 = vmatpush1.msra.mxu0 0.0
        %7579 = vmatprep.subr.mxu0 0.0
        %7580 = vmatpush1.msra.mxu0 0.0
        %7581 = vmatprep.subr.mxu0 0.0
        %7582 = vmatpush1.msra.mxu0 0.0
        %7583 = vmatprep.subr.mxu0 0.0
        %7584 = vmatpush1.msra.mxu0 0.0
        %7585 = vmatprep.subr.mxu0 0.0
        %7586 = vmatpush1.msra.mxu0 0.0
        %7587 = vmatprep.subr.mxu0 0.0
        %7588 = vmatpush1.msra.mxu0 0.0
        %7589 = vmatprep.subr.mxu0 0.0
        %7590 = vmatpush1.msra.mxu0 0.0
        %7591 = vmatprep.subr.mxu0 0.0
        %7592 = vmatpush1.msra.mxu0 0.0
        %7593 = vmatprep.subr.mxu0 0.0
        %7594 = vmatpush1.msra.mxu0 0.0
        %7595 = vmatprep.subr.mxu0 0.0
        %7596 = vmatpush1.msra.mxu0 0.0
        %7597 = vmatprep.subr.mxu0 0.0
        %7598 = vmatpush1.msra.mxu0 0.0
        %7599 = vmatprep.subr.mxu0 0.0
        %7600 = vmatpush1.msra.mxu0 0.0
        %7601 = vmatprep.subr.mxu0 0.0
        %7602 = vmatpush1.msra.mxu0 0.0
        %7603 = vmatprep.subr.mxu0 0.0
        %7604 = vmatpush1.msra.mxu0 0.0
        %7605 = vmatprep.subr.mxu0 0.0
        %7606 = vmatpush1.msra.mxu0 0.0
        %7607 = vmatprep.subr.mxu0 0.0
        %7608 = vmatpush1.msra.mxu0 0.0
        %7609 = vmatprep.subr.mxu0 0.0
        %7610 = vmatpush1.msra.mxu0 0.0
        %7611 = vmatprep.subr.mxu0 0.0
        %7612 = vmatpush1.msra.mxu0 0.0
        %7613 = vmatprep.subr.mxu0 0.0
        %7614 = vmatpush1.msra.mxu0 0.0
        %7615 = vmatprep.subr.mxu0 0.0
        %7616 = vmatpush1.msra.mxu0 0.0
        %7617 = vmatprep.subr.mxu0 0.0
        %7618 = vmatpush1.msra.mxu0 0.0
        %7619 = vmatprep.subr.mxu0 0.0
        %7620 = vmatpush1.msra.mxu0 0.0
        %7621 = vmatprep.subr.mxu0 0.0
        %7622 = vmatpush1.msra.mxu0 0.0
        %7623 = vmatprep.subr.mxu0 0.0
        %7624 = vmatpush1.msra.mxu0 0.0
        %7625 = vmatprep.subr.mxu0 0.0
        %7626 = vmatpush1.msra.mxu0 0.0
        %7627 = vmatprep.subr.mxu0 0.0
        %7628 = vmatpush1.msra.mxu0 0.0
        %7629 = vmatprep.mubr.f32.mxu0 0.0
        %7630 = vmatmul.mubr.f32.gmra.mrb[0].mxu0 %v7470
        %v7631 = vpop.f32.mrb[0].mxu0
        %v7632 = vadd.f32 0.0, %v7631
        %v7633 = vpop.f32.mrb[0].mxu0
        %7634 = vmatprep.mubr.f32.mxu0 0.0
        %7635 = vmatmul.mubr.f32.gmra.mrb[0].mxu0 %v7473
        %v7636 = vpop.f32.mrb[0].mxu0
        %v7637 = vadd.f32 0.0, %v7636
        %v7638 = vpop.f32.mrb[0].mxu0
        %7639 = vmatprep.mubr.f32.mxu0 0.0
        %7640 = vmatmul.mubr.f32.gmra.mrb[0].mxu0 %v7476
        %v7641 = vpop.f32.mrb[0].mxu0
        %v7642 = vadd.f32 0.0, %v7641
        %v7643 = vpop.f32.mrb[0].mxu0
        %7644 = vmatprep.mubr.f32.mxu0 0.0
        %7645 = vmatmul.mubr.f32.gmra.mrb[0].mxu0 %v7479
        %v7646 = vpop.f32.mrb[0].mxu0
        %v7647 = vadd.f32 0.0, %v7646
        %v7648 = vpop.f32.mrb[0].mxu0
        %7649 = vmatprep.mubr.f32.mxu0 0.0
        %7650 = vmatmul.mubr.f32.gmra.mrb[0].mxu0 %v7482
        %v7651 = vpop.f32.mrb[0].mxu0
        %v7652 = vadd.f32 0.0, %v7651
        %v7653 = vpop.f32.mrb[0].mxu0
        %7654 = vmatprep.mubr.f32.mxu0 0.0
        %7655 = vmatmul.mubr.f32.gmra.mrb[0].mxu0 %v7485
        %v7656 = vpop.f32.mrb[0].mxu0
        %v7657 = vadd.f32 0.0, %v7656
        %v7658 = vpop.f32.mrb[0].mxu0
        %7659 = vmatprep.mubr.f32.mxu0 0.0
        %7660 = vmatmul.mubr.f32.gmra.mrb[0].mxu0 %v7488
        %v7661 = vpop.f32.mrb[0].mxu0
        %v7662 = vadd.f32 0.0, %v7661
        %v7663 = vpop.f32.mrb[0].mxu0
        %7664 = vmatprep.mubr.f32.mxu0 0.0
        %7665 = vmatmul.mubr.f32.gmra.mrb[0].mxu0 %v7491
        %v7666 = vpop.f32.mrb[0].mxu0
        %v7667 = vadd.f32 0.0, %v7666
        %v7668 = vpop.f32.mrb[0].mxu0
        %7669 = vmatprep.mubr.f32.mxu0 0.0
        %7670 = vmatmul.mubr.f32.gmra.mrb[0].mxu0 %v7494
        %v7671 = vpop.f32.mrb[0].mxu0
        %v7672 = vadd.f32 0.0, %v7671
        %v7673 = vpop.f32.mrb[0].mxu0
        %7674 = vmatprep.mubr.f32.mxu0 0.0
        %7675 = vmatmul.mubr.f32.gmra.mrb[0].mxu0 %v7497
        %v7676 = vpop.f32.mrb[0].mxu0
        %v7677 = vadd.f32 0.0, %v7676
        %v7678 = vpop.f32.mrb[0].mxu0
        %7679 = vmatprep.mubr.f32.mxu0 0.0
        %7680 = vmatmul.mubr.f32.gmra.mrb[0].mxu0 %v7500
        %v7681 = vpop.f32.mrb[0].mxu0
        %v7682 = vadd.f32 0.0, %v7681
        %v7683 = vpop.f32.mrb[0].mxu0
        %7684 = vmatprep.mubr.f32.mxu0 0.0
        %7685 = vmatmul.mubr.f32.gmra.mrb[0].mxu0 %v7503
        %v7686 = vpop.f32.mrb[0].mxu0
        %v7687 = vadd.f32 0.0, %v7686
        %v7688 = vpop.f32.mrb[0].mxu0
        %7689 = vmatprep.mubr.f32.mxu0 0.0
        %7690 = vmatmul.mubr.f32.gmra.mrb[0].mxu0 %v7506
        %v7691 = vpop.f32.mrb[0].mxu0
        %v7692 = vadd.f32 0.0, %v7691
        %v7693 = vpop.f32.mrb[0].mxu0
        %7694 = vmatprep.mubr.f32.mxu0 0.0
        %7695 = vmatmul.mubr.f32.gmra.mrb[0].mxu0 %v7509
        %v7696 = vpop.f32.mrb[0].mxu0
        %v7697 = vadd.f32 0.0, %v7696
        %v7698 = vpop.f32.mrb[0].mxu0
        %7699 = vmatprep.mubr.f32.mxu0 0.0
        %7700 = vmatmul.mubr.f32.gmra.mrb[0].mxu0 %v7512
        %v7701 = vpop.f32.mrb[0].mxu0
        %v7702 = vadd.f32 0.0, %v7701
        %v7703 = vpop.f32.mrb[0].mxu0
        %7704 = vmatprep.mubr.f32.mxu0 0.0
        %7705 = vmatmul.mubr.f32.gmra.mrb[0].mxu0 %v7515
        %v7706 = vpop.f32.mrb[0].mxu0
        %v7707 = vadd.f32 0.0, %v7706
        %v7708 = vpop.f32.mrb[0].mxu0
        %7709 = vmatprep.mubr.f32.mxu0 0.0
        %7710 = vmatmul.mubr.f32.gmra.mrb[0].mxu0 %v7518
        %v7711 = vpop.f32.mrb[0].mxu0
        %v7712 = vadd.f32 0.0, %v7711
        %v7713 = vpop.f32.mrb[0].mxu0
        %7714 = vmatprep.mubr.f32.mxu0 0.0
        %7715 = vmatmul.mubr.f32.gmra.mrb[0].mxu0 %v7521
        %v7716 = vpop.f32.mrb[0].mxu0
        %v7717 = vadd.f32 0.0, %v7716
        %v7718 = vpop.f32.mrb[0].mxu0
        %7719 = vmatprep.mubr.f32.mxu0 0.0
        %7720 = vmatmul.mubr.f32.gmra.mrb[0].mxu0 %v7524
        %v7721 = vpop.f32.mrb[0].mxu0
        %v7722 = vadd.f32 0.0, %v7721
        %v7723 = vpop.f32.mrb[0].mxu0
        %7724 = vmatprep.mubr.f32.mxu0 0.0
        %7725 = vmatmul.mubr.f32.gmra.mrb[0].mxu0 %v7527
        %v7726 = vpop.f32.mrb[0].mxu0
        %v7727 = vadd.f32 0.0, %v7726
        %v7728 = vpop.f32.mrb[0].mxu0
        %7729 = vmatprep.mubr.f32.mxu0 0.0
        %7730 = vmatmul.mubr.f32.gmra.mrb[0].mxu0 %v7530
        %v7731 = vpop.f32.mrb[0].mxu0
        %v7732 = vadd.f32 0.0, %v7731
        %v7733 = vpop.f32.mrb[0].mxu0
        %7734 = vmatprep.mubr.f32.mxu0 0.0
        %7735 = vmatmul.mubr.f32.gmra.mrb[0].mxu0 %v7533
        %v7736 = vpop.f32.mrb[0].mxu0
        %v7737 = vadd.f32 0.0, %v7736
        %v7738 = vpop.f32.mrb[0].mxu0
        %7739 = vmatprep.mubr.f32.mxu0 0.0
        %7740 = vmatmul.mubr.f32.gmra.mrb[0].mxu0 %v7536
        %v7741 = vpop.f32.mrb[0].mxu0
        %v7742 = vadd.f32 0.0, %v7741
        %v7743 = vpop.f32.mrb[0].mxu0
        %7744 = vmatprep.mubr.f32.mxu0 0.0
        %7745 = vmatmul.mubr.f32.gmra.mrb[0].mxu0 %v7539
        %v7746 = vpop.f32.mrb[0].mxu0
        %v7747 = vadd.f32 0.0, %v7746
        %v7748 = vpop.f32.mrb[0].mxu0
        %7749 = vmatprep.mubr.f32.mxu0 0.0
        %7750 = vmatmul.mubr.f32.gmra.mrb[0].mxu0 %v7542
        %v7751 = vpop.f32.mrb[0].mxu0
        %v7752 = vadd.f32 0.0, %v7751
        %v7753 = vpop.f32.mrb[0].mxu0
        %7754 = vmatprep.mubr.f32.mxu0 0.0
        %7755 = vmatmul.mubr.f32.gmra.mrb[0].mxu0 %v7545
        %v7756 = vpop.f32.mrb[0].mxu0
        %v7757 = vadd.f32 0.0, %v7756
        %v7758 = vpop.f32.mrb[0].mxu0
        %7759 = vmatprep.mubr.f32.mxu0 0.0
        %7760 = vmatmul.mubr.f32.gmra.mrb[0].mxu0 %v7548
        %v7761 = vpop.f32.mrb[0].mxu0
        %v7762 = vadd.f32 0.0, %v7761
        %v7763 = vpop.f32.mrb[0].mxu0
        %7764 = vmatprep.mubr.f32.mxu0 0.0
        %7765 = vmatmul.mubr.f32.gmra.mrb[0].mxu0 %v7551
        %v7766 = vpop.f32.mrb[0].mxu0
        %v7767 = vadd.f32 0.0, %v7766
        %v7768 = vpop.f32.mrb[0].mxu0
        %7769 = vmatprep.mubr.f32.mxu0 0.0
        %7770 = vmatmul.mubr.f32.gmra.mrb[0].mxu0 %v7554
        %v7771 = vpop.f32.mrb[0].mxu0
        %v7772 = vadd.f32 0.0, %v7771
        %v7773 = vpop.f32.mrb[0].mxu0
        %7774 = vmatprep.mubr.f32.mxu0 0.0
        %7775 = vmatmul.mubr.f32.gmra.mrb[0].mxu0 %v7557
        %v7776 = vpop.f32.mrb[0].mxu0
        %v7777 = vadd.f32 0.0, %v7776
        %v7778 = vpop.f32.mrb[0].mxu0
        %7779 = vmatprep.mubr.f32.mxu0 0.0
        %7780 = vmatmul.mubr.f32.gmra.mrb[0].mxu0 %v7560
        %v7781 = vpop.f32.mrb[0].mxu0
        %v7782 = vadd.f32 0.0, %v7781
        %v7783 = vpop.f32.mrb[0].mxu0
        %7784 = vmatprep.mubr.f32.mxu0 0.0
        %7785 = vmatmul.mubr.f32.gmra.mrb[0].mxu0 %v7563
        %v7786 = vpop.f32.mrb[0].mxu0
        %v7787 = vadd.f32 0.0, %v7786
        %v7788 = vpop.f32.mrb[0].mxu0
        %7789 = vdwg.mxu0
        %v7790 = vadd.f32 %v7400, %v7632
        %v7791 = vadd.f32 %v7401, %v7637
        %v7792 = vadd.f32 %v7402, %v7642
        %v7793 = vadd.f32 %v7403, %v7647
        %v7794 = vadd.f32 %v7404, %v7652
        %v7795 = vadd.f32 %v7405, %v7657
        %v7796 = vadd.f32 %v7406, %v7662
        %v7797 = vadd.f32 %v7407, %v7667
        %v7798 = vadd.f32 %v7408, %v7672
        %v7799 = vadd.f32 %v7409, %v7677
        %v7800 = vadd.f32 %v7410, %v7682
        %v7801 = vadd.f32 %v7411, %v7687
        %v7802 = vadd.f32 %v7412, %v7692
        %v7803 = vadd.f32 %v7413, %v7697
        %v7804 = vadd.f32 %v7414, %v7702
        %v7805 = vadd.f32 %v7415, %v7707
        %v7806 = vadd.f32 %v7416, %v7712
        %v7807 = vadd.f32 %v7417, %v7717
        %v7808 = vadd.f32 %v7418, %v7722
        %v7809 = vadd.f32 %v7419, %v7727
        %v7810 = vadd.f32 %v7420, %v7732
        %v7811 = vadd.f32 %v7421, %v7737
        %v7812 = vadd.f32 %v7422, %v7742
        %v7813 = vadd.f32 %v7423, %v7747
        %v7814 = vadd.f32 %v7424, %v7752
        %v7815 = vadd.f32 %v7425, %v7757
        %v7816 = vadd.f32 %v7426, %v7762
        %v7817 = vadd.f32 %v7427, %v7767
        %v7818 = vadd.f32 %v7428, %v7772
        %v7819 = vadd.f32 %v7429, %v7777
        %v7820 = vadd.f32 %v7430, %v7782
        %v7821 = vadd.f32 %v7431, %v7787
        %v7822 = vld [vmem:[%s6] sm:$0xf]
        %v7823 = vadd.f32 %v7790, %v739
        %v7824 = vadd.f32 %v7791, %v744
        %v7825 = vadd.f32 %v7792, %v749
        %v7826 = vadd.f32 %v7793, %v754
        %v7827 = vadd.f32 %v7794, %v759
        %v7828 = vadd.f32 %v7795, %v764
        %v7829 = vadd.f32 %v7796, %v769
        %v7830 = vadd.f32 %v7797, %v774
        %v7831 = vadd.f32 %v7798, %v779
        %v7832 = vadd.f32 %v7799, %v784
        %v7833 = vadd.f32 %v7800, %v789
        %v7834 = vadd.f32 %v7801, %v794
        %v7835 = vadd.f32 %v7802, %v799
        %v7836 = vadd.f32 %v7803, %v804
        %v7837 = vadd.f32 %v7804, %v809
        %v7838 = vadd.f32 %v7805, %v814
        %v7839 = vadd.f32 %v7806, %v819
        %v7840 = vadd.f32 %v7807, %v824
        %v7841 = vadd.f32 %v7808, %v829
        %v7842 = vadd.f32 %v7809, %v834
        %v7843 = vadd.f32 %v7810, %v839
        %v7844 = vadd.f32 %v7811, %v844
        %v7845 = vadd.f32 %v7812, %v849
        %v7846 = vadd.f32 %v7813, %v854
        %v7847 = vadd.f32 %v7814, %v859
        %v7848 = vadd.f32 %v7815, %v864
        %v7849 = vadd.f32 %v7816, %v869
        %v7850 = vadd.f32 %v7817, %v874
        %v7851 = vadd.f32 %v7818, %v879
        %v7852 = vadd.f32 %v7819, %v884
        %v7853 = vadd.f32 %v7820, %v889
        %v7854 = vadd.f32 %v7821, %v894
        %v7855 = vlaneseq
        %v7856 = vshrl.u32 %v7855, 7
        %v7857 = vsub.s32 0, %v7856
        %v7858 = vrot.slane %v7822, %v7857
        %v7859 = vadd.f32 %v7823, %v7858
        %v7860 = vadd.f32 %v7824, %v7858
        %v7861 = vadd.f32 %v7825, %v7858
        %v7862 = vadd.f32 %v7826, %v7858
        %v7863 = vadd.f32 %v7827, %v7858
        %v7864 = vadd.f32 %v7828, %v7858
        %v7865 = vadd.f32 %v7829, %v7858
        %v7866 = vadd.f32 %v7830, %v7858
        %v7867 = vadd.f32 %v7831, %v7858
        %v7868 = vadd.f32 %v7832, %v7858
        %v7869 = vadd.f32 %v7833, %v7858
        %v7870 = vadd.f32 %v7834, %v7858
        %v7871 = vadd.f32 %v7835, %v7858
        %v7872 = vadd.f32 %v7836, %v7858
        %v7873 = vadd.f32 %v7837, %v7858
        %v7874 = vadd.f32 %v7838, %v7858
        %v7875 = vadd.f32 %v7839, %v7858
        %v7876 = vadd.f32 %v7840, %v7858
        %v7877 = vadd.f32 %v7841, %v7858
        %v7878 = vadd.f32 %v7842, %v7858
        %v7879 = vadd.f32 %v7843, %v7858
        %v7880 = vadd.f32 %v7844, %v7858
        %v7881 = vadd.f32 %v7845, %v7858
        %v7882 = vadd.f32 %v7846, %v7858
        %v7883 = vadd.f32 %v7847, %v7858
        %v7884 = vadd.f32 %v7848, %v7858
        %v7885 = vadd.f32 %v7849, %v7858
        %v7886 = vadd.f32 %v7850, %v7858
        %v7887 = vadd.f32 %v7851, %v7858
        %v7888 = vadd.f32 %v7852, %v7858
        %v7889 = vadd.f32 %v7853, %v7858
        %v7890 = vadd.f32 %v7854, %v7858
        %vm7891 = vcmp.gt.f32.partialorder %v7859, 0.0
        %vm7892 = vcmp.gt.f32.partialorder %v7860, 0.0
        %vm7893 = vcmp.gt.f32.partialorder %v7861, 0.0
        %vm7894 = vcmp.gt.f32.partialorder %v7862, 0.0
        %vm7895 = vcmp.gt.f32.partialorder %v7863, 0.0
        %vm7896 = vcmp.gt.f32.partialorder %v7864, 0.0
        %vm7897 = vcmp.gt.f32.partialorder %v7865, 0.0
        %vm7898 = vcmp.gt.f32.partialorder %v7866, 0.0
        %vm7899 = vcmp.gt.f32.partialorder %v7867, 0.0
        %vm7900 = vcmp.gt.f32.partialorder %v7868, 0.0
        %vm7901 = vcmp.gt.f32.partialorder %v7869, 0.0
        %vm7902 = vcmp.gt.f32.partialorder %v7870, 0.0
        %vm7903 = vcmp.gt.f32.partialorder %v7871, 0.0
        %vm7904 = vcmp.gt.f32.partialorder %v7872, 0.0
        %vm7905 = vcmp.gt.f32.partialorder %v7873, 0.0
        %vm7906 = vcmp.gt.f32.partialorder %v7874, 0.0
        %vm7907 = vcmp.gt.f32.partialorder %v7875, 0.0
        %vm7908 = vcmp.gt.f32.partialorder %v7876, 0.0
        %vm7909 = vcmp.gt.f32.partialorder %v7877, 0.0
        %vm7910 = vcmp.gt.f32.partialorder %v7878, 0.0
        %vm7911 = vcmp.gt.f32.partialorder %v7879, 0.0
        %vm7912 = vcmp.gt.f32.partialorder %v7880, 0.0
        %vm7913 = vcmp.gt.f32.partialorder %v7881, 0.0
        %vm7914 = vcmp.gt.f32.partialorder %v7882, 0.0
        %vm7915 = vcmp.gt.f32.partialorder %v7883, 0.0
        %vm7916 = vcmp.gt.f32.partialorder %v7884, 0.0
        %vm7917 = vcmp.gt.f32.partialorder %v7885, 0.0
        %vm7918 = vcmp.gt.f32.partialorder %v7886, 0.0
        %vm7919 = vcmp.gt.f32.partialorder %v7887, 0.0
        %vm7920 = vcmp.gt.f32.partialorder %v7888, 0.0
        %vm7921 = vcmp.gt.f32.partialorder %v7889, 0.0
        %vm7922 = vcmp.gt.f32.partialorder %v7890, 0.0
        %v7923 = vlaneseq
        %v7924 = vshrl.u32 %v7923, 7
        %v7925 = vsub.s32 1, %v7924
        %v7926 = vrot.slane %v7822, %v7925
        %v7927 = vmul.f32 %v7926, %v7859
        %v7928 = vmul.f32 %v7926, %v7860
        %v7929 = vmul.f32 %v7926, %v7861
        %v7930 = vmul.f32 %v7926, %v7862
        %v7931 = vmul.f32 %v7926, %v7863
        %v7932 = vmul.f32 %v7926, %v7864
        %v7933 = vmul.f32 %v7926, %v7865
        %v7934 = vmul.f32 %v7926, %v7866
        %v7935 = vmul.f32 %v7926, %v7867
        %v7936 = vmul.f32 %v7926, %v7868
        %v7937 = vmul.f32 %v7926, %v7869
        %v7938 = vmul.f32 %v7926, %v7870
        %v7939 = vmul.f32 %v7926, %v7871
        %v7940 = vmul.f32 %v7926, %v7872
        %v7941 = vmul.f32 %v7926, %v7873
        %v7942 = vmul.f32 %v7926, %v7874
        %v7943 = vmul.f32 %v7926, %v7875
        %v7944 = vmul.f32 %v7926, %v7876
        %v7945 = vmul.f32 %v7926, %v7877
        %v7946 = vmul.f32 %v7926, %v7878
        %v7947 = vmul.f32 %v7926, %v7879
        %v7948 = vmul.f32 %v7926, %v7880
        %v7949 = vmul.f32 %v7926, %v7881
        %v7950 = vmul.f32 %v7926, %v7882
        %v7951 = vmul.f32 %v7926, %v7883
        %v7952 = vmul.f32 %v7926, %v7884
        %v7953 = vmul.f32 %v7926, %v7885
        %v7954 = vmul.f32 %v7926, %v7886
        %v7955 = vmul.f32 %v7926, %v7887
        %v7956 = vmul.f32 %v7926, %v7888
        %v7957 = vmul.f32 %v7926, %v7889
        %v7958 = vmul.f32 %v7926, %v7890
        %v7959 = vsel %vm7891, %v7859, %v7927
        %v7960 = vsel %vm7892, %v7860, %v7928
        %v7961 = vsel %vm7893, %v7861, %v7929
        %v7962 = vsel %vm7894, %v7862, %v7930
        %v7963 = vsel %vm7895, %v7863, %v7931
        %v7964 = vsel %vm7896, %v7864, %v7932
        %v7965 = vsel %vm7897, %v7865, %v7933
        %v7966 = vsel %vm7898, %v7866, %v7934
        %v7967 = vsel %vm7899, %v7867, %v7935
        %v7968 = vsel %vm7900, %v7868, %v7936
        %v7969 = vsel %vm7901, %v7869, %v7937
        %v7970 = vsel %vm7902, %v7870, %v7938
        %v7971 = vsel %vm7903, %v7871, %v7939
        %v7972 = vsel %vm7904, %v7872, %v7940
        %v7973 = vsel %vm7905, %v7873, %v7941
        %v7974 = vsel %vm7906, %v7874, %v7942
        %v7975 = vsel %vm7907, %v7875, %v7943
        %v7976 = vsel %vm7908, %v7876, %v7944
        %v7977 = vsel %vm7909, %v7877, %v7945
        %v7978 = vsel %vm7910, %v7878, %v7946
        %v7979 = vsel %vm7911, %v7879, %v7947
        %v7980 = vsel %vm7912, %v7880, %v7948
        %v7981 = vsel %vm7913, %v7881, %v7949
        %v7982 = vsel %vm7914, %v7882, %v7950
        %v7983 = vsel %vm7915, %v7883, %v7951
        %v7984 = vsel %vm7916, %v7884, %v7952
        %v7985 = vsel %vm7917, %v7885, %v7953
        %v7986 = vsel %vm7918, %v7886, %v7954
        %v7987 = vsel %vm7919, %v7887, %v7955
        %v7988 = vsel %vm7920, %v7888, %v7956
        %v7989 = vsel %vm7921, %v7889, %v7957
        %v7990 = vsel %vm7922, %v7890, %v7958
        %7991 = vst.msk [vmem:[#allocation3] sm:$0xff] %vm897, 0.0
        %7992 = vst.msk [vmem:[#allocation3 + $0x8] sm:$0xff] %vm897, 0.0
        %vm7993 = vcmask 254976
        %7994 = vst.msk [vmem:[#allocation3 + $0x10] sm:$0x3] %vm7993, 0.0
        %7995 = vst.msk [vmem:[#allocation3 + $0x18] sm:$0xff] %vm897, 0.0
        %7996 = vst.msk [vmem:[#allocation3 + $0x20] sm:$0xff] %vm897, 0.0
        %7997 = vst.msk [vmem:[#allocation3 + $0x28] sm:$0x3] %vm7993, 0.0
        %7998 = vst.msk [vmem:[#allocation3 + $0x30] sm:$0xff] %vm897, 0.0
        %7999 = vst.msk [vmem:[#allocation3 + $0x38] sm:$0xff] %vm897, 0.0
        %8000 = vst.msk [vmem:[#allocation3 + $0x40] sm:$0x3] %vm7993, 0.0
        %8001 = vst.msk [vmem:[#allocation3 + $0x48] sm:$0xff] %vm897, 0.0
        %8002 = vst.msk [vmem:[#allocation3 + $0x50] sm:$0xff] %vm897, 0.0
        %8003 = vst.msk [vmem:[#allocation3 + $0x58] sm:$0x3] %vm7993, 0.0
        %8004 = vst.msk [vmem:[#allocation3 + $0x60] sm:$0xff] %vm897, 0.0
        %8005 = vst.msk [vmem:[#allocation3 + $0x68] sm:$0xff] %vm897, 0.0
        %8006 = vst.msk [vmem:[#allocation3 + $0x70] sm:$0x3] %vm7993, 0.0
        %8007 = vst.msk [vmem:[#allocation3 + $0x78] sm:$0xff] %vm897, 0.0
        %8008 = vst.msk [vmem:[#allocation3 + $0x80] sm:$0xff] %vm897, 0.0
        %8009 = vst.msk [vmem:[#allocation3 + $0x88] sm:$0x3] %vm7993, 0.0
        %8010 = vst.msk [vmem:[#allocation3 + $0x90] sm:$0xff] %vm897, 0.0
        %8011 = vst.msk [vmem:[#allocation3 + $0x98] sm:$0xff] %vm897, 0.0
        %8012 = vst.msk [vmem:[#allocation3 + $0xa0] sm:$0x3] %vm7993, 0.0
        %8013 = vst.msk [vmem:[#allocation3 + $0xa8] sm:$0xff] %vm897, 0.0
        %8014 = vst.msk [vmem:[#allocation3 + $0xb0] sm:$0xff] %vm897, 0.0
        %8015 = vst.msk [vmem:[#allocation3 + $0xb8] sm:$0x3] %vm7993, 0.0
        %8016 = vst.msk [vmem:[#allocation3 + $0xc0] sm:$0xff] %vm897, 0.0
        %8017 = vst.msk [vmem:[#allocation3 + $0xc8] sm:$0xff] %vm897, 0.0
        %8018 = vst.msk [vmem:[#allocation3 + $0xd0] sm:$0x3] %vm7993, 0.0
        %8019 = vst.msk [vmem:[#allocation3 + $0xd8] sm:$0xff] %vm897, 0.0
        %8020 = vst.msk [vmem:[#allocation3 + $0xe0] sm:$0xff] %vm897, 0.0
        %8021 = vst.msk [vmem:[#allocation3 + $0xe8] sm:$0x3] %vm7993, 0.0
        %8022 = vst.msk [vmem:[#allocation3 + $0xf0] sm:$0xff] %vm897, 0.0
        %8023 = vst.msk [vmem:[#allocation3 + $0xf8] sm:$0xff] %vm897, 0.0
        %8024 = vst.msk [vmem:[#allocation3 + $0x100] sm:$0x3] %vm7993, 0.0
        %8025 = vst.msk [vmem:[#allocation3 + $0x108] sm:$0xff] %vm897, 0.0
        %8026 = vst.msk [vmem:[#allocation3 + $0x110] sm:$0xff] %vm897, 0.0
        %8027 = vst.msk [vmem:[#allocation3 + $0x118] sm:$0x3] %vm7993, 0.0
        %8028 = vst.msk [vmem:[#allocation3 + $0x120] sm:$0xff] %vm897, 0.0
        %8029 = vst.msk [vmem:[#allocation3 + $0x128] sm:$0xff] %vm897, 0.0
        %8030 = vst.msk [vmem:[#allocation3 + $0x130] sm:$0x3] %vm7993, 0.0
        %8031 = vst.msk [vmem:[#allocation3 + $0x138] sm:$0xff] %vm897, 0.0
        %8032 = vst.msk [vmem:[#allocation3 + $0x140] sm:$0xff] %vm897, 0.0
        %8033 = vst.msk [vmem:[#allocation3 + $0x148] sm:$0x3] %vm7993, 0.0
        %8034 = vst.msk [vmem:[#allocation3 + $0x150] sm:$0xff] %vm897, 0.0
        %8035 = vst.msk [vmem:[#allocation3 + $0x158] sm:$0xff] %vm897, 0.0
        %8036 = vst.msk [vmem:[#allocation3 + $0x160] sm:$0x3] %vm7993, 0.0
        %8037 = vst.msk [vmem:[#allocation3 + $0x168] sm:$0xff] %vm897, 0.0
        %8038 = vst.msk [vmem:[#allocation3 + $0x170] sm:$0xff] %vm897, 0.0
        %8039 = vst.msk [vmem:[#allocation3 + $0x178] sm:$0x3] %vm7993, 0.0
        %8040 = vst.msk [vmem:[#allocation3 + $0x180] sm:$0xff] %vm897, 0.0
        %8041 = vst.msk [vmem:[#allocation3 + $0x188] sm:$0xff] %vm897, 0.0
        %8042 = vst.msk [vmem:[#allocation3 + $0x190] sm:$0x3] %vm7993, 0.0
        %8043 = vst.msk [vmem:[#allocation3 + $0x198] sm:$0xff] %vm897, 0.0
        %8044 = vst.msk [vmem:[#allocation3 + $0x1a0] sm:$0xff] %vm897, 0.0
        %8045 = vst.msk [vmem:[#allocation3 + $0x1a8] sm:$0x3] %vm7993, 0.0
        %s8046 = scalar_lea.vmem [#allocation3], 24
        %8047 = vst.msk [vmem:[%s8046 + $0x1] sm:$0xff] %vm897, %v7959
        %8048 = vst.msk [vmem:[%s8046 + $0x9] sm:$0xff] %vm897, %v7960
        %8049 = vst.msk [vmem:[%s8046 + $0x19] sm:$0xff] %vm897, %v7961
        %8050 = vst.msk [vmem:[%s8046 + $0x21] sm:$0xff] %vm897, %v7962
        %8051 = vst.msk [vmem:[%s8046 + $0x31] sm:$0xff] %vm897, %v7963
        %8052 = vst.msk [vmem:[%s8046 + $0x39] sm:$0xff] %vm897, %v7964
        %8053 = vst.msk [vmem:[%s8046 + $0x49] sm:$0xff] %vm897, %v7965
        %8054 = vst.msk [vmem:[%s8046 + $0x51] sm:$0xff] %vm897, %v7966
        %8055 = vst.msk [vmem:[%s8046 + $0x61] sm:$0xff] %vm897, %v7967
        %8056 = vst.msk [vmem:[%s8046 + $0x69] sm:$0xff] %vm897, %v7968
        %8057 = vst.msk [vmem:[%s8046 + $0x79] sm:$0xff] %vm897, %v7969
        %8058 = vst.msk [vmem:[%s8046 + $0x81] sm:$0xff] %vm897, %v7970
        %8059 = vst.msk [vmem:[%s8046 + $0x91] sm:$0xff] %vm897, %v7971
        %8060 = vst.msk [vmem:[%s8046 + $0x99] sm:$0xff] %vm897, %v7972
        %8061 = vst.msk [vmem:[%s8046 + $0xa9] sm:$0xff] %vm897, %v7973
        %8062 = vst.msk [vmem:[%s8046 + $0xb1] sm:$0xff] %vm897, %v7974
        %8063 = vst.msk [vmem:[%s8046 + $0xc1] sm:$0xff] %vm897, %v7975
        %8064 = vst.msk [vmem:[%s8046 + $0xc9] sm:$0xff] %vm897, %v7976
        %8065 = vst.msk [vmem:[%s8046 + $0xd9] sm:$0xff] %vm897, %v7977
        %8066 = vst.msk [vmem:[%s8046 + $0xe1] sm:$0xff] %vm897, %v7978
        %8067 = vst.msk [vmem:[%s8046 + $0xf1] sm:$0xff] %vm897, %v7979
        %8068 = vst.msk [vmem:[%s8046 + $0xf9] sm:$0xff] %vm897, %v7980
        %8069 = vst.msk [vmem:[%s8046 + $0x109] sm:$0xff] %vm897, %v7981
        %8070 = vst.msk [vmem:[%s8046 + $0x111] sm:$0xff] %vm897, %v7982
        %8071 = vst.msk [vmem:[%s8046 + $0x121] sm:$0xff] %vm897, %v7983
        %8072 = vst.msk [vmem:[%s8046 + $0x129] sm:$0xff] %vm897, %v7984
        %8073 = vst.msk [vmem:[%s8046 + $0x139] sm:$0xff] %vm897, %v7985
        %8074 = vst.msk [vmem:[%s8046 + $0x141] sm:$0xff] %vm897, %v7986
        %8075 = vst.msk [vmem:[%s8046 + $0x151] sm:$0xff] %vm897, %v7987
        %8076 = vst.msk [vmem:[%s8046 + $0x159] sm:$0xff] %vm897, %v7988
        %8077 = vst.msk [vmem:[%s8046 + $0x169] sm:$0xff] %vm897, %v7989
        %8078 = vst.msk [vmem:[%s8046 + $0x171] sm:$0xff] %vm897, %v7990
        %v8079 = vld [vmem:[#allocation3] sm:$0xff]
        %v8080 = vld [vmem:[#allocation3 + $0x8] sm:$0xff]
        %v8081 = vld [vmem:[#allocation3 + $0x18] sm:$0xff]
        %v8082 = vld [vmem:[#allocation3 + $0x20] sm:$0xff]
        %v8083 = vld [vmem:[#allocation3 + $0x30] sm:$0xff]
        %v8084 = vld [vmem:[#allocation3 + $0x38] sm:$0xff]
        %v8085 = vld [vmem:[#allocation3 + $0x48] sm:$0xff]
        %v8086 = vld [vmem:[#allocation3 + $0x50] sm:$0xff]
        %v8087 = vld [vmem:[#allocation3 + $0x60] sm:$0xff]
        %v8088 = vld [vmem:[#allocation3 + $0x68] sm:$0xff]
        %v8089 = vld [vmem:[#allocation3 + $0x78] sm:$0xff]
        %v8090 = vld [vmem:[#allocation3 + $0x80] sm:$0xff]
        %v8091 = vld [vmem:[#allocation3 + $0x90] sm:$0xff]
        %v8092 = vld [vmem:[#allocation3 + $0x98] sm:$0xff]
        %v8093 = vld [vmem:[#allocation3 + $0xa8] sm:$0xff]
        %v8094 = vld [vmem:[#allocation3 + $0xb0] sm:$0xff]
        %v8095 = vld [vmem:[#allocation3 + $0xc0] sm:$0xff]
        %v8096 = vld [vmem:[#allocation3 + $0xc8] sm:$0xff]
        %v8097 = vld [vmem:[#allocation3 + $0xd8] sm:$0xff]
        %v8098 = vld [vmem:[#allocation3 + $0xe0] sm:$0xff]
        %v8099 = vld [vmem:[#allocation3 + $0xf0] sm:$0xff]
        %v8100 = vld [vmem:[#allocation3 + $0xf8] sm:$0xff]
        %v8101 = vld [vmem:[#allocation3 + $0x108] sm:$0xff]
        %v8102 = vld [vmem:[#allocation3 + $0x110] sm:$0xff]
        %v8103 = vld [vmem:[#allocation3 + $0x120] sm:$0xff]
        %v8104 = vld [vmem:[#allocation3 + $0x128] sm:$0xff]
        %v8105 = vld [vmem:[#allocation3 + $0x138] sm:$0xff]
        %v8106 = vld [vmem:[#allocation3 + $0x140] sm:$0xff]
        %v8107 = vld [vmem:[#allocation3 + $0x150] sm:$0xff]
        %v8108 = vld [vmem:[#allocation3 + $0x158] sm:$0xff]
        %v8109 = vld [vmem:[#allocation3 + $0x168] sm:$0xff]
        %v8110 = vld [vmem:[#allocation3 + $0x170] sm:$0xff]
        %v8111 = vld [vmem:[%s5] sm:$0xff]
        %v8112 = vld [vmem:[%s5 + $0x8] sm:$0xff]
        %v8113 = vld [vmem:[%s5 + $0x10] sm:$0xff]
        %v8114 = vld [vmem:[%s5 + $0x18] sm:$0xff]
        %v8115 = vld [vmem:[#allocation3 + $0x1] sm:$0xff]
        %v8116 = vld [vmem:[#allocation3 + $0x9] sm:$0xff]
        %v8117 = vld [vmem:[#allocation3 + $0x19] sm:$0xff]
        %v8118 = vld [vmem:[#allocation3 + $0x21] sm:$0xff]
        %v8119 = vld [vmem:[#allocation3 + $0x31] sm:$0xff]
        %v8120 = vld [vmem:[#allocation3 + $0x39] sm:$0xff]
        %v8121 = vld [vmem:[#allocation3 + $0x49] sm:$0xff]
        %v8122 = vld [vmem:[#allocation3 + $0x51] sm:$0xff]
        %v8123 = vld [vmem:[#allocation3 + $0x61] sm:$0xff]
        %v8124 = vld [vmem:[#allocation3 + $0x69] sm:$0xff]
        %v8125 = vld [vmem:[#allocation3 + $0x79] sm:$0xff]
        %v8126 = vld [vmem:[#allocation3 + $0x81] sm:$0xff]
        %v8127 = vld [vmem:[#allocation3 + $0x91] sm:$0xff]
        %v8128 = vld [vmem:[#allocation3 + $0x99] sm:$0xff]
        %v8129 = vld [vmem:[#allocation3 + $0xa9] sm:$0xff]
        %v8130 = vld [vmem:[#allocation3 + $0xb1] sm:$0xff]
        %v8131 = vld [vmem:[#allocation3 + $0xc1] sm:$0xff]
        %v8132 = vld [vmem:[#allocation3 + $0xc9] sm:$0xff]
        %v8133 = vld [vmem:[#allocation3 + $0xd9] sm:$0xff]
        %v8134 = vld [vmem:[#allocation3 + $0xe1] sm:$0xff]
        %v8135 = vld [vmem:[#allocation3 + $0xf1] sm:$0xff]
        %v8136 = vld [vmem:[#allocation3 + $0xf9] sm:$0xff]
        %v8137 = vld [vmem:[#allocation3 + $0x109] sm:$0xff]
        %v8138 = vld [vmem:[#allocation3 + $0x111] sm:$0xff]
        %v8139 = vld [vmem:[#allocation3 + $0x121] sm:$0xff]
        %v8140 = vld [vmem:[#allocation3 + $0x129] sm:$0xff]
        %v8141 = vld [vmem:[#allocation3 + $0x139] sm:$0xff]
        %v8142 = vld [vmem:[#allocation3 + $0x141] sm:$0xff]
        %v8143 = vld [vmem:[#allocation3 + $0x151] sm:$0xff]
        %v8144 = vld [vmem:[#allocation3 + $0x159] sm:$0xff]
        %v8145 = vld [vmem:[#allocation3 + $0x169] sm:$0xff]
        %v8146 = vld [vmem:[#allocation3 + $0x171] sm:$0xff]
        %s8147 = scalar_lea.vmem %s5, 32
        %v8148 = vld [vmem:[%s8147] sm:$0xff]
        %v8149 = vld [vmem:[%s8147 + $0x8] sm:$0xff]
        %v8150 = vld [vmem:[%s8147 + $0x10] sm:$0xff]
        %v8151 = vld [vmem:[%s8147 + $0x18] sm:$0xff]
        %v8153 = vsel %vm897, %v8115, 0
        %v8156 = vsel %vm897, %v8116, 0
        %v8159 = vsel %vm897, %v8117, 0
        %v8162 = vsel %vm897, %v8118, 0
        %v8165 = vsel %vm897, %v8119, 0
        %v8168 = vsel %vm897, %v8120, 0
        %v8171 = vsel %vm897, %v8121, 0
        %v8174 = vsel %vm897, %v8122, 0
        %v8177 = vsel %vm897, %v8123, 0
        %v8180 = vsel %vm897, %v8124, 0
        %v8183 = vsel %vm897, %v8125, 0
        %v8186 = vsel %vm897, %v8126, 0
        %v8189 = vsel %vm897, %v8127, 0
        %v8192 = vsel %vm897, %v8128, 0
        %v8195 = vsel %vm897, %v8129, 0
        %v8198 = vsel %vm897, %v8130, 0
        %v8201 = vsel %vm897, %v8131, 0
        %v8204 = vsel %vm897, %v8132, 0
        %v8207 = vsel %vm897, %v8133, 0
        %v8210 = vsel %vm897, %v8134, 0
        %v8213 = vsel %vm897, %v8135, 0
        %v8216 = vsel %vm897, %v8136, 0
        %v8219 = vsel %vm897, %v8137, 0
        %v8222 = vsel %vm897, %v8138, 0
        %v8225 = vsel %vm897, %v8139, 0
        %v8228 = vsel %vm897, %v8140, 0
        %v8231 = vsel %vm897, %v8141, 0
        %v8234 = vsel %vm897, %v8142, 0
        %v8237 = vsel %vm897, %v8143, 0
        %v8240 = vsel %vm897, %v8144, 0
        %v8243 = vsel %vm897, %v8145, 0
        %v8246 = vsel %vm897, %v8146, 0
        %8248 = vmatprep.subr.mxu0 0.0
        %8249 = vmatpush1.msra.mxu0 %v8148
        %8250 = vmatprep.subr.mxu0 0.0
        %8251 = vmatpush1.msra.mxu0 %v8149
        %8252 = vmatprep.subr.mxu0 0.0
        %8253 = vmatpush1.msra.mxu0 %v8150
        %8254 = vmatprep.subr.mxu0 0.0
        %8255 = vmatpush1.msra.mxu0 %v8151
        %8256 = vmatprep.subr.mxu0 0.0
        %8257 = vmatpush1.msra.mxu0 0.0
        %8258 = vmatprep.subr.mxu0 0.0
        %8259 = vmatpush1.msra.mxu0 0.0
        %8260 = vmatprep.subr.mxu0 0.0
        %8261 = vmatpush1.msra.mxu0 0.0
        %8262 = vmatprep.subr.mxu0 0.0
        %8263 = vmatpush1.msra.mxu0 0.0
        %8264 = vmatprep.subr.mxu0 0.0
        %8265 = vmatpush1.msra.mxu0 0.0
        %8266 = vmatprep.subr.mxu0 0.0
        %8267 = vmatpush1.msra.mxu0 0.0
        %8268 = vmatprep.subr.mxu0 0.0
        %8269 = vmatpush1.msra.mxu0 0.0
        %8270 = vmatprep.subr.mxu0 0.0
        %8271 = vmatpush1.msra.mxu0 0.0
        %8272 = vmatprep.subr.mxu0 0.0
        %8273 = vmatpush1.msra.mxu0 0.0
        %8274 = vmatprep.subr.mxu0 0.0
        %8275 = vmatpush1.msra.mxu0 0.0
        %8276 = vmatprep.subr.mxu0 0.0
        %8277 = vmatpush1.msra.mxu0 0.0
        %8278 = vmatprep.subr.mxu0 0.0
        %8279 = vmatpush1.msra.mxu0 0.0
        %8280 = vmatprep.subr.mxu0 0.0
        %8281 = vmatpush1.msra.mxu0 0.0
        %8282 = vmatprep.subr.mxu0 0.0
        %8283 = vmatpush1.msra.mxu0 0.0
        %8284 = vmatprep.subr.mxu0 0.0
        %8285 = vmatpush1.msra.mxu0 0.0
        %8286 = vmatprep.subr.mxu0 0.0
        %8287 = vmatpush1.msra.mxu0 0.0
        %8288 = vmatprep.subr.mxu0 0.0
        %8289 = vmatpush1.msra.mxu0 0.0
        %8290 = vmatprep.subr.mxu0 0.0
        %8291 = vmatpush1.msra.mxu0 0.0
        %8292 = vmatprep.subr.mxu0 0.0
        %8293 = vmatpush1.msra.mxu0 0.0
        %8294 = vmatprep.subr.mxu0 0.0
        %8295 = vmatpush1.msra.mxu0 0.0
        %8296 = vmatprep.subr.mxu0 0.0
        %8297 = vmatpush1.msra.mxu0 0.0
        %8298 = vmatprep.subr.mxu0 0.0
        %8299 = vmatpush1.msra.mxu0 0.0
        %8300 = vmatprep.subr.mxu0 0.0
        %8301 = vmatpush1.msra.mxu0 0.0
        %8302 = vmatprep.subr.mxu0 0.0
        %8303 = vmatpush1.msra.mxu0 0.0
        %8304 = vmatprep.subr.mxu0 0.0
        %8305 = vmatpush1.msra.mxu0 0.0
        %8306 = vmatprep.subr.mxu0 0.0
        %8307 = vmatpush1.msra.mxu0 0.0
        %8308 = vmatprep.subr.mxu0 0.0
        %8309 = vmatpush1.msra.mxu0 0.0
        %8310 = vmatprep.subr.mxu0 0.0
        %8311 = vmatpush1.msra.mxu0 0.0
        %8312 = vmatprep.mubr.f32.mxu0 0.0
        %8313 = vmatmul.mubr.f32.gmra.mrb[0].mxu0 %v8153
        %v8314 = vpop.f32.mrb[0].mxu0
        %v8315 = vadd.f32 0.0, %v8314
        %v8316 = vpop.f32.mrb[0].mxu0
        %8317 = vmatprep.mubr.f32.mxu0 0.0
        %8318 = vmatmul.mubr.f32.gmra.mrb[0].mxu0 %v8156
        %v8319 = vpop.f32.mrb[0].mxu0
        %v8320 = vadd.f32 0.0, %v8319
        %v8321 = vpop.f32.mrb[0].mxu0
        %8322 = vmatprep.mubr.f32.mxu0 0.0
        %8323 = vmatmul.mubr.f32.gmra.mrb[0].mxu0 %v8159
        %v8324 = vpop.f32.mrb[0].mxu0
        %v8325 = vadd.f32 0.0, %v8324
        %v8326 = vpop.f32.mrb[0].mxu0
        %8327 = vmatprep.mubr.f32.mxu0 0.0
        %8328 = vmatmul.mubr.f32.gmra.mrb[0].mxu0 %v8162
        %v8329 = vpop.f32.mrb[0].mxu0
        %v8330 = vadd.f32 0.0, %v8329
        %v8331 = vpop.f32.mrb[0].mxu0
        %8332 = vmatprep.mubr.f32.mxu0 0.0
        %8333 = vmatmul.mubr.f32.gmra.mrb[0].mxu0 %v8165
        %v8334 = vpop.f32.mrb[0].mxu0
        %v8335 = vadd.f32 0.0, %v8334
        %v8336 = vpop.f32.mrb[0].mxu0
        %8337 = vmatprep.mubr.f32.mxu0 0.0
        %8338 = vmatmul.mubr.f32.gmra.mrb[0].mxu0 %v8168
        %v8339 = vpop.f32.mrb[0].mxu0
        %v8340 = vadd.f32 0.0, %v8339
        %v8341 = vpop.f32.mrb[0].mxu0
        %8342 = vmatprep.mubr.f32.mxu0 0.0
        %8343 = vmatmul.mubr.f32.gmra.mrb[0].mxu0 %v8171
        %v8344 = vpop.f32.mrb[0].mxu0
        %v8345 = vadd.f32 0.0, %v8344
        %v8346 = vpop.f32.mrb[0].mxu0
        %8347 = vmatprep.mubr.f32.mxu0 0.0
        %8348 = vmatmul.mubr.f32.gmra.mrb[0].mxu0 %v8174
        %v8349 = vpop.f32.mrb[0].mxu0
        %v8350 = vadd.f32 0.0, %v8349
        %v8351 = vpop.f32.mrb[0].mxu0
        %8352 = vmatprep.mubr.f32.mxu0 0.0
        %8353 = vmatmul.mubr.f32.gmra.mrb[0].mxu0 %v8177
        %v8354 = vpop.f32.mrb[0].mxu0
        %v8355 = vadd.f32 0.0, %v8354
        %v8356 = vpop.f32.mrb[0].mxu0
        %8357 = vmatprep.mubr.f32.mxu0 0.0
        %8358 = vmatmul.mubr.f32.gmra.mrb[0].mxu0 %v8180
        %v8359 = vpop.f32.mrb[0].mxu0
        %v8360 = vadd.f32 0.0, %v8359
        %v8361 = vpop.f32.mrb[0].mxu0
        %8362 = vmatprep.mubr.f32.mxu0 0.0
        %8363 = vmatmul.mubr.f32.gmra.mrb[0].mxu0 %v8183
        %v8364 = vpop.f32.mrb[0].mxu0
        %v8365 = vadd.f32 0.0, %v8364
        %v8366 = vpop.f32.mrb[0].mxu0
        %8367 = vmatprep.mubr.f32.mxu0 0.0
        %8368 = vmatmul.mubr.f32.gmra.mrb[0].mxu0 %v8186
        %v8369 = vpop.f32.mrb[0].mxu0
        %v8370 = vadd.f32 0.0, %v8369
        %v8371 = vpop.f32.mrb[0].mxu0
        %8372 = vmatprep.mubr.f32.mxu0 0.0
        %8373 = vmatmul.mubr.f32.gmra.mrb[0].mxu0 %v8189
        %v8374 = vpop.f32.mrb[0].mxu0
        %v8375 = vadd.f32 0.0, %v8374
        %v8376 = vpop.f32.mrb[0].mxu0
        %8377 = vmatprep.mubr.f32.mxu0 0.0
        %8378 = vmatmul.mubr.f32.gmra.mrb[0].mxu0 %v8192
        %v8379 = vpop.f32.mrb[0].mxu0
        %v8380 = vadd.f32 0.0, %v8379
        %v8381 = vpop.f32.mrb[0].mxu0
        %8382 = vmatprep.mubr.f32.mxu0 0.0
        %8383 = vmatmul.mubr.f32.gmra.mrb[0].mxu0 %v8195
        %v8384 = vpop.f32.mrb[0].mxu0
        %v8385 = vadd.f32 0.0, %v8384
        %v8386 = vpop.f32.mrb[0].mxu0
        %8387 = vmatprep.mubr.f32.mxu0 0.0
        %8388 = vmatmul.mubr.f32.gmra.mrb[0].mxu0 %v8198
        %v8389 = vpop.f32.mrb[0].mxu0
        %v8390 = vadd.f32 0.0, %v8389
        %v8391 = vpop.f32.mrb[0].mxu0
        %8392 = vmatprep.mubr.f32.mxu0 0.0
        %8393 = vmatmul.mubr.f32.gmra.mrb[0].mxu0 %v8201
        %v8394 = vpop.f32.mrb[0].mxu0
        %v8395 = vadd.f32 0.0, %v8394
        %v8396 = vpop.f32.mrb[0].mxu0
        %8397 = vmatprep.mubr.f32.mxu0 0.0
        %8398 = vmatmul.mubr.f32.gmra.mrb[0].mxu0 %v8204
        %v8399 = vpop.f32.mrb[0].mxu0
        %v8400 = vadd.f32 0.0, %v8399
        %v8401 = vpop.f32.mrb[0].mxu0
        %8402 = vmatprep.mubr.f32.mxu0 0.0
        %8403 = vmatmul.mubr.f32.gmra.mrb[0].mxu0 %v8207
        %v8404 = vpop.f32.mrb[0].mxu0
        %v8405 = vadd.f32 0.0, %v8404
        %v8406 = vpop.f32.mrb[0].mxu0
        %8407 = vmatprep.mubr.f32.mxu0 0.0
        %8408 = vmatmul.mubr.f32.gmra.mrb[0].mxu0 %v8210
        %v8409 = vpop.f32.mrb[0].mxu0
        %v8410 = vadd.f32 0.0, %v8409
        %v8411 = vpop.f32.mrb[0].mxu0
        %8412 = vmatprep.mubr.f32.mxu0 0.0
        %8413 = vmatmul.mubr.f32.gmra.mrb[0].mxu0 %v8213
        %v8414 = vpop.f32.mrb[0].mxu0
        %v8415 = vadd.f32 0.0, %v8414
        %v8416 = vpop.f32.mrb[0].mxu0
        %8417 = vmatprep.mubr.f32.mxu0 0.0
        %8418 = vmatmul.mubr.f32.gmra.mrb[0].mxu0 %v8216
        %v8419 = vpop.f32.mrb[0].mxu0
        %v8420 = vadd.f32 0.0, %v8419
        %v8421 = vpop.f32.mrb[0].mxu0
        %8422 = vmatprep.mubr.f32.mxu0 0.0
        %8423 = vmatmul.mubr.f32.gmra.mrb[0].mxu0 %v8219
        %v8424 = vpop.f32.mrb[0].mxu0
        %v8425 = vadd.f32 0.0, %v8424
        %v8426 = vpop.f32.mrb[0].mxu0
        %8427 = vmatprep.mubr.f32.mxu0 0.0
        %8428 = vmatmul.mubr.f32.gmra.mrb[0].mxu0 %v8222
        %v8429 = vpop.f32.mrb[0].mxu0
        %v8430 = vadd.f32 0.0, %v8429
        %v8431 = vpop.f32.mrb[0].mxu0
        %8432 = vmatprep.mubr.f32.mxu0 0.0
        %8433 = vmatmul.mubr.f32.gmra.mrb[0].mxu0 %v8225
        %v8434 = vpop.f32.mrb[0].mxu0
        %v8435 = vadd.f32 0.0, %v8434
        %v8436 = vpop.f32.mrb[0].mxu0
        %8437 = vmatprep.mubr.f32.mxu0 0.0
        %8438 = vmatmul.mubr.f32.gmra.mrb[0].mxu0 %v8228
        %v8439 = vpop.f32.mrb[0].mxu0
        %v8440 = vadd.f32 0.0, %v8439
        %v8441 = vpop.f32.mrb[0].mxu0
        %8442 = vmatprep.mubr.f32.mxu0 0.0
        %8443 = vmatmul.mubr.f32.gmra.mrb[0].mxu0 %v8231
        %v8444 = vpop.f32.mrb[0].mxu0
        %v8445 = vadd.f32 0.0, %v8444
        %v8446 = vpop.f32.mrb[0].mxu0
        %8447 = vmatprep.mubr.f32.mxu0 0.0
        %8448 = vmatmul.mubr.f32.gmra.mrb[0].mxu0 %v8234
        %v8449 = vpop.f32.mrb[0].mxu0
        %v8450 = vadd.f32 0.0, %v8449
        %v8451 = vpop.f32.mrb[0].mxu0
        %8452 = vmatprep.mubr.f32.mxu0 0.0
        %8453 = vmatmul.mubr.f32.gmra.mrb[0].mxu0 %v8237
        %v8454 = vpop.f32.mrb[0].mxu0
        %v8455 = vadd.f32 0.0, %v8454
        %v8456 = vpop.f32.mrb[0].mxu0
        %8457 = vmatprep.mubr.f32.mxu0 0.0
        %8458 = vmatmul.mubr.f32.gmra.mrb[0].mxu0 %v8240
        %v8459 = vpop.f32.mrb[0].mxu0
        %v8460 = vadd.f32 0.0, %v8459
        %v8461 = vpop.f32.mrb[0].mxu0
        %8462 = vmatprep.mubr.f32.mxu0 0.0
        %8463 = vmatmul.mubr.f32.gmra.mrb[0].mxu0 %v8243
        %v8464 = vpop.f32.mrb[0].mxu0
        %v8465 = vadd.f32 0.0, %v8464
        %v8466 = vpop.f32.mrb[0].mxu0
        %8467 = vmatprep.mubr.f32.mxu0 0.0
        %8468 = vmatmul.mubr.f32.gmra.mrb[0].mxu0 %v8246
        %v8469 = vpop.f32.mrb[0].mxu0
        %v8470 = vadd.f32 0.0, %v8469
        %v8471 = vpop.f32.mrb[0].mxu0
        %8472 = vdwg.mxu0
        %v8474 = vsel %vm897, %v8079, 0
        %v8477 = vsel %vm897, %v8080, 0
        %v8480 = vsel %vm897, %v8081, 0
        %v8483 = vsel %vm897, %v8082, 0
        %v8486 = vsel %vm897, %v8083, 0
        %v8489 = vsel %vm897, %v8084, 0
        %v8492 = vsel %vm897, %v8085, 0
        %v8495 = vsel %vm897, %v8086, 0
        %v8498 = vsel %vm897, %v8087, 0
        %v8501 = vsel %vm897, %v8088, 0
        %v8504 = vsel %vm897, %v8089, 0
        %v8507 = vsel %vm897, %v8090, 0
        %v8510 = vsel %vm897, %v8091, 0
        %v8513 = vsel %vm897, %v8092, 0
        %v8516 = vsel %vm897, %v8093, 0
        %v8519 = vsel %vm897, %v8094, 0
        %v8522 = vsel %vm897, %v8095, 0
        %v8525 = vsel %vm897, %v8096, 0
        %v8528 = vsel %vm897, %v8097, 0
        %v8531 = vsel %vm897, %v8098, 0
        %v8534 = vsel %vm897, %v8099, 0
        %v8537 = vsel %vm897, %v8100, 0
        %v8540 = vsel %vm897, %v8101, 0
        %v8543 = vsel %vm897, %v8102, 0
        %v8546 = vsel %vm897, %v8103, 0
        %v8549 = vsel %vm897, %v8104, 0
        %v8552 = vsel %vm897, %v8105, 0
        %v8555 = vsel %vm897, %v8106, 0
        %v8558 = vsel %vm897, %v8107, 0
        %v8561 = vsel %vm897, %v8108, 0
        %v8564 = vsel %vm897, %v8109, 0
        %v8567 = vsel %vm897, %v8110, 0
        %8569 = vmatprep.subr.mxu0 0.0
        %8570 = vmatpush1.msra.mxu0 %v8111
        %8571 = vmatprep.subr.mxu0 0.0
        %8572 = vmatpush1.msra.mxu0 %v8112
        %8573 = vmatprep.subr.mxu0 0.0
        %8574 = vmatpush1.msra.mxu0 %v8113
        %8575 = vmatprep.subr.mxu0 0.0
        %8576 = vmatpush1.msra.mxu0 %v8114
        %8577 = vmatprep.subr.mxu0 0.0
        %8578 = vmatpush1.msra.mxu0 0.0
        %8579 = vmatprep.subr.mxu0 0.0
        %8580 = vmatpush1.msra.mxu0 0.0
        %8581 = vmatprep.subr.mxu0 0.0
        %8582 = vmatpush1.msra.mxu0 0.0
        %8583 = vmatprep.subr.mxu0 0.0
        %8584 = vmatpush1.msra.mxu0 0.0
        %8585 = vmatprep.subr.mxu0 0.0
        %8586 = vmatpush1.msra.mxu0 0.0
        %8587 = vmatprep.subr.mxu0 0.0
        %8588 = vmatpush1.msra.mxu0 0.0
        %8589 = vmatprep.subr.mxu0 0.0
        %8590 = vmatpush1.msra.mxu0 0.0
        %8591 = vmatprep.subr.mxu0 0.0
        %8592 = vmatpush1.msra.mxu0 0.0
        %8593 = vmatprep.subr.mxu0 0.0
        %8594 = vmatpush1.msra.mxu0 0.0
        %8595 = vmatprep.subr.mxu0 0.0
        %8596 = vmatpush1.msra.mxu0 0.0
        %8597 = vmatprep.subr.mxu0 0.0
        %8598 = vmatpush1.msra.mxu0 0.0
        %8599 = vmatprep.subr.mxu0 0.0
        %8600 = vmatpush1.msra.mxu0 0.0
        %8601 = vmatprep.subr.mxu0 0.0
        %8602 = vmatpush1.msra.mxu0 0.0
        %8603 = vmatprep.subr.mxu0 0.0
        %8604 = vmatpush1.msra.mxu0 0.0
        %8605 = vmatprep.subr.mxu0 0.0
        %8606 = vmatpush1.msra.mxu0 0.0
        %8607 = vmatprep.subr.mxu0 0.0
        %8608 = vmatpush1.msra.mxu0 0.0
        %8609 = vmatprep.subr.mxu0 0.0
        %8610 = vmatpush1.msra.mxu0 0.0
        %8611 = vmatprep.subr.mxu0 0.0
        %8612 = vmatpush1.msra.mxu0 0.0
        %8613 = vmatprep.subr.mxu0 0.0
        %8614 = vmatpush1.msra.mxu0 0.0
        %8615 = vmatprep.subr.mxu0 0.0
        %8616 = vmatpush1.msra.mxu0 0.0
        %8617 = vmatprep.subr.mxu0 0.0
        %8618 = vmatpush1.msra.mxu0 0.0
        %8619 = vmatprep.subr.mxu0 0.0
        %8620 = vmatpush1.msra.mxu0 0.0
        %8621 = vmatprep.subr.mxu0 0.0
        %8622 = vmatpush1.msra.mxu0 0.0
        %8623 = vmatprep.subr.mxu0 0.0
        %8624 = vmatpush1.msra.mxu0 0.0
        %8625 = vmatprep.subr.mxu0 0.0
        %8626 = vmatpush1.msra.mxu0 0.0
        %8627 = vmatprep.subr.mxu0 0.0
        %8628 = vmatpush1.msra.mxu0 0.0
        %8629 = vmatprep.subr.mxu0 0.0
        %8630 = vmatpush1.msra.mxu0 0.0
        %8631 = vmatprep.subr.mxu0 0.0
        %8632 = vmatpush1.msra.mxu0 0.0
        %8633 = vmatprep.mubr.f32.mxu0 0.0
        %8634 = vmatmul.mubr.f32.gmra.mrb[0].mxu0 %v8474
        %v8635 = vpop.f32.mrb[0].mxu0
        %v8636 = vadd.f32 %v8315, %v8635
        %v8637 = vpop.f32.mrb[0].mxu0
        %8638 = vmatprep.mubr.f32.mxu0 0.0
        %8639 = vmatmul.mubr.f32.gmra.mrb[0].mxu0 %v8477
        %v8640 = vpop.f32.mrb[0].mxu0
        %v8641 = vadd.f32 %v8320, %v8640
        %v8642 = vpop.f32.mrb[0].mxu0
        %8643 = vmatprep.mubr.f32.mxu0 0.0
        %8644 = vmatmul.mubr.f32.gmra.mrb[0].mxu0 %v8480
        %v8645 = vpop.f32.mrb[0].mxu0
        %v8646 = vadd.f32 %v8325, %v8645
        %v8647 = vpop.f32.mrb[0].mxu0
        %8648 = vmatprep.mubr.f32.mxu0 0.0
        %8649 = vmatmul.mubr.f32.gmra.mrb[0].mxu0 %v8483
        %v8650 = vpop.f32.mrb[0].mxu0
        %v8651 = vadd.f32 %v8330, %v8650
        %v8652 = vpop.f32.mrb[0].mxu0
        %8653 = vmatprep.mubr.f32.mxu0 0.0
        %8654 = vmatmul.mubr.f32.gmra.mrb[0].mxu0 %v8486
        %v8655 = vpop.f32.mrb[0].mxu0
        %v8656 = vadd.f32 %v8335, %v8655
        %v8657 = vpop.f32.mrb[0].mxu0
        %8658 = vmatprep.mubr.f32.mxu0 0.0
        %8659 = vmatmul.mubr.f32.gmra.mrb[0].mxu0 %v8489
        %v8660 = vpop.f32.mrb[0].mxu0
        %v8661 = vadd.f32 %v8340, %v8660
        %v8662 = vpop.f32.mrb[0].mxu0
        %8663 = vmatprep.mubr.f32.mxu0 0.0
        %8664 = vmatmul.mubr.f32.gmra.mrb[0].mxu0 %v8492
        %v8665 = vpop.f32.mrb[0].mxu0
        %v8666 = vadd.f32 %v8345, %v8665
        %v8667 = vpop.f32.mrb[0].mxu0
        %8668 = vmatprep.mubr.f32.mxu0 0.0
        %8669 = vmatmul.mubr.f32.gmra.mrb[0].mxu0 %v8495
        %v8670 = vpop.f32.mrb[0].mxu0
        %v8671 = vadd.f32 %v8350, %v8670
        %v8672 = vpop.f32.mrb[0].mxu0
        %8673 = vmatprep.mubr.f32.mxu0 0.0
        %8674 = vmatmul.mubr.f32.gmra.mrb[0].mxu0 %v8498
        %v8675 = vpop.f32.mrb[0].mxu0
        %v8676 = vadd.f32 %v8355, %v8675
        %v8677 = vpop.f32.mrb[0].mxu0
        %8678 = vmatprep.mubr.f32.mxu0 0.0
        %8679 = vmatmul.mubr.f32.gmra.mrb[0].mxu0 %v8501
        %v8680 = vpop.f32.mrb[0].mxu0
        %v8681 = vadd.f32 %v8360, %v8680
        %v8682 = vpop.f32.mrb[0].mxu0
        %8683 = vmatprep.mubr.f32.mxu0 0.0
        %8684 = vmatmul.mubr.f32.gmra.mrb[0].mxu0 %v8504
        %v8685 = vpop.f32.mrb[0].mxu0
        %v8686 = vadd.f32 %v8365, %v8685
        %v8687 = vpop.f32.mrb[0].mxu0
        %8688 = vmatprep.mubr.f32.mxu0 0.0
        %8689 = vmatmul.mubr.f32.gmra.mrb[0].mxu0 %v8507
        %v8690 = vpop.f32.mrb[0].mxu0
        %v8691 = vadd.f32 %v8370, %v8690
        %v8692 = vpop.f32.mrb[0].mxu0
        %8693 = vmatprep.mubr.f32.mxu0 0.0
        %8694 = vmatmul.mubr.f32.gmra.mrb[0].mxu0 %v8510
        %v8695 = vpop.f32.mrb[0].mxu0
        %v8696 = vadd.f32 %v8375, %v8695
        %v8697 = vpop.f32.mrb[0].mxu0
        %8698 = vmatprep.mubr.f32.mxu0 0.0
        %8699 = vmatmul.mubr.f32.gmra.mrb[0].mxu0 %v8513
        %v8700 = vpop.f32.mrb[0].mxu0
        %v8701 = vadd.f32 %v8380, %v8700
        %v8702 = vpop.f32.mrb[0].mxu0
        %8703 = vmatprep.mubr.f32.mxu0 0.0
        %8704 = vmatmul.mubr.f32.gmra.mrb[0].mxu0 %v8516
        %v8705 = vpop.f32.mrb[0].mxu0
        %v8706 = vadd.f32 %v8385, %v8705
        %v8707 = vpop.f32.mrb[0].mxu0
        %8708 = vmatprep.mubr.f32.mxu0 0.0
        %8709 = vmatmul.mubr.f32.gmra.mrb[0].mxu0 %v8519
        %v8710 = vpop.f32.mrb[0].mxu0
        %v8711 = vadd.f32 %v8390, %v8710
        %v8712 = vpop.f32.mrb[0].mxu0
        %8713 = vmatprep.mubr.f32.mxu0 0.0
        %8714 = vmatmul.mubr.f32.gmra.mrb[0].mxu0 %v8522
        %v8715 = vpop.f32.mrb[0].mxu0
        %v8716 = vadd.f32 %v8395, %v8715
        %v8717 = vpop.f32.mrb[0].mxu0
        %8718 = vmatprep.mubr.f32.mxu0 0.0
        %8719 = vmatmul.mubr.f32.gmra.mrb[0].mxu0 %v8525
        %v8720 = vpop.f32.mrb[0].mxu0
        %v8721 = vadd.f32 %v8400, %v8720
        %v8722 = vpop.f32.mrb[0].mxu0
        %8723 = vmatprep.mubr.f32.mxu0 0.0
        %8724 = vmatmul.mubr.f32.gmra.mrb[0].mxu0 %v8528
        %v8725 = vpop.f32.mrb[0].mxu0
        %v8726 = vadd.f32 %v8405, %v8725
        %v8727 = vpop.f32.mrb[0].mxu0
        %8728 = vmatprep.mubr.f32.mxu0 0.0
        %8729 = vmatmul.mubr.f32.gmra.mrb[0].mxu0 %v8531
        %v8730 = vpop.f32.mrb[0].mxu0
        %v8731 = vadd.f32 %v8410, %v8730
        %v8732 = vpop.f32.mrb[0].mxu0
        %8733 = vmatprep.mubr.f32.mxu0 0.0
        %8734 = vmatmul.mubr.f32.gmra.mrb[0].mxu0 %v8534
        %v8735 = vpop.f32.mrb[0].mxu0
        %v8736 = vadd.f32 %v8415, %v8735
        %v8737 = vpop.f32.mrb[0].mxu0
        %8738 = vmatprep.mubr.f32.mxu0 0.0
        %8739 = vmatmul.mubr.f32.gmra.mrb[0].mxu0 %v8537
        %v8740 = vpop.f32.mrb[0].mxu0
        %v8741 = vadd.f32 %v8420, %v8740
        %v8742 = vpop.f32.mrb[0].mxu0
        %8743 = vmatprep.mubr.f32.mxu0 0.0
        %8744 = vmatmul.mubr.f32.gmra.mrb[0].mxu0 %v8540
        %v8745 = vpop.f32.mrb[0].mxu0
        %v8746 = vadd.f32 %v8425, %v8745
        %v8747 = vpop.f32.mrb[0].mxu0
        %8748 = vmatprep.mubr.f32.mxu0 0.0
        %8749 = vmatmul.mubr.f32.gmra.mrb[0].mxu0 %v8543
        %v8750 = vpop.f32.mrb[0].mxu0
        %v8751 = vadd.f32 %v8430, %v8750
        %v8752 = vpop.f32.mrb[0].mxu0
        %8753 = vmatprep.mubr.f32.mxu0 0.0
        %8754 = vmatmul.mubr.f32.gmra.mrb[0].mxu0 %v8546
        %v8755 = vpop.f32.mrb[0].mxu0
        %v8756 = vadd.f32 %v8435, %v8755
        %v8757 = vpop.f32.mrb[0].mxu0
        %8758 = vmatprep.mubr.f32.mxu0 0.0
        %8759 = vmatmul.mubr.f32.gmra.mrb[0].mxu0 %v8549
        %v8760 = vpop.f32.mrb[0].mxu0
        %v8761 = vadd.f32 %v8440, %v8760
        %v8762 = vpop.f32.mrb[0].mxu0
        %8763 = vmatprep.mubr.f32.mxu0 0.0
        %8764 = vmatmul.mubr.f32.gmra.mrb[0].mxu0 %v8552
        %v8765 = vpop.f32.mrb[0].mxu0
        %v8766 = vadd.f32 %v8445, %v8765
        %v8767 = vpop.f32.mrb[0].mxu0
        %8768 = vmatprep.mubr.f32.mxu0 0.0
        %8769 = vmatmul.mubr.f32.gmra.mrb[0].mxu0 %v8555
        %v8770 = vpop.f32.mrb[0].mxu0
        %v8771 = vadd.f32 %v8450, %v8770
        %v8772 = vpop.f32.mrb[0].mxu0
        %8773 = vmatprep.mubr.f32.mxu0 0.0
        %8774 = vmatmul.mubr.f32.gmra.mrb[0].mxu0 %v8558
        %v8775 = vpop.f32.mrb[0].mxu0
        %v8776 = vadd.f32 %v8455, %v8775
        %v8777 = vpop.f32.mrb[0].mxu0
        %8778 = vmatprep.mubr.f32.mxu0 0.0
        %8779 = vmatmul.mubr.f32.gmra.mrb[0].mxu0 %v8561
        %v8780 = vpop.f32.mrb[0].mxu0
        %v8781 = vadd.f32 %v8460, %v8780
        %v8782 = vpop.f32.mrb[0].mxu0
        %8783 = vmatprep.mubr.f32.mxu0 0.0
        %8784 = vmatmul.mubr.f32.gmra.mrb[0].mxu0 %v8564
        %v8785 = vpop.f32.mrb[0].mxu0
        %v8786 = vadd.f32 %v8465, %v8785
        %v8787 = vpop.f32.mrb[0].mxu0
        %8788 = vmatprep.mubr.f32.mxu0 0.0
        %8789 = vmatmul.mubr.f32.gmra.mrb[0].mxu0 %v8567
        %v8790 = vpop.f32.mrb[0].mxu0
        %v8791 = vadd.f32 %v8470, %v8790
        %v8792 = vpop.f32.mrb[0].mxu0
        %8793 = vdwg.mxu0
        %v8794 = vld [vmem:[#allocation3 + $0x2] sm:$0xff]
        %v8795 = vld [vmem:[#allocation3 + $0xa] sm:$0xff]
        %v8796 = vld [vmem:[#allocation3 + $0x1a] sm:$0xff]
        %v8797 = vld [vmem:[#allocation3 + $0x22] sm:$0xff]
        %v8798 = vld [vmem:[#allocation3 + $0x32] sm:$0xff]
        %v8799 = vld [vmem:[#allocation3 + $0x3a] sm:$0xff]
        %v8800 = vld [vmem:[#allocation3 + $0x4a] sm:$0xff]
        %v8801 = vld [vmem:[#allocation3 + $0x52] sm:$0xff]
        %v8802 = vld [vmem:[#allocation3 + $0x62] sm:$0xff]
        %v8803 = vld [vmem:[#allocation3 + $0x6a] sm:$0xff]
        %v8804 = vld [vmem:[#allocation3 + $0x7a] sm:$0xff]
        %v8805 = vld [vmem:[#allocation3 + $0x82] sm:$0xff]
        %v8806 = vld [vmem:[#allocation3 + $0x92] sm:$0xff]
        %v8807 = vld [vmem:[#allocation3 + $0x9a] sm:$0xff]
        %v8808 = vld [vmem:[#allocation3 + $0xaa] sm:$0xff]
        %v8809 = vld [vmem:[#allocation3 + $0xb2] sm:$0xff]
        %v8810 = vld [vmem:[#allocation3 + $0xc2] sm:$0xff]
        %v8811 = vld [vmem:[#allocation3 + $0xca] sm:$0xff]
        %v8812 = vld [vmem:[#allocation3 + $0xda] sm:$0xff]
        %v8813 = vld [vmem:[#allocation3 + $0xe2] sm:$0xff]
        %v8814 = vld [vmem:[#allocation3 + $0xf2] sm:$0xff]
        %v8815 = vld [vmem:[#allocation3 + $0xfa] sm:$0xff]
        %v8816 = vld [vmem:[#allocation3 + $0x10a] sm:$0xff]
        %v8817 = vld [vmem:[#allocation3 + $0x112] sm:$0xff]
        %v8818 = vld [vmem:[#allocation3 + $0x122] sm:$0xff]
        %v8819 = vld [vmem:[#allocation3 + $0x12a] sm:$0xff]
        %v8820 = vld [vmem:[#allocation3 + $0x13a] sm:$0xff]
        %v8821 = vld [vmem:[#allocation3 + $0x142] sm:$0xff]
        %v8822 = vld [vmem:[#allocation3 + $0x152] sm:$0xff]
        %v8823 = vld [vmem:[#allocation3 + $0x15a] sm:$0xff]
        %v8824 = vld [vmem:[#allocation3 + $0x16a] sm:$0xff]
        %v8825 = vld [vmem:[#allocation3 + $0x172] sm:$0xff]
        %s8826 = scalar_lea.vmem %s5, 64
        %v8827 = vld [vmem:[%s8826] sm:$0xff]
        %v8828 = vld [vmem:[%s8826 + $0x8] sm:$0xff]
        %v8829 = vld [vmem:[%s8826 + $0x10] sm:$0xff]
        %v8830 = vld [vmem:[%s8826 + $0x18] sm:$0xff]
        %v8832 = vsel %vm897, %v8794, 0
        %v8835 = vsel %vm897, %v8795, 0
        %v8838 = vsel %vm897, %v8796, 0
        %v8841 = vsel %vm897, %v8797, 0
        %v8844 = vsel %vm897, %v8798, 0
        %v8847 = vsel %vm897, %v8799, 0
        %v8850 = vsel %vm897, %v8800, 0
        %v8853 = vsel %vm897, %v8801, 0
        %v8856 = vsel %vm897, %v8802, 0
        %v8859 = vsel %vm897, %v8803, 0
        %v8862 = vsel %vm897, %v8804, 0
        %v8865 = vsel %vm897, %v8805, 0
        %v8868 = vsel %vm897, %v8806, 0
        %v8871 = vsel %vm897, %v8807, 0
        %v8874 = vsel %vm897, %v8808, 0
        %v8877 = vsel %vm897, %v8809, 0
        %v8880 = vsel %vm897, %v8810, 0
        %v8883 = vsel %vm897, %v8811, 0
        %v8886 = vsel %vm897, %v8812, 0
        %v8889 = vsel %vm897, %v8813, 0
        %v8892 = vsel %vm897, %v8814, 0
        %v8895 = vsel %vm897, %v8815, 0
        %v8898 = vsel %vm897, %v8816, 0
        %v8901 = vsel %vm897, %v8817, 0
        %v8904 = vsel %vm897, %v8818, 0
        %v8907 = vsel %vm897, %v8819, 0
        %v8910 = vsel %vm897, %v8820, 0
        %v8913 = vsel %vm897, %v8821, 0
        %v8916 = vsel %vm897, %v8822, 0
        %v8919 = vsel %vm897, %v8823, 0
        %v8922 = vsel %vm897, %v8824, 0
        %v8925 = vsel %vm897, %v8825, 0
        %8927 = vmatprep.subr.mxu0 0.0
        %8928 = vmatpush1.msra.mxu0 %v8827
        %8929 = vmatprep.subr.mxu0 0.0
        %8930 = vmatpush1.msra.mxu0 %v8828
        %8931 = vmatprep.subr.mxu0 0.0
        %8932 = vmatpush1.msra.mxu0 %v8829
        %8933 = vmatprep.subr.mxu0 0.0
        %8934 = vmatpush1.msra.mxu0 %v8830
        %8935 = vmatprep.subr.mxu0 0.0
        %8936 = vmatpush1.msra.mxu0 0.0
        %8937 = vmatprep.subr.mxu0 0.0
        %8938 = vmatpush1.msra.mxu0 0.0
        %8939 = vmatprep.subr.mxu0 0.0
        %8940 = vmatpush1.msra.mxu0 0.0
        %8941 = vmatprep.subr.mxu0 0.0
        %8942 = vmatpush1.msra.mxu0 0.0
        %8943 = vmatprep.subr.mxu0 0.0
        %8944 = vmatpush1.msra.mxu0 0.0
        %8945 = vmatprep.subr.mxu0 0.0
        %8946 = vmatpush1.msra.mxu0 0.0
        %8947 = vmatprep.subr.mxu0 0.0
        %8948 = vmatpush1.msra.mxu0 0.0
        %8949 = vmatprep.subr.mxu0 0.0
        %8950 = vmatpush1.msra.mxu0 0.0
        %8951 = vmatprep.subr.mxu0 0.0
        %8952 = vmatpush1.msra.mxu0 0.0
        %8953 = vmatprep.subr.mxu0 0.0
        %8954 = vmatpush1.msra.mxu0 0.0
        %8955 = vmatprep.subr.mxu0 0.0
        %8956 = vmatpush1.msra.mxu0 0.0
        %8957 = vmatprep.subr.mxu0 0.0
        %8958 = vmatpush1.msra.mxu0 0.0
        %8959 = vmatprep.subr.mxu0 0.0
        %8960 = vmatpush1.msra.mxu0 0.0
        %8961 = vmatprep.subr.mxu0 0.0
        %8962 = vmatpush1.msra.mxu0 0.0
        %8963 = vmatprep.subr.mxu0 0.0
        %8964 = vmatpush1.msra.mxu0 0.0
        %8965 = vmatprep.subr.mxu0 0.0
        %8966 = vmatpush1.msra.mxu0 0.0
        %8967 = vmatprep.subr.mxu0 0.0
        %8968 = vmatpush1.msra.mxu0 0.0
        %8969 = vmatprep.subr.mxu0 0.0
        %8970 = vmatpush1.msra.mxu0 0.0
        %8971 = vmatprep.subr.mxu0 0.0
        %8972 = vmatpush1.msra.mxu0 0.0
        %8973 = vmatprep.subr.mxu0 0.0
        %8974 = vmatpush1.msra.mxu0 0.0
        %8975 = vmatprep.subr.mxu0 0.0
        %8976 = vmatpush1.msra.mxu0 0.0
        %8977 = vmatprep.subr.mxu0 0.0
        %8978 = vmatpush1.msra.mxu0 0.0
        %8979 = vmatprep.subr.mxu0 0.0
        %8980 = vmatpush1.msra.mxu0 0.0
        %8981 = vmatprep.subr.mxu0 0.0
        %8982 = vmatpush1.msra.mxu0 0.0
        %8983 = vmatprep.subr.mxu0 0.0
        %8984 = vmatpush1.msra.mxu0 0.0
        %8985 = vmatprep.subr.mxu0 0.0
        %8986 = vmatpush1.msra.mxu0 0.0
        %8987 = vmatprep.subr.mxu0 0.0
        %8988 = vmatpush1.msra.mxu0 0.0
        %8989 = vmatprep.subr.mxu0 0.0
        %8990 = vmatpush1.msra.mxu0 0.0
        %8991 = vmatprep.mubr.f32.mxu0 0.0
        %8992 = vmatmul.mubr.f32.gmra.mrb[0].mxu0 %v8832
        %v8993 = vpop.f32.mrb[0].mxu0
        %v8994 = vadd.f32 0.0, %v8993
        %v8995 = vpop.f32.mrb[0].mxu0
        %8996 = vmatprep.mubr.f32.mxu0 0.0
        %8997 = vmatmul.mubr.f32.gmra.mrb[0].mxu0 %v8835
        %v8998 = vpop.f32.mrb[0].mxu0
        %v8999 = vadd.f32 0.0, %v8998
        %v9000 = vpop.f32.mrb[0].mxu0
        %9001 = vmatprep.mubr.f32.mxu0 0.0
        %9002 = vmatmul.mubr.f32.gmra.mrb[0].mxu0 %v8838
        %v9003 = vpop.f32.mrb[0].mxu0
        %v9004 = vadd.f32 0.0, %v9003
        %v9005 = vpop.f32.mrb[0].mxu0
        %9006 = vmatprep.mubr.f32.mxu0 0.0
        %9007 = vmatmul.mubr.f32.gmra.mrb[0].mxu0 %v8841
        %v9008 = vpop.f32.mrb[0].mxu0
        %v9009 = vadd.f32 0.0, %v9008
        %v9010 = vpop.f32.mrb[0].mxu0
        %9011 = vmatprep.mubr.f32.mxu0 0.0
        %9012 = vmatmul.mubr.f32.gmra.mrb[0].mxu0 %v8844
        %v9013 = vpop.f32.mrb[0].mxu0
        %v9014 = vadd.f32 0.0, %v9013
        %v9015 = vpop.f32.mrb[0].mxu0
        %9016 = vmatprep.mubr.f32.mxu0 0.0
        %9017 = vmatmul.mubr.f32.gmra.mrb[0].mxu0 %v8847
        %v9018 = vpop.f32.mrb[0].mxu0
        %v9019 = vadd.f32 0.0, %v9018
        %v9020 = vpop.f32.mrb[0].mxu0
        %9021 = vmatprep.mubr.f32.mxu0 0.0
        %9022 = vmatmul.mubr.f32.gmra.mrb[0].mxu0 %v8850
        %v9023 = vpop.f32.mrb[0].mxu0
        %v9024 = vadd.f32 0.0, %v9023
        %v9025 = vpop.f32.mrb[0].mxu0
        %9026 = vmatprep.mubr.f32.mxu0 0.0
        %9027 = vmatmul.mubr.f32.gmra.mrb[0].mxu0 %v8853
        %v9028 = vpop.f32.mrb[0].mxu0
        %v9029 = vadd.f32 0.0, %v9028
        %v9030 = vpop.f32.mrb[0].mxu0
        %9031 = vmatprep.mubr.f32.mxu0 0.0
        %9032 = vmatmul.mubr.f32.gmra.mrb[0].mxu0 %v8856
        %v9033 = vpop.f32.mrb[0].mxu0
        %v9034 = vadd.f32 0.0, %v9033
        %v9035 = vpop.f32.mrb[0].mxu0
        %9036 = vmatprep.mubr.f32.mxu0 0.0
        %9037 = vmatmul.mubr.f32.gmra.mrb[0].mxu0 %v8859
        %v9038 = vpop.f32.mrb[0].mxu0
        %v9039 = vadd.f32 0.0, %v9038
        %v9040 = vpop.f32.mrb[0].mxu0
        %9041 = vmatprep.mubr.f32.mxu0 0.0
        %9042 = vmatmul.mubr.f32.gmra.mrb[0].mxu0 %v8862
        %v9043 = vpop.f32.mrb[0].mxu0
        %v9044 = vadd.f32 0.0, %v9043
        %v9045 = vpop.f32.mrb[0].mxu0
        %9046 = vmatprep.mubr.f32.mxu0 0.0
        %9047 = vmatmul.mubr.f32.gmra.mrb[0].mxu0 %v8865
        %v9048 = vpop.f32.mrb[0].mxu0
        %v9049 = vadd.f32 0.0, %v9048
        %v9050 = vpop.f32.mrb[0].mxu0
        %9051 = vmatprep.mubr.f32.mxu0 0.0
        %9052 = vmatmul.mubr.f32.gmra.mrb[0].mxu0 %v8868
        %v9053 = vpop.f32.mrb[0].mxu0
        %v9054 = vadd.f32 0.0, %v9053
        %v9055 = vpop.f32.mrb[0].mxu0
        %9056 = vmatprep.mubr.f32.mxu0 0.0
        %9057 = vmatmul.mubr.f32.gmra.mrb[0].mxu0 %v8871
        %v9058 = vpop.f32.mrb[0].mxu0
        %v9059 = vadd.f32 0.0, %v9058
        %v9060 = vpop.f32.mrb[0].mxu0
        %9061 = vmatprep.mubr.f32.mxu0 0.0
        %9062 = vmatmul.mubr.f32.gmra.mrb[0].mxu0 %v8874
        %v9063 = vpop.f32.mrb[0].mxu0
        %v9064 = vadd.f32 0.0, %v9063
        %v9065 = vpop.f32.mrb[0].mxu0
        %9066 = vmatprep.mubr.f32.mxu0 0.0
        %9067 = vmatmul.mubr.f32.gmra.mrb[0].mxu0 %v8877
        %v9068 = vpop.f32.mrb[0].mxu0
        %v9069 = vadd.f32 0.0, %v9068
        %v9070 = vpop.f32.mrb[0].mxu0
        %9071 = vmatprep.mubr.f32.mxu0 0.0
        %9072 = vmatmul.mubr.f32.gmra.mrb[0].mxu0 %v8880
        %v9073 = vpop.f32.mrb[0].mxu0
        %v9074 = vadd.f32 0.0, %v9073
        %v9075 = vpop.f32.mrb[0].mxu0
        %9076 = vmatprep.mubr.f32.mxu0 0.0
        %9077 = vmatmul.mubr.f32.gmra.mrb[0].mxu0 %v8883
        %v9078 = vpop.f32.mrb[0].mxu0
        %v9079 = vadd.f32 0.0, %v9078
        %v9080 = vpop.f32.mrb[0].mxu0
        %9081 = vmatprep.mubr.f32.mxu0 0.0
        %9082 = vmatmul.mubr.f32.gmra.mrb[0].mxu0 %v8886
        %v9083 = vpop.f32.mrb[0].mxu0
        %v9084 = vadd.f32 0.0, %v9083
        %v9085 = vpop.f32.mrb[0].mxu0
        %9086 = vmatprep.mubr.f32.mxu0 0.0
        %9087 = vmatmul.mubr.f32.gmra.mrb[0].mxu0 %v8889
        %v9088 = vpop.f32.mrb[0].mxu0
        %v9089 = vadd.f32 0.0, %v9088
        %v9090 = vpop.f32.mrb[0].mxu0
        %9091 = vmatprep.mubr.f32.mxu0 0.0
        %9092 = vmatmul.mubr.f32.gmra.mrb[0].mxu0 %v8892
        %v9093 = vpop.f32.mrb[0].mxu0
        %v9094 = vadd.f32 0.0, %v9093
        %v9095 = vpop.f32.mrb[0].mxu0
        %9096 = vmatprep.mubr.f32.mxu0 0.0
        %9097 = vmatmul.mubr.f32.gmra.mrb[0].mxu0 %v8895
        %v9098 = vpop.f32.mrb[0].mxu0
        %v9099 = vadd.f32 0.0, %v9098
        %v9100 = vpop.f32.mrb[0].mxu0
        %9101 = vmatprep.mubr.f32.mxu0 0.0
        %9102 = vmatmul.mubr.f32.gmra.mrb[0].mxu0 %v8898
        %v9103 = vpop.f32.mrb[0].mxu0
        %v9104 = vadd.f32 0.0, %v9103
        %v9105 = vpop.f32.mrb[0].mxu0
        %9106 = vmatprep.mubr.f32.mxu0 0.0
        %9107 = vmatmul.mubr.f32.gmra.mrb[0].mxu0 %v8901
        %v9108 = vpop.f32.mrb[0].mxu0
        %v9109 = vadd.f32 0.0, %v9108
        %v9110 = vpop.f32.mrb[0].mxu0
        %9111 = vmatprep.mubr.f32.mxu0 0.0
        %9112 = vmatmul.mubr.f32.gmra.mrb[0].mxu0 %v8904
        %v9113 = vpop.f32.mrb[0].mxu0
        %v9114 = vadd.f32 0.0, %v9113
        %v9115 = vpop.f32.mrb[0].mxu0
        %9116 = vmatprep.mubr.f32.mxu0 0.0
        %9117 = vmatmul.mubr.f32.gmra.mrb[0].mxu0 %v8907
        %v9118 = vpop.f32.mrb[0].mxu0
        %v9119 = vadd.f32 0.0, %v9118
        %v9120 = vpop.f32.mrb[0].mxu0
        %9121 = vmatprep.mubr.f32.mxu0 0.0
        %9122 = vmatmul.mubr.f32.gmra.mrb[0].mxu0 %v8910
        %v9123 = vpop.f32.mrb[0].mxu0
        %v9124 = vadd.f32 0.0, %v9123
        %v9125 = vpop.f32.mrb[0].mxu0
        %9126 = vmatprep.mubr.f32.mxu0 0.0
        %9127 = vmatmul.mubr.f32.gmra.mrb[0].mxu0 %v8913
        %v9128 = vpop.f32.mrb[0].mxu0
        %v9129 = vadd.f32 0.0, %v9128
        %v9130 = vpop.f32.mrb[0].mxu0
        %9131 = vmatprep.mubr.f32.mxu0 0.0
        %9132 = vmatmul.mubr.f32.gmra.mrb[0].mxu0 %v8916
        %v9133 = vpop.f32.mrb[0].mxu0
        %v9134 = vadd.f32 0.0, %v9133
        %v9135 = vpop.f32.mrb[0].mxu0
        %9136 = vmatprep.mubr.f32.mxu0 0.0
        %9137 = vmatmul.mubr.f32.gmra.mrb[0].mxu0 %v8919
        %v9138 = vpop.f32.mrb[0].mxu0
        %v9139 = vadd.f32 0.0, %v9138
        %v9140 = vpop.f32.mrb[0].mxu0
        %9141 = vmatprep.mubr.f32.mxu0 0.0
        %9142 = vmatmul.mubr.f32.gmra.mrb[0].mxu0 %v8922
        %v9143 = vpop.f32.mrb[0].mxu0
        %v9144 = vadd.f32 0.0, %v9143
        %v9145 = vpop.f32.mrb[0].mxu0
        %9146 = vmatprep.mubr.f32.mxu0 0.0
        %9147 = vmatmul.mubr.f32.gmra.mrb[0].mxu0 %v8925
        %v9148 = vpop.f32.mrb[0].mxu0
        %v9149 = vadd.f32 0.0, %v9148
        %v9150 = vpop.f32.mrb[0].mxu0
        %9151 = vdwg.mxu0
        %v9152 = vadd.f32 %v8636, %v8994
        %v9153 = vadd.f32 %v8641, %v8999
        %v9154 = vadd.f32 %v8646, %v9004
        %v9155 = vadd.f32 %v8651, %v9009
        %v9156 = vadd.f32 %v8656, %v9014
        %v9157 = vadd.f32 %v8661, %v9019
        %v9158 = vadd.f32 %v8666, %v9024
        %v9159 = vadd.f32 %v8671, %v9029
        %v9160 = vadd.f32 %v8676, %v9034
        %v9161 = vadd.f32 %v8681, %v9039
        %v9162 = vadd.f32 %v8686, %v9044
        %v9163 = vadd.f32 %v8691, %v9049
        %v9164 = vadd.f32 %v8696, %v9054
        %v9165 = vadd.f32 %v8701, %v9059
        %v9166 = vadd.f32 %v8706, %v9064
        %v9167 = vadd.f32 %v8711, %v9069
        %v9168 = vadd.f32 %v8716, %v9074
        %v9169 = vadd.f32 %v8721, %v9079
        %v9170 = vadd.f32 %v8726, %v9084
        %v9171 = vadd.f32 %v8731, %v9089
        %v9172 = vadd.f32 %v8736, %v9094
        %v9173 = vadd.f32 %v8741, %v9099
        %v9174 = vadd.f32 %v8746, %v9104
        %v9175 = vadd.f32 %v8751, %v9109
        %v9176 = vadd.f32 %v8756, %v9114
        %v9177 = vadd.f32 %v8761, %v9119
        %v9178 = vadd.f32 %v8766, %v9124
        %v9179 = vadd.f32 %v8771, %v9129
        %v9180 = vadd.f32 %v8776, %v9134
        %v9181 = vadd.f32 %v8781, %v9139
        %v9182 = vadd.f32 %v8786, %v9144
        %v9183 = vadd.f32 %v8791, %v9149
        %v9184 = vld [vmem:[%s8046] sm:$0xff]
        %v9185 = vld [vmem:[%s8046 + $0x8] sm:$0xff]
        %v9186 = vld [vmem:[%s8046 + $0x18] sm:$0xff]
        %v9187 = vld [vmem:[%s8046 + $0x20] sm:$0xff]
        %v9188 = vld [vmem:[%s8046 + $0x30] sm:$0xff]
        %v9189 = vld [vmem:[%s8046 + $0x38] sm:$0xff]
        %v9190 = vld [vmem:[%s8046 + $0x48] sm:$0xff]
        %v9191 = vld [vmem:[%s8046 + $0x50] sm:$0xff]
        %v9192 = vld [vmem:[%s8046 + $0x60] sm:$0xff]
        %v9193 = vld [vmem:[%s8046 + $0x68] sm:$0xff]
        %v9194 = vld [vmem:[%s8046 + $0x78] sm:$0xff]
        %v9195 = vld [vmem:[%s8046 + $0x80] sm:$0xff]
        %v9196 = vld [vmem:[%s8046 + $0x90] sm:$0xff]
        %v9197 = vld [vmem:[%s8046 + $0x98] sm:$0xff]
        %v9198 = vld [vmem:[%s8046 + $0xa8] sm:$0xff]
        %v9199 = vld [vmem:[%s8046 + $0xb0] sm:$0xff]
        %v9200 = vld [vmem:[%s8046 + $0xc0] sm:$0xff]
        %v9201 = vld [vmem:[%s8046 + $0xc8] sm:$0xff]
        %v9202 = vld [vmem:[%s8046 + $0xd8] sm:$0xff]
        %v9203 = vld [vmem:[%s8046 + $0xe0] sm:$0xff]
        %v9204 = vld [vmem:[%s8046 + $0xf0] sm:$0xff]
        %v9205 = vld [vmem:[%s8046 + $0xf8] sm:$0xff]
        %v9206 = vld [vmem:[%s8046 + $0x108] sm:$0xff]
        %v9207 = vld [vmem:[%s8046 + $0x110] sm:$0xff]
        %v9208 = vld [vmem:[%s8046 + $0x120] sm:$0xff]
        %v9209 = vld [vmem:[%s8046 + $0x128] sm:$0xff]
        %v9210 = vld [vmem:[%s8046 + $0x138] sm:$0xff]
        %v9211 = vld [vmem:[%s8046 + $0x140] sm:$0xff]
        %v9212 = vld [vmem:[%s8046 + $0x150] sm:$0xff]
        %v9213 = vld [vmem:[%s8046 + $0x158] sm:$0xff]
        %v9214 = vld [vmem:[%s8046 + $0x168] sm:$0xff]
        %v9215 = vld [vmem:[%s8046 + $0x170] sm:$0xff]
        %s9216 = scalar_lea.vmem %s5, 96
        %v9217 = vld [vmem:[%s9216] sm:$0xff]
        %v9218 = vld [vmem:[%s9216 + $0x8] sm:$0xff]
        %v9219 = vld [vmem:[%s9216 + $0x10] sm:$0xff]
        %v9220 = vld [vmem:[%s9216 + $0x18] sm:$0xff]
        %v9222 = vsel %vm897, %v9184, 0
        %v9225 = vsel %vm897, %v9185, 0
        %v9228 = vsel %vm897, %v9186, 0
        %v9231 = vsel %vm897, %v9187, 0
        %v9234 = vsel %vm897, %v9188, 0
        %v9237 = vsel %vm897, %v9189, 0
        %v9240 = vsel %vm897, %v9190, 0
        %v9243 = vsel %vm897, %v9191, 0
        %v9246 = vsel %vm897, %v9192, 0
        %v9249 = vsel %vm897, %v9193, 0
        %v9252 = vsel %vm897, %v9194, 0
        %v9255 = vsel %vm897, %v9195, 0
        %v9258 = vsel %vm897, %v9196, 0
        %v9261 = vsel %vm897, %v9197, 0
        %v9264 = vsel %vm897, %v9198, 0
        %v9267 = vsel %vm897, %v9199, 0
        %v9270 = vsel %vm897, %v9200, 0
        %v9273 = vsel %vm897, %v9201, 0
        %v9276 = vsel %vm897, %v9202, 0
        %v9279 = vsel %vm897, %v9203, 0
        %v9282 = vsel %vm897, %v9204, 0
        %v9285 = vsel %vm897, %v9205, 0
        %v9288 = vsel %vm897, %v9206, 0
        %v9291 = vsel %vm897, %v9207, 0
        %v9294 = vsel %vm897, %v9208, 0
        %v9297 = vsel %vm897, %v9209, 0
        %v9300 = vsel %vm897, %v9210, 0
        %v9303 = vsel %vm897, %v9211, 0
        %v9306 = vsel %vm897, %v9212, 0
        %v9309 = vsel %vm897, %v9213, 0
        %v9312 = vsel %vm897, %v9214, 0
        %v9315 = vsel %vm897, %v9215, 0
        %9317 = vmatprep.subr.mxu0 0.0
        %9318 = vmatpush1.msra.mxu0 %v9217
        %9319 = vmatprep.subr.mxu0 0.0
        %9320 = vmatpush1.msra.mxu0 %v9218
        %9321 = vmatprep.subr.mxu0 0.0
        %9322 = vmatpush1.msra.mxu0 %v9219
        %9323 = vmatprep.subr.mxu0 0.0
        %9324 = vmatpush1.msra.mxu0 %v9220
        %9325 = vmatprep.subr.mxu0 0.0
        %9326 = vmatpush1.msra.mxu0 0.0
        %9327 = vmatprep.subr.mxu0 0.0
        %9328 = vmatpush1.msra.mxu0 0.0
        %9329 = vmatprep.subr.mxu0 0.0
        %9330 = vmatpush1.msra.mxu0 0.0
        %9331 = vmatprep.subr.mxu0 0.0
        %9332 = vmatpush1.msra.mxu0 0.0
        %9333 = vmatprep.subr.mxu0 0.0
        %9334 = vmatpush1.msra.mxu0 0.0
        %9335 = vmatprep.subr.mxu0 0.0
        %9336 = vmatpush1.msra.mxu0 0.0
        %9337 = vmatprep.subr.mxu0 0.0
        %9338 = vmatpush1.msra.mxu0 0.0
        %9339 = vmatprep.subr.mxu0 0.0
        %9340 = vmatpush1.msra.mxu0 0.0
        %9341 = vmatprep.subr.mxu0 0.0
        %9342 = vmatpush1.msra.mxu0 0.0
        %9343 = vmatprep.subr.mxu0 0.0
        %9344 = vmatpush1.msra.mxu0 0.0
        %9345 = vmatprep.subr.mxu0 0.0
        %9346 = vmatpush1.msra.mxu0 0.0
        %9347 = vmatprep.subr.mxu0 0.0
        %9348 = vmatpush1.msra.mxu0 0.0
        %9349 = vmatprep.subr.mxu0 0.0
        %9350 = vmatpush1.msra.mxu0 0.0
        %9351 = vmatprep.subr.mxu0 0.0
        %9352 = vmatpush1.msra.mxu0 0.0
        %9353 = vmatprep.subr.mxu0 0.0
        %9354 = vmatpush1.msra.mxu0 0.0
        %9355 = vmatprep.subr.mxu0 0.0
        %9356 = vmatpush1.msra.mxu0 0.0
        %9357 = vmatprep.subr.mxu0 0.0
        %9358 = vmatpush1.msra.mxu0 0.0
        %9359 = vmatprep.subr.mxu0 0.0
        %9360 = vmatpush1.msra.mxu0 0.0
        %9361 = vmatprep.subr.mxu0 0.0
        %9362 = vmatpush1.msra.mxu0 0.0
        %9363 = vmatprep.subr.mxu0 0.0
        %9364 = vmatpush1.msra.mxu0 0.0
        %9365 = vmatprep.subr.mxu0 0.0
        %9366 = vmatpush1.msra.mxu0 0.0
        %9367 = vmatprep.subr.mxu0 0.0
        %9368 = vmatpush1.msra.mxu0 0.0
        %9369 = vmatprep.subr.mxu0 0.0
        %9370 = vmatpush1.msra.mxu0 0.0
        %9371 = vmatprep.subr.mxu0 0.0
        %9372 = vmatpush1.msra.mxu0 0.0
        %9373 = vmatprep.subr.mxu0 0.0
        %9374 = vmatpush1.msra.mxu0 0.0
        %9375 = vmatprep.subr.mxu0 0.0
        %9376 = vmatpush1.msra.mxu0 0.0
        %9377 = vmatprep.subr.mxu0 0.0
        %9378 = vmatpush1.msra.mxu0 0.0
        %9379 = vmatprep.subr.mxu0 0.0
        %9380 = vmatpush1.msra.mxu0 0.0
        %9381 = vmatprep.mubr.f32.mxu0 0.0
        %9382 = vmatmul.mubr.f32.gmra.mrb[0].mxu0 %v9222
        %v9383 = vpop.f32.mrb[0].mxu0
        %v9384 = vadd.f32 0.0, %v9383
        %v9385 = vpop.f32.mrb[0].mxu0
        %9386 = vmatprep.mubr.f32.mxu0 0.0
        %9387 = vmatmul.mubr.f32.gmra.mrb[0].mxu0 %v9225
        %v9388 = vpop.f32.mrb[0].mxu0
        %v9389 = vadd.f32 0.0, %v9388
        %v9390 = vpop.f32.mrb[0].mxu0
        %9391 = vmatprep.mubr.f32.mxu0 0.0
        %9392 = vmatmul.mubr.f32.gmra.mrb[0].mxu0 %v9228
        %v9393 = vpop.f32.mrb[0].mxu0
        %v9394 = vadd.f32 0.0, %v9393
        %v9395 = vpop.f32.mrb[0].mxu0
        %9396 = vmatprep.mubr.f32.mxu0 0.0
        %9397 = vmatmul.mubr.f32.gmra.mrb[0].mxu0 %v9231
        %v9398 = vpop.f32.mrb[0].mxu0
        %v9399 = vadd.f32 0.0, %v9398
        %v9400 = vpop.f32.mrb[0].mxu0
        %9401 = vmatprep.mubr.f32.mxu0 0.0
        %9402 = vmatmul.mubr.f32.gmra.mrb[0].mxu0 %v9234
        %v9403 = vpop.f32.mrb[0].mxu0
        %v9404 = vadd.f32 0.0, %v9403
        %v9405 = vpop.f32.mrb[0].mxu0
        %9406 = vmatprep.mubr.f32.mxu0 0.0
        %9407 = vmatmul.mubr.f32.gmra.mrb[0].mxu0 %v9237
        %v9408 = vpop.f32.mrb[0].mxu0
        %v9409 = vadd.f32 0.0, %v9408
        %v9410 = vpop.f32.mrb[0].mxu0
        %9411 = vmatprep.mubr.f32.mxu0 0.0
        %9412 = vmatmul.mubr.f32.gmra.mrb[0].mxu0 %v9240
        %v9413 = vpop.f32.mrb[0].mxu0
        %v9414 = vadd.f32 0.0, %v9413
        %v9415 = vpop.f32.mrb[0].mxu0
        %9416 = vmatprep.mubr.f32.mxu0 0.0
        %9417 = vmatmul.mubr.f32.gmra.mrb[0].mxu0 %v9243
        %v9418 = vpop.f32.mrb[0].mxu0
        %v9419 = vadd.f32 0.0, %v9418
        %v9420 = vpop.f32.mrb[0].mxu0
        %9421 = vmatprep.mubr.f32.mxu0 0.0
        %9422 = vmatmul.mubr.f32.gmra.mrb[0].mxu0 %v9246
        %v9423 = vpop.f32.mrb[0].mxu0
        %v9424 = vadd.f32 0.0, %v9423
        %v9425 = vpop.f32.mrb[0].mxu0
        %9426 = vmatprep.mubr.f32.mxu0 0.0
        %9427 = vmatmul.mubr.f32.gmra.mrb[0].mxu0 %v9249
        %v9428 = vpop.f32.mrb[0].mxu0
        %v9429 = vadd.f32 0.0, %v9428
        %v9430 = vpop.f32.mrb[0].mxu0
        %9431 = vmatprep.mubr.f32.mxu0 0.0
        %9432 = vmatmul.mubr.f32.gmra.mrb[0].mxu0 %v9252
        %v9433 = vpop.f32.mrb[0].mxu0
        %v9434 = vadd.f32 0.0, %v9433
        %v9435 = vpop.f32.mrb[0].mxu0
        %9436 = vmatprep.mubr.f32.mxu0 0.0
        %9437 = vmatmul.mubr.f32.gmra.mrb[0].mxu0 %v9255
        %v9438 = vpop.f32.mrb[0].mxu0
        %v9439 = vadd.f32 0.0, %v9438
        %v9440 = vpop.f32.mrb[0].mxu0
        %9441 = vmatprep.mubr.f32.mxu0 0.0
        %9442 = vmatmul.mubr.f32.gmra.mrb[0].mxu0 %v9258
        %v9443 = vpop.f32.mrb[0].mxu0
        %v9444 = vadd.f32 0.0, %v9443
        %v9445 = vpop.f32.mrb[0].mxu0
        %9446 = vmatprep.mubr.f32.mxu0 0.0
        %9447 = vmatmul.mubr.f32.gmra.mrb[0].mxu0 %v9261
        %v9448 = vpop.f32.mrb[0].mxu0
        %v9449 = vadd.f32 0.0, %v9448
        %v9450 = vpop.f32.mrb[0].mxu0
        %9451 = vmatprep.mubr.f32.mxu0 0.0
        %9452 = vmatmul.mubr.f32.gmra.mrb[0].mxu0 %v9264
        %v9453 = vpop.f32.mrb[0].mxu0
        %v9454 = vadd.f32 0.0, %v9453
        %v9455 = vpop.f32.mrb[0].mxu0
        %9456 = vmatprep.mubr.f32.mxu0 0.0
        %9457 = vmatmul.mubr.f32.gmra.mrb[0].mxu0 %v9267
        %v9458 = vpop.f32.mrb[0].mxu0
        %v9459 = vadd.f32 0.0, %v9458
        %v9460 = vpop.f32.mrb[0].mxu0
        %9461 = vmatprep.mubr.f32.mxu0 0.0
        %9462 = vmatmul.mubr.f32.gmra.mrb[0].mxu0 %v9270
        %v9463 = vpop.f32.mrb[0].mxu0
        %v9464 = vadd.f32 0.0, %v9463
        %v9465 = vpop.f32.mrb[0].mxu0
        %9466 = vmatprep.mubr.f32.mxu0 0.0
        %9467 = vmatmul.mubr.f32.gmra.mrb[0].mxu0 %v9273
        %v9468 = vpop.f32.mrb[0].mxu0
        %v9469 = vadd.f32 0.0, %v9468
        %v9470 = vpop.f32.mrb[0].mxu0
        %9471 = vmatprep.mubr.f32.mxu0 0.0
        %9472 = vmatmul.mubr.f32.gmra.mrb[0].mxu0 %v9276
        %v9473 = vpop.f32.mrb[0].mxu0
        %v9474 = vadd.f32 0.0, %v9473
        %v9475 = vpop.f32.mrb[0].mxu0
        %9476 = vmatprep.mubr.f32.mxu0 0.0
        %9477 = vmatmul.mubr.f32.gmra.mrb[0].mxu0 %v9279
        %v9478 = vpop.f32.mrb[0].mxu0
        %v9479 = vadd.f32 0.0, %v9478
        %v9480 = vpop.f32.mrb[0].mxu0
        %9481 = vmatprep.mubr.f32.mxu0 0.0
        %9482 = vmatmul.mubr.f32.gmra.mrb[0].mxu0 %v9282
        %v9483 = vpop.f32.mrb[0].mxu0
        %v9484 = vadd.f32 0.0, %v9483
        %v9485 = vpop.f32.mrb[0].mxu0
        %9486 = vmatprep.mubr.f32.mxu0 0.0
        %9487 = vmatmul.mubr.f32.gmra.mrb[0].mxu0 %v9285
        %v9488 = vpop.f32.mrb[0].mxu0
        %v9489 = vadd.f32 0.0, %v9488
        %v9490 = vpop.f32.mrb[0].mxu0
        %9491 = vmatprep.mubr.f32.mxu0 0.0
        %9492 = vmatmul.mubr.f32.gmra.mrb[0].mxu0 %v9288
        %v9493 = vpop.f32.mrb[0].mxu0
        %v9494 = vadd.f32 0.0, %v9493
        %v9495 = vpop.f32.mrb[0].mxu0
        %9496 = vmatprep.mubr.f32.mxu0 0.0
        %9497 = vmatmul.mubr.f32.gmra.mrb[0].mxu0 %v9291
        %v9498 = vpop.f32.mrb[0].mxu0
        %v9499 = vadd.f32 0.0, %v9498
        %v9500 = vpop.f32.mrb[0].mxu0
        %9501 = vmatprep.mubr.f32.mxu0 0.0
        %9502 = vmatmul.mubr.f32.gmra.mrb[0].mxu0 %v9294
        %v9503 = vpop.f32.mrb[0].mxu0
        %v9504 = vadd.f32 0.0, %v9503
        %v9505 = vpop.f32.mrb[0].mxu0
        %9506 = vmatprep.mubr.f32.mxu0 0.0
        %9507 = vmatmul.mubr.f32.gmra.mrb[0].mxu0 %v9297
        %v9508 = vpop.f32.mrb[0].mxu0
        %v9509 = vadd.f32 0.0, %v9508
        %v9510 = vpop.f32.mrb[0].mxu0
        %9511 = vmatprep.mubr.f32.mxu0 0.0
        %9512 = vmatmul.mubr.f32.gmra.mrb[0].mxu0 %v9300
        %v9513 = vpop.f32.mrb[0].mxu0
        %v9514 = vadd.f32 0.0, %v9513
        %v9515 = vpop.f32.mrb[0].mxu0
        %9516 = vmatprep.mubr.f32.mxu0 0.0
        %9517 = vmatmul.mubr.f32.gmra.mrb[0].mxu0 %v9303
        %v9518 = vpop.f32.mrb[0].mxu0
        %v9519 = vadd.f32 0.0, %v9518
        %v9520 = vpop.f32.mrb[0].mxu0
        %9521 = vmatprep.mubr.f32.mxu0 0.0
        %9522 = vmatmul.mubr.f32.gmra.mrb[0].mxu0 %v9306
        %v9523 = vpop.f32.mrb[0].mxu0
        %v9524 = vadd.f32 0.0, %v9523
        %v9525 = vpop.f32.mrb[0].mxu0
        %9526 = vmatprep.mubr.f32.mxu0 0.0
        %9527 = vmatmul.mubr.f32.gmra.mrb[0].mxu0 %v9309
        %v9528 = vpop.f32.mrb[0].mxu0
        %v9529 = vadd.f32 0.0, %v9528
        %v9530 = vpop.f32.mrb[0].mxu0
        %9531 = vmatprep.mubr.f32.mxu0 0.0
        %9532 = vmatmul.mubr.f32.gmra.mrb[0].mxu0 %v9312
        %v9533 = vpop.f32.mrb[0].mxu0
        %v9534 = vadd.f32 0.0, %v9533
        %v9535 = vpop.f32.mrb[0].mxu0
        %9536 = vmatprep.mubr.f32.mxu0 0.0
        %9537 = vmatmul.mubr.f32.gmra.mrb[0].mxu0 %v9315
        %v9538 = vpop.f32.mrb[0].mxu0
        %v9539 = vadd.f32 0.0, %v9538
        %v9540 = vpop.f32.mrb[0].mxu0
        %9541 = vdwg.mxu0
        %v9542 = vadd.f32 %v9152, %v9384
        %v9543 = vadd.f32 %v9153, %v9389
        %v9544 = vadd.f32 %v9154, %v9394
        %v9545 = vadd.f32 %v9155, %v9399
        %v9546 = vadd.f32 %v9156, %v9404
        %v9547 = vadd.f32 %v9157, %v9409
        %v9548 = vadd.f32 %v9158, %v9414
        %v9549 = vadd.f32 %v9159, %v9419
        %v9550 = vadd.f32 %v9160, %v9424
        %v9551 = vadd.f32 %v9161, %v9429
        %v9552 = vadd.f32 %v9162, %v9434
        %v9553 = vadd.f32 %v9163, %v9439
        %v9554 = vadd.f32 %v9164, %v9444
        %v9555 = vadd.f32 %v9165, %v9449
        %v9556 = vadd.f32 %v9166, %v9454
        %v9557 = vadd.f32 %v9167, %v9459
        %v9558 = vadd.f32 %v9168, %v9464
        %v9559 = vadd.f32 %v9169, %v9469
        %v9560 = vadd.f32 %v9170, %v9474
        %v9561 = vadd.f32 %v9171, %v9479
        %v9562 = vadd.f32 %v9172, %v9484
        %v9563 = vadd.f32 %v9173, %v9489
        %v9564 = vadd.f32 %v9174, %v9494
        %v9565 = vadd.f32 %v9175, %v9499
        %v9566 = vadd.f32 %v9176, %v9504
        %v9567 = vadd.f32 %v9177, %v9509
        %v9568 = vadd.f32 %v9178, %v9514
        %v9569 = vadd.f32 %v9179, %v9519
        %v9570 = vadd.f32 %v9180, %v9524
        %v9571 = vadd.f32 %v9181, %v9529
        %v9572 = vadd.f32 %v9182, %v9534
        %v9573 = vadd.f32 %v9183, %v9539
        %v9574 = vld [vmem:[%s8046 + $0x1] sm:$0xff]
        %v9575 = vld [vmem:[%s8046 + $0x9] sm:$0xff]
        %v9576 = vld [vmem:[%s8046 + $0x19] sm:$0xff]
        %v9577 = vld [vmem:[%s8046 + $0x21] sm:$0xff]
        %v9578 = vld [vmem:[%s8046 + $0x31] sm:$0xff]
        %v9579 = vld [vmem:[%s8046 + $0x39] sm:$0xff]
        %v9580 = vld [vmem:[%s8046 + $0x49] sm:$0xff]
        %v9581 = vld [vmem:[%s8046 + $0x51] sm:$0xff]
        %v9582 = vld [vmem:[%s8046 + $0x61] sm:$0xff]
        %v9583 = vld [vmem:[%s8046 + $0x69] sm:$0xff]
        %v9584 = vld [vmem:[%s8046 + $0x79] sm:$0xff]
        %v9585 = vld [vmem:[%s8046 + $0x81] sm:$0xff]
        %v9586 = vld [vmem:[%s8046 + $0x91] sm:$0xff]
        %v9587 = vld [vmem:[%s8046 + $0x99] sm:$0xff]
        %v9588 = vld [vmem:[%s8046 + $0xa9] sm:$0xff]
        %v9589 = vld [vmem:[%s8046 + $0xb1] sm:$0xff]
        %v9590 = vld [vmem:[%s8046 + $0xc1] sm:$0xff]
        %v9591 = vld [vmem:[%s8046 + $0xc9] sm:$0xff]
        %v9592 = vld [vmem:[%s8046 + $0xd9] sm:$0xff]
        %v9593 = vld [vmem:[%s8046 + $0xe1] sm:$0xff]
        %v9594 = vld [vmem:[%s8046 + $0xf1] sm:$0xff]
        %v9595 = vld [vmem:[%s8046 + $0xf9] sm:$0xff]
        %v9596 = vld [vmem:[%s8046 + $0x109] sm:$0xff]
        %v9597 = vld [vmem:[%s8046 + $0x111] sm:$0xff]
        %v9598 = vld [vmem:[%s8046 + $0x121] sm:$0xff]
        %v9599 = vld [vmem:[%s8046 + $0x129] sm:$0xff]
        %v9600 = vld [vmem:[%s8046 + $0x139] sm:$0xff]
        %v9601 = vld [vmem:[%s8046 + $0x141] sm:$0xff]
        %v9602 = vld [vmem:[%s8046 + $0x151] sm:$0xff]
        %v9603 = vld [vmem:[%s8046 + $0x159] sm:$0xff]
        %v9604 = vld [vmem:[%s8046 + $0x169] sm:$0xff]
        %v9605 = vld [vmem:[%s8046 + $0x171] sm:$0xff]
        %s9606 = scalar_lea.vmem %s5, 128
        %v9607 = vld [vmem:[%s9606] sm:$0xff]
        %v9608 = vld [vmem:[%s9606 + $0x8] sm:$0xff]
        %v9609 = vld [vmem:[%s9606 + $0x10] sm:$0xff]
        %v9610 = vld [vmem:[%s9606 + $0x18] sm:$0xff]
        %v9612 = vsel %vm897, %v9574, 0
        %v9615 = vsel %vm897, %v9575, 0
        %v9618 = vsel %vm897, %v9576, 0
        %v9621 = vsel %vm897, %v9577, 0
        %v9624 = vsel %vm897, %v9578, 0
        %v9627 = vsel %vm897, %v9579, 0
        %v9630 = vsel %vm897, %v9580, 0
        %v9633 = vsel %vm897, %v9581, 0
        %v9636 = vsel %vm897, %v9582, 0
        %v9639 = vsel %vm897, %v9583, 0
        %v9642 = vsel %vm897, %v9584, 0
        %v9645 = vsel %vm897, %v9585, 0
        %v9648 = vsel %vm897, %v9586, 0
        %v9651 = vsel %vm897, %v9587, 0
        %v9654 = vsel %vm897, %v9588, 0
        %v9657 = vsel %vm897, %v9589, 0
        %v9660 = vsel %vm897, %v9590, 0
        %v9663 = vsel %vm897, %v9591, 0
        %v9666 = vsel %vm897, %v9592, 0
        %v9669 = vsel %vm897, %v9593, 0
        %v9672 = vsel %vm897, %v9594, 0
        %v9675 = vsel %vm897, %v9595, 0
        %v9678 = vsel %vm897, %v9596, 0
        %v9681 = vsel %vm897, %v9597, 0
        %v9684 = vsel %vm897, %v9598, 0
        %v9687 = vsel %vm897, %v9599, 0
        %v9690 = vsel %vm897, %v9600, 0
        %v9693 = vsel %vm897, %v9601, 0
        %v9696 = vsel %vm897, %v9602, 0
        %v9699 = vsel %vm897, %v9603, 0
        %v9702 = vsel %vm897, %v9604, 0
        %v9705 = vsel %vm897, %v9605, 0
        %9707 = vmatprep.subr.mxu0 0.0
        %9708 = vmatpush1.msra.mxu0 %v9607
        %9709 = vmatprep.subr.mxu0 0.0
        %9710 = vmatpush1.msra.mxu0 %v9608
        %9711 = vmatprep.subr.mxu0 0.0
        %9712 = vmatpush1.msra.mxu0 %v9609
        %9713 = vmatprep.subr.mxu0 0.0
        %9714 = vmatpush1.msra.mxu0 %v9610
        %9715 = vmatprep.subr.mxu0 0.0
        %9716 = vmatpush1.msra.mxu0 0.0
        %9717 = vmatprep.subr.mxu0 0.0
        %9718 = vmatpush1.msra.mxu0 0.0
        %9719 = vmatprep.subr.mxu0 0.0
        %9720 = vmatpush1.msra.mxu0 0.0
        %9721 = vmatprep.subr.mxu0 0.0
        %9722 = vmatpush1.msra.mxu0 0.0
        %9723 = vmatprep.subr.mxu0 0.0
        %9724 = vmatpush1.msra.mxu0 0.0
        %9725 = vmatprep.subr.mxu0 0.0
        %9726 = vmatpush1.msra.mxu0 0.0
        %9727 = vmatprep.subr.mxu0 0.0
        %9728 = vmatpush1.msra.mxu0 0.0
        %9729 = vmatprep.subr.mxu0 0.0
        %9730 = vmatpush1.msra.mxu0 0.0
        %9731 = vmatprep.subr.mxu0 0.0
        %9732 = vmatpush1.msra.mxu0 0.0
        %9733 = vmatprep.subr.mxu0 0.0
        %9734 = vmatpush1.msra.mxu0 0.0
        %9735 = vmatprep.subr.mxu0 0.0
        %9736 = vmatpush1.msra.mxu0 0.0
        %9737 = vmatprep.subr.mxu0 0.0
        %9738 = vmatpush1.msra.mxu0 0.0
        %9739 = vmatprep.subr.mxu0 0.0
        %9740 = vmatpush1.msra.mxu0 0.0
        %9741 = vmatprep.subr.mxu0 0.0
        %9742 = vmatpush1.msra.mxu0 0.0
        %9743 = vmatprep.subr.mxu0 0.0
        %9744 = vmatpush1.msra.mxu0 0.0
        %9745 = vmatprep.subr.mxu0 0.0
        %9746 = vmatpush1.msra.mxu0 0.0
        %9747 = vmatprep.subr.mxu0 0.0
        %9748 = vmatpush1.msra.mxu0 0.0
        %9749 = vmatprep.subr.mxu0 0.0
        %9750 = vmatpush1.msra.mxu0 0.0
        %9751 = vmatprep.subr.mxu0 0.0
        %9752 = vmatpush1.msra.mxu0 0.0
        %9753 = vmatprep.subr.mxu0 0.0
        %9754 = vmatpush1.msra.mxu0 0.0
        %9755 = vmatprep.subr.mxu0 0.0
        %9756 = vmatpush1.msra.mxu0 0.0
        %9757 = vmatprep.subr.mxu0 0.0
        %9758 = vmatpush1.msra.mxu0 0.0
        %9759 = vmatprep.subr.mxu0 0.0
        %9760 = vmatpush1.msra.mxu0 0.0
        %9761 = vmatprep.subr.mxu0 0.0
        %9762 = vmatpush1.msra.mxu0 0.0
        %9763 = vmatprep.subr.mxu0 0.0
        %9764 = vmatpush1.msra.mxu0 0.0
        %9765 = vmatprep.subr.mxu0 0.0
        %9766 = vmatpush1.msra.mxu0 0.0
        %9767 = vmatprep.subr.mxu0 0.0
        %9768 = vmatpush1.msra.mxu0 0.0
        %9769 = vmatprep.subr.mxu0 0.0
        %9770 = vmatpush1.msra.mxu0 0.0
        %9771 = vmatprep.mubr.f32.mxu0 0.0
        %9772 = vmatmul.mubr.f32.gmra.mrb[0].mxu0 %v9612
        %v9773 = vpop.f32.mrb[0].mxu0
        %v9774 = vadd.f32 0.0, %v9773
        %v9775 = vpop.f32.mrb[0].mxu0
        %9776 = vmatprep.mubr.f32.mxu0 0.0
        %9777 = vmatmul.mubr.f32.gmra.mrb[0].mxu0 %v9615
        %v9778 = vpop.f32.mrb[0].mxu0
        %v9779 = vadd.f32 0.0, %v9778
        %v9780 = vpop.f32.mrb[0].mxu0
        %9781 = vmatprep.mubr.f32.mxu0 0.0
        %9782 = vmatmul.mubr.f32.gmra.mrb[0].mxu0 %v9618
        %v9783 = vpop.f32.mrb[0].mxu0
        %v9784 = vadd.f32 0.0, %v9783
        %v9785 = vpop.f32.mrb[0].mxu0
        %9786 = vmatprep.mubr.f32.mxu0 0.0
        %9787 = vmatmul.mubr.f32.gmra.mrb[0].mxu0 %v9621
        %v9788 = vpop.f32.mrb[0].mxu0
        %v9789 = vadd.f32 0.0, %v9788
        %v9790 = vpop.f32.mrb[0].mxu0
        %9791 = vmatprep.mubr.f32.mxu0 0.0
        %9792 = vmatmul.mubr.f32.gmra.mrb[0].mxu0 %v9624
        %v9793 = vpop.f32.mrb[0].mxu0
        %v9794 = vadd.f32 0.0, %v9793
        %v9795 = vpop.f32.mrb[0].mxu0
        %9796 = vmatprep.mubr.f32.mxu0 0.0
        %9797 = vmatmul.mubr.f32.gmra.mrb[0].mxu0 %v9627
        %v9798 = vpop.f32.mrb[0].mxu0
        %v9799 = vadd.f32 0.0, %v9798
        %v9800 = vpop.f32.mrb[0].mxu0
        %9801 = vmatprep.mubr.f32.mxu0 0.0
        %9802 = vmatmul.mubr.f32.gmra.mrb[0].mxu0 %v9630
        %v9803 = vpop.f32.mrb[0].mxu0
        %v9804 = vadd.f32 0.0, %v9803
        %v9805 = vpop.f32.mrb[0].mxu0
        %9806 = vmatprep.mubr.f32.mxu0 0.0
        %9807 = vmatmul.mubr.f32.gmra.mrb[0].mxu0 %v9633
        %v9808 = vpop.f32.mrb[0].mxu0
        %v9809 = vadd.f32 0.0, %v9808
        %v9810 = vpop.f32.mrb[0].mxu0
        %9811 = vmatprep.mubr.f32.mxu0 0.0
        %9812 = vmatmul.mubr.f32.gmra.mrb[0].mxu0 %v9636
        %v9813 = vpop.f32.mrb[0].mxu0
        %v9814 = vadd.f32 0.0, %v9813
        %v9815 = vpop.f32.mrb[0].mxu0
        %9816 = vmatprep.mubr.f32.mxu0 0.0
        %9817 = vmatmul.mubr.f32.gmra.mrb[0].mxu0 %v9639
        %v9818 = vpop.f32.mrb[0].mxu0
        %v9819 = vadd.f32 0.0, %v9818
        %v9820 = vpop.f32.mrb[0].mxu0
        %9821 = vmatprep.mubr.f32.mxu0 0.0
        %9822 = vmatmul.mubr.f32.gmra.mrb[0].mxu0 %v9642
        %v9823 = vpop.f32.mrb[0].mxu0
        %v9824 = vadd.f32 0.0, %v9823
        %v9825 = vpop.f32.mrb[0].mxu0
        %9826 = vmatprep.mubr.f32.mxu0 0.0
        %9827 = vmatmul.mubr.f32.gmra.mrb[0].mxu0 %v9645
        %v9828 = vpop.f32.mrb[0].mxu0
        %v9829 = vadd.f32 0.0, %v9828
        %v9830 = vpop.f32.mrb[0].mxu0
        %9831 = vmatprep.mubr.f32.mxu0 0.0
        %9832 = vmatmul.mubr.f32.gmra.mrb[0].mxu0 %v9648
        %v9833 = vpop.f32.mrb[0].mxu0
        %v9834 = vadd.f32 0.0, %v9833
        %v9835 = vpop.f32.mrb[0].mxu0
        %9836 = vmatprep.mubr.f32.mxu0 0.0
        %9837 = vmatmul.mubr.f32.gmra.mrb[0].mxu0 %v9651
        %v9838 = vpop.f32.mrb[0].mxu0
        %v9839 = vadd.f32 0.0, %v9838
        %v9840 = vpop.f32.mrb[0].mxu0
        %9841 = vmatprep.mubr.f32.mxu0 0.0
        %9842 = vmatmul.mubr.f32.gmra.mrb[0].mxu0 %v9654
        %v9843 = vpop.f32.mrb[0].mxu0
        %v9844 = vadd.f32 0.0, %v9843
        %v9845 = vpop.f32.mrb[0].mxu0
        %9846 = vmatprep.mubr.f32.mxu0 0.0
        %9847 = vmatmul.mubr.f32.gmra.mrb[0].mxu0 %v9657
        %v9848 = vpop.f32.mrb[0].mxu0
        %v9849 = vadd.f32 0.0, %v9848
        %v9850 = vpop.f32.mrb[0].mxu0
        %9851 = vmatprep.mubr.f32.mxu0 0.0
        %9852 = vmatmul.mubr.f32.gmra.mrb[0].mxu0 %v9660
        %v9853 = vpop.f32.mrb[0].mxu0
        %v9854 = vadd.f32 0.0, %v9853
        %v9855 = vpop.f32.mrb[0].mxu0
        %9856 = vmatprep.mubr.f32.mxu0 0.0
        %9857 = vmatmul.mubr.f32.gmra.mrb[0].mxu0 %v9663
        %v9858 = vpop.f32.mrb[0].mxu0
        %v9859 = vadd.f32 0.0, %v9858
        %v9860 = vpop.f32.mrb[0].mxu0
        %9861 = vmatprep.mubr.f32.mxu0 0.0
        %9862 = vmatmul.mubr.f32.gmra.mrb[0].mxu0 %v9666
        %v9863 = vpop.f32.mrb[0].mxu0
        %v9864 = vadd.f32 0.0, %v9863
        %v9865 = vpop.f32.mrb[0].mxu0
        %9866 = vmatprep.mubr.f32.mxu0 0.0
        %9867 = vmatmul.mubr.f32.gmra.mrb[0].mxu0 %v9669
        %v9868 = vpop.f32.mrb[0].mxu0
        %v9869 = vadd.f32 0.0, %v9868
        %v9870 = vpop.f32.mrb[0].mxu0
        %9871 = vmatprep.mubr.f32.mxu0 0.0
        %9872 = vmatmul.mubr.f32.gmra.mrb[0].mxu0 %v9672
        %v9873 = vpop.f32.mrb[0].mxu0
        %v9874 = vadd.f32 0.0, %v9873
        %v9875 = vpop.f32.mrb[0].mxu0
        %9876 = vmatprep.mubr.f32.mxu0 0.0
        %9877 = vmatmul.mubr.f32.gmra.mrb[0].mxu0 %v9675
        %v9878 = vpop.f32.mrb[0].mxu0
        %v9879 = vadd.f32 0.0, %v9878
        %v9880 = vpop.f32.mrb[0].mxu0
        %9881 = vmatprep.mubr.f32.mxu0 0.0
        %9882 = vmatmul.mubr.f32.gmra.mrb[0].mxu0 %v9678
        %v9883 = vpop.f32.mrb[0].mxu0
        %v9884 = vadd.f32 0.0, %v9883
        %v9885 = vpop.f32.mrb[0].mxu0
        %9886 = vmatprep.mubr.f32.mxu0 0.0
        %9887 = vmatmul.mubr.f32.gmra.mrb[0].mxu0 %v9681
        %v9888 = vpop.f32.mrb[0].mxu0
        %v9889 = vadd.f32 0.0, %v9888
        %v9890 = vpop.f32.mrb[0].mxu0
        %9891 = vmatprep.mubr.f32.mxu0 0.0
        %9892 = vmatmul.mubr.f32.gmra.mrb[0].mxu0 %v9684
        %v9893 = vpop.f32.mrb[0].mxu0
        %v9894 = vadd.f32 0.0, %v9893
        %v9895 = vpop.f32.mrb[0].mxu0
        %9896 = vmatprep.mubr.f32.mxu0 0.0
        %9897 = vmatmul.mubr.f32.gmra.mrb[0].mxu0 %v9687
        %v9898 = vpop.f32.mrb[0].mxu0
        %v9899 = vadd.f32 0.0, %v9898
        %v9900 = vpop.f32.mrb[0].mxu0
        %9901 = vmatprep.mubr.f32.mxu0 0.0
        %9902 = vmatmul.mubr.f32.gmra.mrb[0].mxu0 %v9690
        %v9903 = vpop.f32.mrb[0].mxu0
        %v9904 = vadd.f32 0.0, %v9903
        %v9905 = vpop.f32.mrb[0].mxu0
        %9906 = vmatprep.mubr.f32.mxu0 0.0
        %9907 = vmatmul.mubr.f32.gmra.mrb[0].mxu0 %v9693
        %v9908 = vpop.f32.mrb[0].mxu0
        %v9909 = vadd.f32 0.0, %v9908
        %v9910 = vpop.f32.mrb[0].mxu0
        %9911 = vmatprep.mubr.f32.mxu0 0.0
        %9912 = vmatmul.mubr.f32.gmra.mrb[0].mxu0 %v9696
        %v9913 = vpop.f32.mrb[0].mxu0
        %v9914 = vadd.f32 0.0, %v9913
        %v9915 = vpop.f32.mrb[0].mxu0
        %9916 = vmatprep.mubr.f32.mxu0 0.0
        %9917 = vmatmul.mubr.f32.gmra.mrb[0].mxu0 %v9699
        %v9918 = vpop.f32.mrb[0].mxu0
        %v9919 = vadd.f32 0.0, %v9918
        %v9920 = vpop.f32.mrb[0].mxu0
        %9921 = vmatprep.mubr.f32.mxu0 0.0
        %9922 = vmatmul.mubr.f32.gmra.mrb[0].mxu0 %v9702
        %v9923 = vpop.f32.mrb[0].mxu0
        %v9924 = vadd.f32 0.0, %v9923
        %v9925 = vpop.f32.mrb[0].mxu0
        %9926 = vmatprep.mubr.f32.mxu0 0.0
        %9927 = vmatmul.mubr.f32.gmra.mrb[0].mxu0 %v9705
        %v9928 = vpop.f32.mrb[0].mxu0
        %v9929 = vadd.f32 0.0, %v9928
        %v9930 = vpop.f32.mrb[0].mxu0
        %9931 = vdwg.mxu0
        %v9932 = vadd.f32 %v9542, %v9774
        %v9933 = vadd.f32 %v9543, %v9779
        %v9934 = vadd.f32 %v9544, %v9784
        %v9935 = vadd.f32 %v9545, %v9789
        %v9936 = vadd.f32 %v9546, %v9794
        %v9937 = vadd.f32 %v9547, %v9799
        %v9938 = vadd.f32 %v9548, %v9804
        %v9939 = vadd.f32 %v9549, %v9809
        %v9940 = vadd.f32 %v9550, %v9814
        %v9941 = vadd.f32 %v9551, %v9819
        %v9942 = vadd.f32 %v9552, %v9824
        %v9943 = vadd.f32 %v9553, %v9829
        %v9944 = vadd.f32 %v9554, %v9834
        %v9945 = vadd.f32 %v9555, %v9839
        %v9946 = vadd.f32 %v9556, %v9844
        %v9947 = vadd.f32 %v9557, %v9849
        %v9948 = vadd.f32 %v9558, %v9854
        %v9949 = vadd.f32 %v9559, %v9859
        %v9950 = vadd.f32 %v9560, %v9864
        %v9951 = vadd.f32 %v9561, %v9869
        %v9952 = vadd.f32 %v9562, %v9874
        %v9953 = vadd.f32 %v9563, %v9879
        %v9954 = vadd.f32 %v9564, %v9884
        %v9955 = vadd.f32 %v9565, %v9889
        %v9956 = vadd.f32 %v9566, %v9894
        %v9957 = vadd.f32 %v9567, %v9899
        %v9958 = vadd.f32 %v9568, %v9904
        %v9959 = vadd.f32 %v9569, %v9909
        %v9960 = vadd.f32 %v9570, %v9914
        %v9961 = vadd.f32 %v9571, %v9919
        %v9962 = vadd.f32 %v9572, %v9924
        %v9963 = vadd.f32 %v9573, %v9929
        %v9964 = vld [vmem:[%s8046 + $0x2] sm:$0xff]
        %v9965 = vld [vmem:[%s8046 + $0xa] sm:$0xff]
        %v9966 = vld [vmem:[%s8046 + $0x1a] sm:$0xff]
        %v9967 = vld [vmem:[%s8046 + $0x22] sm:$0xff]
        %v9968 = vld [vmem:[%s8046 + $0x32] sm:$0xff]
        %v9969 = vld [vmem:[%s8046 + $0x3a] sm:$0xff]
        %v9970 = vld [vmem:[%s8046 + $0x4a] sm:$0xff]
        %v9971 = vld [vmem:[%s8046 + $0x52] sm:$0xff]
        %v9972 = vld [vmem:[%s8046 + $0x62] sm:$0xff]
        %v9973 = vld [vmem:[%s8046 + $0x6a] sm:$0xff]
        %v9974 = vld [vmem:[%s8046 + $0x7a] sm:$0xff]
        %v9975 = vld [vmem:[%s8046 + $0x82] sm:$0xff]
        %v9976 = vld [vmem:[%s8046 + $0x92] sm:$0xff]
        %v9977 = vld [vmem:[%s8046 + $0x9a] sm:$0xff]
        %v9978 = vld [vmem:[%s8046 + $0xaa] sm:$0xff]
        %v9979 = vld [vmem:[%s8046 + $0xb2] sm:$0xff]
        %v9980 = vld [vmem:[%s8046 + $0xc2] sm:$0xff]
        %v9981 = vld [vmem:[%s8046 + $0xca] sm:$0xff]
        %v9982 = vld [vmem:[%s8046 + $0xda] sm:$0xff]
        %v9983 = vld [vmem:[%s8046 + $0xe2] sm:$0xff]
        %v9984 = vld [vmem:[%s8046 + $0xf2] sm:$0xff]
        %v9985 = vld [vmem:[%s8046 + $0xfa] sm:$0xff]
        %v9986 = vld [vmem:[%s8046 + $0x10a] sm:$0xff]
        %v9987 = vld [vmem:[%s8046 + $0x112] sm:$0xff]
        %v9988 = vld [vmem:[%s8046 + $0x122] sm:$0xff]
        %v9989 = vld [vmem:[%s8046 + $0x12a] sm:$0xff]
        %v9990 = vld [vmem:[%s8046 + $0x13a] sm:$0xff]
        %v9991 = vld [vmem:[%s8046 + $0x142] sm:$0xff]
        %v9992 = vld [vmem:[%s8046 + $0x152] sm:$0xff]
        %v9993 = vld [vmem:[%s8046 + $0x15a] sm:$0xff]
        %v9994 = vld [vmem:[%s8046 + $0x16a] sm:$0xff]
        %v9995 = vld [vmem:[%s8046 + $0x172] sm:$0xff]
        %s9996 = scalar_lea.vmem %s5, 160
        %v9997 = vld [vmem:[%s9996] sm:$0xff]
        %v9998 = vld [vmem:[%s9996 + $0x8] sm:$0xff]
        %v9999 = vld [vmem:[%s9996 + $0x10] sm:$0xff]
        %v10000 = vld [vmem:[%s9996 + $0x18] sm:$0xff]
        %v10002 = vsel %vm897, %v9964, 0
        %v10005 = vsel %vm897, %v9965, 0
        %v10008 = vsel %vm897, %v9966, 0
        %v10011 = vsel %vm897, %v9967, 0
        %v10014 = vsel %vm897, %v9968, 0
        %v10017 = vsel %vm897, %v9969, 0
        %v10020 = vsel %vm897, %v9970, 0
        %v10023 = vsel %vm897, %v9971, 0
        %v10026 = vsel %vm897, %v9972, 0
        %v10029 = vsel %vm897, %v9973, 0
        %v10032 = vsel %vm897, %v9974, 0
        %v10035 = vsel %vm897, %v9975, 0
        %v10038 = vsel %vm897, %v9976, 0
        %v10041 = vsel %vm897, %v9977, 0
        %v10044 = vsel %vm897, %v9978, 0
        %v10047 = vsel %vm897, %v9979, 0
        %v10050 = vsel %vm897, %v9980, 0
        %v10053 = vsel %vm897, %v9981, 0
        %v10056 = vsel %vm897, %v9982, 0
        %v10059 = vsel %vm897, %v9983, 0
        %v10062 = vsel %vm897, %v9984, 0
        %v10065 = vsel %vm897, %v9985, 0
        %v10068 = vsel %vm897, %v9986, 0
        %v10071 = vsel %vm897, %v9987, 0
        %v10074 = vsel %vm897, %v9988, 0
        %v10077 = vsel %vm897, %v9989, 0
        %v10080 = vsel %vm897, %v9990, 0
        %v10083 = vsel %vm897, %v9991, 0
        %v10086 = vsel %vm897, %v9992, 0
        %v10089 = vsel %vm897, %v9993, 0
        %v10092 = vsel %vm897, %v9994, 0
        %v10095 = vsel %vm897, %v9995, 0
        %10097 = vmatprep.subr.mxu0 0.0
        %10098 = vmatpush1.msra.mxu0 %v9997
        %10099 = vmatprep.subr.mxu0 0.0
        %10100 = vmatpush1.msra.mxu0 %v9998
        %10101 = vmatprep.subr.mxu0 0.0
        %10102 = vmatpush1.msra.mxu0 %v9999
        %10103 = vmatprep.subr.mxu0 0.0
        %10104 = vmatpush1.msra.mxu0 %v10000
        %10105 = vmatprep.subr.mxu0 0.0
        %10106 = vmatpush1.msra.mxu0 0.0
        %10107 = vmatprep.subr.mxu0 0.0
        %10108 = vmatpush1.msra.mxu0 0.0
        %10109 = vmatprep.subr.mxu0 0.0
        %10110 = vmatpush1.msra.mxu0 0.0
        %10111 = vmatprep.subr.mxu0 0.0
        %10112 = vmatpush1.msra.mxu0 0.0
        %10113 = vmatprep.subr.mxu0 0.0
        %10114 = vmatpush1.msra.mxu0 0.0
        %10115 = vmatprep.subr.mxu0 0.0
        %10116 = vmatpush1.msra.mxu0 0.0
        %10117 = vmatprep.subr.mxu0 0.0
        %10118 = vmatpush1.msra.mxu0 0.0
        %10119 = vmatprep.subr.mxu0 0.0
        %10120 = vmatpush1.msra.mxu0 0.0
        %10121 = vmatprep.subr.mxu0 0.0
        %10122 = vmatpush1.msra.mxu0 0.0
        %10123 = vmatprep.subr.mxu0 0.0
        %10124 = vmatpush1.msra.mxu0 0.0
        %10125 = vmatprep.subr.mxu0 0.0
        %10126 = vmatpush1.msra.mxu0 0.0
        %10127 = vmatprep.subr.mxu0 0.0
        %10128 = vmatpush1.msra.mxu0 0.0
        %10129 = vmatprep.subr.mxu0 0.0
        %10130 = vmatpush1.msra.mxu0 0.0
        %10131 = vmatprep.subr.mxu0 0.0
        %10132 = vmatpush1.msra.mxu0 0.0
        %10133 = vmatprep.subr.mxu0 0.0
        %10134 = vmatpush1.msra.mxu0 0.0
        %10135 = vmatprep.subr.mxu0 0.0
        %10136 = vmatpush1.msra.mxu0 0.0
        %10137 = vmatprep.subr.mxu0 0.0
        %10138 = vmatpush1.msra.mxu0 0.0
        %10139 = vmatprep.subr.mxu0 0.0
        %10140 = vmatpush1.msra.mxu0 0.0
        %10141 = vmatprep.subr.mxu0 0.0
        %10142 = vmatpush1.msra.mxu0 0.0
        %10143 = vmatprep.subr.mxu0 0.0
        %10144 = vmatpush1.msra.mxu0 0.0
        %10145 = vmatprep.subr.mxu0 0.0
        %10146 = vmatpush1.msra.mxu0 0.0
        %10147 = vmatprep.subr.mxu0 0.0
        %10148 = vmatpush1.msra.mxu0 0.0
        %10149 = vmatprep.subr.mxu0 0.0
        %10150 = vmatpush1.msra.mxu0 0.0
        %10151 = vmatprep.subr.mxu0 0.0
        %10152 = vmatpush1.msra.mxu0 0.0
        %10153 = vmatprep.subr.mxu0 0.0
        %10154 = vmatpush1.msra.mxu0 0.0
        %10155 = vmatprep.subr.mxu0 0.0
        %10156 = vmatpush1.msra.mxu0 0.0
        %10157 = vmatprep.subr.mxu0 0.0
        %10158 = vmatpush1.msra.mxu0 0.0
        %10159 = vmatprep.subr.mxu0 0.0
        %10160 = vmatpush1.msra.mxu0 0.0
        %10161 = vmatprep.mubr.f32.mxu0 0.0
        %10162 = vmatmul.mubr.f32.gmra.mrb[0].mxu0 %v10002
        %v10163 = vpop.f32.mrb[0].mxu0
        %v10164 = vadd.f32 0.0, %v10163
        %v10165 = vpop.f32.mrb[0].mxu0
        %10166 = vmatprep.mubr.f32.mxu0 0.0
        %10167 = vmatmul.mubr.f32.gmra.mrb[0].mxu0 %v10005
        %v10168 = vpop.f32.mrb[0].mxu0
        %v10169 = vadd.f32 0.0, %v10168
        %v10170 = vpop.f32.mrb[0].mxu0
        %10171 = vmatprep.mubr.f32.mxu0 0.0
        %10172 = vmatmul.mubr.f32.gmra.mrb[0].mxu0 %v10008
        %v10173 = vpop.f32.mrb[0].mxu0
        %v10174 = vadd.f32 0.0, %v10173
        %v10175 = vpop.f32.mrb[0].mxu0
        %10176 = vmatprep.mubr.f32.mxu0 0.0
        %10177 = vmatmul.mubr.f32.gmra.mrb[0].mxu0 %v10011
        %v10178 = vpop.f32.mrb[0].mxu0
        %v10179 = vadd.f32 0.0, %v10178
        %v10180 = vpop.f32.mrb[0].mxu0
        %10181 = vmatprep.mubr.f32.mxu0 0.0
        %10182 = vmatmul.mubr.f32.gmra.mrb[0].mxu0 %v10014
        %v10183 = vpop.f32.mrb[0].mxu0
        %v10184 = vadd.f32 0.0, %v10183
        %v10185 = vpop.f32.mrb[0].mxu0
        %10186 = vmatprep.mubr.f32.mxu0 0.0
        %10187 = vmatmul.mubr.f32.gmra.mrb[0].mxu0 %v10017
        %v10188 = vpop.f32.mrb[0].mxu0
        %v10189 = vadd.f32 0.0, %v10188
        %v10190 = vpop.f32.mrb[0].mxu0
        %10191 = vmatprep.mubr.f32.mxu0 0.0
        %10192 = vmatmul.mubr.f32.gmra.mrb[0].mxu0 %v10020
        %v10193 = vpop.f32.mrb[0].mxu0
        %v10194 = vadd.f32 0.0, %v10193
        %v10195 = vpop.f32.mrb[0].mxu0
        %10196 = vmatprep.mubr.f32.mxu0 0.0
        %10197 = vmatmul.mubr.f32.gmra.mrb[0].mxu0 %v10023
        %v10198 = vpop.f32.mrb[0].mxu0
        %v10199 = vadd.f32 0.0, %v10198
        %v10200 = vpop.f32.mrb[0].mxu0
        %10201 = vmatprep.mubr.f32.mxu0 0.0
        %10202 = vmatmul.mubr.f32.gmra.mrb[0].mxu0 %v10026
        %v10203 = vpop.f32.mrb[0].mxu0
        %v10204 = vadd.f32 0.0, %v10203
        %v10205 = vpop.f32.mrb[0].mxu0
        %10206 = vmatprep.mubr.f32.mxu0 0.0
        %10207 = vmatmul.mubr.f32.gmra.mrb[0].mxu0 %v10029
        %v10208 = vpop.f32.mrb[0].mxu0
        %v10209 = vadd.f32 0.0, %v10208
        %v10210 = vpop.f32.mrb[0].mxu0
        %10211 = vmatprep.mubr.f32.mxu0 0.0
        %10212 = vmatmul.mubr.f32.gmra.mrb[0].mxu0 %v10032
        %v10213 = vpop.f32.mrb[0].mxu0
        %v10214 = vadd.f32 0.0, %v10213
        %v10215 = vpop.f32.mrb[0].mxu0
        %10216 = vmatprep.mubr.f32.mxu0 0.0
        %10217 = vmatmul.mubr.f32.gmra.mrb[0].mxu0 %v10035
        %v10218 = vpop.f32.mrb[0].mxu0
        %v10219 = vadd.f32 0.0, %v10218
        %v10220 = vpop.f32.mrb[0].mxu0
        %10221 = vmatprep.mubr.f32.mxu0 0.0
        %10222 = vmatmul.mubr.f32.gmra.mrb[0].mxu0 %v10038
        %v10223 = vpop.f32.mrb[0].mxu0
        %v10224 = vadd.f32 0.0, %v10223
        %v10225 = vpop.f32.mrb[0].mxu0
        %10226 = vmatprep.mubr.f32.mxu0 0.0
        %10227 = vmatmul.mubr.f32.gmra.mrb[0].mxu0 %v10041
        %v10228 = vpop.f32.mrb[0].mxu0
        %v10229 = vadd.f32 0.0, %v10228
        %v10230 = vpop.f32.mrb[0].mxu0
        %10231 = vmatprep.mubr.f32.mxu0 0.0
        %10232 = vmatmul.mubr.f32.gmra.mrb[0].mxu0 %v10044
        %v10233 = vpop.f32.mrb[0].mxu0
        %v10234 = vadd.f32 0.0, %v10233
        %v10235 = vpop.f32.mrb[0].mxu0
        %10236 = vmatprep.mubr.f32.mxu0 0.0
        %10237 = vmatmul.mubr.f32.gmra.mrb[0].mxu0 %v10047
        %v10238 = vpop.f32.mrb[0].mxu0
        %v10239 = vadd.f32 0.0, %v10238
        %v10240 = vpop.f32.mrb[0].mxu0
        %10241 = vmatprep.mubr.f32.mxu0 0.0
        %10242 = vmatmul.mubr.f32.gmra.mrb[0].mxu0 %v10050
        %v10243 = vpop.f32.mrb[0].mxu0
        %v10244 = vadd.f32 0.0, %v10243
        %v10245 = vpop.f32.mrb[0].mxu0
        %10246 = vmatprep.mubr.f32.mxu0 0.0
        %10247 = vmatmul.mubr.f32.gmra.mrb[0].mxu0 %v10053
        %v10248 = vpop.f32.mrb[0].mxu0
        %v10249 = vadd.f32 0.0, %v10248
        %v10250 = vpop.f32.mrb[0].mxu0
        %10251 = vmatprep.mubr.f32.mxu0 0.0
        %10252 = vmatmul.mubr.f32.gmra.mrb[0].mxu0 %v10056
        %v10253 = vpop.f32.mrb[0].mxu0
        %v10254 = vadd.f32 0.0, %v10253
        %v10255 = vpop.f32.mrb[0].mxu0
        %10256 = vmatprep.mubr.f32.mxu0 0.0
        %10257 = vmatmul.mubr.f32.gmra.mrb[0].mxu0 %v10059
        %v10258 = vpop.f32.mrb[0].mxu0
        %v10259 = vadd.f32 0.0, %v10258
        %v10260 = vpop.f32.mrb[0].mxu0
        %10261 = vmatprep.mubr.f32.mxu0 0.0
        %10262 = vmatmul.mubr.f32.gmra.mrb[0].mxu0 %v10062
        %v10263 = vpop.f32.mrb[0].mxu0
        %v10264 = vadd.f32 0.0, %v10263
        %v10265 = vpop.f32.mrb[0].mxu0
        %10266 = vmatprep.mubr.f32.mxu0 0.0
        %10267 = vmatmul.mubr.f32.gmra.mrb[0].mxu0 %v10065
        %v10268 = vpop.f32.mrb[0].mxu0
        %v10269 = vadd.f32 0.0, %v10268
        %v10270 = vpop.f32.mrb[0].mxu0
        %10271 = vmatprep.mubr.f32.mxu0 0.0
        %10272 = vmatmul.mubr.f32.gmra.mrb[0].mxu0 %v10068
        %v10273 = vpop.f32.mrb[0].mxu0
        %v10274 = vadd.f32 0.0, %v10273
        %v10275 = vpop.f32.mrb[0].mxu0
        %10276 = vmatprep.mubr.f32.mxu0 0.0
        %10277 = vmatmul.mubr.f32.gmra.mrb[0].mxu0 %v10071
        %v10278 = vpop.f32.mrb[0].mxu0
        %v10279 = vadd.f32 0.0, %v10278
        %v10280 = vpop.f32.mrb[0].mxu0
        %10281 = vmatprep.mubr.f32.mxu0 0.0
        %10282 = vmatmul.mubr.f32.gmra.mrb[0].mxu0 %v10074
        %v10283 = vpop.f32.mrb[0].mxu0
        %v10284 = vadd.f32 0.0, %v10283
        %v10285 = vpop.f32.mrb[0].mxu0
        %10286 = vmatprep.mubr.f32.mxu0 0.0
        %10287 = vmatmul.mubr.f32.gmra.mrb[0].mxu0 %v10077
        %v10288 = vpop.f32.mrb[0].mxu0
        %v10289 = vadd.f32 0.0, %v10288
        %v10290 = vpop.f32.mrb[0].mxu0
        %10291 = vmatprep.mubr.f32.mxu0 0.0
        %10292 = vmatmul.mubr.f32.gmra.mrb[0].mxu0 %v10080
        %v10293 = vpop.f32.mrb[0].mxu0
        %v10294 = vadd.f32 0.0, %v10293
        %v10295 = vpop.f32.mrb[0].mxu0
        %10296 = vmatprep.mubr.f32.mxu0 0.0
        %10297 = vmatmul.mubr.f32.gmra.mrb[0].mxu0 %v10083
        %v10298 = vpop.f32.mrb[0].mxu0
        %v10299 = vadd.f32 0.0, %v10298
        %v10300 = vpop.f32.mrb[0].mxu0
        %10301 = vmatprep.mubr.f32.mxu0 0.0
        %10302 = vmatmul.mubr.f32.gmra.mrb[0].mxu0 %v10086
        %v10303 = vpop.f32.mrb[0].mxu0
        %v10304 = vadd.f32 0.0, %v10303
        %v10305 = vpop.f32.mrb[0].mxu0
        %10306 = vmatprep.mubr.f32.mxu0 0.0
        %10307 = vmatmul.mubr.f32.gmra.mrb[0].mxu0 %v10089
        %v10308 = vpop.f32.mrb[0].mxu0
        %v10309 = vadd.f32 0.0, %v10308
        %v10310 = vpop.f32.mrb[0].mxu0
        %10311 = vmatprep.mubr.f32.mxu0 0.0
        %10312 = vmatmul.mubr.f32.gmra.mrb[0].mxu0 %v10092
        %v10313 = vpop.f32.mrb[0].mxu0
        %v10314 = vadd.f32 0.0, %v10313
        %v10315 = vpop.f32.mrb[0].mxu0
        %10316 = vmatprep.mubr.f32.mxu0 0.0
        %10317 = vmatmul.mubr.f32.gmra.mrb[0].mxu0 %v10095
        %v10318 = vpop.f32.mrb[0].mxu0
        %v10319 = vadd.f32 0.0, %v10318
        %v10320 = vpop.f32.mrb[0].mxu0
        %10321 = vdwg.mxu0
        %v10322 = vadd.f32 %v9932, %v10164
        %v10323 = vadd.f32 %v9933, %v10169
        %v10324 = vadd.f32 %v9934, %v10174
        %v10325 = vadd.f32 %v9935, %v10179
        %v10326 = vadd.f32 %v9936, %v10184
        %v10327 = vadd.f32 %v9937, %v10189
        %v10328 = vadd.f32 %v9938, %v10194
        %v10329 = vadd.f32 %v9939, %v10199
        %v10330 = vadd.f32 %v9940, %v10204
        %v10331 = vadd.f32 %v9941, %v10209
        %v10332 = vadd.f32 %v9942, %v10214
        %v10333 = vadd.f32 %v9943, %v10219
        %v10334 = vadd.f32 %v9944, %v10224
        %v10335 = vadd.f32 %v9945, %v10229
        %v10336 = vadd.f32 %v9946, %v10234
        %v10337 = vadd.f32 %v9947, %v10239
        %v10338 = vadd.f32 %v9948, %v10244
        %v10339 = vadd.f32 %v9949, %v10249
        %v10340 = vadd.f32 %v9950, %v10254
        %v10341 = vadd.f32 %v9951, %v10259
        %v10342 = vadd.f32 %v9952, %v10264
        %v10343 = vadd.f32 %v9953, %v10269
        %v10344 = vadd.f32 %v9954, %v10274
        %v10345 = vadd.f32 %v9955, %v10279
        %v10346 = vadd.f32 %v9956, %v10284
        %v10347 = vadd.f32 %v9957, %v10289
        %v10348 = vadd.f32 %v9958, %v10294
        %v10349 = vadd.f32 %v9959, %v10299
        %v10350 = vadd.f32 %v9960, %v10304
        %v10351 = vadd.f32 %v9961, %v10309
        %v10352 = vadd.f32 %v9962, %v10314
        %v10353 = vadd.f32 %v9963, %v10319
        %s10354 = scalar_lea.vmem [#allocation3], 48
        %v10355 = vld [vmem:[%s10354] sm:$0xff]
        %v10356 = vld [vmem:[%s10354 + $0x8] sm:$0xff]
        %v10357 = vld [vmem:[%s10354 + $0x18] sm:$0xff]
        %v10358 = vld [vmem:[%s10354 + $0x20] sm:$0xff]
        %v10359 = vld [vmem:[%s10354 + $0x30] sm:$0xff]
        %v10360 = vld [vmem:[%s10354 + $0x38] sm:$0xff]
        %v10361 = vld [vmem:[%s10354 + $0x48] sm:$0xff]
        %v10362 = vld [vmem:[%s10354 + $0x50] sm:$0xff]
        %v10363 = vld [vmem:[%s10354 + $0x60] sm:$0xff]
        %v10364 = vld [vmem:[%s10354 + $0x68] sm:$0xff]
        %v10365 = vld [vmem:[%s10354 + $0x78] sm:$0xff]
        %v10366 = vld [vmem:[%s10354 + $0x80] sm:$0xff]
        %v10367 = vld [vmem:[%s10354 + $0x90] sm:$0xff]
        %v10368 = vld [vmem:[%s10354 + $0x98] sm:$0xff]
        %v10369 = vld [vmem:[%s10354 + $0xa8] sm:$0xff]
        %v10370 = vld [vmem:[%s10354 + $0xb0] sm:$0xff]
        %v10371 = vld [vmem:[%s10354 + $0xc0] sm:$0xff]
        %v10372 = vld [vmem:[%s10354 + $0xc8] sm:$0xff]
        %v10373 = vld [vmem:[%s10354 + $0xd8] sm:$0xff]
        %v10374 = vld [vmem:[%s10354 + $0xe0] sm:$0xff]
        %v10375 = vld [vmem:[%s10354 + $0xf0] sm:$0xff]
        %v10376 = vld [vmem:[%s10354 + $0xf8] sm:$0xff]
        %v10377 = vld [vmem:[%s10354 + $0x108] sm:$0xff]
        %v10378 = vld [vmem:[%s10354 + $0x110] sm:$0xff]
        %v10379 = vld [vmem:[%s10354 + $0x120] sm:$0xff]
        %v10380 = vld [vmem:[%s10354 + $0x128] sm:$0xff]
        %v10381 = vld [vmem:[%s10354 + $0x138] sm:$0xff]
        %v10382 = vld [vmem:[%s10354 + $0x140] sm:$0xff]
        %v10383 = vld [vmem:[%s10354 + $0x150] sm:$0xff]
        %v10384 = vld [vmem:[%s10354 + $0x158] sm:$0xff]
        %v10385 = vld [vmem:[%s10354 + $0x168] sm:$0xff]
        %v10386 = vld [vmem:[%s10354 + $0x170] sm:$0xff]
        %s10387 = scalar_lea.vmem %s5, 192
        %v10388 = vld [vmem:[%s10387] sm:$0xff]
        %v10389 = vld [vmem:[%s10387 + $0x8] sm:$0xff]
        %v10390 = vld [vmem:[%s10387 + $0x10] sm:$0xff]
        %v10391 = vld [vmem:[%s10387 + $0x18] sm:$0xff]
        %v10393 = vsel %vm897, %v10355, 0
        %v10396 = vsel %vm897, %v10356, 0
        %v10399 = vsel %vm897, %v10357, 0
        %v10402 = vsel %vm897, %v10358, 0
        %v10405 = vsel %vm897, %v10359, 0
        %v10408 = vsel %vm897, %v10360, 0
        %v10411 = vsel %vm897, %v10361, 0
        %v10414 = vsel %vm897, %v10362, 0
        %v10417 = vsel %vm897, %v10363, 0
        %v10420 = vsel %vm897, %v10364, 0
        %v10423 = vsel %vm897, %v10365, 0
        %v10426 = vsel %vm897, %v10366, 0
        %v10429 = vsel %vm897, %v10367, 0
        %v10432 = vsel %vm897, %v10368, 0
        %v10435 = vsel %vm897, %v10369, 0
        %v10438 = vsel %vm897, %v10370, 0
        %v10441 = vsel %vm897, %v10371, 0
        %v10444 = vsel %vm897, %v10372, 0
        %v10447 = vsel %vm897, %v10373, 0
        %v10450 = vsel %vm897, %v10374, 0
        %v10453 = vsel %vm897, %v10375, 0
        %v10456 = vsel %vm897, %v10376, 0
        %v10459 = vsel %vm897, %v10377, 0
        %v10462 = vsel %vm897, %v10378, 0
        %v10465 = vsel %vm897, %v10379, 0
        %v10468 = vsel %vm897, %v10380, 0
        %v10471 = vsel %vm897, %v10381, 0
        %v10474 = vsel %vm897, %v10382, 0
        %v10477 = vsel %vm897, %v10383, 0
        %v10480 = vsel %vm897, %v10384, 0
        %v10483 = vsel %vm897, %v10385, 0
        %v10486 = vsel %vm897, %v10386, 0
        %10488 = vmatprep.subr.mxu0 0.0
        %10489 = vmatpush1.msra.mxu0 %v10388
        %10490 = vmatprep.subr.mxu0 0.0
        %10491 = vmatpush1.msra.mxu0 %v10389
        %10492 = vmatprep.subr.mxu0 0.0
        %10493 = vmatpush1.msra.mxu0 %v10390
        %10494 = vmatprep.subr.mxu0 0.0
        %10495 = vmatpush1.msra.mxu0 %v10391
        %10496 = vmatprep.subr.mxu0 0.0
        %10497 = vmatpush1.msra.mxu0 0.0
        %10498 = vmatprep.subr.mxu0 0.0
        %10499 = vmatpush1.msra.mxu0 0.0
        %10500 = vmatprep.subr.mxu0 0.0
        %10501 = vmatpush1.msra.mxu0 0.0
        %10502 = vmatprep.subr.mxu0 0.0
        %10503 = vmatpush1.msra.mxu0 0.0
        %10504 = vmatprep.subr.mxu0 0.0
        %10505 = vmatpush1.msra.mxu0 0.0
        %10506 = vmatprep.subr.mxu0 0.0
        %10507 = vmatpush1.msra.mxu0 0.0
        %10508 = vmatprep.subr.mxu0 0.0
        %10509 = vmatpush1.msra.mxu0 0.0
        %10510 = vmatprep.subr.mxu0 0.0
        %10511 = vmatpush1.msra.mxu0 0.0
        %10512 = vmatprep.subr.mxu0 0.0
        %10513 = vmatpush1.msra.mxu0 0.0
        %10514 = vmatprep.subr.mxu0 0.0
        %10515 = vmatpush1.msra.mxu0 0.0
        %10516 = vmatprep.subr.mxu0 0.0
        %10517 = vmatpush1.msra.mxu0 0.0
        %10518 = vmatprep.subr.mxu0 0.0
        %10519 = vmatpush1.msra.mxu0 0.0
        %10520 = vmatprep.subr.mxu0 0.0
        %10521 = vmatpush1.msra.mxu0 0.0
        %10522 = vmatprep.subr.mxu0 0.0
        %10523 = vmatpush1.msra.mxu0 0.0
        %10524 = vmatprep.subr.mxu0 0.0
        %10525 = vmatpush1.msra.mxu0 0.0
        %10526 = vmatprep.subr.mxu0 0.0
        %10527 = vmatpush1.msra.mxu0 0.0
        %10528 = vmatprep.subr.mxu0 0.0
        %10529 = vmatpush1.msra.mxu0 0.0
        %10530 = vmatprep.subr.mxu0 0.0
        %10531 = vmatpush1.msra.mxu0 0.0
        %10532 = vmatprep.subr.mxu0 0.0
        %10533 = vmatpush1.msra.mxu0 0.0
        %10534 = vmatprep.subr.mxu0 0.0
        %10535 = vmatpush1.msra.mxu0 0.0
        %10536 = vmatprep.subr.mxu0 0.0
        %10537 = vmatpush1.msra.mxu0 0.0
        %10538 = vmatprep.subr.mxu0 0.0
        %10539 = vmatpush1.msra.mxu0 0.0
        %10540 = vmatprep.subr.mxu0 0.0
        %10541 = vmatpush1.msra.mxu0 0.0
        %10542 = vmatprep.subr.mxu0 0.0
        %10543 = vmatpush1.msra.mxu0 0.0
        %10544 = vmatprep.subr.mxu0 0.0
        %10545 = vmatpush1.msra.mxu0 0.0
        %10546 = vmatprep.subr.mxu0 0.0
        %10547 = vmatpush1.msra.mxu0 0.0
        %10548 = vmatprep.subr.mxu0 0.0
        %10549 = vmatpush1.msra.mxu0 0.0
        %10550 = vmatprep.subr.mxu0 0.0
        %10551 = vmatpush1.msra.mxu0 0.0
        %10552 = vmatprep.mubr.f32.mxu0 0.0
        %10553 = vmatmul.mubr.f32.gmra.mrb[0].mxu0 %v10393
        %v10554 = vpop.f32.mrb[0].mxu0
        %v10555 = vadd.f32 0.0, %v10554
        %v10556 = vpop.f32.mrb[0].mxu0
        %10557 = vmatprep.mubr.f32.mxu0 0.0
        %10558 = vmatmul.mubr.f32.gmra.mrb[0].mxu0 %v10396
        %v10559 = vpop.f32.mrb[0].mxu0
        %v10560 = vadd.f32 0.0, %v10559
        %v10561 = vpop.f32.mrb[0].mxu0
        %10562 = vmatprep.mubr.f32.mxu0 0.0
        %10563 = vmatmul.mubr.f32.gmra.mrb[0].mxu0 %v10399
        %v10564 = vpop.f32.mrb[0].mxu0
        %v10565 = vadd.f32 0.0, %v10564
        %v10566 = vpop.f32.mrb[0].mxu0
        %10567 = vmatprep.mubr.f32.mxu0 0.0
        %10568 = vmatmul.mubr.f32.gmra.mrb[0].mxu0 %v10402
        %v10569 = vpop.f32.mrb[0].mxu0
        %v10570 = vadd.f32 0.0, %v10569
        %v10571 = vpop.f32.mrb[0].mxu0
        %10572 = vmatprep.mubr.f32.mxu0 0.0
        %10573 = vmatmul.mubr.f32.gmra.mrb[0].mxu0 %v10405
        %v10574 = vpop.f32.mrb[0].mxu0
        %v10575 = vadd.f32 0.0, %v10574
        %v10576 = vpop.f32.mrb[0].mxu0
        %10577 = vmatprep.mubr.f32.mxu0 0.0
        %10578 = vmatmul.mubr.f32.gmra.mrb[0].mxu0 %v10408
        %v10579 = vpop.f32.mrb[0].mxu0
        %v10580 = vadd.f32 0.0, %v10579
        %v10581 = vpop.f32.mrb[0].mxu0
        %10582 = vmatprep.mubr.f32.mxu0 0.0
        %10583 = vmatmul.mubr.f32.gmra.mrb[0].mxu0 %v10411
        %v10584 = vpop.f32.mrb[0].mxu0
        %v10585 = vadd.f32 0.0, %v10584
        %v10586 = vpop.f32.mrb[0].mxu0
        %10587 = vmatprep.mubr.f32.mxu0 0.0
        %10588 = vmatmul.mubr.f32.gmra.mrb[0].mxu0 %v10414
        %v10589 = vpop.f32.mrb[0].mxu0
        %v10590 = vadd.f32 0.0, %v10589
        %v10591 = vpop.f32.mrb[0].mxu0
        %10592 = vmatprep.mubr.f32.mxu0 0.0
        %10593 = vmatmul.mubr.f32.gmra.mrb[0].mxu0 %v10417
        %v10594 = vpop.f32.mrb[0].mxu0
        %v10595 = vadd.f32 0.0, %v10594
        %v10596 = vpop.f32.mrb[0].mxu0
        %10597 = vmatprep.mubr.f32.mxu0 0.0
        %10598 = vmatmul.mubr.f32.gmra.mrb[0].mxu0 %v10420
        %v10599 = vpop.f32.mrb[0].mxu0
        %v10600 = vadd.f32 0.0, %v10599
        %v10601 = vpop.f32.mrb[0].mxu0
        %10602 = vmatprep.mubr.f32.mxu0 0.0
        %10603 = vmatmul.mubr.f32.gmra.mrb[0].mxu0 %v10423
        %v10604 = vpop.f32.mrb[0].mxu0
        %v10605 = vadd.f32 0.0, %v10604
        %v10606 = vpop.f32.mrb[0].mxu0
        %10607 = vmatprep.mubr.f32.mxu0 0.0
        %10608 = vmatmul.mubr.f32.gmra.mrb[0].mxu0 %v10426
        %v10609 = vpop.f32.mrb[0].mxu0
        %v10610 = vadd.f32 0.0, %v10609
        %v10611 = vpop.f32.mrb[0].mxu0
        %10612 = vmatprep.mubr.f32.mxu0 0.0
        %10613 = vmatmul.mubr.f32.gmra.mrb[0].mxu0 %v10429
        %v10614 = vpop.f32.mrb[0].mxu0
        %v10615 = vadd.f32 0.0, %v10614
        %v10616 = vpop.f32.mrb[0].mxu0
        %10617 = vmatprep.mubr.f32.mxu0 0.0
        %10618 = vmatmul.mubr.f32.gmra.mrb[0].mxu0 %v10432
        %v10619 = vpop.f32.mrb[0].mxu0
        %v10620 = vadd.f32 0.0, %v10619
        %v10621 = vpop.f32.mrb[0].mxu0
        %10622 = vmatprep.mubr.f32.mxu0 0.0
        %10623 = vmatmul.mubr.f32.gmra.mrb[0].mxu0 %v10435
        %v10624 = vpop.f32.mrb[0].mxu0
        %v10625 = vadd.f32 0.0, %v10624
        %v10626 = vpop.f32.mrb[0].mxu0
        %10627 = vmatprep.mubr.f32.mxu0 0.0
        %10628 = vmatmul.mubr.f32.gmra.mrb[0].mxu0 %v10438
        %v10629 = vpop.f32.mrb[0].mxu0
        %v10630 = vadd.f32 0.0, %v10629
        %v10631 = vpop.f32.mrb[0].mxu0
        %10632 = vmatprep.mubr.f32.mxu0 0.0
        %10633 = vmatmul.mubr.f32.gmra.mrb[0].mxu0 %v10441
        %v10634 = vpop.f32.mrb[0].mxu0
        %v10635 = vadd.f32 0.0, %v10634
        %v10636 = vpop.f32.mrb[0].mxu0
        %10637 = vmatprep.mubr.f32.mxu0 0.0
        %10638 = vmatmul.mubr.f32.gmra.mrb[0].mxu0 %v10444
        %v10639 = vpop.f32.mrb[0].mxu0
        %v10640 = vadd.f32 0.0, %v10639
        %v10641 = vpop.f32.mrb[0].mxu0
        %10642 = vmatprep.mubr.f32.mxu0 0.0
        %10643 = vmatmul.mubr.f32.gmra.mrb[0].mxu0 %v10447
        %v10644 = vpop.f32.mrb[0].mxu0
        %v10645 = vadd.f32 0.0, %v10644
        %v10646 = vpop.f32.mrb[0].mxu0
        %10647 = vmatprep.mubr.f32.mxu0 0.0
        %10648 = vmatmul.mubr.f32.gmra.mrb[0].mxu0 %v10450
        %v10649 = vpop.f32.mrb[0].mxu0
        %v10650 = vadd.f32 0.0, %v10649
        %v10651 = vpop.f32.mrb[0].mxu0
        %10652 = vmatprep.mubr.f32.mxu0 0.0
        %10653 = vmatmul.mubr.f32.gmra.mrb[0].mxu0 %v10453
        %v10654 = vpop.f32.mrb[0].mxu0
        %v10655 = vadd.f32 0.0, %v10654
        %v10656 = vpop.f32.mrb[0].mxu0
        %10657 = vmatprep.mubr.f32.mxu0 0.0
        %10658 = vmatmul.mubr.f32.gmra.mrb[0].mxu0 %v10456
        %v10659 = vpop.f32.mrb[0].mxu0
        %v10660 = vadd.f32 0.0, %v10659
        %v10661 = vpop.f32.mrb[0].mxu0
        %10662 = vmatprep.mubr.f32.mxu0 0.0
        %10663 = vmatmul.mubr.f32.gmra.mrb[0].mxu0 %v10459
        %v10664 = vpop.f32.mrb[0].mxu0
        %v10665 = vadd.f32 0.0, %v10664
        %v10666 = vpop.f32.mrb[0].mxu0
        %10667 = vmatprep.mubr.f32.mxu0 0.0
        %10668 = vmatmul.mubr.f32.gmra.mrb[0].mxu0 %v10462
        %v10669 = vpop.f32.mrb[0].mxu0
        %v10670 = vadd.f32 0.0, %v10669
        %v10671 = vpop.f32.mrb[0].mxu0
        %10672 = vmatprep.mubr.f32.mxu0 0.0
        %10673 = vmatmul.mubr.f32.gmra.mrb[0].mxu0 %v10465
        %v10674 = vpop.f32.mrb[0].mxu0
        %v10675 = vadd.f32 0.0, %v10674
        %v10676 = vpop.f32.mrb[0].mxu0
        %10677 = vmatprep.mubr.f32.mxu0 0.0
        %10678 = vmatmul.mubr.f32.gmra.mrb[0].mxu0 %v10468
        %v10679 = vpop.f32.mrb[0].mxu0
        %v10680 = vadd.f32 0.0, %v10679
        %v10681 = vpop.f32.mrb[0].mxu0
        %10682 = vmatprep.mubr.f32.mxu0 0.0
        %10683 = vmatmul.mubr.f32.gmra.mrb[0].mxu0 %v10471
        %v10684 = vpop.f32.mrb[0].mxu0
        %v10685 = vadd.f32 0.0, %v10684
        %v10686 = vpop.f32.mrb[0].mxu0
        %10687 = vmatprep.mubr.f32.mxu0 0.0
        %10688 = vmatmul.mubr.f32.gmra.mrb[0].mxu0 %v10474
        %v10689 = vpop.f32.mrb[0].mxu0
        %v10690 = vadd.f32 0.0, %v10689
        %v10691 = vpop.f32.mrb[0].mxu0
        %10692 = vmatprep.mubr.f32.mxu0 0.0
        %10693 = vmatmul.mubr.f32.gmra.mrb[0].mxu0 %v10477
        %v10694 = vpop.f32.mrb[0].mxu0
        %v10695 = vadd.f32 0.0, %v10694
        %v10696 = vpop.f32.mrb[0].mxu0
        %10697 = vmatprep.mubr.f32.mxu0 0.0
        %10698 = vmatmul.mubr.f32.gmra.mrb[0].mxu0 %v10480
        %v10699 = vpop.f32.mrb[0].mxu0
        %v10700 = vadd.f32 0.0, %v10699
        %v10701 = vpop.f32.mrb[0].mxu0
        %10702 = vmatprep.mubr.f32.mxu0 0.0
        %10703 = vmatmul.mubr.f32.gmra.mrb[0].mxu0 %v10483
        %v10704 = vpop.f32.mrb[0].mxu0
        %v10705 = vadd.f32 0.0, %v10704
        %v10706 = vpop.f32.mrb[0].mxu0
        %10707 = vmatprep.mubr.f32.mxu0 0.0
        %10708 = vmatmul.mubr.f32.gmra.mrb[0].mxu0 %v10486
        %v10709 = vpop.f32.mrb[0].mxu0
        %v10710 = vadd.f32 0.0, %v10709
        %v10711 = vpop.f32.mrb[0].mxu0
        %10712 = vdwg.mxu0
        %v10713 = vadd.f32 %v10322, %v10555
        %v10714 = vadd.f32 %v10323, %v10560
        %v10715 = vadd.f32 %v10324, %v10565
        %v10716 = vadd.f32 %v10325, %v10570
        %v10717 = vadd.f32 %v10326, %v10575
        %v10718 = vadd.f32 %v10327, %v10580
        %v10719 = vadd.f32 %v10328, %v10585
        %v10720 = vadd.f32 %v10329, %v10590
        %v10721 = vadd.f32 %v10330, %v10595
        %v10722 = vadd.f32 %v10331, %v10600
        %v10723 = vadd.f32 %v10332, %v10605
        %v10724 = vadd.f32 %v10333, %v10610
        %v10725 = vadd.f32 %v10334, %v10615
        %v10726 = vadd.f32 %v10335, %v10620
        %v10727 = vadd.f32 %v10336, %v10625
        %v10728 = vadd.f32 %v10337, %v10630
        %v10729 = vadd.f32 %v10338, %v10635
        %v10730 = vadd.f32 %v10339, %v10640
        %v10731 = vadd.f32 %v10340, %v10645
        %v10732 = vadd.f32 %v10341, %v10650
        %v10733 = vadd.f32 %v10342, %v10655
        %v10734 = vadd.f32 %v10343, %v10660
        %v10735 = vadd.f32 %v10344, %v10665
        %v10736 = vadd.f32 %v10345, %v10670
        %v10737 = vadd.f32 %v10346, %v10675
        %v10738 = vadd.f32 %v10347, %v10680
        %v10739 = vadd.f32 %v10348, %v10685
        %v10740 = vadd.f32 %v10349, %v10690
        %v10741 = vadd.f32 %v10350, %v10695
        %v10742 = vadd.f32 %v10351, %v10700
        %v10743 = vadd.f32 %v10352, %v10705
        %v10744 = vadd.f32 %v10353, %v10710
        %v10745 = vld [vmem:[%s10354 + $0x1] sm:$0xff]
        %v10746 = vld [vmem:[%s10354 + $0x9] sm:$0xff]
        %v10747 = vld [vmem:[%s10354 + $0x19] sm:$0xff]
        %v10748 = vld [vmem:[%s10354 + $0x21] sm:$0xff]
        %v10749 = vld [vmem:[%s10354 + $0x31] sm:$0xff]
        %v10750 = vld [vmem:[%s10354 + $0x39] sm:$0xff]
        %v10751 = vld [vmem:[%s10354 + $0x49] sm:$0xff]
        %v10752 = vld [vmem:[%s10354 + $0x51] sm:$0xff]
        %v10753 = vld [vmem:[%s10354 + $0x61] sm:$0xff]
        %v10754 = vld [vmem:[%s10354 + $0x69] sm:$0xff]
        %v10755 = vld [vmem:[%s10354 + $0x79] sm:$0xff]
        %v10756 = vld [vmem:[%s10354 + $0x81] sm:$0xff]
        %v10757 = vld [vmem:[%s10354 + $0x91] sm:$0xff]
        %v10758 = vld [vmem:[%s10354 + $0x99] sm:$0xff]
        %v10759 = vld [vmem:[%s10354 + $0xa9] sm:$0xff]
        %v10760 = vld [vmem:[%s10354 + $0xb1] sm:$0xff]
        %v10761 = vld [vmem:[%s10354 + $0xc1] sm:$0xff]
        %v10762 = vld [vmem:[%s10354 + $0xc9] sm:$0xff]
        %v10763 = vld [vmem:[%s10354 + $0xd9] sm:$0xff]
        %v10764 = vld [vmem:[%s10354 + $0xe1] sm:$0xff]
        %v10765 = vld [vmem:[%s10354 + $0xf1] sm:$0xff]
        %v10766 = vld [vmem:[%s10354 + $0xf9] sm:$0xff]
        %v10767 = vld [vmem:[%s10354 + $0x109] sm:$0xff]
        %v10768 = vld [vmem:[%s10354 + $0x111] sm:$0xff]
        %v10769 = vld [vmem:[%s10354 + $0x121] sm:$0xff]
        %v10770 = vld [vmem:[%s10354 + $0x129] sm:$0xff]
        %v10771 = vld [vmem:[%s10354 + $0x139] sm:$0xff]
        %v10772 = vld [vmem:[%s10354 + $0x141] sm:$0xff]
        %v10773 = vld [vmem:[%s10354 + $0x151] sm:$0xff]
        %v10774 = vld [vmem:[%s10354 + $0x159] sm:$0xff]
        %v10775 = vld [vmem:[%s10354 + $0x169] sm:$0xff]
        %v10776 = vld [vmem:[%s10354 + $0x171] sm:$0xff]
        %s10777 = scalar_lea.vmem %s5, 224
        %v10778 = vld [vmem:[%s10777] sm:$0xff]
        %v10779 = vld [vmem:[%s10777 + $0x8] sm:$0xff]
        %v10780 = vld [vmem:[%s10777 + $0x10] sm:$0xff]
        %v10781 = vld [vmem:[%s10777 + $0x18] sm:$0xff]
        %v10783 = vsel %vm897, %v10745, 0
        %v10786 = vsel %vm897, %v10746, 0
        %v10789 = vsel %vm897, %v10747, 0
        %v10792 = vsel %vm897, %v10748, 0
        %v10795 = vsel %vm897, %v10749, 0
        %v10798 = vsel %vm897, %v10750, 0
        %v10801 = vsel %vm897, %v10751, 0
        %v10804 = vsel %vm897, %v10752, 0
        %v10807 = vsel %vm897, %v10753, 0
        %v10810 = vsel %vm897, %v10754, 0
        %v10813 = vsel %vm897, %v10755, 0
        %v10816 = vsel %vm897, %v10756, 0
        %v10819 = vsel %vm897, %v10757, 0
        %v10822 = vsel %vm897, %v10758, 0
        %v10825 = vsel %vm897, %v10759, 0
        %v10828 = vsel %vm897, %v10760, 0
        %v10831 = vsel %vm897, %v10761, 0
        %v10834 = vsel %vm897, %v10762, 0
        %v10837 = vsel %vm897, %v10763, 0
        %v10840 = vsel %vm897, %v10764, 0
        %v10843 = vsel %vm897, %v10765, 0
        %v10846 = vsel %vm897, %v10766, 0
        %v10849 = vsel %vm897, %v10767, 0
        %v10852 = vsel %vm897, %v10768, 0
        %v10855 = vsel %vm897, %v10769, 0
        %v10858 = vsel %vm897, %v10770, 0
        %v10861 = vsel %vm897, %v10771, 0
        %v10864 = vsel %vm897, %v10772, 0
        %v10867 = vsel %vm897, %v10773, 0
        %v10870 = vsel %vm897, %v10774, 0
        %v10873 = vsel %vm897, %v10775, 0
        %v10876 = vsel %vm897, %v10776, 0
        %10878 = vmatprep.subr.mxu0 0.0
        %10879 = vmatpush1.msra.mxu0 %v10778
        %10880 = vmatprep.subr.mxu0 0.0
        %10881 = vmatpush1.msra.mxu0 %v10779
        %10882 = vmatprep.subr.mxu0 0.0
        %10883 = vmatpush1.msra.mxu0 %v10780
        %10884 = vmatprep.subr.mxu0 0.0
        %10885 = vmatpush1.msra.mxu0 %v10781
        %10886 = vmatprep.subr.mxu0 0.0
        %10887 = vmatpush1.msra.mxu0 0.0
        %10888 = vmatprep.subr.mxu0 0.0
        %10889 = vmatpush1.msra.mxu0 0.0
        %10890 = vmatprep.subr.mxu0 0.0
        %10891 = vmatpush1.msra.mxu0 0.0
        %10892 = vmatprep.subr.mxu0 0.0
        %10893 = vmatpush1.msra.mxu0 0.0
        %10894 = vmatprep.subr.mxu0 0.0
        %10895 = vmatpush1.msra.mxu0 0.0
        %10896 = vmatprep.subr.mxu0 0.0
        %10897 = vmatpush1.msra.mxu0 0.0
        %10898 = vmatprep.subr.mxu0 0.0
        %10899 = vmatpush1.msra.mxu0 0.0
        %10900 = vmatprep.subr.mxu0 0.0
        %10901 = vmatpush1.msra.mxu0 0.0
        %10902 = vmatprep.subr.mxu0 0.0
        %10903 = vmatpush1.msra.mxu0 0.0
        %10904 = vmatprep.subr.mxu0 0.0
        %10905 = vmatpush1.msra.mxu0 0.0
        %10906 = vmatprep.subr.mxu0 0.0
        %10907 = vmatpush1.msra.mxu0 0.0
        %10908 = vmatprep.subr.mxu0 0.0
        %10909 = vmatpush1.msra.mxu0 0.0
        %10910 = vmatprep.subr.mxu0 0.0
        %10911 = vmatpush1.msra.mxu0 0.0
        %10912 = vmatprep.subr.mxu0 0.0
        %10913 = vmatpush1.msra.mxu0 0.0
        %10914 = vmatprep.subr.mxu0 0.0
        %10915 = vmatpush1.msra.mxu0 0.0
        %10916 = vmatprep.subr.mxu0 0.0
        %10917 = vmatpush1.msra.mxu0 0.0
        %10918 = vmatprep.subr.mxu0 0.0
        %10919 = vmatpush1.msra.mxu0 0.0
        %10920 = vmatprep.subr.mxu0 0.0
        %10921 = vmatpush1.msra.mxu0 0.0
        %10922 = vmatprep.subr.mxu0 0.0
        %10923 = vmatpush1.msra.mxu0 0.0
        %10924 = vmatprep.subr.mxu0 0.0
        %10925 = vmatpush1.msra.mxu0 0.0
        %10926 = vmatprep.subr.mxu0 0.0
        %10927 = vmatpush1.msra.mxu0 0.0
        %10928 = vmatprep.subr.mxu0 0.0
        %10929 = vmatpush1.msra.mxu0 0.0
        %10930 = vmatprep.subr.mxu0 0.0
        %10931 = vmatpush1.msra.mxu0 0.0
        %10932 = vmatprep.subr.mxu0 0.0
        %10933 = vmatpush1.msra.mxu0 0.0
        %10934 = vmatprep.subr.mxu0 0.0
        %10935 = vmatpush1.msra.mxu0 0.0
        %10936 = vmatprep.subr.mxu0 0.0
        %10937 = vmatpush1.msra.mxu0 0.0
        %10938 = vmatprep.subr.mxu0 0.0
        %10939 = vmatpush1.msra.mxu0 0.0
        %10940 = vmatprep.subr.mxu0 0.0
        %10941 = vmatpush1.msra.mxu0 0.0
        %10942 = vmatprep.mubr.f32.mxu0 0.0
        %10943 = vmatmul.mubr.f32.gmra.mrb[0].mxu0 %v10783
        %v10944 = vpop.f32.mrb[0].mxu0
        %v10945 = vadd.f32 0.0, %v10944
        %v10946 = vpop.f32.mrb[0].mxu0
        %10947 = vmatprep.mubr.f32.mxu0 0.0
        %10948 = vmatmul.mubr.f32.gmra.mrb[0].mxu0 %v10786
        %v10949 = vpop.f32.mrb[0].mxu0
        %v10950 = vadd.f32 0.0, %v10949
        %v10951 = vpop.f32.mrb[0].mxu0
        %10952 = vmatprep.mubr.f32.mxu0 0.0
        %10953 = vmatmul.mubr.f32.gmra.mrb[0].mxu0 %v10789
        %v10954 = vpop.f32.mrb[0].mxu0
        %v10955 = vadd.f32 0.0, %v10954
        %v10956 = vpop.f32.mrb[0].mxu0
        %10957 = vmatprep.mubr.f32.mxu0 0.0
        %10958 = vmatmul.mubr.f32.gmra.mrb[0].mxu0 %v10792
        %v10959 = vpop.f32.mrb[0].mxu0
        %v10960 = vadd.f32 0.0, %v10959
        %v10961 = vpop.f32.mrb[0].mxu0
        %10962 = vmatprep.mubr.f32.mxu0 0.0
        %10963 = vmatmul.mubr.f32.gmra.mrb[0].mxu0 %v10795
        %v10964 = vpop.f32.mrb[0].mxu0
        %v10965 = vadd.f32 0.0, %v10964
        %v10966 = vpop.f32.mrb[0].mxu0
        %10967 = vmatprep.mubr.f32.mxu0 0.0
        %10968 = vmatmul.mubr.f32.gmra.mrb[0].mxu0 %v10798
        %v10969 = vpop.f32.mrb[0].mxu0
        %v10970 = vadd.f32 0.0, %v10969
        %v10971 = vpop.f32.mrb[0].mxu0
        %10972 = vmatprep.mubr.f32.mxu0 0.0
        %10973 = vmatmul.mubr.f32.gmra.mrb[0].mxu0 %v10801
        %v10974 = vpop.f32.mrb[0].mxu0
        %v10975 = vadd.f32 0.0, %v10974
        %v10976 = vpop.f32.mrb[0].mxu0
        %10977 = vmatprep.mubr.f32.mxu0 0.0
        %10978 = vmatmul.mubr.f32.gmra.mrb[0].mxu0 %v10804
        %v10979 = vpop.f32.mrb[0].mxu0
        %v10980 = vadd.f32 0.0, %v10979
        %v10981 = vpop.f32.mrb[0].mxu0
        %10982 = vmatprep.mubr.f32.mxu0 0.0
        %10983 = vmatmul.mubr.f32.gmra.mrb[0].mxu0 %v10807
        %v10984 = vpop.f32.mrb[0].mxu0
        %v10985 = vadd.f32 0.0, %v10984
        %v10986 = vpop.f32.mrb[0].mxu0
        %10987 = vmatprep.mubr.f32.mxu0 0.0
        %10988 = vmatmul.mubr.f32.gmra.mrb[0].mxu0 %v10810
        %v10989 = vpop.f32.mrb[0].mxu0
        %v10990 = vadd.f32 0.0, %v10989
        %v10991 = vpop.f32.mrb[0].mxu0
        %10992 = vmatprep.mubr.f32.mxu0 0.0
        %10993 = vmatmul.mubr.f32.gmra.mrb[0].mxu0 %v10813
        %v10994 = vpop.f32.mrb[0].mxu0
        %v10995 = vadd.f32 0.0, %v10994
        %v10996 = vpop.f32.mrb[0].mxu0
        %10997 = vmatprep.mubr.f32.mxu0 0.0
        %10998 = vmatmul.mubr.f32.gmra.mrb[0].mxu0 %v10816
        %v10999 = vpop.f32.mrb[0].mxu0
        %v11000 = vadd.f32 0.0, %v10999
        %v11001 = vpop.f32.mrb[0].mxu0
        %11002 = vmatprep.mubr.f32.mxu0 0.0
        %11003 = vmatmul.mubr.f32.gmra.mrb[0].mxu0 %v10819
        %v11004 = vpop.f32.mrb[0].mxu0
        %v11005 = vadd.f32 0.0, %v11004
        %v11006 = vpop.f32.mrb[0].mxu0
        %11007 = vmatprep.mubr.f32.mxu0 0.0
        %11008 = vmatmul.mubr.f32.gmra.mrb[0].mxu0 %v10822
        %v11009 = vpop.f32.mrb[0].mxu0
        %v11010 = vadd.f32 0.0, %v11009
        %v11011 = vpop.f32.mrb[0].mxu0
        %11012 = vmatprep.mubr.f32.mxu0 0.0
        %11013 = vmatmul.mubr.f32.gmra.mrb[0].mxu0 %v10825
        %v11014 = vpop.f32.mrb[0].mxu0
        %v11015 = vadd.f32 0.0, %v11014
        %v11016 = vpop.f32.mrb[0].mxu0
        %11017 = vmatprep.mubr.f32.mxu0 0.0
        %11018 = vmatmul.mubr.f32.gmra.mrb[0].mxu0 %v10828
        %v11019 = vpop.f32.mrb[0].mxu0
        %v11020 = vadd.f32 0.0, %v11019
        %v11021 = vpop.f32.mrb[0].mxu0
        %11022 = vmatprep.mubr.f32.mxu0 0.0
        %11023 = vmatmul.mubr.f32.gmra.mrb[0].mxu0 %v10831
        %v11024 = vpop.f32.mrb[0].mxu0
        %v11025 = vadd.f32 0.0, %v11024
        %v11026 = vpop.f32.mrb[0].mxu0
        %11027 = vmatprep.mubr.f32.mxu0 0.0
        %11028 = vmatmul.mubr.f32.gmra.mrb[0].mxu0 %v10834
        %v11029 = vpop.f32.mrb[0].mxu0
        %v11030 = vadd.f32 0.0, %v11029
        %v11031 = vpop.f32.mrb[0].mxu0
        %11032 = vmatprep.mubr.f32.mxu0 0.0
        %11033 = vmatmul.mubr.f32.gmra.mrb[0].mxu0 %v10837
        %v11034 = vpop.f32.mrb[0].mxu0
        %v11035 = vadd.f32 0.0, %v11034
        %v11036 = vpop.f32.mrb[0].mxu0
        %11037 = vmatprep.mubr.f32.mxu0 0.0
        %11038 = vmatmul.mubr.f32.gmra.mrb[0].mxu0 %v10840
        %v11039 = vpop.f32.mrb[0].mxu0
        %v11040 = vadd.f32 0.0, %v11039
        %v11041 = vpop.f32.mrb[0].mxu0
        %11042 = vmatprep.mubr.f32.mxu0 0.0
        %11043 = vmatmul.mubr.f32.gmra.mrb[0].mxu0 %v10843
        %v11044 = vpop.f32.mrb[0].mxu0
        %v11045 = vadd.f32 0.0, %v11044
        %v11046 = vpop.f32.mrb[0].mxu0
        %11047 = vmatprep.mubr.f32.mxu0 0.0
        %11048 = vmatmul.mubr.f32.gmra.mrb[0].mxu0 %v10846
        %v11049 = vpop.f32.mrb[0].mxu0
        %v11050 = vadd.f32 0.0, %v11049
        %v11051 = vpop.f32.mrb[0].mxu0
        %11052 = vmatprep.mubr.f32.mxu0 0.0
        %11053 = vmatmul.mubr.f32.gmra.mrb[0].mxu0 %v10849
        %v11054 = vpop.f32.mrb[0].mxu0
        %v11055 = vadd.f32 0.0, %v11054
        %v11056 = vpop.f32.mrb[0].mxu0
        %11057 = vmatprep.mubr.f32.mxu0 0.0
        %11058 = vmatmul.mubr.f32.gmra.mrb[0].mxu0 %v10852
        %v11059 = vpop.f32.mrb[0].mxu0
        %v11060 = vadd.f32 0.0, %v11059
        %v11061 = vpop.f32.mrb[0].mxu0
        %11062 = vmatprep.mubr.f32.mxu0 0.0
        %11063 = vmatmul.mubr.f32.gmra.mrb[0].mxu0 %v10855
        %v11064 = vpop.f32.mrb[0].mxu0
        %v11065 = vadd.f32 0.0, %v11064
        %v11066 = vpop.f32.mrb[0].mxu0
        %11067 = vmatprep.mubr.f32.mxu0 0.0
        %11068 = vmatmul.mubr.f32.gmra.mrb[0].mxu0 %v10858
        %v11069 = vpop.f32.mrb[0].mxu0
        %v11070 = vadd.f32 0.0, %v11069
        %v11071 = vpop.f32.mrb[0].mxu0
        %11072 = vmatprep.mubr.f32.mxu0 0.0
        %11073 = vmatmul.mubr.f32.gmra.mrb[0].mxu0 %v10861
        %v11074 = vpop.f32.mrb[0].mxu0
        %v11075 = vadd.f32 0.0, %v11074
        %v11076 = vpop.f32.mrb[0].mxu0
        %11077 = vmatprep.mubr.f32.mxu0 0.0
        %11078 = vmatmul.mubr.f32.gmra.mrb[0].mxu0 %v10864
        %v11079 = vpop.f32.mrb[0].mxu0
        %v11080 = vadd.f32 0.0, %v11079
        %v11081 = vpop.f32.mrb[0].mxu0
        %11082 = vmatprep.mubr.f32.mxu0 0.0
        %11083 = vmatmul.mubr.f32.gmra.mrb[0].mxu0 %v10867
        %v11084 = vpop.f32.mrb[0].mxu0
        %v11085 = vadd.f32 0.0, %v11084
        %v11086 = vpop.f32.mrb[0].mxu0
        %11087 = vmatprep.mubr.f32.mxu0 0.0
        %11088 = vmatmul.mubr.f32.gmra.mrb[0].mxu0 %v10870
        %v11089 = vpop.f32.mrb[0].mxu0
        %v11090 = vadd.f32 0.0, %v11089
        %v11091 = vpop.f32.mrb[0].mxu0
        %11092 = vmatprep.mubr.f32.mxu0 0.0
        %11093 = vmatmul.mubr.f32.gmra.mrb[0].mxu0 %v10873
        %v11094 = vpop.f32.mrb[0].mxu0
        %v11095 = vadd.f32 0.0, %v11094
        %v11096 = vpop.f32.mrb[0].mxu0
        %11097 = vmatprep.mubr.f32.mxu0 0.0
        %11098 = vmatmul.mubr.f32.gmra.mrb[0].mxu0 %v10876
        %v11099 = vpop.f32.mrb[0].mxu0
        %v11100 = vadd.f32 0.0, %v11099
        %v11101 = vpop.f32.mrb[0].mxu0
        %11102 = vdwg.mxu0
        %v11103 = vadd.f32 %v10713, %v10945
        %v11104 = vadd.f32 %v10714, %v10950
        %v11105 = vadd.f32 %v10715, %v10955
        %v11106 = vadd.f32 %v10716, %v10960
        %v11107 = vadd.f32 %v10717, %v10965
        %v11108 = vadd.f32 %v10718, %v10970
        %v11109 = vadd.f32 %v10719, %v10975
        %v11110 = vadd.f32 %v10720, %v10980
        %v11111 = vadd.f32 %v10721, %v10985
        %v11112 = vadd.f32 %v10722, %v10990
        %v11113 = vadd.f32 %v10723, %v10995
        %v11114 = vadd.f32 %v10724, %v11000
        %v11115 = vadd.f32 %v10725, %v11005
        %v11116 = vadd.f32 %v10726, %v11010
        %v11117 = vadd.f32 %v10727, %v11015
        %v11118 = vadd.f32 %v10728, %v11020
        %v11119 = vadd.f32 %v10729, %v11025
        %v11120 = vadd.f32 %v10730, %v11030
        %v11121 = vadd.f32 %v10731, %v11035
        %v11122 = vadd.f32 %v10732, %v11040
        %v11123 = vadd.f32 %v10733, %v11045
        %v11124 = vadd.f32 %v10734, %v11050
        %v11125 = vadd.f32 %v10735, %v11055
        %v11126 = vadd.f32 %v10736, %v11060
        %v11127 = vadd.f32 %v10737, %v11065
        %v11128 = vadd.f32 %v10738, %v11070
        %v11129 = vadd.f32 %v10739, %v11075
        %v11130 = vadd.f32 %v10740, %v11080
        %v11131 = vadd.f32 %v10741, %v11085
        %v11132 = vadd.f32 %v10742, %v11090
        %v11133 = vadd.f32 %v10743, %v11095
        %v11134 = vadd.f32 %v10744, %v11100
        %v11135 = vld [vmem:[%s10354 + $0x2] sm:$0xff]
        %v11136 = vld [vmem:[%s10354 + $0xa] sm:$0xff]
        %v11137 = vld [vmem:[%s10354 + $0x1a] sm:$0xff]
        %v11138 = vld [vmem:[%s10354 + $0x22] sm:$0xff]
        %v11139 = vld [vmem:[%s10354 + $0x32] sm:$0xff]
        %v11140 = vld [vmem:[%s10354 + $0x3a] sm:$0xff]
        %v11141 = vld [vmem:[%s10354 + $0x4a] sm:$0xff]
        %v11142 = vld [vmem:[%s10354 + $0x52] sm:$0xff]
        %v11143 = vld [vmem:[%s10354 + $0x62] sm:$0xff]
        %v11144 = vld [vmem:[%s10354 + $0x6a] sm:$0xff]
        %v11145 = vld [vmem:[%s10354 + $0x7a] sm:$0xff]
        %v11146 = vld [vmem:[%s10354 + $0x82] sm:$0xff]
        %v11147 = vld [vmem:[%s10354 + $0x92] sm:$0xff]
        %v11148 = vld [vmem:[%s10354 + $0x9a] sm:$0xff]
        %v11149 = vld [vmem:[%s10354 + $0xaa] sm:$0xff]
        %v11150 = vld [vmem:[%s10354 + $0xb2] sm:$0xff]
        %v11151 = vld [vmem:[%s10354 + $0xc2] sm:$0xff]
        %v11152 = vld [vmem:[%s10354 + $0xca] sm:$0xff]
        %v11153 = vld [vmem:[%s10354 + $0xda] sm:$0xff]
        %v11154 = vld [vmem:[%s10354 + $0xe2] sm:$0xff]
        %v11155 = vld [vmem:[%s10354 + $0xf2] sm:$0xff]
        %v11156 = vld [vmem:[%s10354 + $0xfa] sm:$0xff]
        %v11157 = vld [vmem:[%s10354 + $0x10a] sm:$0xff]
        %v11158 = vld [vmem:[%s10354 + $0x112] sm:$0xff]
        %v11159 = vld [vmem:[%s10354 + $0x122] sm:$0xff]
        %v11160 = vld [vmem:[%s10354 + $0x12a] sm:$0xff]
        %v11161 = vld [vmem:[%s10354 + $0x13a] sm:$0xff]
        %v11162 = vld [vmem:[%s10354 + $0x142] sm:$0xff]
        %v11163 = vld [vmem:[%s10354 + $0x152] sm:$0xff]
        %v11164 = vld [vmem:[%s10354 + $0x15a] sm:$0xff]
        %v11165 = vld [vmem:[%s10354 + $0x16a] sm:$0xff]
        %v11166 = vld [vmem:[%s10354 + $0x172] sm:$0xff]
        %s11167 = scalar_lea.vmem %s5, 256
        %v11168 = vld [vmem:[%s11167] sm:$0xff]
        %v11169 = vld [vmem:[%s11167 + $0x8] sm:$0xff]
        %v11170 = vld [vmem:[%s11167 + $0x10] sm:$0xff]
        %v11171 = vld [vmem:[%s11167 + $0x18] sm:$0xff]
        %v11173 = vsel %vm897, %v11135, 0
        %v11176 = vsel %vm897, %v11136, 0
        %v11179 = vsel %vm897, %v11137, 0
        %v11182 = vsel %vm897, %v11138, 0
        %v11185 = vsel %vm897, %v11139, 0
        %v11188 = vsel %vm897, %v11140, 0
        %v11191 = vsel %vm897, %v11141, 0
        %v11194 = vsel %vm897, %v11142, 0
        %v11197 = vsel %vm897, %v11143, 0
        %v11200 = vsel %vm897, %v11144, 0
        %v11203 = vsel %vm897, %v11145, 0
        %v11206 = vsel %vm897, %v11146, 0
        %v11209 = vsel %vm897, %v11147, 0
        %v11212 = vsel %vm897, %v11148, 0
        %v11215 = vsel %vm897, %v11149, 0
        %v11218 = vsel %vm897, %v11150, 0
        %v11221 = vsel %vm897, %v11151, 0
        %v11224 = vsel %vm897, %v11152, 0
        %v11227 = vsel %vm897, %v11153, 0
        %v11230 = vsel %vm897, %v11154, 0
        %v11233 = vsel %vm897, %v11155, 0
        %v11236 = vsel %vm897, %v11156, 0
        %v11239 = vsel %vm897, %v11157, 0
        %v11242 = vsel %vm897, %v11158, 0
        %v11245 = vsel %vm897, %v11159, 0
        %v11248 = vsel %vm897, %v11160, 0
        %v11251 = vsel %vm897, %v11161, 0
        %v11254 = vsel %vm897, %v11162, 0
        %v11257 = vsel %vm897, %v11163, 0
        %v11260 = vsel %vm897, %v11164, 0
        %v11263 = vsel %vm897, %v11165, 0
        %v11266 = vsel %vm897, %v11166, 0
        %11268 = vmatprep.subr.mxu0 0.0
        %11269 = vmatpush1.msra.mxu0 %v11168
        %11270 = vmatprep.subr.mxu0 0.0
        %11271 = vmatpush1.msra.mxu0 %v11169
        %11272 = vmatprep.subr.mxu0 0.0
        %11273 = vmatpush1.msra.mxu0 %v11170
        %11274 = vmatprep.subr.mxu0 0.0
        %11275 = vmatpush1.msra.mxu0 %v11171
        %11276 = vmatprep.subr.mxu0 0.0
        %11277 = vmatpush1.msra.mxu0 0.0
        %11278 = vmatprep.subr.mxu0 0.0
        %11279 = vmatpush1.msra.mxu0 0.0
        %11280 = vmatprep.subr.mxu0 0.0
        %11281 = vmatpush1.msra.mxu0 0.0
        %11282 = vmatprep.subr.mxu0 0.0
        %11283 = vmatpush1.msra.mxu0 0.0
        %11284 = vmatprep.subr.mxu0 0.0
        %11285 = vmatpush1.msra.mxu0 0.0
        %11286 = vmatprep.subr.mxu0 0.0
        %11287 = vmatpush1.msra.mxu0 0.0
        %11288 = vmatprep.subr.mxu0 0.0
        %11289 = vmatpush1.msra.mxu0 0.0
        %11290 = vmatprep.subr.mxu0 0.0
        %11291 = vmatpush1.msra.mxu0 0.0
        %11292 = vmatprep.subr.mxu0 0.0
        %11293 = vmatpush1.msra.mxu0 0.0
        %11294 = vmatprep.subr.mxu0 0.0
        %11295 = vmatpush1.msra.mxu0 0.0
        %11296 = vmatprep.subr.mxu0 0.0
        %11297 = vmatpush1.msra.mxu0 0.0
        %11298 = vmatprep.subr.mxu0 0.0
        %11299 = vmatpush1.msra.mxu0 0.0
        %11300 = vmatprep.subr.mxu0 0.0
        %11301 = vmatpush1.msra.mxu0 0.0
        %11302 = vmatprep.subr.mxu0 0.0
        %11303 = vmatpush1.msra.mxu0 0.0
        %11304 = vmatprep.subr.mxu0 0.0
        %11305 = vmatpush1.msra.mxu0 0.0
        %11306 = vmatprep.subr.mxu0 0.0
        %11307 = vmatpush1.msra.mxu0 0.0
        %11308 = vmatprep.subr.mxu0 0.0
        %11309 = vmatpush1.msra.mxu0 0.0
        %11310 = vmatprep.subr.mxu0 0.0
        %11311 = vmatpush1.msra.mxu0 0.0
        %11312 = vmatprep.subr.mxu0 0.0
        %11313 = vmatpush1.msra.mxu0 0.0
        %11314 = vmatprep.subr.mxu0 0.0
        %11315 = vmatpush1.msra.mxu0 0.0
        %11316 = vmatprep.subr.mxu0 0.0
        %11317 = vmatpush1.msra.mxu0 0.0
        %11318 = vmatprep.subr.mxu0 0.0
        %11319 = vmatpush1.msra.mxu0 0.0
        %11320 = vmatprep.subr.mxu0 0.0
        %11321 = vmatpush1.msra.mxu0 0.0
        %11322 = vmatprep.subr.mxu0 0.0
        %11323 = vmatpush1.msra.mxu0 0.0
        %11324 = vmatprep.subr.mxu0 0.0
        %11325 = vmatpush1.msra.mxu0 0.0
        %11326 = vmatprep.subr.mxu0 0.0
        %11327 = vmatpush1.msra.mxu0 0.0
        %11328 = vmatprep.subr.mxu0 0.0
        %11329 = vmatpush1.msra.mxu0 0.0
        %11330 = vmatprep.subr.mxu0 0.0
        %11331 = vmatpush1.msra.mxu0 0.0
        %11332 = vmatprep.mubr.f32.mxu0 0.0
        %11333 = vmatmul.mubr.f32.gmra.mrb[0].mxu0 %v11173
        %v11334 = vpop.f32.mrb[0].mxu0
        %v11335 = vadd.f32 0.0, %v11334
        %v11336 = vpop.f32.mrb[0].mxu0
        %11337 = vmatprep.mubr.f32.mxu0 0.0
        %11338 = vmatmul.mubr.f32.gmra.mrb[0].mxu0 %v11176
        %v11339 = vpop.f32.mrb[0].mxu0
        %v11340 = vadd.f32 0.0, %v11339
        %v11341 = vpop.f32.mrb[0].mxu0
        %11342 = vmatprep.mubr.f32.mxu0 0.0
        %11343 = vmatmul.mubr.f32.gmra.mrb[0].mxu0 %v11179
        %v11344 = vpop.f32.mrb[0].mxu0
        %v11345 = vadd.f32 0.0, %v11344
        %v11346 = vpop.f32.mrb[0].mxu0
        %11347 = vmatprep.mubr.f32.mxu0 0.0
        %11348 = vmatmul.mubr.f32.gmra.mrb[0].mxu0 %v11182
        %v11349 = vpop.f32.mrb[0].mxu0
        %v11350 = vadd.f32 0.0, %v11349
        %v11351 = vpop.f32.mrb[0].mxu0
        %11352 = vmatprep.mubr.f32.mxu0 0.0
        %11353 = vmatmul.mubr.f32.gmra.mrb[0].mxu0 %v11185
        %v11354 = vpop.f32.mrb[0].mxu0
        %v11355 = vadd.f32 0.0, %v11354
        %v11356 = vpop.f32.mrb[0].mxu0
        %11357 = vmatprep.mubr.f32.mxu0 0.0
        %11358 = vmatmul.mubr.f32.gmra.mrb[0].mxu0 %v11188
        %v11359 = vpop.f32.mrb[0].mxu0
        %v11360 = vadd.f32 0.0, %v11359
        %v11361 = vpop.f32.mrb[0].mxu0
        %11362 = vmatprep.mubr.f32.mxu0 0.0
        %11363 = vmatmul.mubr.f32.gmra.mrb[0].mxu0 %v11191
        %v11364 = vpop.f32.mrb[0].mxu0
        %v11365 = vadd.f32 0.0, %v11364
        %v11366 = vpop.f32.mrb[0].mxu0
        %11367 = vmatprep.mubr.f32.mxu0 0.0
        %11368 = vmatmul.mubr.f32.gmra.mrb[0].mxu0 %v11194
        %v11369 = vpop.f32.mrb[0].mxu0
        %v11370 = vadd.f32 0.0, %v11369
        %v11371 = vpop.f32.mrb[0].mxu0
        %11372 = vmatprep.mubr.f32.mxu0 0.0
        %11373 = vmatmul.mubr.f32.gmra.mrb[0].mxu0 %v11197
        %v11374 = vpop.f32.mrb[0].mxu0
        %v11375 = vadd.f32 0.0, %v11374
        %v11376 = vpop.f32.mrb[0].mxu0
        %11377 = vmatprep.mubr.f32.mxu0 0.0
        %11378 = vmatmul.mubr.f32.gmra.mrb[0].mxu0 %v11200
        %v11379 = vpop.f32.mrb[0].mxu0
        %v11380 = vadd.f32 0.0, %v11379
        %v11381 = vpop.f32.mrb[0].mxu0
        %11382 = vmatprep.mubr.f32.mxu0 0.0
        %11383 = vmatmul.mubr.f32.gmra.mrb[0].mxu0 %v11203
        %v11384 = vpop.f32.mrb[0].mxu0
        %v11385 = vadd.f32 0.0, %v11384
        %v11386 = vpop.f32.mrb[0].mxu0
        %11387 = vmatprep.mubr.f32.mxu0 0.0
        %11388 = vmatmul.mubr.f32.gmra.mrb[0].mxu0 %v11206
        %v11389 = vpop.f32.mrb[0].mxu0
        %v11390 = vadd.f32 0.0, %v11389
        %v11391 = vpop.f32.mrb[0].mxu0
        %11392 = vmatprep.mubr.f32.mxu0 0.0
        %11393 = vmatmul.mubr.f32.gmra.mrb[0].mxu0 %v11209
        %v11394 = vpop.f32.mrb[0].mxu0
        %v11395 = vadd.f32 0.0, %v11394
        %v11396 = vpop.f32.mrb[0].mxu0
        %11397 = vmatprep.mubr.f32.mxu0 0.0
        %11398 = vmatmul.mubr.f32.gmra.mrb[0].mxu0 %v11212
        %v11399 = vpop.f32.mrb[0].mxu0
        %v11400 = vadd.f32 0.0, %v11399
        %v11401 = vpop.f32.mrb[0].mxu0
        %11402 = vmatprep.mubr.f32.mxu0 0.0
        %11403 = vmatmul.mubr.f32.gmra.mrb[0].mxu0 %v11215
        %v11404 = vpop.f32.mrb[0].mxu0
        %v11405 = vadd.f32 0.0, %v11404
        %v11406 = vpop.f32.mrb[0].mxu0
        %11407 = vmatprep.mubr.f32.mxu0 0.0
        %11408 = vmatmul.mubr.f32.gmra.mrb[0].mxu0 %v11218
        %v11409 = vpop.f32.mrb[0].mxu0
        %v11410 = vadd.f32 0.0, %v11409
        %v11411 = vpop.f32.mrb[0].mxu0
        %11412 = vmatprep.mubr.f32.mxu0 0.0
        %11413 = vmatmul.mubr.f32.gmra.mrb[0].mxu0 %v11221
        %v11414 = vpop.f32.mrb[0].mxu0
        %v11415 = vadd.f32 0.0, %v11414
        %v11416 = vpop.f32.mrb[0].mxu0
        %11417 = vmatprep.mubr.f32.mxu0 0.0
        %11418 = vmatmul.mubr.f32.gmra.mrb[0].mxu0 %v11224
        %v11419 = vpop.f32.mrb[0].mxu0
        %v11420 = vadd.f32 0.0, %v11419
        %v11421 = vpop.f32.mrb[0].mxu0
        %11422 = vmatprep.mubr.f32.mxu0 0.0
        %11423 = vmatmul.mubr.f32.gmra.mrb[0].mxu0 %v11227
        %v11424 = vpop.f32.mrb[0].mxu0
        %v11425 = vadd.f32 0.0, %v11424
        %v11426 = vpop.f32.mrb[0].mxu0
        %11427 = vmatprep.mubr.f32.mxu0 0.0
        %11428 = vmatmul.mubr.f32.gmra.mrb[0].mxu0 %v11230
        %v11429 = vpop.f32.mrb[0].mxu0
        %v11430 = vadd.f32 0.0, %v11429
        %v11431 = vpop.f32.mrb[0].mxu0
        %11432 = vmatprep.mubr.f32.mxu0 0.0
        %11433 = vmatmul.mubr.f32.gmra.mrb[0].mxu0 %v11233
        %v11434 = vpop.f32.mrb[0].mxu0
        %v11435 = vadd.f32 0.0, %v11434
        %v11436 = vpop.f32.mrb[0].mxu0
        %11437 = vmatprep.mubr.f32.mxu0 0.0
        %11438 = vmatmul.mubr.f32.gmra.mrb[0].mxu0 %v11236
        %v11439 = vpop.f32.mrb[0].mxu0
        %v11440 = vadd.f32 0.0, %v11439
        %v11441 = vpop.f32.mrb[0].mxu0
        %11442 = vmatprep.mubr.f32.mxu0 0.0
        %11443 = vmatmul.mubr.f32.gmra.mrb[0].mxu0 %v11239
        %v11444 = vpop.f32.mrb[0].mxu0
        %v11445 = vadd.f32 0.0, %v11444
        %v11446 = vpop.f32.mrb[0].mxu0
        %11447 = vmatprep.mubr.f32.mxu0 0.0
        %11448 = vmatmul.mubr.f32.gmra.mrb[0].mxu0 %v11242
        %v11449 = vpop.f32.mrb[0].mxu0
        %v11450 = vadd.f32 0.0, %v11449
        %v11451 = vpop.f32.mrb[0].mxu0
        %11452 = vmatprep.mubr.f32.mxu0 0.0
        %11453 = vmatmul.mubr.f32.gmra.mrb[0].mxu0 %v11245
        %v11454 = vpop.f32.mrb[0].mxu0
        %v11455 = vadd.f32 0.0, %v11454
        %v11456 = vpop.f32.mrb[0].mxu0
        %11457 = vmatprep.mubr.f32.mxu0 0.0
        %11458 = vmatmul.mubr.f32.gmra.mrb[0].mxu0 %v11248
        %v11459 = vpop.f32.mrb[0].mxu0
        %v11460 = vadd.f32 0.0, %v11459
        %v11461 = vpop.f32.mrb[0].mxu0
        %11462 = vmatprep.mubr.f32.mxu0 0.0
        %11463 = vmatmul.mubr.f32.gmra.mrb[0].mxu0 %v11251
        %v11464 = vpop.f32.mrb[0].mxu0
        %v11465 = vadd.f32 0.0, %v11464
        %v11466 = vpop.f32.mrb[0].mxu0
        %11467 = vmatprep.mubr.f32.mxu0 0.0
        %11468 = vmatmul.mubr.f32.gmra.mrb[0].mxu0 %v11254
        %v11469 = vpop.f32.mrb[0].mxu0
        %v11470 = vadd.f32 0.0, %v11469
        %v11471 = vpop.f32.mrb[0].mxu0
        %11472 = vmatprep.mubr.f32.mxu0 0.0
        %11473 = vmatmul.mubr.f32.gmra.mrb[0].mxu0 %v11257
        %v11474 = vpop.f32.mrb[0].mxu0
        %v11475 = vadd.f32 0.0, %v11474
        %v11476 = vpop.f32.mrb[0].mxu0
        %11477 = vmatprep.mubr.f32.mxu0 0.0
        %11478 = vmatmul.mubr.f32.gmra.mrb[0].mxu0 %v11260
        %v11479 = vpop.f32.mrb[0].mxu0
        %v11480 = vadd.f32 0.0, %v11479
        %v11481 = vpop.f32.mrb[0].mxu0
        %11482 = vmatprep.mubr.f32.mxu0 0.0
        %11483 = vmatmul.mubr.f32.gmra.mrb[0].mxu0 %v11263
        %v11484 = vpop.f32.mrb[0].mxu0
        %v11485 = vadd.f32 0.0, %v11484
        %v11486 = vpop.f32.mrb[0].mxu0
        %11487 = vmatprep.mubr.f32.mxu0 0.0
        %11488 = vmatmul.mubr.f32.gmra.mrb[0].mxu0 %v11266
        %v11489 = vpop.f32.mrb[0].mxu0
        %v11490 = vadd.f32 0.0, %v11489
        %v11491 = vpop.f32.mrb[0].mxu0
        %11492 = vdwg.mxu0
        %v11493 = vadd.f32 %v11103, %v11335
        %v11494 = vadd.f32 %v11104, %v11340
        %v11495 = vadd.f32 %v11105, %v11345
        %v11496 = vadd.f32 %v11106, %v11350
        %v11497 = vadd.f32 %v11107, %v11355
        %v11498 = vadd.f32 %v11108, %v11360
        %v11499 = vadd.f32 %v11109, %v11365
        %v11500 = vadd.f32 %v11110, %v11370
        %v11501 = vadd.f32 %v11111, %v11375
        %v11502 = vadd.f32 %v11112, %v11380
        %v11503 = vadd.f32 %v11113, %v11385
        %v11504 = vadd.f32 %v11114, %v11390
        %v11505 = vadd.f32 %v11115, %v11395
        %v11506 = vadd.f32 %v11116, %v11400
        %v11507 = vadd.f32 %v11117, %v11405
        %v11508 = vadd.f32 %v11118, %v11410
        %v11509 = vadd.f32 %v11119, %v11415
        %v11510 = vadd.f32 %v11120, %v11420
        %v11511 = vadd.f32 %v11121, %v11425
        %v11512 = vadd.f32 %v11122, %v11430
        %v11513 = vadd.f32 %v11123, %v11435
        %v11514 = vadd.f32 %v11124, %v11440
        %v11515 = vadd.f32 %v11125, %v11445
        %v11516 = vadd.f32 %v11126, %v11450
        %v11517 = vadd.f32 %v11127, %v11455
        %v11518 = vadd.f32 %v11128, %v11460
        %v11519 = vadd.f32 %v11129, %v11465
        %v11520 = vadd.f32 %v11130, %v11470
        %v11521 = vadd.f32 %v11131, %v11475
        %v11522 = vadd.f32 %v11132, %v11480
        %v11523 = vadd.f32 %v11133, %v11485
        %v11524 = vadd.f32 %v11134, %v11490
        %v11525 = vlaneseq
        %v11526 = vshrl.u32 %v11525, 7
        %v11527 = vsub.s32 2, %v11526
        %v11528 = vrot.slane %v7822, %v11527
        %v11529 = vadd.f32 %v11493, %v11528
        %v11530 = vadd.f32 %v11494, %v11528
        %v11531 = vadd.f32 %v11495, %v11528
        %v11532 = vadd.f32 %v11496, %v11528
        %v11533 = vadd.f32 %v11497, %v11528
        %v11534 = vadd.f32 %v11498, %v11528
        %v11535 = vadd.f32 %v11499, %v11528
        %v11536 = vadd.f32 %v11500, %v11528
        %v11537 = vadd.f32 %v11501, %v11528
        %v11538 = vadd.f32 %v11502, %v11528
        %v11539 = vadd.f32 %v11503, %v11528
        %v11540 = vadd.f32 %v11504, %v11528
        %v11541 = vadd.f32 %v11505, %v11528
        %v11542 = vadd.f32 %v11506, %v11528
        %v11543 = vadd.f32 %v11507, %v11528
        %v11544 = vadd.f32 %v11508, %v11528
        %v11545 = vadd.f32 %v11509, %v11528
        %v11546 = vadd.f32 %v11510, %v11528
        %v11547 = vadd.f32 %v11511, %v11528
        %v11548 = vadd.f32 %v11512, %v11528
        %v11549 = vadd.f32 %v11513, %v11528
        %v11550 = vadd.f32 %v11514, %v11528
        %v11551 = vadd.f32 %v11515, %v11528
        %v11552 = vadd.f32 %v11516, %v11528
        %v11553 = vadd.f32 %v11517, %v11528
        %v11554 = vadd.f32 %v11518, %v11528
        %v11555 = vadd.f32 %v11519, %v11528
        %v11556 = vadd.f32 %v11520, %v11528
        %v11557 = vadd.f32 %v11521, %v11528
        %v11558 = vadd.f32 %v11522, %v11528
        %v11559 = vadd.f32 %v11523, %v11528
        %v11560 = vadd.f32 %v11524, %v11528
        %vm11561 = vcmp.gt.f32.partialorder %v11529, 0.0
        %vm11562 = vcmp.gt.f32.partialorder %v11530, 0.0
        %vm11563 = vcmp.gt.f32.partialorder %v11531, 0.0
        %vm11564 = vcmp.gt.f32.partialorder %v11532, 0.0
        %vm11565 = vcmp.gt.f32.partialorder %v11533, 0.0
        %vm11566 = vcmp.gt.f32.partialorder %v11534, 0.0
        %vm11567 = vcmp.gt.f32.partialorder %v11535, 0.0
        %vm11568 = vcmp.gt.f32.partialorder %v11536, 0.0
        %vm11569 = vcmp.gt.f32.partialorder %v11537, 0.0
        %vm11570 = vcmp.gt.f32.partialorder %v11538, 0.0
        %vm11571 = vcmp.gt.f32.partialorder %v11539, 0.0
        %vm11572 = vcmp.gt.f32.partialorder %v11540, 0.0
        %vm11573 = vcmp.gt.f32.partialorder %v11541, 0.0
        %vm11574 = vcmp.gt.f32.partialorder %v11542, 0.0
        %vm11575 = vcmp.gt.f32.partialorder %v11543, 0.0
        %vm11576 = vcmp.gt.f32.partialorder %v11544, 0.0
        %vm11577 = vcmp.gt.f32.partialorder %v11545, 0.0
        %vm11578 = vcmp.gt.f32.partialorder %v11546, 0.0
        %vm11579 = vcmp.gt.f32.partialorder %v11547, 0.0
        %vm11580 = vcmp.gt.f32.partialorder %v11548, 0.0
        %vm11581 = vcmp.gt.f32.partialorder %v11549, 0.0
        %vm11582 = vcmp.gt.f32.partialorder %v11550, 0.0
        %vm11583 = vcmp.gt.f32.partialorder %v11551, 0.0
        %vm11584 = vcmp.gt.f32.partialorder %v11552, 0.0
        %vm11585 = vcmp.gt.f32.partialorder %v11553, 0.0
        %vm11586 = vcmp.gt.f32.partialorder %v11554, 0.0
        %vm11587 = vcmp.gt.f32.partialorder %v11555, 0.0
        %vm11588 = vcmp.gt.f32.partialorder %v11556, 0.0
        %vm11589 = vcmp.gt.f32.partialorder %v11557, 0.0
        %vm11590 = vcmp.gt.f32.partialorder %v11558, 0.0
        %vm11591 = vcmp.gt.f32.partialorder %v11559, 0.0
        %vm11592 = vcmp.gt.f32.partialorder %v11560, 0.0
        %v11593 = vlaneseq
        %v11594 = vshrl.u32 %v11593, 7
        %v11595 = vsub.s32 3, %v11594
        %v11596 = vrot.slane %v7822, %v11595
        %v11597 = vmul.f32 %v11596, %v11529
        %v11598 = vmul.f32 %v11596, %v11530
        %v11599 = vmul.f32 %v11596, %v11531
        %v11600 = vmul.f32 %v11596, %v11532
        %v11601 = vmul.f32 %v11596, %v11533
        %v11602 = vmul.f32 %v11596, %v11534
        %v11603 = vmul.f32 %v11596, %v11535
        %v11604 = vmul.f32 %v11596, %v11536
        %v11605 = vmul.f32 %v11596, %v11537
        %v11606 = vmul.f32 %v11596, %v11538
        %v11607 = vmul.f32 %v11596, %v11539
        %v11608 = vmul.f32 %v11596, %v11540
        %v11609 = vmul.f32 %v11596, %v11541
        %v11610 = vmul.f32 %v11596, %v11542
        %v11611 = vmul.f32 %v11596, %v11543
        %v11612 = vmul.f32 %v11596, %v11544
        %v11613 = vmul.f32 %v11596, %v11545
        %v11614 = vmul.f32 %v11596, %v11546
        %v11615 = vmul.f32 %v11596, %v11547
        %v11616 = vmul.f32 %v11596, %v11548
        %v11617 = vmul.f32 %v11596, %v11549
        %v11618 = vmul.f32 %v11596, %v11550
        %v11619 = vmul.f32 %v11596, %v11551
        %v11620 = vmul.f32 %v11596, %v11552
        %v11621 = vmul.f32 %v11596, %v11553
        %v11622 = vmul.f32 %v11596, %v11554
        %v11623 = vmul.f32 %v11596, %v11555
        %v11624 = vmul.f32 %v11596, %v11556
        %v11625 = vmul.f32 %v11596, %v11557
        %v11626 = vmul.f32 %v11596, %v11558
        %v11627 = vmul.f32 %v11596, %v11559
        %v11628 = vmul.f32 %v11596, %v11560
        %v11629 = vsel %vm11561, %v11529, %v11597
        %v11630 = vsel %vm11562, %v11530, %v11598
        %v11631 = vsel %vm11563, %v11531, %v11599
        %v11632 = vsel %vm11564, %v11532, %v11600
        %v11633 = vsel %vm11565, %v11533, %v11601
        %v11634 = vsel %vm11566, %v11534, %v11602
        %v11635 = vsel %vm11567, %v11535, %v11603
        %v11636 = vsel %vm11568, %v11536, %v11604
        %v11637 = vsel %vm11569, %v11537, %v11605
        %v11638 = vsel %vm11570, %v11538, %v11606
        %v11639 = vsel %vm11571, %v11539, %v11607
        %v11640 = vsel %vm11572, %v11540, %v11608
        %v11641 = vsel %vm11573, %v11541, %v11609
        %v11642 = vsel %vm11574, %v11542, %v11610
        %v11643 = vsel %vm11575, %v11543, %v11611
        %v11644 = vsel %vm11576, %v11544, %v11612
        %v11645 = vsel %vm11577, %v11545, %v11613
        %v11646 = vsel %vm11578, %v11546, %v11614
        %v11647 = vsel %vm11579, %v11547, %v11615
        %v11648 = vsel %vm11580, %v11548, %v11616
        %v11649 = vsel %vm11581, %v11549, %v11617
        %v11650 = vsel %vm11582, %v11550, %v11618
        %v11651 = vsel %vm11583, %v11551, %v11619
        %v11652 = vsel %vm11584, %v11552, %v11620
        %v11653 = vsel %vm11585, %v11553, %v11621
        %v11654 = vsel %vm11586, %v11554, %v11622
        %v11655 = vsel %vm11587, %v11555, %v11623
        %v11656 = vsel %vm11588, %v11556, %v11624
        %v11657 = vsel %vm11589, %v11557, %v11625
        %v11658 = vsel %vm11590, %v11558, %v11626
        %v11659 = vsel %vm11591, %v11559, %v11627
        %v11660 = vsel %vm11592, %v11560, %v11628
        %11661 = vxpose.xlu0.b32.start [1/16] %v11629, 128
        %11662 = vxpose.xlu0.b32.cont [2/16] %v11630, 128
        %11663 = vxpose.xlu0.b32.cont [3/16] %v11631, 128
        %11664 = vxpose.xlu0.b32.cont [4/16] %v11632, 128
        %11665 = vxpose.xlu0.b32.cont [5/16] %v11633, 128
        %11666 = vxpose.xlu0.b32.cont [6/16] %v11634, 128
        %11667 = vxpose.xlu0.b32.cont [7/16] %v11635, 128
        %11668 = vxpose.xlu0.b32.cont [8/16] %v11636, 128
        %11669 = vxpose.xlu0.b32.cont [9/16] %v11637, 128
        %11670 = vxpose.xlu0.b32.cont [10/16] %v11638, 128
        %11671 = vxpose.xlu0.b32.cont [11/16] %v11639, 128
        %11672 = vxpose.xlu0.b32.cont [12/16] %v11640, 128
        %11673 = vxpose.xlu0.b32.cont [13/16] %v11641, 128
        %11674 = vxpose.xlu0.b32.cont [14/16] %v11642, 128
        %11675 = vxpose.xlu0.b32.cont [15/16] %v11643, 128
        %11676 = vxpose.xlu0.b32.end [16/16] %v11644, 128
        %v11677 = vpop.trf.xlu0
        %v11678 = vpop.trf.xlu0
        %v11679 = vpop.trf.xlu0
        %v11680 = vpop.trf.xlu0
        %v11681 = vpop.trf.xlu0
        %v11682 = vpop.trf.xlu0
        %v11683 = vpop.trf.xlu0
        %v11684 = vpop.trf.xlu0
        %v11685 = vpop.trf.xlu0
        %v11686 = vpop.trf.xlu0
        %v11687 = vpop.trf.xlu0
        %v11688 = vpop.trf.xlu0
        %v11689 = vpop.trf.xlu0
        %v11690 = vpop.trf.xlu0
        %v11691 = vpop.trf.xlu0
        %v11692 = vpop.trf.xlu0
        %11693 = vxpose.xlu0.b32.start [1/16] %v11645, 128
        %11694 = vxpose.xlu0.b32.cont [2/16] %v11646, 128
        %11695 = vxpose.xlu0.b32.cont [3/16] %v11647, 128
        %11696 = vxpose.xlu0.b32.cont [4/16] %v11648, 128
        %11697 = vxpose.xlu0.b32.cont [5/16] %v11649, 128
        %11698 = vxpose.xlu0.b32.cont [6/16] %v11650, 128
        %11699 = vxpose.xlu0.b32.cont [7/16] %v11651, 128
        %11700 = vxpose.xlu0.b32.cont [8/16] %v11652, 128
        %11701 = vxpose.xlu0.b32.cont [9/16] %v11653, 128
        %11702 = vxpose.xlu0.b32.cont [10/16] %v11654, 128
        %11703 = vxpose.xlu0.b32.cont [11/16] %v11655, 128
        %11704 = vxpose.xlu0.b32.cont [12/16] %v11656, 128
        %11705 = vxpose.xlu0.b32.cont [13/16] %v11657, 128
        %11706 = vxpose.xlu0.b32.cont [14/16] %v11658, 128
        %11707 = vxpose.xlu0.b32.cont [15/16] %v11659, 128
        %11708 = vxpose.xlu0.b32.end [16/16] %v11660, 128
        %v11709 = vpop.trf.xlu0
        %v11710 = vpop.trf.xlu0
        %v11711 = vpop.trf.xlu0
        %v11712 = vpop.trf.xlu0
        %v11713 = vpop.trf.xlu0
        %v11714 = vpop.trf.xlu0
        %v11715 = vpop.trf.xlu0
        %v11716 = vpop.trf.xlu0
        %v11717 = vpop.trf.xlu0
        %v11718 = vpop.trf.xlu0
        %v11719 = vpop.trf.xlu0
        %v11720 = vpop.trf.xlu0
        %v11721 = vpop.trf.xlu0
        %v11722 = vpop.trf.xlu0
        %v11723 = vpop.trf.xlu0
        %v11724 = vpop.trf.xlu0
        %11725 = vst [vmem:[%s350] sm:$0xff] %v11677
        %11726 = vst [vmem:[%s350 + $0x8] sm:$0xff] %v11709
        %11727 = vst [vmem:[%s350 + $0x10] sm:$0xff] %v11678
        %11728 = vst [vmem:[%s350 + $0x18] sm:$0xff] %v11710
        %11729 = vst [vmem:[%s350 + $0x20] sm:$0xff] %v11679
        %11730 = vst [vmem:[%s350 + $0x28] sm:$0xff] %v11711
        %11731 = vst [vmem:[%s350 + $0x30] sm:$0xff] %v11680
        %11732 = vst [vmem:[%s350 + $0x38] sm:$0xff] %v11712
        %s11733 = sand.u32 %s192, 1
        %s11734 = scalar_lea.sflag [#allocation6], %s11733
        %s11735 = sand.u32 %s192, 1
        %s11736 = smul.addr %s11735, 64
        %s11737 = scalar_lea.vmem [#allocation10], %s11736
        // Predicated region
        $region61: #{tpu_custom_call.1} parent=47 // pred_check
          %p11738 = pneg %p202
        $region62: #{tpu_custom_call.1} parent=47 // pred_check_branch
          %11740 = sbr.rel (%p11738) target = $region64
        $region63: #{tpu_custom_call.1} parent=47 // pred_region
          %s11742 = ssub.s32 1024, 1024
          %11743 = vsyncadd %s11734, %s11742
          %s11744 = smul.addr %s27, 8
          %s11745 = smul.addr %s11744, 128
          %s11746 = scalar_lea.hbm %s7, %s11745
          %s11747 = sshll.u32 %s11737, 4
          %s11748 = int_to_ptr.vmem [resolvable:$true] %s11747
          %11753 = dma.vmem_to_hbm [thread:$0]  %s11748, 1024, %s11746, %s11734, 256, 256, 16
        $region64: #{tpu_custom_call.1} parent=47 // pred_fallthru
          _
      $region48: #{tpu_custom_call.1} parent=5 // pred_fallthru
        _
      %p11754 = scmp.le.s32.totalorder 2, %s22
      // Predicated region
      $region65: #{tpu_custom_call.1} parent=5 // pred_check
        %p11755 = pneg %p11754
      $region66: #{tpu_custom_call.1} parent=5 // pred_check_branch
        %11757 = sbr.rel (%p11755) target = $region68
      $region67: #{tpu_custom_call.1} parent=5 // pred_region
        %s11758 = ssub.s32 %s22, 2
        // Predicated region
        $region69: #{tpu_custom_call.1} parent=67 // pred_check
          %p11759 = pneg %p208
        $region70: #{tpu_custom_call.1} parent=67 // pred_check_branch
          %11761 = sbr.rel (%p11759) target = $region72
        $region71: #{tpu_custom_call.1} parent=67 // pred_region
          %s11762 = sand.u32 %s193, 1
          %s11763 = scalar_lea.sflag [#allocation6], %s11762
          %s11764 = sand.u32 %s193, 1
          %s11765 = smul.addr %s11764, 64
          %s11766 = scalar_lea.vmem [#allocation10], %s11765
          %11767 = dma.done %s11763, 1024
        $region72: #{tpu_custom_call.1} parent=67 // pred_fallthru
          _
      $region68: #{tpu_custom_call.1} parent=5 // pred_fallthru
        _
    $region6: #{tpu_custom_call.1} parent=1 // loop_footer
      %s26 = sadd.s32 1, %s22
    $region7: #{tpu_custom_call.1} parent=1 // loop_footer_branch
      %21 = sbr.rel target = $region3
    $region8: #{tpu_custom_call.1} parent=1 // loop_exit
      _
    %11768 = vsyncpa [#allocation5], 1
    %s11769 = scalar_lea.sflag [#allocation5], 1
    %11770 = vsyncpa %s11769, 1
    %11771 = vsyncpa [#allocation8], 1
    %s11772 = scalar_lea.sflag [#allocation8], 1
    %11773 = vsyncpa %s11772, 1
    %11774 = vsyncpa [#allocation6], 1
    %s11775 = scalar_lea.sflag [#allocation6], 1
    %11776 = vsyncpa %s11775, 1

</llo_original>
